<compile_context>
chip_gen: v7x
topology: tpu7x:2x2x1
jax: 0.10.0
libtpu: 0.0.40
codegen_flags: <defaults>
</compile_context>

<pallas_src>
import jax
import jax.numpy as jnp
from jax.experimental import pallas as pl
from jax.experimental.pallas import tpu as pltpu


# ---------------------------------------------------------------------------
# Fused conv-as-matmul Pallas kernel
# ---------------------------------------------------------------------------

def _fused_matmul(cols, w, *, epi=None, sc=None, add=None,
                  out_dtype=jnp.float32):
    """out = cols @ w  (+ sc_in @ sc_w)  -> [relu(out*scale+bias)]  -> (+ add)

    cols : (M, K)  bf16   im2col patch matrix
    w    : (K, N)  bf16   conv weight
    epi  : (scale, bias)  f32 per-output-channel BN affine, followed by ReLU
    sc   : (sc_in, sc_w)  bf16 fused 1x1-shortcut matmul, added to the result
    add  : (M, N)         identity-shortcut slab added to the result
    """
    M, K = cols.shape
    N = w.shape[1]

    # Tile M so DMA pipelines and (on v7x) both TensorCores get tiles.
    if M >= 1024 and M % 512 == 0:
        tm = 512
    elif M % 256 == 0:
        tm = 256
    else:
        tm = M
    grid = (M // tm,)

    has_epi, has_sc, has_add = epi is not None, sc is not None, add is not None

    operands = [cols, w]
    in_specs = [pl.BlockSpec((tm, K), lambda i: (i, 0)),
                pl.BlockSpec((K, N), lambda i: (0, 0))]
    if has_sc:
        sc_in, sc_w = sc
        Ks = sc_in.shape[1]
        operands += [sc_in, sc_w]
        in_specs += [pl.BlockSpec((tm, Ks), lambda i: (i, 0)),
                     pl.BlockSpec((Ks, N), lambda i: (0, 0))]
    if has_epi:
        scale, bias = epi
        operands += [scale.reshape(1, N).astype(jnp.float32),
                     bias.reshape(1, N).astype(jnp.float32)]
        in_specs += [pl.BlockSpec((1, N), lambda i: (0, 0)),
                     pl.BlockSpec((1, N), lambda i: (0, 0))]
    if has_add:
        operands += [add]
        in_specs += [pl.BlockSpec((tm, N), lambda i: (i, 0))]

    def kernel(*refs):
        it = iter(refs)
        cols_ref, w_ref = next(it), next(it)
        acc = jnp.dot(cols_ref[...], w_ref[...],
                      preferred_element_type=jnp.float32)
        if has_sc:
            sc_ref, scw_ref = next(it), next(it)
            acc = acc + jnp.dot(sc_ref[...], scw_ref[...],
                                preferred_element_type=jnp.float32)
        if has_epi:
            s_ref, b_ref = next(it), next(it)
            acc = jnp.maximum(acc * s_ref[...] + b_ref[...], 0.0)
        if has_add:
            a_ref = next(it)
            acc = acc + a_ref[...].astype(jnp.float32)
        out_ref = next(it)
        out_ref[...] = acc.astype(out_ref.dtype)

    return pl.pallas_call(
        kernel,
        out_shape=jax.ShapeDtypeStruct((M, N), out_dtype),
        grid=grid,
        in_specs=in_specs,
        out_specs=pl.BlockSpec((tm, N), lambda i: (i, 0)),
        compiler_params=pltpu.CompilerParams(
            dimension_semantics=("parallel",)),
    )(*operands)


# ---------------------------------------------------------------------------
# Fused tail kernel: BN+ReLU -> global 8x8 avg pool -> Linear
# ---------------------------------------------------------------------------

def _tail_kernel(x_ref, s_ref, b_ref, w_ref, fb_ref, o_ref):
    x = jnp.maximum(x_ref[...] * s_ref[...] + b_ref[...], 0.0)   # (N, HW, C)
    pooled = jnp.mean(x, axis=1)                                 # (N, C)
    o_ref[...] = (jnp.dot(pooled.astype(jnp.bfloat16), w_ref[...],
                          preferred_element_type=jnp.float32)
                  + fb_ref[...])


def pallas_tail(x3d, scale, bias, fc_w, fc_b):
    N, HW, C = x3d.shape
    O = fc_w.shape[1]
    return pl.pallas_call(
        _tail_kernel,
        out_shape=jax.ShapeDtypeStruct((N, O), jnp.float32),
    )(x3d, scale.reshape(1, 1, C), bias.reshape(1, 1, C),
      fc_w, fc_b.reshape(1, O))


# ---------------------------------------------------------------------------
# Conv lowering glue (im2col) — XLA pad/slice/concat; matmul runs in Pallas
# ---------------------------------------------------------------------------

def _im2col_3x3(x, stride):
    # x: (N, H, W, C) NHWC, padding=1  ->  (N*Ho*Wo, 9*C) bf16 patch matrix
    N, H, W, C = x.shape
    xp = jnp.pad(x, ((0, 0), (1, 1), (1, 1), (0, 0)))
    Ho = (H + 2 - 3) // stride + 1
    Wo = (W + 2 - 3) // stride + 1
    taps = [xp[:, kh:kh + stride * Ho:stride, kw:kw + stride * Wo:stride, :]
            for kh in range(3) for kw in range(3)]
    cols = jnp.concatenate(taps, axis=-1).astype(jnp.bfloat16)   # (N,Ho,Wo,9C)
    return cols.reshape(N * Ho * Wo, 9 * C), (N, Ho, Wo)


def stem_conv(x, w_pad):
    # w_pad: (32, 16) bf16 — contraction dim zero-padded 27 -> 32
    cols, (N, Ho, Wo) = _im2col_3x3(x, 1)                        # (M, 27)
    cols = jnp.pad(cols, ((0, 0), (0, w_pad.shape[0] - cols.shape[1])))
    out = _fused_matmul(cols, w_pad)
    return out.reshape(N, Ho, Wo, w_pad.shape[1])


# ---------------------------------------------------------------------------
# Parameter initialization (deterministic, synthetic; eval-mode BN folded)
# ---------------------------------------------------------------------------

def _conv_w(key, kh, kw, cin, cout):
    fan_in = kh * kw * cin
    w = (jax.random.normal(key, (kh, kw, cin, cout), jnp.float32)
         * (2.0 / fan_in) ** 0.5)
    return w.reshape(kh * kw * cin, cout).astype(jnp.bfloat16)


def _bn_params(key, c, eps=1e-5):
    k1, k2, k3, k4 = jax.random.split(key, 4)
    gamma = 1.0 + 0.1 * jax.random.normal(k1, (c,), jnp.float32)
    beta = 0.1 * jax.random.normal(k2, (c,), jnp.float32)
    mean = 0.1 * jax.random.normal(k3, (c,), jnp.float32)
    var = 1.0 + 0.1 * jax.random.uniform(k4, (c,), jnp.float32)
    scale = gamma / jnp.sqrt(var + eps)      # eval-mode BN folded to affine
    bias = beta - mean * scale
    return scale, bias


def init_wideresnet(key, depth=10, widen_factor=2):
    assert (depth - 4) % 6 == 0
    n = (depth - 4) // 6
    nCh = [16, 16 * widen_factor, 32 * widen_factor, 64 * widen_factor]
    keys = list(jax.random.split(key, 4 + 6 * 3 * n + 8))
    ki = iter(keys)

    stem = _conv_w(next(ki), 3, 3, 3, nCh[0])                    # (27, 16)
    stem = jnp.pad(stem, ((0, 32 - stem.shape[0]), (0, 0)))      # K 27 -> 32
    params = {"stem_w": stem, "blocks": []}

    strides = [1, 2, 2]
    for s_idx in range(3):
        in_p, out_p, stride = nCh[s_idx], nCh[s_idx + 1], strides[s_idx]
        stage = []
        for i in range(n):
            ip = in_p if i == 0 else out_p
            st = stride if i == 0 else 1
            blk = {
                "stride": st,
                "bn1": _bn_params(next(ki), ip),
                "conv1_w": _conv_w(next(ki), 3, 3, ip, out_p),
                "bn2": _bn_params(next(ki), out_p),
                "conv2_w": _conv_w(next(ki), 3, 3, out_p, out_p),
                "shortcut_w": (None if ip == out_p
                               else _conv_w(next(ki), 1, 1, ip, out_p)),
            }
            stage.append(blk)
        params["blocks"].append(stage)

    params["bn_final"] = _bn_params(next(ki), nCh[3])
    params["fc_w"] = (jax.random.normal(next(ki), (nCh[3], 10), jnp.float32)
                      * (1.0 / nCh[3]) ** 0.5).astype(jnp.bfloat16)
    params["fc_b"] = 0.01 * jax.random.normal(next(ki), (10,), jnp.float32)
    params["nChannels"] = nCh[3]
    return params


# ---------------------------------------------------------------------------
# Forward pass (matches WideResNet.forward / BasicBlock.forward, dropRate=0)
# ---------------------------------------------------------------------------

def basic_block(p, x):
    N, H, W, Cin = x.shape
    s1, b1 = p["bn1"]
    # Pre-activation: applied before im2col so conv padding stays zero; XLA
    # fuses this affine+relu (and the bf16 cast) into the im2col fusion.
    act = jnp.maximum(x * s1.reshape(1, 1, 1, -1) + b1.reshape(1, 1, 1, -1), 0.0)
    equal = p["shortcut_w"] is None
    stride = p["stride"]
    Cout = p["conv1_w"].shape[1]

    # conv1 with fused BN2-affine + ReLU epilogue (bf16 intra-block activation)
    cols1, (_, Ho, Wo) = _im2col_3x3(act, stride)
    h = _fused_matmul(cols1, p["conv1_w"], epi=p["bn2"], out_dtype=jnp.bfloat16)
    h = h.reshape(N, Ho, Wo, Cout)

    # TODO(synk): dropout (dropRate > 0) not implemented; module uses dropRate=0.

    # conv2 with the residual fused into the same kernel
    cols2, _ = _im2col_3x3(h, 1)
    if equal:
        out = _fused_matmul(cols2, p["conv2_w"], add=x.reshape(-1, Cout))
    else:
        sc_in = act[:, ::stride, ::stride, :].reshape(-1, Cin).astype(jnp.bfloat16)
        out = _fused_matmul(cols2, p["conv2_w"], sc=(sc_in, p["shortcut_w"]))
    return out.reshape(N, Ho, Wo, Cout)


def wideresnet_forward(params, x_nchw):
    x = jnp.transpose(x_nchw, (0, 2, 3, 1)).astype(jnp.float32)   # NCHW -> NHWC
    out = stem_conv(x, params["stem_w"])
    for stage in params["blocks"]:
        for blk in stage:
            out = basic_block(blk, out)
    N, H, W, C = out.shape
    scale, bias = params["bn_final"]
    # H = W = 8 here -> avg_pool2d(out, 8) == global mean over HW, fused in tail
    return pallas_tail(out.reshape(N, H * W, C), scale, bias,
                       params["fc_w"], params["fc_b"])


# ---------------------------------------------------------------------------
# Main
# ---------------------------------------------------------------------------

if __name__ == "__main__":
    key = jax.random.PRNGKey(0)
    kp, kx = jax.random.split(key)

    # WideResNet(depth=10, widen_factor=2): smallest valid depth, small widen.
    params = init_wideresnet(kp, depth=10, widen_factor=2)

    # CIFAR-style input (32x32 required so avg_pool2d(8) sees an 8x8 map).
    x = jax.random.normal(kx, (2, 3, 32, 32), jnp.float32)        # NCHW like PyTorch

    fwd = jax.jit(lambda inp: wideresnet_forward(params, inp))
    logits = fwd(x)
    jax.block_until_ready(logits)

    assert logits.shape == (2, 10), logits.shape
    assert jnp.all(jnp.isfinite(logits))
    print("KERNEL_OK")
</pallas_src>

<mosaic_0001>
module attributes {stable_mosaic.version = 11 : i64} {
  func.func @kernel(%arg0: i32, %arg1: memref<512x32xbf16, #tpu.memory_space<vmem>>, %arg2: memref<32x16xbf16, #tpu.memory_space<vmem>>, %arg3: memref<512x16xf32, #tpu.memory_space<vmem>>) attributes {dimension_semantics = [#tpu.dimension_semantics<parallel>], iteration_bounds = array<i64: 4>, scalar_prefetch = 0 : i64, scratch_operands = 0 : i64, tpu.core_type = #tpu.core_type<tc>, window_params = [{transform_indices = @transform_0, window_bounds = array<i64: 512, 32>}, {pipeline_mode = #tpu.pipeline_mode<synchronous>, transform_indices = @transform_1, window_bounds = array<i64: 32, 16>}, {transform_indices = @transform_2, window_bounds = array<i64: 512, 16>}]} {
    %c0 = arith.constant 0 : index
    %c0_0 = arith.constant 0 : index
    %0 = vector.load %arg1[%c0, %c0_0] : memref<512x32xbf16, #tpu.memory_space<vmem>>, vector<512x32xbf16>
    %c0_1 = arith.constant 0 : index
    %c0_2 = arith.constant 0 : index
    %1 = vector.load %arg2[%c0_1, %c0_2] : memref<32x16xbf16, #tpu.memory_space<vmem>>, vector<32x16xbf16>
    %cst = arith.constant dense<0.000000e+00> : vector<512x16xf32>
    %2 = tpu.matmul %0, %1, %cst {dimension_numbers = #tpu.dot_dimension_numbers<[1], [0], [0], [1], [0, 0, 1, 1], [], []>} : vector<512x32xbf16>, vector<32x16xbf16>, vector<512x16xf32> -> vector<512x16xf32>
    %c0_3 = arith.constant 0 : index
    %c0_4 = arith.constant 0 : index
    %3 = vector.load %arg3[%c0_3, %c0_4] : memref<512x16xf32, #tpu.memory_space<vmem>>, vector<512x16xf32>
    tpu.vector_store %arg3[%c0_3, %c0_4], %2 {strides = array<i32>} : memref<512x16xf32, #tpu.memory_space<vmem>>, vector<512x16xf32>,
    return
  }
  func.func @transform_0(%arg0: i32) -> (i32, i32) {
    %c0_i32 = arith.constant 0 : i32
    %c0_i32_0 = arith.constant 0 : i32
    return %arg0, %c0_i32 : i32, i32
  }
  func.func @transform_1(%arg0: i32) -> (i32, i32) {
    %c0_i32 = arith.constant 0 : i32
    %c0_i32_0 = arith.constant 0 : i32
    %c0_i32_1 = arith.constant 0 : i32
    return %c0_i32, %c0_i32_0 : i32, i32
  }
  func.func @transform_2(%arg0: i32) -> (i32, i32) {
    %c0_i32 = arith.constant 0 : i32
    %c0_i32_0 = arith.constant 0 : i32
    return %arg0, %c0_i32 : i32, i32
  }
}

module attributes {stable_mosaic.version = 11 : i64} {
  func.func @kernel(%arg0: i32, %arg1: memref<512x144xbf16, #tpu.memory_space<vmem>>, %arg2: memref<144x32xbf16, #tpu.memory_space<vmem>>, %arg3: memref<1x32xf32, #tpu.memory_space<vmem>>, %arg4: memref<1x32xf32, #tpu.memory_space<vmem>>, %arg5: memref<512x32xbf16, #tpu.memory_space<vmem>>) attributes {dimension_semantics = [#tpu.dimension_semantics<parallel>], iteration_bounds = array<i64: 4>, scalar_prefetch = 0 : i64, scratch_operands = 0 : i64, tpu.core_type = #tpu.core_type<tc>, window_params = [{transform_indices = @transform_0, window_bounds = array<i64: 512, 144>}, {pipeline_mode = #tpu.pipeline_mode<synchronous>, transform_indices = @transform_1, window_bounds = array<i64: 144, 32>}, {pipeline_mode = #tpu.pipeline_mode<synchronous>, transform_indices = @transform_2, window_bounds = array<i64: 1, 32>}, {pipeline_mode = #tpu.pipeline_mode<synchronous>, transform_indices = @transform_3, window_bounds = array<i64: 1, 32>}, {transform_indices = @transform_4, window_bounds = array<i64: 512, 32>}]} {
    %c0 = arith.constant 0 : index
    %c0_0 = arith.constant 0 : index
    %0 = vector.load %arg1[%c0, %c0_0] : memref<512x144xbf16, #tpu.memory_space<vmem>>, vector<512x144xbf16>
    %c0_1 = arith.constant 0 : index
    %c0_2 = arith.constant 0 : index
    %1 = vector.load %arg2[%c0_1, %c0_2] : memref<144x32xbf16, #tpu.memory_space<vmem>>, vector<144x32xbf16>
    %cst = arith.constant dense<0.000000e+00> : vector<512x32xf32>
    %2 = tpu.matmul %0, %1, %cst {dimension_numbers = #tpu.dot_dimension_numbers<[1], [0], [0], [1], [0, 0, 1, 1], [], []>} : vector<512x144xbf16>, vector<144x32xbf16>, vector<512x32xf32> -> vector<512x32xf32>
    %c0_3 = arith.constant 0 : index
    %c0_4 = arith.constant 0 : index
    %3 = vector.load %arg3[%c0_3, %c0_4] : memref<1x32xf32, #tpu.memory_space<vmem>>, vector<1x32xf32>
    %4 = vector.broadcast %3 : vector<1x32xf32> to vector<512x32xf32>
    %5 = arith.mulf %2, %4 : vector<512x32xf32>
    %c0_5 = arith.constant 0 : index
    %c0_6 = arith.constant 0 : index
    %6 = vector.load %arg4[%c0_5, %c0_6] : memref<1x32xf32, #tpu.memory_space<vmem>>, vector<1x32xf32>
    %7 = vector.broadcast %6 : vector<1x32xf32> to vector<512x32xf32>
    %8 = arith.addf %5, %7 : vector<512x32xf32>
    %cst_7 = arith.constant 0.000000e+00 : f32
    %9 = vector.broadcast %cst_7 : f32 to vector<512x32xf32>
    %10 = arith.maximumf %8, %9 : vector<512x32xf32>
    %11 = arith.truncf %10 : vector<512x32xf32> to vector<512x32xbf16>
    %c0_8 = arith.constant 0 : index
    %c0_9 = arith.constant 0 : index
    %12 = vector.load %arg5[%c0_8, %c0_9] : memref<512x32xbf16, #tpu.memory_space<vmem>>, vector<512x32xbf16>
    tpu.vector_store %arg5[%c0_8, %c0_9], %11 {strides = array<i32>} : memref<512x32xbf16, #tpu.memory_space<vmem>>, vector<512x32xbf16>,
    return
  }
  func.func @transform_0(%arg0: i32) -> (i32, i32) {
    %c0_i32 = arith.constant 0 : i32
    %c0_i32_0 = arith.constant 0 : i32
    return %arg0, %c0_i32 : i32, i32
  }
  func.func @transform_1(%arg0: i32) -> (i32, i32) {
    %c0_i32 = arith.constant 0 : i32
    %c0_i32_0 = arith.constant 0 : i32
    %c0_i32_1 = arith.constant 0 : i32
    return %c0_i32, %c0_i32_0 : i32, i32
  }
  func.func @transform_2(%arg0: i32) -> (i32, i32) {
    %c0_i32 = arith.constant 0 : i32
    %c0_i32_0 = arith.constant 0 : i32
    %c0_i32_1 = arith.constant 0 : i32
    return %c0_i32, %c0_i32_0 : i32, i32
  }
  func.func @transform_3(%arg0: i32) -> (i32, i32) {
    %c0_i32 = arith.constant 0 : i32
    %c0_i32_0 = arith.constant 0 : i32
    %c0_i32_1 = arith.constant 0 : i32
    return %c0_i32, %c0_i32_0 : i32, i32
  }
  func.func @transform_4(%arg0: i32) -> (i32, i32) {
    %c0_i32 = arith.constant 0 : i32
    %c0_i32_0 = arith.constant 0 : i32
    return %arg0, %c0_i32 : i32, i32
  }
}

module attributes {stable_mosaic.version = 11 : i64} {
  func.func @kernel(%arg0: i32, %arg1: memref<512x288xbf16, #tpu.memory_space<vmem>>, %arg2: memref<288x32xbf16, #tpu.memory_space<vmem>>, %arg3: memref<512x16xbf16, #tpu.memory_space<vmem>>, %arg4: memref<16x32xbf16, #tpu.memory_space<vmem>>, %arg5: memref<512x32xf32, #tpu.memory_space<vmem>>) attributes {dimension_semantics = [#tpu.dimension_semantics<parallel>], iteration_bounds = array<i64: 4>, scalar_prefetch = 0 : i64, scratch_operands = 0 : i64, tpu.core_type = #tpu.core_type<tc>, window_params = [{transform_indices = @transform_0, window_bounds = array<i64: 512, 288>}, {pipeline_mode = #tpu.pipeline_mode<synchronous>, transform_indices = @transform_1, window_bounds = array<i64: 288, 32>}, {transform_indices = @transform_2, window_bounds = array<i64: 512, 16>}, {pipeline_mode = #tpu.pipeline_mode<synchronous>, transform_indices = @transform_3, window_bounds = array<i64: 16, 32>}, {transform_indices = @transform_4, window_bounds = array<i64: 512, 32>}]} {
    %c0 = arith.constant 0 : index
    %c0_0 = arith.constant 0 : index
    %0 = vector.load %arg1[%c0, %c0_0] : memref<512x288xbf16, #tpu.memory_space<vmem>>, vector<512x288xbf16>
    %c0_1 = arith.constant 0 : index
    %c0_2 = arith.constant 0 : index
    %1 = vector.load %arg2[%c0_1, %c0_2] : memref<288x32xbf16, #tpu.memory_space<vmem>>, vector<288x32xbf16>
    %cst = arith.constant dense<0.000000e+00> : vector<512x32xf32>
    %2 = tpu.matmul %0, %1, %cst {dimension_numbers = #tpu.dot_dimension_numbers<[1], [0], [0], [1], [0, 0, 1, 1], [], []>} : vector<512x288xbf16>, vector<288x32xbf16>, vector<512x32xf32> -> vector<512x32xf32>
    %c0_3 = arith.constant 0 : index
    %c0_4 = arith.constant 0 : index
    %3 = vector.load %arg3[%c0_3, %c0_4] : memref<512x16xbf16, #tpu.memory_space<vmem>>, vector<512x16xbf16>
    %c0_5 = arith.constant 0 : index
    %c0_6 = arith.constant 0 : index
    %4 = vector.load %arg4[%c0_5, %c0_6] : memref<16x32xbf16, #tpu.memory_space<vmem>>, vector<16x32xbf16>
    %cst_7 = arith.constant dense<0.000000e+00> : vector<512x32xf32>
    %5 = tpu.matmul %3, %4, %cst_7 {dimension_numbers = #tpu.dot_dimension_numbers<[1], [0], [0], [1], [0, 0, 1, 1], [], []>} : vector<512x16xbf16>, vector<16x32xbf16>, vector<512x32xf32> -> vector<512x32xf32>
    %6 = arith.addf %2, %5 : vector<512x32xf32>
    %c0_8 = arith.constant 0 : index
    %c0_9 = arith.constant 0 : index
    %7 = vector.load %arg5[%c0_8, %c0_9] : memref<512x32xf32, #tpu.memory_space<vmem>>, vector<512x32xf32>
    tpu.vector_store %arg5[%c0_8, %c0_9], %6 {strides = array<i32>} : memref<512x32xf32, #tpu.memory_space<vmem>>, vector<512x32xf32>,
    return
  }
  func.func @transform_0(%arg0: i32) -> (i32, i32) {
    %c0_i32 = arith.constant 0 : i32
    %c0_i32_0 = arith.constant 0 : i32
    return %arg0, %c0_i32 : i32, i32
  }
  func.func @transform_1(%arg0: i32) -> (i32, i32) {
    %c0_i32 = arith.constant 0 : i32
    %c0_i32_0 = arith.constant 0 : i32
    %c0_i32_1 = arith.constant 0 : i32
    return %c0_i32, %c0_i32_0 : i32, i32
  }
  func.func @transform_2(%arg0: i32) -> (i32, i32) {
    %c0_i32 = arith.constant 0 : i32
    %c0_i32_0 = arith.constant 0 : i32
    return %arg0, %c0_i32 : i32, i32
  }
  func.func @transform_3(%arg0: i32) -> (i32, i32) {
    %c0_i32 = arith.constant 0 : i32
    %c0_i32_0 = arith.constant 0 : i32
    %c0_i32_1 = arith.constant 0 : i32
    return %c0_i32, %c0_i32_0 : i32, i32
  }
  func.func @transform_4(%arg0: i32) -> (i32, i32) {
    %c0_i32 = arith.constant 0 : i32
    %c0_i32_0 = arith.constant 0 : i32
    return %arg0, %c0_i32 : i32, i32
  }
}

module attributes {stable_mosaic.version = 11 : i64} {
  func.func @kernel(%arg0: i32, %arg1: memref<256x288xbf16, #tpu.memory_space<vmem>>, %arg2: memref<288x64xbf16, #tpu.memory_space<vmem>>, %arg3: memref<1x64xf32, #tpu.memory_space<vmem>>, %arg4: memref<1x64xf32, #tpu.memory_space<vmem>>, %arg5: memref<256x64xbf16, #tpu.memory_space<vmem>>) attributes {dimension_semantics = [#tpu.dimension_semantics<parallel>], iteration_bounds = array<i64: 2>, scalar_prefetch = 0 : i64, scratch_operands = 0 : i64, tpu.core_type = #tpu.core_type<tc>, window_params = [{transform_indices = @transform_0, window_bounds = array<i64: 256, 288>}, {pipeline_mode = #tpu.pipeline_mode<synchronous>, transform_indices = @transform_1, window_bounds = array<i64: 288, 64>}, {pipeline_mode = #tpu.pipeline_mode<synchronous>, transform_indices = @transform_2, window_bounds = array<i64: 1, 64>}, {pipeline_mode = #tpu.pipeline_mode<synchronous>, transform_indices = @transform_3, window_bounds = array<i64: 1, 64>}, {transform_indices = @transform_4, window_bounds = array<i64: 256, 64>}]} {
    %c0 = arith.constant 0 : index
    %c0_0 = arith.constant 0 : index
    %0 = vector.load %arg1[%c0, %c0_0] : memref<256x288xbf16, #tpu.memory_space<vmem>>, vector<256x288xbf16>
    %c0_1 = arith.constant 0 : index
    %c0_2 = arith.constant 0 : index
    %1 = vector.load %arg2[%c0_1, %c0_2] : memref<288x64xbf16, #tpu.memory_space<vmem>>, vector<288x64xbf16>
    %cst = arith.constant dense<0.000000e+00> : vector<256x64xf32>
    %2 = tpu.matmul %0, %1, %cst {dimension_numbers = #tpu.dot_dimension_numbers<[1], [0], [0], [1], [0, 0, 1, 1], [], []>} : vector<256x288xbf16>, vector<288x64xbf16>, vector<256x64xf32> -> vector<256x64xf32>
    %c0_3 = arith.constant 0 : index
    %c0_4 = arith.constant 0 : index
    %3 = vector.load %arg3[%c0_3, %c0_4] : memref<1x64xf32, #tpu.memory_space<vmem>>, vector<1x64xf32>
    %4 = vector.broadcast %3 : vector<1x64xf32> to vector<256x64xf32>
    %5 = arith.mulf %2, %4 : vector<256x64xf32>
    %c0_5 = arith.constant 0 : index
    %c0_6 = arith.constant 0 : index
    %6 = vector.load %arg4[%c0_5, %c0_6] : memref<1x64xf32, #tpu.memory_space<vmem>>, vector<1x64xf32>
    %7 = vector.broadcast %6 : vector<1x64xf32> to vector<256x64xf32>
    %8 = arith.addf %5, %7 : vector<256x64xf32>
    %cst_7 = arith.constant 0.000000e+00 : f32
    %9 = vector.broadcast %cst_7 : f32 to vector<256x64xf32>
    %10 = arith.maximumf %8, %9 : vector<256x64xf32>
    %11 = arith.truncf %10 : vector<256x64xf32> to vector<256x64xbf16>
    %c0_8 = arith.constant 0 : index
    %c0_9 = arith.constant 0 : index
    %12 = vector.load %arg5[%c0_8, %c0_9] : memref<256x64xbf16, #tpu.memory_space<vmem>>, vector<256x64xbf16>
    tpu.vector_store %arg5[%c0_8, %c0_9], %11 {strides = array<i32>} : memref<256x64xbf16, #tpu.memory_space<vmem>>, vector<256x64xbf16>,
    return
  }
  func.func @transform_0(%arg0: i32) -> (i32, i32) {
    %c0_i32 = arith.constant 0 : i32
    %c0_i32_0 = arith.constant 0 : i32
    return %arg0, %c0_i32 : i32, i32
  }
  func.func @transform_1(%arg0: i32) -> (i32, i32) {
    %c0_i32 = arith.constant 0 : i32
    %c0_i32_0 = arith.constant 0 : i32
    %c0_i32_1 = arith.constant 0 : i32
    return %c0_i32, %c0_i32_0 : i32, i32
  }
  func.func @transform_2(%arg0: i32) -> (i32, i32) {
    %c0_i32 = arith.constant 0 : i32
    %c0_i32_0 = arith.constant 0 : i32
    %c0_i32_1 = arith.constant 0 : i32
    return %c0_i32, %c0_i32_0 : i32, i32
  }
  func.func @transform_3(%arg0: i32) -> (i32, i32) {
    %c0_i32 = arith.constant 0 : i32
    %c0_i32_0 = arith.constant 0 : i32
    %c0_i32_1 = arith.constant 0 : i32
    return %c0_i32, %c0_i32_0 : i32, i32
  }
  func.func @transform_4(%arg0: i32) -> (i32, i32) {
    %c0_i32 = arith.constant 0 : i32
    %c0_i32_0 = arith.constant 0 : i32
    return %arg0, %c0_i32 : i32, i32
  }
}

module attributes {stable_mosaic.version = 11 : i64} {
  func.func @kernel(%arg0: i32, %arg1: memref<256x576xbf16, #tpu.memory_space<vmem>>, %arg2: memref<576x64xbf16, #tpu.memory_space<vmem>>, %arg3: memref<256x32xbf16, #tpu.memory_space<vmem>>, %arg4: memref<32x64xbf16, #tpu.memory_space<vmem>>, %arg5: memref<256x64xf32, #tpu.memory_space<vmem>>) attributes {dimension_semantics = [#tpu.dimension_semantics<parallel>], iteration_bounds = array<i64: 2>, scalar_prefetch = 0 : i64, scratch_operands = 0 : i64, tpu.core_type = #tpu.core_type<tc>, window_params = [{transform_indices = @transform_0, window_bounds = array<i64: 256, 576>}, {pipeline_mode = #tpu.pipeline_mode<synchronous>, transform_indices = @transform_1, window_bounds = array<i64: 576, 64>}, {transform_indices = @transform_2, window_bounds = array<i64: 256, 32>}, {pipeline_mode = #tpu.pipeline_mode<synchronous>, transform_indices = @transform_3, window_bounds = array<i64: 32, 64>}, {transform_indices = @transform_4, window_bounds = array<i64: 256, 64>}]} {
    %c0 = arith.constant 0 : index
    %c0_0 = arith.constant 0 : index
    %0 = vector.load %arg1[%c0, %c0_0] : memref<256x576xbf16, #tpu.memory_space<vmem>>, vector<256x576xbf16>
    %c0_1 = arith.constant 0 : index
    %c0_2 = arith.constant 0 : index
    %1 = vector.load %arg2[%c0_1, %c0_2] : memref<576x64xbf16, #tpu.memory_space<vmem>>, vector<576x64xbf16>
    %cst = arith.constant dense<0.000000e+00> : vector<256x64xf32>
    %2 = tpu.matmul %0, %1, %cst {dimension_numbers = #tpu.dot_dimension_numbers<[1], [0], [0], [1], [0, 0, 1, 1], [], []>} : vector<256x576xbf16>, vector<576x64xbf16>, vector<256x64xf32> -> vector<256x64xf32>
    %c0_3 = arith.constant 0 : index
    %c0_4 = arith.constant 0 : index
    %3 = vector.load %arg3[%c0_3, %c0_4] : memref<256x32xbf16, #tpu.memory_space<vmem>>, vector<256x32xbf16>
    %c0_5 = arith.constant 0 : index
    %c0_6 = arith.constant 0 : index
    %4 = vector.load %arg4[%c0_5, %c0_6] : memref<32x64xbf16, #tpu.memory_space<vmem>>, vector<32x64xbf16>
    %cst_7 = arith.constant dense<0.000000e+00> : vector<256x64xf32>
    %5 = tpu.matmul %3, %4, %cst_7 {dimension_numbers = #tpu.dot_dimension_numbers<[1], [0], [0], [1], [0, 0, 1, 1], [], []>} : vector<256x32xbf16>, vector<32x64xbf16>, vector<256x64xf32> -> vector<256x64xf32>
    %6 = arith.addf %2, %5 : vector<256x64xf32>
    %c0_8 = arith.constant 0 : index
    %c0_9 = arith.constant 0 : index
    %7 = vector.load %arg5[%c0_8, %c0_9] : memref<256x64xf32, #tpu.memory_space<vmem>>, vector<256x64xf32>
    tpu.vector_store %arg5[%c0_8, %c0_9], %6 {strides = array<i32>} : memref<256x64xf32, #tpu.memory_space<vmem>>, vector<256x64xf32>,
    return
  }
  func.func @transform_0(%arg0: i32) -> (i32, i32) {
    %c0_i32 = arith.constant 0 : i32
    %c0_i32_0 = arith.constant 0 : i32
    return %arg0, %c0_i32 : i32, i32
  }
  func.func @transform_1(%arg0: i32) -> (i32, i32) {
    %c0_i32 = arith.constant 0 : i32
    %c0_i32_0 = arith.constant 0 : i32
    %c0_i32_1 = arith.constant 0 : i32
    return %c0_i32, %c0_i32_0 : i32, i32
  }
  func.func @transform_2(%arg0: i32) -> (i32, i32) {
    %c0_i32 = arith.constant 0 : i32
    %c0_i32_0 = arith.constant 0 : i32
    return %arg0, %c0_i32 : i32, i32
  }
  func.func @transform_3(%arg0: i32) -> (i32, i32) {
    %c0_i32 = arith.constant 0 : i32
    %c0_i32_0 = arith.constant 0 : i32
    %c0_i32_1 = arith.constant 0 : i32
    return %c0_i32, %c0_i32_0 : i32, i32
  }
  func.func @transform_4(%arg0: i32) -> (i32, i32) {
    %c0_i32 = arith.constant 0 : i32
    %c0_i32_0 = arith.constant 0 : i32
    return %arg0, %c0_i32 : i32, i32
  }
}

module attributes {stable_mosaic.version = 11 : i64} {
  func.func @kernel(%arg0: i32, %arg1: memref<128x576xbf16, #tpu.memory_space<vmem>>, %arg2: memref<576x128xbf16, #tpu.memory_space<vmem>>, %arg3: memref<1x128xf32, #tpu.memory_space<vmem>>, %arg4: memref<1x128xf32, #tpu.memory_space<vmem>>, %arg5: memref<128x128xbf16, #tpu.memory_space<vmem>>) attributes {dimension_semantics = [#tpu.dimension_semantics<parallel>], iteration_bounds = array<i64: 1>, scalar_prefetch = 0 : i64, scratch_operands = 0 : i64, tpu.core_type = #tpu.core_type<tc>, window_params = [{transform_indices = @transform_0, window_bounds = array<i64: 128, 576>}, {pipeline_mode = #tpu.pipeline_mode<synchronous>, transform_indices = @transform_1, window_bounds = array<i64: 576, 128>}, {pipeline_mode = #tpu.pipeline_mode<synchronous>, transform_indices = @transform_2, window_bounds = array<i64: 1, 128>}, {pipeline_mode = #tpu.pipeline_mode<synchronous>, transform_indices = @transform_3, window_bounds = array<i64: 1, 128>}, {transform_indices = @transform_4, window_bounds = array<i64: 128, 128>}]} {
    %c0 = arith.constant 0 : index
    %c0_0 = arith.constant 0 : index
    %0 = vector.load %arg1[%c0, %c0_0] : memref<128x576xbf16, #tpu.memory_space<vmem>>, vector<128x576xbf16>
    %c0_1 = arith.constant 0 : index
    %c0_2 = arith.constant 0 : index
    %1 = vector.load %arg2[%c0_1, %c0_2] : memref<576x128xbf16, #tpu.memory_space<vmem>>, vector<576x128xbf16>
    %cst = arith.constant dense<0.000000e+00> : vector<128x128xf32>
    %2 = tpu.matmul %0, %1, %cst {dimension_numbers = #tpu.dot_dimension_numbers<[1], [0], [0], [1], [0, 0, 1, 1], [], []>} : vector<128x576xbf16>, vector<576x128xbf16>, vector<128x128xf32> -> vector<128x128xf32>
    %c0_3 = arith.constant 0 : index
    %c0_4 = arith.constant 0 : index
    %3 = vector.load %arg3[%c0_3, %c0_4] : memref<1x128xf32, #tpu.memory_space<vmem>>, vector<1x128xf32>
    %4 = vector.broadcast %3 : vector<1x128xf32> to vector<128x128xf32>
    %5 = arith.mulf %2, %4 : vector<128x128xf32>
    %c0_5 = arith.constant 0 : index
    %c0_6 = arith.constant 0 : index
    %6 = vector.load %arg4[%c0_5, %c0_6] : memref<1x128xf32, #tpu.memory_space<vmem>>, vector<1x128xf32>
    %7 = vector.broadcast %6 : vector<1x128xf32> to vector<128x128xf32>
    %8 = arith.addf %5, %7 : vector<128x128xf32>
    %cst_7 = arith.constant 0.000000e+00 : f32
    %9 = vector.broadcast %cst_7 : f32 to vector<128x128xf32>
    %10 = arith.maximumf %8, %9 : vector<128x128xf32>
    %11 = arith.truncf %10 : vector<128x128xf32> to vector<128x128xbf16>
    %c0_8 = arith.constant 0 : index
    %c0_9 = arith.constant 0 : index
    %12 = vector.load %arg5[%c0_8, %c0_9] : memref<128x128xbf16, #tpu.memory_space<vmem>>, vector<128x128xbf16>
    tpu.vector_store %arg5[%c0_8, %c0_9], %11 {strides = array<i32>} : memref<128x128xbf16, #tpu.memory_space<vmem>>, vector<128x128xbf16>,
    return
  }
  func.func @transform_0(%arg0: i32) -> (i32, i32) {
    %c0_i32 = arith.constant 0 : i32
    %c0_i32_0 = arith.constant 0 : i32
    return %arg0, %c0_i32 : i32, i32
  }
  func.func @transform_1(%arg0: i32) -> (i32, i32) {
    %c0_i32 = arith.constant 0 : i32
    %c0_i32_0 = arith.constant 0 : i32
    %c0_i32_1 = arith.constant 0 : i32
    return %c0_i32, %c0_i32_0 : i32, i32
  }
  func.func @transform_2(%arg0: i32) -> (i32, i32) {
    %c0_i32 = arith.constant 0 : i32
    %c0_i32_0 = arith.constant 0 : i32
    %c0_i32_1 = arith.constant 0 : i32
    return %c0_i32, %c0_i32_0 : i32, i32
  }
  func.func @transform_3(%arg0: i32) -> (i32, i32) {
    %c0_i32 = arith.constant 0 : i32
    %c0_i32_0 = arith.constant 0 : i32
    %c0_i32_1 = arith.constant 0 : i32
    return %c0_i32, %c0_i32_0 : i32, i32
  }
  func.func @transform_4(%arg0: i32) -> (i32, i32) {
    %c0_i32 = arith.constant 0 : i32
    %c0_i32_0 = arith.constant 0 : i32
    return %arg0, %c0_i32 : i32, i32
  }
}

module attributes {stable_mosaic.version = 11 : i64} {
  func.func @kernel(%arg0: i32, %arg1: memref<128x1152xbf16, #tpu.memory_space<vmem>>, %arg2: memref<1152x128xbf16, #tpu.memory_space<vmem>>, %arg3: memref<128x64xbf16, #tpu.memory_space<vmem>>, %arg4: memref<64x128xbf16, #tpu.memory_space<vmem>>, %arg5: memref<128x128xf32, #tpu.memory_space<vmem>>) attributes {dimension_semantics = [#tpu.dimension_semantics<parallel>], iteration_bounds = array<i64: 1>, scalar_prefetch = 0 : i64, scratch_operands = 0 : i64, tpu.core_type = #tpu.core_type<tc>, window_params = [{transform_indices = @transform_0, window_bounds = array<i64: 128, 1152>}, {pipeline_mode = #tpu.pipeline_mode<synchronous>, transform_indices = @transform_1, window_bounds = array<i64: 1152, 128>}, {transform_indices = @transform_2, window_bounds = array<i64: 128, 64>}, {pipeline_mode = #tpu.pipeline_mode<synchronous>, transform_indices = @transform_3, window_bounds = array<i64: 64, 128>}, {transform_indices = @transform_4, window_bounds = array<i64: 128, 128>}]} {
    %c0 = arith.constant 0 : index
    %c0_0 = arith.constant 0 : index
    %0 = vector.load %arg1[%c0, %c0_0] : memref<128x1152xbf16, #tpu.memory_space<vmem>>, vector<128x1152xbf16>
    %c0_1 = arith.constant 0 : index
    %c0_2 = arith.constant 0 : index
    %1 = vector.load %arg2[%c0_1, %c0_2] : memref<1152x128xbf16, #tpu.memory_space<vmem>>, vector<1152x128xbf16>
    %cst = arith.constant dense<0.000000e+00> : vector<128x128xf32>
    %2 = tpu.matmul %0, %1, %cst {dimension_numbers = #tpu.dot_dimension_numbers<[1], [0], [0], [1], [0, 0, 1, 1], [], []>} : vector<128x1152xbf16>, vector<1152x128xbf16>, vector<128x128xf32> -> vector<128x128xf32>
    %c0_3 = arith.constant 0 : index
    %c0_4 = arith.constant 0 : index
    %3 = vector.load %arg3[%c0_3, %c0_4] : memref<128x64xbf16, #tpu.memory_space<vmem>>, vector<128x64xbf16>
    %c0_5 = arith.constant 0 : index
    %c0_6 = arith.constant 0 : index
    %4 = vector.load %arg4[%c0_5, %c0_6] : memref<64x128xbf16, #tpu.memory_space<vmem>>, vector<64x128xbf16>
    %cst_7 = arith.constant dense<0.000000e+00> : vector<128x128xf32>
    %5 = tpu.matmul %3, %4, %cst_7 {dimension_numbers = #tpu.dot_dimension_numbers<[1], [0], [0], [1], [0, 0, 1, 1], [], []>} : vector<128x64xbf16>, vector<64x128xbf16>, vector<128x128xf32> -> vector<128x128xf32>
    %6 = arith.addf %2, %5 : vector<128x128xf32>
    %c0_8 = arith.constant 0 : index
    %c0_9 = arith.constant 0 : index
    %7 = vector.load %arg5[%c0_8, %c0_9] : memref<128x128xf32, #tpu.memory_space<vmem>>, vector<128x128xf32>
    tpu.vector_store %arg5[%c0_8, %c0_9], %6 {strides = array<i32>} : memref<128x128xf32, #tpu.memory_space<vmem>>, vector<128x128xf32>,
    return
  }
  func.func @transform_0(%arg0: i32) -> (i32, i32) {
    %c0_i32 = arith.constant 0 : i32
    %c0_i32_0 = arith.constant 0 : i32
    return %arg0, %c0_i32 : i32, i32
  }
  func.func @transform_1(%arg0: i32) -> (i32, i32) {
    %c0_i32 = arith.constant 0 : i32
    %c0_i32_0 = arith.constant 0 : i32
    %c0_i32_1 = arith.constant 0 : i32
    return %c0_i32, %c0_i32_0 : i32, i32
  }
  func.func @transform_2(%arg0: i32) -> (i32, i32) {
    %c0_i32 = arith.constant 0 : i32
    %c0_i32_0 = arith.constant 0 : i32
    return %arg0, %c0_i32 : i32, i32
  }
  func.func @transform_3(%arg0: i32) -> (i32, i32) {
    %c0_i32 = arith.constant 0 : i32
    %c0_i32_0 = arith.constant 0 : i32
    %c0_i32_1 = arith.constant 0 : i32
    return %c0_i32, %c0_i32_0 : i32, i32
  }
  func.func @transform_4(%arg0: i32) -> (i32, i32) {
    %c0_i32 = arith.constant 0 : i32
    %c0_i32_0 = arith.constant 0 : i32
    return %arg0, %c0_i32 : i32, i32
  }
}

module attributes {stable_mosaic.version = 11 : i64} {
  func.func @_tail_kernel(%arg0: memref<2x64x128xf32, #tpu.memory_space<vmem>>, %arg1: memref<1x1x128xf32, #tpu.memory_space<vmem>>, %arg2: memref<1x1x128xf32, #tpu.memory_space<vmem>>, %arg3: memref<128x10xbf16, #tpu.memory_space<vmem>>, %arg4: memref<1x10xf32, #tpu.memory_space<vmem>>, %arg5: memref<2x10xf32, #tpu.memory_space<vmem>>) attributes {dimension_semantics = [], scalar_prefetch = 0 : i64, scratch_operands = 0 : i64, tpu.core_type = #tpu.core_type<tc>} {
    %c0 = arith.constant 0 : index
    %c0_0 = arith.constant 0 : index
    %c0_1 = arith.constant 0 : index
    %0 = vector.load %arg0[%c0, %c0_0, %c0_1] : memref<2x64x128xf32, #tpu.memory_space<vmem>>, vector<2x64x128xf32>
    %c0_2 = arith.constant 0 : index
    %c0_3 = arith.constant 0 : index
    %c0_4 = arith.constant 0 : index
    %1 = vector.load %arg1[%c0_2, %c0_3, %c0_4] : memref<1x1x128xf32, #tpu.memory_space<vmem>>, vector<1x1x128xf32>
    %2 = vector.broadcast %1 : vector<1x1x128xf32> to vector<2x64x128xf32>
    %3 = arith.mulf %0, %2 : vector<2x64x128xf32>
    %c0_5 = arith.constant 0 : index
    %c0_6 = arith.constant 0 : index
    %c0_7 = arith.constant 0 : index
    %4 = vector.load %arg2[%c0_5, %c0_6, %c0_7] : memref<1x1x128xf32, #tpu.memory_space<vmem>>, vector<1x1x128xf32>
    %5 = vector.broadcast %4 : vector<1x1x128xf32> to vector<2x64x128xf32>
    %6 = arith.addf %3, %5 : vector<2x64x128xf32>
    %cst = arith.constant 0.000000e+00 : f32
    %7 = vector.broadcast %cst : f32 to vector<2x64x128xf32>
    %8 = arith.maximumf %6, %7 : vector<2x64x128xf32>
    %cst_8 = arith.constant dense<0.000000e+00> : vector<2x128xf32>
    %9 = vector.multi_reduction <add>, %8, %cst_8 [1] : vector<2x64x128xf32> to vector<2x128xf32>
    %cst_9 = arith.constant 6.400000e+01 : f32
    %10 = vector.broadcast %cst_9 : f32 to vector<2x128xf32>
    %11 = arith.divf %9, %10 : vector<2x128xf32>
    %12 = arith.truncf %11 : vector<2x128xf32> to vector<2x128xbf16>
    %c0_10 = arith.constant 0 : index
    %c0_11 = arith.constant 0 : index
    %13 = vector.load %arg3[%c0_10, %c0_11] : memref<128x10xbf16, #tpu.memory_space<vmem>>, vector<128x10xbf16>
    %cst_12 = arith.constant dense<0.000000e+00> : vector<2x10xf32>
    %14 = tpu.matmul %12, %13, %cst_12 {dimension_numbers = #tpu.dot_dimension_numbers<[1], [0], [0], [1], [0, 0, 1, 1], [], []>} : vector<2x128xbf16>, vector<128x10xbf16>, vector<2x10xf32> -> vector<2x10xf32>
    %c0_13 = arith.constant 0 : index
    %c0_14 = arith.constant 0 : index
    %15 = vector.load %arg4[%c0_13, %c0_14] : memref<1x10xf32, #tpu.memory_space<vmem>>, vector<1x10xf32>
    %16 = vector.broadcast %15 : vector<1x10xf32> to vector<2x10xf32>
    %17 = arith.addf %14, %16 : vector<2x10xf32>
    %c0_15 = arith.constant 0 : index
    %c0_16 = arith.constant 0 : index
    %18 = vector.load %arg5[%c0_15, %c0_16] : memref<2x10xf32, #tpu.memory_space<vmem>>, vector<2x10xf32>
    tpu.vector_store %arg5[%c0_15, %c0_16], %17 {strides = array<i32>} : memref<2x10xf32, #tpu.memory_space<vmem>>, vector<2x10xf32>,
    return
  }
}

</mosaic_0001>

<llo_original>
// kernel: _lambda_.8
$region0: #{_lambda_.8}
  #allocation0 [shape = 'u32[]', space=smem, size = 0x4, offset = 0x4, fixed_abs, tag = 'smem constant byte address 0x4 - core index']
  #allocation1 [shape = 'u32[144,128]{1,0:T(1,128)}', space=vmem, size = 0x12000, scoped, tag = 'internal scratch']
  %s0 = inlined_call_operand.vmem [shape: bf16[2048,32], index: 0, kind: input, shape index: {}]
  %s1 = inlined_call_operand.vmem [shape: bf16[32,16], index: 1, kind: input, shape index: {}]
  %s2 = inlined_call_operand.vmem [shape: f32[2048,16], index: 2, kind: output, shape index: {}]
  %s3 = sld [smem:[#allocation0]]
  $region41: #{_lambda_.8} parent=0
    _
  %s5 = ssub.s32 1, %s3
  %s6 = scalar_select 0, %s5, %s3
  loop: start=0, step=1, limit=6
  $region2: #{_lambda_.8} parent=0 // loop_pre_header
    _
  $region3: #{_lambda_.8} parent=0 // loop_header
    %s8 = sphi 0, %s12
    %p9 = scmp.ge.s32.totalorder %s8, 6
    %s18 = sphi 0, %s20
    %s21 = sphi 0, %s18
    %s22 = sphi 0, %s21
    %s38 = sphi 0, %s22
    %s42 = sphi 0, %s42
    %s44 = sphi 0, %s42
    %s45 = sphi 0, %s44
    %s59 = sphi 0, %s45
    %s65 = sphi 0, %s67
    %s68 = sphi 0, %s65
    %s69 = sphi 0, %s68
    %s85 = sphi 0, %s69
  $region4: #{_lambda_.8} parent=0 // loop_header_branch
    %11 = sbr.rel (%p9) target = $region8
  $region5: #{_lambda_.8} parent=0 // loop_body
    %s13 = ssub.s32 %s8, 1
    %s14 = ssub.s32 %s8, 2
    %s15 = sadd.s32 %s8, 1
    %s16 = ssub.s32 %s8, %s15
    %p17 = scmp.eq.s32.totalorder %s16, 0
    %s19 = sadd.s32 %s18, 1
    %s20 = scalar_select %p17, %s18, %s19
    %p23 = pneg %p17
    %p24 = scmp.eq.s32.totalorder %s8, 3
    %p25 = por %p23, %p24
    %p26 = scmp.ne.s32.totalorder %s18, %s21
    %p27 = scmp.eq.s32.totalorder %s8, 0
    %p28 = por %p26, %p27
    %p29 = scmp.ne.s32.totalorder %s18, %s21
    %p30 = scmp.eq.s32.totalorder %s13, 3
    %p31 = por %p29, %p30
    %p32 = scmp.ne.s32.totalorder %s21, %s22
    %p33 = scmp.eq.s32.totalorder %s13, 0
    %p34 = por %p32, %p33
    %p35 = scmp.ne.s32.totalorder %s21, %s22
    %p36 = scmp.eq.s32.totalorder %s14, 3
    %p37 = por %p35, %p36
    %p39 = scmp.ne.s32.totalorder %s22, %s38
    %p40 = scmp.eq.s32.totalorder %s14, 0
    %p41 = por %p39, %p40
    %s43 = sadd.s32 %s42, 1
    %p46 = scmp.eq.s32.totalorder %s8, 3
    %p47 = scmp.ne.s32.totalorder %s42, %s44
    %p48 = scmp.eq.s32.totalorder %s8, 0
    %p49 = por %p47, %p48
    %p50 = scmp.ne.s32.totalorder %s42, %s44
    %p51 = scmp.eq.s32.totalorder %s13, 3
    %p52 = por %p50, %p51
    %p53 = scmp.ne.s32.totalorder %s44, %s45
    %p54 = scmp.eq.s32.totalorder %s13, 0
    %p55 = por %p53, %p54
    %p56 = scmp.ne.s32.totalorder %s44, %s45
    %p57 = scmp.eq.s32.totalorder %s14, 3
    %p58 = por %p56, %p57
    %p60 = scmp.ne.s32.totalorder %s45, %s59
    %p61 = scmp.eq.s32.totalorder %s14, 0
    %p62 = por %p60, %p61
    %s63 = ssub.s32 %s8, %s15
    %p64 = scmp.eq.s32.totalorder %s63, 0
    %s66 = sadd.s32 %s65, 1
    %s67 = scalar_select %p64, %s65, %s66
    %p70 = pneg %p64
    %p71 = scmp.eq.s32.totalorder %s8, 3
    %p72 = por %p70, %p71
    %p73 = scmp.ne.s32.totalorder %s65, %s68
    %p74 = scmp.eq.s32.totalorder %s8, 0
    %p75 = por %p73, %p74
    %p76 = scmp.ne.s32.totalorder %s65, %s68
    %p77 = scmp.eq.s32.totalorder %s13, 3
    %p78 = por %p76, %p77
    %p79 = scmp.ne.s32.totalorder %s68, %s69
    %p80 = scmp.eq.s32.totalorder %s13, 0
    %p81 = por %p79, %p80
    %p82 = scmp.ne.s32.totalorder %s68, %s69
    %p83 = scmp.eq.s32.totalorder %s14, 3
    %p84 = por %p82, %p83
    %p86 = scmp.ne.s32.totalorder %s69, %s85
    %p87 = scmp.eq.s32.totalorder %s14, 0
    %p88 = por %p86, %p87
    %p89 = scmp.le.s32.totalorder 1, %s8
    %p90 = scmp.lt.s32.totalorder %s8, 5
    %p91 = pnand %p89, %p90
    %p92 = pneg %p91
    // Predicated region
    $region9: #{_lambda_.8} parent=5 // pred_check
      _
    $region10: #{_lambda_.8} parent=5 // pred_check_branch
      %94 = sbr.rel (%p91) target = $region12
    $region11: #{_lambda_.8} parent=5 // pred_region
      %s95 = ssub.s32 %s8, 1
      // Predicated region
      $region13: #{_lambda_.8} parent=11 // pred_check
        %p96 = pneg %p55
      $region14: #{_lambda_.8} parent=11 // pred_check_branch
        %98 = sbr.rel (%p96) target = $region16
      $region15: #{_lambda_.8} parent=11 // pred_region
        _
      $region16: #{_lambda_.8} parent=11 // pred_fallthru
        _
    $region12: #{_lambda_.8} parent=5 // pred_fallthru
      _
    %p99 = scmp.lt.s32.totalorder %s8, 4
    // Predicated region
    $region17: #{_lambda_.8} parent=5 // pred_check
      %p100 = pneg %p99
    $region18: #{_lambda_.8} parent=5 // pred_check_branch
      %102 = sbr.rel (%p100) target = $region20
    $region19: #{_lambda_.8} parent=5 // pred_region
      // Predicated region
      $region21: #{_lambda_.8} parent=19 // pred_check
        %p103 = pneg %p28
      $region22: #{_lambda_.8} parent=19 // pred_check_branch
        %105 = sbr.rel (%p103) target = $region24
      $region23: #{_lambda_.8} parent=19 // pred_region
        %s106 = smul.u32 64, %s8
        %p107 = scmp.lt.s32.totalorder %s106, 255
        %s108 = scalar_select %p107, %s106, 255
        %s109 = smul.addr %s108, 4
        %s110 = scalar_lea.vmem %s0, %s109
        %s111 = smul.u32 64, %s8
      $region24: #{_lambda_.8} parent=19 // pred_fallthru
        _
    $region20: #{_lambda_.8} parent=5 // pred_fallthru
      _
    %p112 = scmp.le.s32.totalorder 1, %s8
    %p113 = scmp.lt.s32.totalorder %s8, 5
    %p114 = pnand %p112, %p113
    %p115 = pneg %p114
    // Predicated region
    $region25: #{_lambda_.8} parent=5 // pred_check
      _
    $region26: #{_lambda_.8} parent=5 // pred_check_branch
      %117 = sbr.rel (%p114) target = $region28
    $region27: #{_lambda_.8} parent=5 // pred_region
      %s118 = ssub.s32 %s8, 1
      %s119 = smul.u32 64, %s13
      %p120 = scmp.lt.s32.totalorder %s119, 255
      %s121 = scalar_select %p120, %s119, 255
      %s122 = smul.addr %s121, 4
      %s123 = scalar_lea.vmem %s0, %s122
      %p124 = pneg %p34
      %p125 = pneg %p31
      %p126 = pneg %p55
      %p127 = pneg %p52
      %p128 = pneg %p81
      %p129 = pneg %p78
      %s130 = smul.u32 64, %s13
      %p131 = scmp.lt.s32.totalorder %s130, 255
      %s132 = scalar_select %p131, %s130, 255
      %s133 = smul.addr %s132, 8
      %s134 = scalar_lea.vmem %s2, %s133
      %s135 = smul.u32 64, %s13
      %p136 = scmp.lt.s32.totalorder %s135, 255
      %s137 = scalar_select %p136, %s135, 255
      %s138 = smul.addr %s137, 4
      %s139 = scalar_lea.vmem %s0, %s138
      %s140 = smul.u32 64, %s13
      %s141 = smul.u32 64, %s13
      %p142 = scmp.lt.s32.totalorder %s141, 255
      %s143 = scalar_select %p142, %s141, 255
      %s144 = smul.addr %s143, 8
      %s145 = scalar_lea.vmem %s2, %s144
      %s146 = smul.u32 64, %s13
      %v148 = vld [vmem:[%s139] sm:$0xf]
      %v149 = vld [vmem:[%s139 + $0x4] sm:$0xf]
      %v150 = vld [vmem:[%s139 + $0x8] sm:$0xf]
      %v151 = vld [vmem:[%s139 + $0xc] sm:$0xf]
      %v152 = vld [vmem:[%s139 + $0x10] sm:$0xf]
      %v153 = vld [vmem:[%s139 + $0x14] sm:$0xf]
      %v154 = vld [vmem:[%s139 + $0x18] sm:$0xf]
      %v155 = vld [vmem:[%s139 + $0x1c] sm:$0xf]
      %v156 = vld [vmem:[%s139 + $0x20] sm:$0xf]
      %v157 = vld [vmem:[%s139 + $0x24] sm:$0xf]
      %v158 = vld [vmem:[%s139 + $0x28] sm:$0xf]
      %v159 = vld [vmem:[%s139 + $0x2c] sm:$0xf]
      %v160 = vld [vmem:[%s139 + $0x30] sm:$0xf]
      %v161 = vld [vmem:[%s139 + $0x34] sm:$0xf]
      %v162 = vld [vmem:[%s139 + $0x38] sm:$0xf]
      %v163 = vld [vmem:[%s139 + $0x3c] sm:$0xf]
      %v164 = vld [vmem:[%s139 + $0x40] sm:$0xf]
      %v165 = vld [vmem:[%s139 + $0x44] sm:$0xf]
      %v166 = vld [vmem:[%s139 + $0x48] sm:$0xf]
      %v167 = vld [vmem:[%s139 + $0x4c] sm:$0xf]
      %v168 = vld [vmem:[%s139 + $0x50] sm:$0xf]
      %v169 = vld [vmem:[%s139 + $0x54] sm:$0xf]
      %v170 = vld [vmem:[%s139 + $0x58] sm:$0xf]
      %v171 = vld [vmem:[%s139 + $0x5c] sm:$0xf]
      %v172 = vld [vmem:[%s139 + $0x60] sm:$0xf]
      %v173 = vld [vmem:[%s139 + $0x64] sm:$0xf]
      %v174 = vld [vmem:[%s139 + $0x68] sm:$0xf]
      %v175 = vld [vmem:[%s139 + $0x6c] sm:$0xf]
      %v176 = vld [vmem:[%s139 + $0x70] sm:$0xf]
      %v177 = vld [vmem:[%s139 + $0x74] sm:$0xf]
      %v178 = vld [vmem:[%s139 + $0x78] sm:$0xf]
      %v179 = vld [vmem:[%s139 + $0x7c] sm:$0xf]
      %v180 = vld [vmem:[%s139 + $0x80] sm:$0xf]
      %v181 = vld [vmem:[%s139 + $0x84] sm:$0xf]
      %v182 = vld [vmem:[%s139 + $0x88] sm:$0xf]
      %v183 = vld [vmem:[%s139 + $0x8c] sm:$0xf]
      %v184 = vld [vmem:[%s139 + $0x90] sm:$0xf]
      %v185 = vld [vmem:[%s139 + $0x94] sm:$0xf]
      %v186 = vld [vmem:[%s139 + $0x98] sm:$0xf]
      %v187 = vld [vmem:[%s139 + $0x9c] sm:$0xf]
      %v188 = vld [vmem:[%s139 + $0xa0] sm:$0xf]
      %v189 = vld [vmem:[%s139 + $0xa4] sm:$0xf]
      %v190 = vld [vmem:[%s139 + $0xa8] sm:$0xf]
      %v191 = vld [vmem:[%s139 + $0xac] sm:$0xf]
      %v192 = vld [vmem:[%s139 + $0xb0] sm:$0xf]
      %v193 = vld [vmem:[%s139 + $0xb4] sm:$0xf]
      %v194 = vld [vmem:[%s139 + $0xb8] sm:$0xf]
      %v195 = vld [vmem:[%s139 + $0xbc] sm:$0xf]
      %v196 = vld [vmem:[%s139 + $0xc0] sm:$0xf]
      %v197 = vld [vmem:[%s139 + $0xc4] sm:$0xf]
      %v198 = vld [vmem:[%s139 + $0xc8] sm:$0xf]
      %v199 = vld [vmem:[%s139 + $0xcc] sm:$0xf]
      %v200 = vld [vmem:[%s139 + $0xd0] sm:$0xf]
      %v201 = vld [vmem:[%s139 + $0xd4] sm:$0xf]
      %v202 = vld [vmem:[%s139 + $0xd8] sm:$0xf]
      %v203 = vld [vmem:[%s139 + $0xdc] sm:$0xf]
      %v204 = vld [vmem:[%s139 + $0xe0] sm:$0xf]
      %v205 = vld [vmem:[%s139 + $0xe4] sm:$0xf]
      %v206 = vld [vmem:[%s139 + $0xe8] sm:$0xf]
      %v207 = vld [vmem:[%s139 + $0xec] sm:$0xf]
      %v208 = vld [vmem:[%s139 + $0xf0] sm:$0xf]
      %v209 = vld [vmem:[%s139 + $0xf4] sm:$0xf]
      %v210 = vld [vmem:[%s139 + $0xf8] sm:$0xf]
      %v211 = vld [vmem:[%s139 + $0xfc] sm:$0xf]
      %v212 = vld [vmem:[%s1] sm:$0xf]
      %v213 = vld [vmem:[%s1 + $0x4] sm:$0xf]
      %v214 = vld [vmem:[%s1 + $0x8] sm:$0xf]
      %v215 = vld [vmem:[%s1 + $0xc] sm:$0xf]
      %v280 = vunpack.c.l.b16 %v148
      %v281 = vunpack.c.l.b16 %v149
      %v282 = vunpack.c.l.b16 %v150
      %v283 = vunpack.c.l.b16 %v151
      %v284 = vunpack.c.l.b16 %v152
      %v285 = vunpack.c.l.b16 %v153
      %v286 = vunpack.c.l.b16 %v154
      %v287 = vunpack.c.l.b16 %v155
      %v288 = vunpack.c.l.b16 %v156
      %v289 = vunpack.c.l.b16 %v157
      %v290 = vunpack.c.l.b16 %v158
      %v291 = vunpack.c.l.b16 %v159
      %v292 = vunpack.c.l.b16 %v160
      %v293 = vunpack.c.l.b16 %v161
      %v294 = vunpack.c.l.b16 %v162
      %v295 = vunpack.c.l.b16 %v163
      %v296 = vunpack.c.l.b16 %v164
      %v297 = vunpack.c.l.b16 %v165
      %v298 = vunpack.c.l.b16 %v166
      %v299 = vunpack.c.l.b16 %v167
      %v300 = vunpack.c.l.b16 %v168
      %v301 = vunpack.c.l.b16 %v169
      %v302 = vunpack.c.l.b16 %v170
      %v303 = vunpack.c.l.b16 %v171
      %v304 = vunpack.c.l.b16 %v172
      %v305 = vunpack.c.l.b16 %v173
      %v306 = vunpack.c.l.b16 %v174
      %v307 = vunpack.c.l.b16 %v175
      %v308 = vunpack.c.l.b16 %v176
      %v309 = vunpack.c.l.b16 %v177
      %v310 = vunpack.c.l.b16 %v178
      %v311 = vunpack.c.l.b16 %v179
      %v312 = vunpack.c.l.b16 %v180
      %v313 = vunpack.c.l.b16 %v181
      %v314 = vunpack.c.l.b16 %v182
      %v315 = vunpack.c.l.b16 %v183
      %v316 = vunpack.c.l.b16 %v184
      %v317 = vunpack.c.l.b16 %v185
      %v318 = vunpack.c.l.b16 %v186
      %v319 = vunpack.c.l.b16 %v187
      %v320 = vunpack.c.l.b16 %v188
      %v321 = vunpack.c.l.b16 %v189
      %v322 = vunpack.c.l.b16 %v190
      %v323 = vunpack.c.l.b16 %v191
      %v324 = vunpack.c.l.b16 %v192
      %v325 = vunpack.c.l.b16 %v193
      %v326 = vunpack.c.l.b16 %v194
      %v327 = vunpack.c.l.b16 %v195
      %v328 = vunpack.c.l.b16 %v196
      %v329 = vunpack.c.l.b16 %v197
      %v330 = vunpack.c.l.b16 %v198
      %v331 = vunpack.c.l.b16 %v199
      %v332 = vunpack.c.l.b16 %v200
      %v333 = vunpack.c.l.b16 %v201
      %v334 = vunpack.c.l.b16 %v202
      %v335 = vunpack.c.l.b16 %v203
      %v336 = vunpack.c.l.b16 %v204
      %v337 = vunpack.c.l.b16 %v205
      %v338 = vunpack.c.l.b16 %v206
      %v339 = vunpack.c.l.b16 %v207
      %v340 = vunpack.c.l.b16 %v208
      %v341 = vunpack.c.l.b16 %v209
      %v342 = vunpack.c.l.b16 %v210
      %v343 = vunpack.c.l.b16 %v211
      %v344 = vpack.c.b16 %v281, %v280
      %v345 = vpack.c.b16 %v283, %v282
      %v346 = vpack.c.b16 %v285, %v284
      %v347 = vpack.c.b16 %v287, %v286
      %v348 = vpack.c.b16 %v289, %v288
      %v349 = vpack.c.b16 %v291, %v290
      %v350 = vpack.c.b16 %v293, %v292
      %v351 = vpack.c.b16 %v295, %v294
      %v352 = vpack.c.b16 %v297, %v296
      %v353 = vpack.c.b16 %v299, %v298
      %v354 = vpack.c.b16 %v301, %v300
      %v355 = vpack.c.b16 %v303, %v302
      %v356 = vpack.c.b16 %v305, %v304
      %v357 = vpack.c.b16 %v307, %v306
      %v358 = vpack.c.b16 %v309, %v308
      %v359 = vpack.c.b16 %v311, %v310
      %v360 = vpack.c.b16 %v313, %v312
      %v361 = vpack.c.b16 %v315, %v314
      %v362 = vpack.c.b16 %v317, %v316
      %v363 = vpack.c.b16 %v319, %v318
      %v364 = vpack.c.b16 %v321, %v320
      %v365 = vpack.c.b16 %v323, %v322
      %v366 = vpack.c.b16 %v325, %v324
      %v367 = vpack.c.b16 %v327, %v326
      %v368 = vpack.c.b16 %v329, %v328
      %v369 = vpack.c.b16 %v331, %v330
      %v370 = vpack.c.b16 %v333, %v332
      %v371 = vpack.c.b16 %v335, %v334
      %v372 = vpack.c.b16 %v337, %v336
      %v373 = vpack.c.b16 %v339, %v338
      %v374 = vpack.c.b16 %v341, %v340
      %v375 = vpack.c.b16 %v343, %v342
      %v380 = vunpack.c.l.b16 %v212
      %v381 = vunpack.c.l.b16 %v213
      %v382 = vunpack.c.l.b16 %v214
      %v383 = vunpack.c.l.b16 %v215
      %v384 = vpack.c.b16 %v381, %v380
      %v385 = vpack.c.b16 %v383, %v382
      %vm388 = vcmask 261120
      %v390 = vsel %vm388, %v344, 0
      %v393 = vsel %vm388, %v345, 0
      %v396 = vsel %vm388, %v346, 0
      %v399 = vsel %vm388, %v347, 0
      %v402 = vsel %vm388, %v348, 0
      %v405 = vsel %vm388, %v349, 0
      %v408 = vsel %vm388, %v350, 0
      %v411 = vsel %vm388, %v351, 0
      %v414 = vsel %vm388, %v352, 0
      %v417 = vsel %vm388, %v353, 0
      %v420 = vsel %vm388, %v354, 0
      %v423 = vsel %vm388, %v355, 0
      %v426 = vsel %vm388, %v356, 0
      %v429 = vsel %vm388, %v357, 0
      %v432 = vsel %vm388, %v358, 0
      %v435 = vsel %vm388, %v359, 0
      %v438 = vsel %vm388, %v360, 0
      %v441 = vsel %vm388, %v361, 0
      %v444 = vsel %vm388, %v362, 0
      %v447 = vsel %vm388, %v363, 0
      %v450 = vsel %vm388, %v364, 0
      %v453 = vsel %vm388, %v365, 0
      %v456 = vsel %vm388, %v366, 0
      %v459 = vsel %vm388, %v367, 0
      %v462 = vsel %vm388, %v368, 0
      %v465 = vsel %vm388, %v369, 0
      %v468 = vsel %vm388, %v370, 0
      %v471 = vsel %vm388, %v371, 0
      %v474 = vsel %vm388, %v372, 0
      %v477 = vsel %vm388, %v373, 0
      %v480 = vsel %vm388, %v374, 0
      %v483 = vsel %vm388, %v375, 0
      %485 = vmatprep.subr.bf16.mxu0 0
      %486 = vmatpush1.bf16.msra.mxu0 %v384
      %487 = vmatprep.subr.bf16.mxu0 0
      %488 = vmatpush1.bf16.msra.mxu0 %v385
      %489 = vmatprep.subr.bf16.mxu0 0
      %490 = vmatpush1.bf16.msra.mxu0 0
      %491 = vmatprep.subr.bf16.mxu0 0
      %492 = vmatpush1.bf16.msra.mxu0 0
      %493 = vmatprep.subr.bf16.mxu0 0
      %494 = vmatpush1.bf16.msra.mxu0 0
      %495 = vmatprep.subr.bf16.mxu0 0
      %496 = vmatpush1.bf16.msra.mxu0 0
      %497 = vmatprep.subr.bf16.mxu0 0
      %498 = vmatpush1.bf16.msra.mxu0 0
      %499 = vmatprep.subr.bf16.mxu0 0
      %500 = vmatpush1.bf16.msra.mxu0 0
      %501 = vmatprep.subr.bf16.mxu0 0
      %502 = vmatpush1.bf16.msra.mxu0 0
      %503 = vmatprep.subr.bf16.mxu0 0
      %504 = vmatpush1.bf16.msra.mxu0 0
      %505 = vmatprep.subr.bf16.mxu0 0
      %506 = vmatpush1.bf16.msra.mxu0 0
      %507 = vmatprep.subr.bf16.mxu0 0
      %508 = vmatpush1.bf16.msra.mxu0 0
      %509 = vmatprep.subr.bf16.mxu0 0
      %510 = vmatpush1.bf16.msra.mxu0 0
      %511 = vmatprep.subr.bf16.mxu0 0
      %512 = vmatpush1.bf16.msra.mxu0 0
      %513 = vmatprep.subr.bf16.mxu0 0
      %514 = vmatpush1.bf16.msra.mxu0 0
      %515 = vmatprep.subr.bf16.mxu0 0
      %516 = vmatpush1.bf16.msra.mxu0 0
      %517 = vmatprep.mubr.bf16.mxu0 0
      %518 = vmatmul.mubr.bf16.gmra.mrb[0].mxu0 %v390
      %v519 = vpop.f32.mrb[0].mxu0
      %v520 = vadd.f32 0.0, %v519
      %v521 = vpop.f32.mrb[0].mxu0
      %v522 = vpop.f32.mrb[0].mxu0
      %v523 = vadd.f32 0.0, %v522
      %v524 = vpop.f32.mrb[0].mxu0
      %525 = vmatprep.mubr.bf16.mxu0 0
      %526 = vmatmul.mubr.bf16.gmra.mrb[0].mxu0 %v393
      %v527 = vpop.f32.mrb[0].mxu0
      %v528 = vadd.f32 0.0, %v527
      %v529 = vpop.f32.mrb[0].mxu0
      %v530 = vpop.f32.mrb[0].mxu0
      %v531 = vadd.f32 0.0, %v530
      %v532 = vpop.f32.mrb[0].mxu0
      %533 = vmatprep.mubr.bf16.mxu0 0
      %534 = vmatmul.mubr.bf16.gmra.mrb[0].mxu0 %v396
      %v535 = vpop.f32.mrb[0].mxu0
      %v536 = vadd.f32 0.0, %v535
      %v537 = vpop.f32.mrb[0].mxu0
      %v538 = vpop.f32.mrb[0].mxu0
      %v539 = vadd.f32 0.0, %v538
      %v540 = vpop.f32.mrb[0].mxu0
      %541 = vmatprep.mubr.bf16.mxu0 0
      %542 = vmatmul.mubr.bf16.gmra.mrb[0].mxu0 %v399
      %v543 = vpop.f32.mrb[0].mxu0
      %v544 = vadd.f32 0.0, %v543
      %v545 = vpop.f32.mrb[0].mxu0
      %v546 = vpop.f32.mrb[0].mxu0
      %v547 = vadd.f32 0.0, %v546
      %v548 = vpop.f32.mrb[0].mxu0
      %549 = vmatprep.mubr.bf16.mxu0 0
      %550 = vmatmul.mubr.bf16.gmra.mrb[0].mxu0 %v402
      %v551 = vpop.f32.mrb[0].mxu0
      %v552 = vadd.f32 0.0, %v551
      %v553 = vpop.f32.mrb[0].mxu0
      %v554 = vpop.f32.mrb[0].mxu0
      %v555 = vadd.f32 0.0, %v554
      %v556 = vpop.f32.mrb[0].mxu0
      %557 = vmatprep.mubr.bf16.mxu0 0
      %558 = vmatmul.mubr.bf16.gmra.mrb[0].mxu0 %v405
      %v559 = vpop.f32.mrb[0].mxu0
      %v560 = vadd.f32 0.0, %v559
      %v561 = vpop.f32.mrb[0].mxu0
      %v562 = vpop.f32.mrb[0].mxu0
      %v563 = vadd.f32 0.0, %v562
      %v564 = vpop.f32.mrb[0].mxu0
      %565 = vmatprep.mubr.bf16.mxu0 0
      %566 = vmatmul.mubr.bf16.gmra.mrb[0].mxu0 %v408
      %v567 = vpop.f32.mrb[0].mxu0
      %v568 = vadd.f32 0.0, %v567
      %v569 = vpop.f32.mrb[0].mxu0
      %v570 = vpop.f32.mrb[0].mxu0
      %v571 = vadd.f32 0.0, %v570
      %v572 = vpop.f32.mrb[0].mxu0
      %573 = vmatprep.mubr.bf16.mxu0 0
      %574 = vmatmul.mubr.bf16.gmra.mrb[0].mxu0 %v411
      %v575 = vpop.f32.mrb[0].mxu0
      %v576 = vadd.f32 0.0, %v575
      %v577 = vpop.f32.mrb[0].mxu0
      %v578 = vpop.f32.mrb[0].mxu0
      %v579 = vadd.f32 0.0, %v578
      %v580 = vpop.f32.mrb[0].mxu0
      %581 = vmatprep.mubr.bf16.mxu0 0
      %582 = vmatmul.mubr.bf16.gmra.mrb[0].mxu0 %v414
      %v583 = vpop.f32.mrb[0].mxu0
      %v584 = vadd.f32 0.0, %v583
      %v585 = vpop.f32.mrb[0].mxu0
      %v586 = vpop.f32.mrb[0].mxu0
      %v587 = vadd.f32 0.0, %v586
      %v588 = vpop.f32.mrb[0].mxu0
      %589 = vmatprep.mubr.bf16.mxu0 0
      %590 = vmatmul.mubr.bf16.gmra.mrb[0].mxu0 %v417
      %v591 = vpop.f32.mrb[0].mxu0
      %v592 = vadd.f32 0.0, %v591
      %v593 = vpop.f32.mrb[0].mxu0
      %v594 = vpop.f32.mrb[0].mxu0
      %v595 = vadd.f32 0.0, %v594
      %v596 = vpop.f32.mrb[0].mxu0
      %597 = vmatprep.mubr.bf16.mxu0 0
      %598 = vmatmul.mubr.bf16.gmra.mrb[0].mxu0 %v420
      %v599 = vpop.f32.mrb[0].mxu0
      %v600 = vadd.f32 0.0, %v599
      %v601 = vpop.f32.mrb[0].mxu0
      %v602 = vpop.f32.mrb[0].mxu0
      %v603 = vadd.f32 0.0, %v602
      %v604 = vpop.f32.mrb[0].mxu0
      %605 = vmatprep.mubr.bf16.mxu0 0
      %606 = vmatmul.mubr.bf16.gmra.mrb[0].mxu0 %v423
      %v607 = vpop.f32.mrb[0].mxu0
      %v608 = vadd.f32 0.0, %v607
      %v609 = vpop.f32.mrb[0].mxu0
      %v610 = vpop.f32.mrb[0].mxu0
      %v611 = vadd.f32 0.0, %v610
      %v612 = vpop.f32.mrb[0].mxu0
      %613 = vmatprep.mubr.bf16.mxu0 0
      %614 = vmatmul.mubr.bf16.gmra.mrb[0].mxu0 %v426
      %v615 = vpop.f32.mrb[0].mxu0
      %v616 = vadd.f32 0.0, %v615
      %v617 = vpop.f32.mrb[0].mxu0
      %v618 = vpop.f32.mrb[0].mxu0
      %v619 = vadd.f32 0.0, %v618
      %v620 = vpop.f32.mrb[0].mxu0
      %621 = vmatprep.mubr.bf16.mxu0 0
      %622 = vmatmul.mubr.bf16.gmra.mrb[0].mxu0 %v429
      %v623 = vpop.f32.mrb[0].mxu0
      %v624 = vadd.f32 0.0, %v623
      %v625 = vpop.f32.mrb[0].mxu0
      %v626 = vpop.f32.mrb[0].mxu0
      %v627 = vadd.f32 0.0, %v626
      %v628 = vpop.f32.mrb[0].mxu0
      %629 = vmatprep.mubr.bf16.mxu0 0
      %630 = vmatmul.mubr.bf16.gmra.mrb[0].mxu0 %v432
      %v631 = vpop.f32.mrb[0].mxu0
      %v632 = vadd.f32 0.0, %v631
      %v633 = vpop.f32.mrb[0].mxu0
      %v634 = vpop.f32.mrb[0].mxu0
      %v635 = vadd.f32 0.0, %v634
      %v636 = vpop.f32.mrb[0].mxu0
      %637 = vmatprep.mubr.bf16.mxu0 0
      %638 = vmatmul.mubr.bf16.gmra.mrb[0].mxu0 %v435
      %v639 = vpop.f32.mrb[0].mxu0
      %v640 = vadd.f32 0.0, %v639
      %v641 = vpop.f32.mrb[0].mxu0
      %v642 = vpop.f32.mrb[0].mxu0
      %v643 = vadd.f32 0.0, %v642
      %v644 = vpop.f32.mrb[0].mxu0
      %645 = vmatprep.mubr.bf16.mxu0 0
      %646 = vmatmul.mubr.bf16.gmra.mrb[0].mxu0 %v438
      %v647 = vpop.f32.mrb[0].mxu0
      %v648 = vadd.f32 0.0, %v647
      %v649 = vpop.f32.mrb[0].mxu0
      %v650 = vpop.f32.mrb[0].mxu0
      %v651 = vadd.f32 0.0, %v650
      %v652 = vpop.f32.mrb[0].mxu0
      %653 = vmatprep.mubr.bf16.mxu0 0
      %654 = vmatmul.mubr.bf16.gmra.mrb[0].mxu0 %v441
      %v655 = vpop.f32.mrb[0].mxu0
      %v656 = vadd.f32 0.0, %v655
      %v657 = vpop.f32.mrb[0].mxu0
      %v658 = vpop.f32.mrb[0].mxu0
      %v659 = vadd.f32 0.0, %v658
      %v660 = vpop.f32.mrb[0].mxu0
      %661 = vmatprep.mubr.bf16.mxu0 0
      %662 = vmatmul.mubr.bf16.gmra.mrb[0].mxu0 %v444
      %v663 = vpop.f32.mrb[0].mxu0
      %v664 = vadd.f32 0.0, %v663
      %v665 = vpop.f32.mrb[0].mxu0
      %v666 = vpop.f32.mrb[0].mxu0
      %v667 = vadd.f32 0.0, %v666
      %v668 = vpop.f32.mrb[0].mxu0
      %669 = vmatprep.mubr.bf16.mxu0 0
      %670 = vmatmul.mubr.bf16.gmra.mrb[0].mxu0 %v447
      %v671 = vpop.f32.mrb[0].mxu0
      %v672 = vadd.f32 0.0, %v671
      %v673 = vpop.f32.mrb[0].mxu0
      %v674 = vpop.f32.mrb[0].mxu0
      %v675 = vadd.f32 0.0, %v674
      %v676 = vpop.f32.mrb[0].mxu0
      %677 = vmatprep.mubr.bf16.mxu0 0
      %678 = vmatmul.mubr.bf16.gmra.mrb[0].mxu0 %v450
      %v679 = vpop.f32.mrb[0].mxu0
      %v680 = vadd.f32 0.0, %v679
      %v681 = vpop.f32.mrb[0].mxu0
      %v682 = vpop.f32.mrb[0].mxu0
      %v683 = vadd.f32 0.0, %v682
      %v684 = vpop.f32.mrb[0].mxu0
      %685 = vmatprep.mubr.bf16.mxu0 0
      %686 = vmatmul.mubr.bf16.gmra.mrb[0].mxu0 %v453
      %v687 = vpop.f32.mrb[0].mxu0
      %v688 = vadd.f32 0.0, %v687
      %v689 = vpop.f32.mrb[0].mxu0
      %v690 = vpop.f32.mrb[0].mxu0
      %v691 = vadd.f32 0.0, %v690
      %v692 = vpop.f32.mrb[0].mxu0
      %693 = vmatprep.mubr.bf16.mxu0 0
      %694 = vmatmul.mubr.bf16.gmra.mrb[0].mxu0 %v456
      %v695 = vpop.f32.mrb[0].mxu0
      %v696 = vadd.f32 0.0, %v695
      %v697 = vpop.f32.mrb[0].mxu0
      %v698 = vpop.f32.mrb[0].mxu0
      %v699 = vadd.f32 0.0, %v698
      %v700 = vpop.f32.mrb[0].mxu0
      %701 = vmatprep.mubr.bf16.mxu0 0
      %702 = vmatmul.mubr.bf16.gmra.mrb[0].mxu0 %v459
      %v703 = vpop.f32.mrb[0].mxu0
      %v704 = vadd.f32 0.0, %v703
      %v705 = vpop.f32.mrb[0].mxu0
      %v706 = vpop.f32.mrb[0].mxu0
      %v707 = vadd.f32 0.0, %v706
      %v708 = vpop.f32.mrb[0].mxu0
      %709 = vmatprep.mubr.bf16.mxu0 0
      %710 = vmatmul.mubr.bf16.gmra.mrb[0].mxu0 %v462
      %v711 = vpop.f32.mrb[0].mxu0
      %v712 = vadd.f32 0.0, %v711
      %v713 = vpop.f32.mrb[0].mxu0
      %v714 = vpop.f32.mrb[0].mxu0
      %v715 = vadd.f32 0.0, %v714
      %v716 = vpop.f32.mrb[0].mxu0
      %717 = vmatprep.mubr.bf16.mxu0 0
      %718 = vmatmul.mubr.bf16.gmra.mrb[0].mxu0 %v465
      %v719 = vpop.f32.mrb[0].mxu0
      %v720 = vadd.f32 0.0, %v719
      %v721 = vpop.f32.mrb[0].mxu0
      %v722 = vpop.f32.mrb[0].mxu0
      %v723 = vadd.f32 0.0, %v722
      %v724 = vpop.f32.mrb[0].mxu0
      %725 = vmatprep.mubr.bf16.mxu0 0
      %726 = vmatmul.mubr.bf16.gmra.mrb[0].mxu0 %v468
      %v727 = vpop.f32.mrb[0].mxu0
      %v728 = vadd.f32 0.0, %v727
      %v729 = vpop.f32.mrb[0].mxu0
      %v730 = vpop.f32.mrb[0].mxu0
      %v731 = vadd.f32 0.0, %v730
      %v732 = vpop.f32.mrb[0].mxu0
      %733 = vmatprep.mubr.bf16.mxu0 0
      %734 = vmatmul.mubr.bf16.gmra.mrb[0].mxu0 %v471
      %v735 = vpop.f32.mrb[0].mxu0
      %v736 = vadd.f32 0.0, %v735
      %v737 = vpop.f32.mrb[0].mxu0
      %v738 = vpop.f32.mrb[0].mxu0
      %v739 = vadd.f32 0.0, %v738
      %v740 = vpop.f32.mrb[0].mxu0
      %741 = vmatprep.mubr.bf16.mxu0 0
      %742 = vmatmul.mubr.bf16.gmra.mrb[0].mxu0 %v474
      %v743 = vpop.f32.mrb[0].mxu0
      %v744 = vadd.f32 0.0, %v743
      %v745 = vpop.f32.mrb[0].mxu0
      %v746 = vpop.f32.mrb[0].mxu0
      %v747 = vadd.f32 0.0, %v746
      %v748 = vpop.f32.mrb[0].mxu0
      %749 = vmatprep.mubr.bf16.mxu0 0
      %750 = vmatmul.mubr.bf16.gmra.mrb[0].mxu0 %v477
      %v751 = vpop.f32.mrb[0].mxu0
      %v752 = vadd.f32 0.0, %v751
      %v753 = vpop.f32.mrb[0].mxu0
      %v754 = vpop.f32.mrb[0].mxu0
      %v755 = vadd.f32 0.0, %v754
      %v756 = vpop.f32.mrb[0].mxu0
      %757 = vmatprep.mubr.bf16.mxu0 0
      %758 = vmatmul.mubr.bf16.gmra.mrb[0].mxu0 %v480
      %v759 = vpop.f32.mrb[0].mxu0
      %v760 = vadd.f32 0.0, %v759
      %v761 = vpop.f32.mrb[0].mxu0
      %v762 = vpop.f32.mrb[0].mxu0
      %v763 = vadd.f32 0.0, %v762
      %v764 = vpop.f32.mrb[0].mxu0
      %765 = vmatprep.mubr.bf16.mxu0 0
      %766 = vmatmul.mubr.bf16.gmra.mrb[0].mxu0 %v483
      %v767 = vpop.f32.mrb[0].mxu0
      %v768 = vadd.f32 0.0, %v767
      %v769 = vpop.f32.mrb[0].mxu0
      %v770 = vpop.f32.mrb[0].mxu0
      %v771 = vadd.f32 0.0, %v770
      %v772 = vpop.f32.mrb[0].mxu0
      %773 = vdwg.mxu0
      %vm774 = vcmask 130048
      %775 = vst.msk [vmem:[%s145] sm:$0xff] %vm774, %v520
      %776 = vst.msk [vmem:[%s145 + $0x8] sm:$0xff] %vm774, %v523
      %777 = vst.msk [vmem:[%s145 + $0x10] sm:$0xff] %vm774, %v528
      %778 = vst.msk [vmem:[%s145 + $0x18] sm:$0xff] %vm774, %v531
      %779 = vst.msk [vmem:[%s145 + $0x20] sm:$0xff] %vm774, %v536
      %780 = vst.msk [vmem:[%s145 + $0x28] sm:$0xff] %vm774, %v539
      %781 = vst.msk [vmem:[%s145 + $0x30] sm:$0xff] %vm774, %v544
      %782 = vst.msk [vmem:[%s145 + $0x38] sm:$0xff] %vm774, %v547
      %783 = vst.msk [vmem:[%s145 + $0x40] sm:$0xff] %vm774, %v552
      %784 = vst.msk [vmem:[%s145 + $0x48] sm:$0xff] %vm774, %v555
      %785 = vst.msk [vmem:[%s145 + $0x50] sm:$0xff] %vm774, %v560
      %786 = vst.msk [vmem:[%s145 + $0x58] sm:$0xff] %vm774, %v563
      %787 = vst.msk [vmem:[%s145 + $0x60] sm:$0xff] %vm774, %v568
      %788 = vst.msk [vmem:[%s145 + $0x68] sm:$0xff] %vm774, %v571
      %789 = vst.msk [vmem:[%s145 + $0x70] sm:$0xff] %vm774, %v576
      %790 = vst.msk [vmem:[%s145 + $0x78] sm:$0xff] %vm774, %v579
      %791 = vst.msk [vmem:[%s145 + $0x80] sm:$0xff] %vm774, %v584
      %792 = vst.msk [vmem:[%s145 + $0x88] sm:$0xff] %vm774, %v587
      %793 = vst.msk [vmem:[%s145 + $0x90] sm:$0xff] %vm774, %v592
      %794 = vst.msk [vmem:[%s145 + $0x98] sm:$0xff] %vm774, %v595
      %795 = vst.msk [vmem:[%s145 + $0xa0] sm:$0xff] %vm774, %v600
      %796 = vst.msk [vmem:[%s145 + $0xa8] sm:$0xff] %vm774, %v603
      %797 = vst.msk [vmem:[%s145 + $0xb0] sm:$0xff] %vm774, %v608
      %798 = vst.msk [vmem:[%s145 + $0xb8] sm:$0xff] %vm774, %v611
      %799 = vst.msk [vmem:[%s145 + $0xc0] sm:$0xff] %vm774, %v616
      %800 = vst.msk [vmem:[%s145 + $0xc8] sm:$0xff] %vm774, %v619
      %801 = vst.msk [vmem:[%s145 + $0xd0] sm:$0xff] %vm774, %v624
      %802 = vst.msk [vmem:[%s145 + $0xd8] sm:$0xff] %vm774, %v627
      %803 = vst.msk [vmem:[%s145 + $0xe0] sm:$0xff] %vm774, %v632
      %804 = vst.msk [vmem:[%s145 + $0xe8] sm:$0xff] %vm774, %v635
      %805 = vst.msk [vmem:[%s145 + $0xf0] sm:$0xff] %vm774, %v640
      %806 = vst.msk [vmem:[%s145 + $0xf8] sm:$0xff] %vm774, %v643
      %807 = vst.msk [vmem:[%s145 + $0x100] sm:$0xff] %vm774, %v648
      %808 = vst.msk [vmem:[%s145 + $0x108] sm:$0xff] %vm774, %v651
      %809 = vst.msk [vmem:[%s145 + $0x110] sm:$0xff] %vm774, %v656
      %810 = vst.msk [vmem:[%s145 + $0x118] sm:$0xff] %vm774, %v659
      %811 = vst.msk [vmem:[%s145 + $0x120] sm:$0xff] %vm774, %v664
      %812 = vst.msk [vmem:[%s145 + $0x128] sm:$0xff] %vm774, %v667
      %813 = vst.msk [vmem:[%s145 + $0x130] sm:$0xff] %vm774, %v672
      %814 = vst.msk [vmem:[%s145 + $0x138] sm:$0xff] %vm774, %v675
      %815 = vst.msk [vmem:[%s145 + $0x140] sm:$0xff] %vm774, %v680
      %816 = vst.msk [vmem:[%s145 + $0x148] sm:$0xff] %vm774, %v683
      %817 = vst.msk [vmem:[%s145 + $0x150] sm:$0xff] %vm774, %v688
      %818 = vst.msk [vmem:[%s145 + $0x158] sm:$0xff] %vm774, %v691
      %819 = vst.msk [vmem:[%s145 + $0x160] sm:$0xff] %vm774, %v696
      %820 = vst.msk [vmem:[%s145 + $0x168] sm:$0xff] %vm774, %v699
      %821 = vst.msk [vmem:[%s145 + $0x170] sm:$0xff] %vm774, %v704
      %822 = vst.msk [vmem:[%s145 + $0x178] sm:$0xff] %vm774, %v707
      %823 = vst.msk [vmem:[%s145 + $0x180] sm:$0xff] %vm774, %v712
      %824 = vst.msk [vmem:[%s145 + $0x188] sm:$0xff] %vm774, %v715
      %825 = vst.msk [vmem:[%s145 + $0x190] sm:$0xff] %vm774, %v720
      %826 = vst.msk [vmem:[%s145 + $0x198] sm:$0xff] %vm774, %v723
      %827 = vst.msk [vmem:[%s145 + $0x1a0] sm:$0xff] %vm774, %v728
      %828 = vst.msk [vmem:[%s145 + $0x1a8] sm:$0xff] %vm774, %v731
      %829 = vst.msk [vmem:[%s145 + $0x1b0] sm:$0xff] %vm774, %v736
      %830 = vst.msk [vmem:[%s145 + $0x1b8] sm:$0xff] %vm774, %v739
      %831 = vst.msk [vmem:[%s145 + $0x1c0] sm:$0xff] %vm774, %v744
      %832 = vst.msk [vmem:[%s145 + $0x1c8] sm:$0xff] %vm774, %v747
      %833 = vst.msk [vmem:[%s145 + $0x1d0] sm:$0xff] %vm774, %v752
      %834 = vst.msk [vmem:[%s145 + $0x1d8] sm:$0xff] %vm774, %v755
      %835 = vst.msk [vmem:[%s145 + $0x1e0] sm:$0xff] %vm774, %v760
      %836 = vst.msk [vmem:[%s145 + $0x1e8] sm:$0xff] %vm774, %v763
      %837 = vst.msk [vmem:[%s145 + $0x1f0] sm:$0xff] %vm774, %v768
      %838 = vst.msk [vmem:[%s145 + $0x1f8] sm:$0xff] %vm774, %v771
      %s839 = smul.u32 64, %s13
      %p840 = scmp.lt.s32.totalorder %s839, 255
      %s841 = scalar_select %p840, %s839, 255
      %s842 = smul.addr %s841, 8
      %s843 = scalar_lea.vmem %s2, %s842
      // Predicated region
      $region29: #{_lambda_.8} parent=27 // pred_check
        %p844 = pneg %p78
      $region30: #{_lambda_.8} parent=27 // pred_check_branch
        %846 = sbr.rel (%p844) target = $region32
      $region31: #{_lambda_.8} parent=27 // pred_region
        %s847 = smul.u32 64, %s13
      $region32: #{_lambda_.8} parent=27 // pred_fallthru
        _
    $region28: #{_lambda_.8} parent=5 // pred_fallthru
      _
    %p848 = scmp.le.s32.totalorder 2, %s8
    // Predicated region
    $region33: #{_lambda_.8} parent=5 // pred_check
      %p849 = pneg %p848
    $region34: #{_lambda_.8} parent=5 // pred_check_branch
      %851 = sbr.rel (%p849) target = $region36
    $region35: #{_lambda_.8} parent=5 // pred_region
      %s852 = ssub.s32 %s8, 2
      // Predicated region
      $region37: #{_lambda_.8} parent=35 // pred_check
        %p853 = pneg %p84
      $region38: #{_lambda_.8} parent=35 // pred_check_branch
        %855 = sbr.rel (%p853) target = $region40
      $region39: #{_lambda_.8} parent=35 // pred_region
        %s856 = smul.u32 64, %s14
        %p857 = scmp.lt.s32.totalorder %s856, 255
        %s858 = scalar_select %p857, %s856, 255
        %s859 = smul.addr %s858, 8
        %s860 = scalar_lea.vmem %s2, %s859
      $region40: #{_lambda_.8} parent=35 // pred_fallthru
        _
    $region36: #{_lambda_.8} parent=5 // pred_fallthru
      _
  $region6: #{_lambda_.8} parent=0 // loop_footer
    %s12 = sadd.s32 1, %s8
  $region7: #{_lambda_.8} parent=0 // loop_footer_branch
    %7 = sbr.rel target = $region3
  $region8: #{_lambda_.8} parent=0 // loop_exit
    _

// kernel: _lambda_.9
$region0: #{_lambda_.9}
  #allocation0 [shape = 'u32[]', space=smem, size = 0x4, offset = 0x4, fixed_abs, tag = 'smem constant byte address 0x4 - core index']
  #allocation1 [shape = 'u32[144,128]{1,0:T(1,128)}', space=vmem, size = 0x12000, scoped, tag = 'internal scratch']
  %s0 = inlined_call_operand.vmem [shape: bf16[2048,144], index: 0, kind: input, shape index: {}]
  %s1 = inlined_call_operand.vmem [shape: bf16[144,32], index: 1, kind: input, shape index: {}]
  %s2 = inlined_call_operand.vmem [shape: f32[1,32], index: 2, kind: input, shape index: {}]
  %s3 = inlined_call_operand.vmem [shape: f32[1,32], index: 3, kind: input, shape index: {}]
  %s4 = inlined_call_operand.vmem [shape: bf16[2048,32], index: 4, kind: output, shape index: {}]
  %s5 = sld [smem:[#allocation0]]
  $region49: #{_lambda_.9} parent=0
    _
  %s7 = ssub.s32 1, %s5
  %s8 = scalar_select 0, %s7, %s5
  loop: start=0, step=1, limit=6
  $region2: #{_lambda_.9} parent=0 // loop_pre_header
    _
  $region3: #{_lambda_.9} parent=0 // loop_header
    %s10 = sphi 0, %s14
    %p11 = scmp.ge.s32.totalorder %s10, 6
    %s20 = sphi 0, %s22
    %s23 = sphi 0, %s20
    %s24 = sphi 0, %s23
    %s40 = sphi 0, %s24
    %s44 = sphi 0, %s44
    %s46 = sphi 0, %s44
    %s47 = sphi 0, %s46
    %s61 = sphi 0, %s47
    %s65 = sphi 0, %s65
    %s67 = sphi 0, %s65
    %s68 = sphi 0, %s67
    %s82 = sphi 0, %s68
    %s86 = sphi 0, %s86
    %s88 = sphi 0, %s86
    %s89 = sphi 0, %s88
    %s103 = sphi 0, %s89
    %s109 = sphi 0, %s111
    %s112 = sphi 0, %s109
    %s113 = sphi 0, %s112
    %s129 = sphi 0, %s113
  $region4: #{_lambda_.9} parent=0 // loop_header_branch
    %13 = sbr.rel (%p11) target = $region8
  $region5: #{_lambda_.9} parent=0 // loop_body
    %s15 = ssub.s32 %s10, 1
    %s16 = ssub.s32 %s10, 2
    %s17 = sadd.s32 %s10, 1
    %s18 = ssub.s32 %s10, %s17
    %p19 = scmp.eq.s32.totalorder %s18, 0
    %s21 = sadd.s32 %s20, 1
    %s22 = scalar_select %p19, %s20, %s21
    %p25 = pneg %p19
    %p26 = scmp.eq.s32.totalorder %s10, 3
    %p27 = por %p25, %p26
    %p28 = scmp.ne.s32.totalorder %s20, %s23
    %p29 = scmp.eq.s32.totalorder %s10, 0
    %p30 = por %p28, %p29
    %p31 = scmp.ne.s32.totalorder %s20, %s23
    %p32 = scmp.eq.s32.totalorder %s15, 3
    %p33 = por %p31, %p32
    %p34 = scmp.ne.s32.totalorder %s23, %s24
    %p35 = scmp.eq.s32.totalorder %s15, 0
    %p36 = por %p34, %p35
    %p37 = scmp.ne.s32.totalorder %s23, %s24
    %p38 = scmp.eq.s32.totalorder %s16, 3
    %p39 = por %p37, %p38
    %p41 = scmp.ne.s32.totalorder %s24, %s40
    %p42 = scmp.eq.s32.totalorder %s16, 0
    %p43 = por %p41, %p42
    %s45 = sadd.s32 %s44, 1
    %p48 = scmp.eq.s32.totalorder %s10, 3
    %p49 = scmp.ne.s32.totalorder %s44, %s46
    %p50 = scmp.eq.s32.totalorder %s10, 0
    %p51 = por %p49, %p50
    %p52 = scmp.ne.s32.totalorder %s44, %s46
    %p53 = scmp.eq.s32.totalorder %s15, 3
    %p54 = por %p52, %p53
    %p55 = scmp.ne.s32.totalorder %s46, %s47
    %p56 = scmp.eq.s32.totalorder %s15, 0
    %p57 = por %p55, %p56
    %p58 = scmp.ne.s32.totalorder %s46, %s47
    %p59 = scmp.eq.s32.totalorder %s16, 3
    %p60 = por %p58, %p59
    %p62 = scmp.ne.s32.totalorder %s47, %s61
    %p63 = scmp.eq.s32.totalorder %s16, 0
    %p64 = por %p62, %p63
    %s66 = sadd.s32 %s65, 1
    %p69 = scmp.eq.s32.totalorder %s10, 3
    %p70 = scmp.ne.s32.totalorder %s65, %s67
    %p71 = scmp.eq.s32.totalorder %s10, 0
    %p72 = por %p70, %p71
    %p73 = scmp.ne.s32.totalorder %s65, %s67
    %p74 = scmp.eq.s32.totalorder %s15, 3
    %p75 = por %p73, %p74
    %p76 = scmp.ne.s32.totalorder %s67, %s68
    %p77 = scmp.eq.s32.totalorder %s15, 0
    %p78 = por %p76, %p77
    %p79 = scmp.ne.s32.totalorder %s67, %s68
    %p80 = scmp.eq.s32.totalorder %s16, 3
    %p81 = por %p79, %p80
    %p83 = scmp.ne.s32.totalorder %s68, %s82
    %p84 = scmp.eq.s32.totalorder %s16, 0
    %p85 = por %p83, %p84
    %s87 = sadd.s32 %s86, 1
    %p90 = scmp.eq.s32.totalorder %s10, 3
    %p91 = scmp.ne.s32.totalorder %s86, %s88
    %p92 = scmp.eq.s32.totalorder %s10, 0
    %p93 = por %p91, %p92
    %p94 = scmp.ne.s32.totalorder %s86, %s88
    %p95 = scmp.eq.s32.totalorder %s15, 3
    %p96 = por %p94, %p95
    %p97 = scmp.ne.s32.totalorder %s88, %s89
    %p98 = scmp.eq.s32.totalorder %s15, 0
    %p99 = por %p97, %p98
    %p100 = scmp.ne.s32.totalorder %s88, %s89
    %p101 = scmp.eq.s32.totalorder %s16, 3
    %p102 = por %p100, %p101
    %p104 = scmp.ne.s32.totalorder %s89, %s103
    %p105 = scmp.eq.s32.totalorder %s16, 0
    %p106 = por %p104, %p105
    %s107 = ssub.s32 %s10, %s17
    %p108 = scmp.eq.s32.totalorder %s107, 0
    %s110 = sadd.s32 %s109, 1
    %s111 = scalar_select %p108, %s109, %s110
    %p114 = pneg %p108
    %p115 = scmp.eq.s32.totalorder %s10, 3
    %p116 = por %p114, %p115
    %p117 = scmp.ne.s32.totalorder %s109, %s112
    %p118 = scmp.eq.s32.totalorder %s10, 0
    %p119 = por %p117, %p118
    %p120 = scmp.ne.s32.totalorder %s109, %s112
    %p121 = scmp.eq.s32.totalorder %s15, 3
    %p122 = por %p120, %p121
    %p123 = scmp.ne.s32.totalorder %s112, %s113
    %p124 = scmp.eq.s32.totalorder %s15, 0
    %p125 = por %p123, %p124
    %p126 = scmp.ne.s32.totalorder %s112, %s113
    %p127 = scmp.eq.s32.totalorder %s16, 3
    %p128 = por %p126, %p127
    %p130 = scmp.ne.s32.totalorder %s113, %s129
    %p131 = scmp.eq.s32.totalorder %s16, 0
    %p132 = por %p130, %p131
    %p133 = scmp.le.s32.totalorder 1, %s10
    %p134 = scmp.lt.s32.totalorder %s10, 5
    %p135 = pnand %p133, %p134
    %p136 = pneg %p135
    // Predicated region
    $region9: #{_lambda_.9} parent=5 // pred_check
      _
    $region10: #{_lambda_.9} parent=5 // pred_check_branch
      %138 = sbr.rel (%p135) target = $region12
    $region11: #{_lambda_.9} parent=5 // pred_region
      %s139 = ssub.s32 %s10, 1
      // Predicated region
      $region13: #{_lambda_.9} parent=11 // pred_check
        %p140 = pneg %p57
      $region14: #{_lambda_.9} parent=11 // pred_check_branch
        %142 = sbr.rel (%p140) target = $region16
      $region15: #{_lambda_.9} parent=11 // pred_region
        _
      $region16: #{_lambda_.9} parent=11 // pred_fallthru
        _
      // Predicated region
      $region17: #{_lambda_.9} parent=11 // pred_check
        %p143 = pneg %p78
      $region18: #{_lambda_.9} parent=11 // pred_check_branch
        %145 = sbr.rel (%p143) target = $region20
      $region19: #{_lambda_.9} parent=11 // pred_region
        _
      $region20: #{_lambda_.9} parent=11 // pred_fallthru
        _
      // Predicated region
      $region21: #{_lambda_.9} parent=11 // pred_check
        %p146 = pneg %p99
      $region22: #{_lambda_.9} parent=11 // pred_check_branch
        %148 = sbr.rel (%p146) target = $region24
      $region23: #{_lambda_.9} parent=11 // pred_region
        _
      $region24: #{_lambda_.9} parent=11 // pred_fallthru
        _
    $region12: #{_lambda_.9} parent=5 // pred_fallthru
      _
    %p149 = scmp.lt.s32.totalorder %s10, 4
    // Predicated region
    $region25: #{_lambda_.9} parent=5 // pred_check
      %p150 = pneg %p149
    $region26: #{_lambda_.9} parent=5 // pred_check_branch
      %152 = sbr.rel (%p150) target = $region28
    $region27: #{_lambda_.9} parent=5 // pred_region
      // Predicated region
      $region29: #{_lambda_.9} parent=27 // pred_check
        %p153 = pneg %p30
      $region30: #{_lambda_.9} parent=27 // pred_check_branch
        %155 = sbr.rel (%p153) target = $region32
      $region31: #{_lambda_.9} parent=27 // pred_region
        %s156 = smul.u32 64, %s10
        %p157 = scmp.lt.s32.totalorder %s156, 255
        %s158 = scalar_select %p157, %s156, 255
        %s159 = smul.addr %s158, 2
        %s160 = smul.addr %s159, 4
        %s161 = scalar_lea.vmem %s0, %s160
        %s162 = smul.u32 64, %s10
      $region32: #{_lambda_.9} parent=27 // pred_fallthru
        _
    $region28: #{_lambda_.9} parent=5 // pred_fallthru
      _
    %p163 = scmp.le.s32.totalorder 1, %s10
    %p164 = scmp.lt.s32.totalorder %s10, 5
    %p165 = pnand %p163, %p164
    %p166 = pneg %p165
    // Predicated region
    $region33: #{_lambda_.9} parent=5 // pred_check
      _
    $region34: #{_lambda_.9} parent=5 // pred_check_branch
      %168 = sbr.rel (%p165) target = $region36
    $region35: #{_lambda_.9} parent=5 // pred_region
      %s169 = ssub.s32 %s10, 1
      %s170 = smul.u32 64, %s15
      %p171 = scmp.lt.s32.totalorder %s170, 255
      %s172 = scalar_select %p171, %s170, 255
      %s173 = smul.addr %s172, 2
      %s174 = smul.addr %s173, 4
      %s175 = scalar_lea.vmem %s0, %s174
      %p176 = pneg %p36
      %p177 = pneg %p33
      %p178 = pneg %p57
      %p179 = pneg %p54
      %p180 = pneg %p78
      %p181 = pneg %p75
      %p182 = pneg %p99
      %p183 = pneg %p96
      %p184 = pneg %p125
      %p185 = pneg %p122
      %s186 = smul.u32 64, %s15
      %p187 = scmp.lt.s32.totalorder %s186, 255
      %s188 = scalar_select %p187, %s186, 255
      %s189 = smul.addr %s188, 4
      %s190 = scalar_lea.vmem %s4, %s189
      %s191 = smul.u32 64, %s15
      %p192 = scmp.lt.s32.totalorder %s191, 255
      %s193 = scalar_select %p192, %s191, 255
      %s194 = smul.addr %s193, 2
      %s195 = smul.addr %s194, 4
      %s196 = scalar_lea.vmem %s0, %s195
      %s197 = smul.u32 64, %s15
      %s198 = smul.u32 64, %s15
      %p199 = scmp.lt.s32.totalorder %s198, 255
      %s200 = scalar_select %p199, %s198, 255
      %s201 = smul.addr %s200, 4
      %s202 = scalar_lea.vmem %s4, %s201
      %s203 = smul.u32 64, %s15
      %v205 = vld [vmem:[%s196] sm:$0xff]
      %v206 = vld [vmem:[%s196 + $0x8] sm:$0xff]
      %v207 = vld [vmem:[%s196 + $0x10] sm:$0xff]
      %v208 = vld [vmem:[%s196 + $0x18] sm:$0xff]
      %v209 = vld [vmem:[%s196 + $0x20] sm:$0xff]
      %v210 = vld [vmem:[%s196 + $0x28] sm:$0xff]
      %v211 = vld [vmem:[%s196 + $0x30] sm:$0xff]
      %v212 = vld [vmem:[%s196 + $0x38] sm:$0xff]
      %v213 = vld [vmem:[%s196 + $0x40] sm:$0xff]
      %v214 = vld [vmem:[%s196 + $0x48] sm:$0xff]
      %v215 = vld [vmem:[%s196 + $0x50] sm:$0xff]
      %v216 = vld [vmem:[%s196 + $0x58] sm:$0xff]
      %v217 = vld [vmem:[%s196 + $0x60] sm:$0xff]
      %v218 = vld [vmem:[%s196 + $0x68] sm:$0xff]
      %v219 = vld [vmem:[%s196 + $0x70] sm:$0xff]
      %v220 = vld [vmem:[%s196 + $0x78] sm:$0xff]
      %v221 = vld [vmem:[%s196 + $0x80] sm:$0xff]
      %v222 = vld [vmem:[%s196 + $0x88] sm:$0xff]
      %v223 = vld [vmem:[%s196 + $0x90] sm:$0xff]
      %v224 = vld [vmem:[%s196 + $0x98] sm:$0xff]
      %v225 = vld [vmem:[%s196 + $0xa0] sm:$0xff]
      %v226 = vld [vmem:[%s196 + $0xa8] sm:$0xff]
      %v227 = vld [vmem:[%s196 + $0xb0] sm:$0xff]
      %v228 = vld [vmem:[%s196 + $0xb8] sm:$0xff]
      %v229 = vld [vmem:[%s196 + $0xc0] sm:$0xff]
      %v230 = vld [vmem:[%s196 + $0xc8] sm:$0xff]
      %v231 = vld [vmem:[%s196 + $0xd0] sm:$0xff]
      %v232 = vld [vmem:[%s196 + $0xd8] sm:$0xff]
      %v233 = vld [vmem:[%s196 + $0xe0] sm:$0xff]
      %v234 = vld [vmem:[%s196 + $0xe8] sm:$0xff]
      %v235 = vld [vmem:[%s196 + $0xf0] sm:$0xff]
      %v236 = vld [vmem:[%s196 + $0xf8] sm:$0xff]
      %v237 = vld [vmem:[%s196 + $0x100] sm:$0xff]
      %v238 = vld [vmem:[%s196 + $0x108] sm:$0xff]
      %v239 = vld [vmem:[%s196 + $0x110] sm:$0xff]
      %v240 = vld [vmem:[%s196 + $0x118] sm:$0xff]
      %v241 = vld [vmem:[%s196 + $0x120] sm:$0xff]
      %v242 = vld [vmem:[%s196 + $0x128] sm:$0xff]
      %v243 = vld [vmem:[%s196 + $0x130] sm:$0xff]
      %v244 = vld [vmem:[%s196 + $0x138] sm:$0xff]
      %v245 = vld [vmem:[%s196 + $0x140] sm:$0xff]
      %v246 = vld [vmem:[%s196 + $0x148] sm:$0xff]
      %v247 = vld [vmem:[%s196 + $0x150] sm:$0xff]
      %v248 = vld [vmem:[%s196 + $0x158] sm:$0xff]
      %v249 = vld [vmem:[%s196 + $0x160] sm:$0xff]
      %v250 = vld [vmem:[%s196 + $0x168] sm:$0xff]
      %v251 = vld [vmem:[%s196 + $0x170] sm:$0xff]
      %v252 = vld [vmem:[%s196 + $0x178] sm:$0xff]
      %v253 = vld [vmem:[%s196 + $0x180] sm:$0xff]
      %v254 = vld [vmem:[%s196 + $0x188] sm:$0xff]
      %v255 = vld [vmem:[%s196 + $0x190] sm:$0xff]
      %v256 = vld [vmem:[%s196 + $0x198] sm:$0xff]
      %v257 = vld [vmem:[%s196 + $0x1a0] sm:$0xff]
      %v258 = vld [vmem:[%s196 + $0x1a8] sm:$0xff]
      %v259 = vld [vmem:[%s196 + $0x1b0] sm:$0xff]
      %v260 = vld [vmem:[%s196 + $0x1b8] sm:$0xff]
      %v261 = vld [vmem:[%s196 + $0x1c0] sm:$0xff]
      %v262 = vld [vmem:[%s196 + $0x1c8] sm:$0xff]
      %v263 = vld [vmem:[%s196 + $0x1d0] sm:$0xff]
      %v264 = vld [vmem:[%s196 + $0x1d8] sm:$0xff]
      %v265 = vld [vmem:[%s196 + $0x1e0] sm:$0xff]
      %v266 = vld [vmem:[%s196 + $0x1e8] sm:$0xff]
      %v267 = vld [vmem:[%s196 + $0x1f0] sm:$0xff]
      %v268 = vld [vmem:[%s196 + $0x1f8] sm:$0xff]
      %v269 = vld [vmem:[%s1] sm:$0xf]
      %v270 = vld [vmem:[%s1 + $0x4] sm:$0xf]
      %v271 = vld [vmem:[%s1 + $0x8] sm:$0xf]
      %v272 = vld [vmem:[%s1 + $0xc] sm:$0xf]
      %v273 = vld [vmem:[%s1 + $0x10] sm:$0xf]
      %v274 = vld [vmem:[%s1 + $0x14] sm:$0xf]
      %v275 = vld [vmem:[%s1 + $0x18] sm:$0xf]
      %v276 = vld [vmem:[%s1 + $0x1c] sm:$0xf]
      %v277 = vld [vmem:[%s1 + $0x20] sm:$0xf]
      %v278 = vld [vmem:[%s1 + $0x24] sm:$0xf]
      %v279 = vld [vmem:[%s1 + $0x28] sm:$0xf]
      %v280 = vld [vmem:[%s1 + $0x2c] sm:$0xf]
      %v281 = vld [vmem:[%s1 + $0x30] sm:$0xf]
      %v282 = vld [vmem:[%s1 + $0x34] sm:$0xf]
      %v283 = vld [vmem:[%s1 + $0x38] sm:$0xf]
      %v284 = vld [vmem:[%s1 + $0x3c] sm:$0xf]
      %v285 = vld [vmem:[%s1 + $0x40] sm:$0xf]
      %v286 = vld [vmem:[%s1 + $0x44] sm:$0xf]
      %v351 = vunpack.c.l.b16 %v205
      %v352 = vunpack.c.h.b16 %v205
      %v353 = vunpack.c.l.b16 %v206
      %v354 = vunpack.c.h.b16 %v206
      %v355 = vunpack.c.l.b16 %v207
      %v356 = vunpack.c.h.b16 %v207
      %v357 = vunpack.c.l.b16 %v208
      %v358 = vunpack.c.h.b16 %v208
      %v359 = vunpack.c.l.b16 %v209
      %v360 = vunpack.c.h.b16 %v209
      %v361 = vunpack.c.l.b16 %v210
      %v362 = vunpack.c.h.b16 %v210
      %v363 = vunpack.c.l.b16 %v211
      %v364 = vunpack.c.h.b16 %v211
      %v365 = vunpack.c.l.b16 %v212
      %v366 = vunpack.c.h.b16 %v212
      %v367 = vunpack.c.l.b16 %v213
      %v368 = vunpack.c.h.b16 %v213
      %v369 = vunpack.c.l.b16 %v214
      %v370 = vunpack.c.h.b16 %v214
      %v371 = vunpack.c.l.b16 %v215
      %v372 = vunpack.c.h.b16 %v215
      %v373 = vunpack.c.l.b16 %v216
      %v374 = vunpack.c.h.b16 %v216
      %v375 = vunpack.c.l.b16 %v217
      %v376 = vunpack.c.h.b16 %v217
      %v377 = vunpack.c.l.b16 %v218
      %v378 = vunpack.c.h.b16 %v218
      %v379 = vunpack.c.l.b16 %v219
      %v380 = vunpack.c.h.b16 %v219
      %v381 = vunpack.c.l.b16 %v220
      %v382 = vunpack.c.h.b16 %v220
      %v383 = vunpack.c.l.b16 %v221
      %v384 = vunpack.c.h.b16 %v221
      %v385 = vunpack.c.l.b16 %v222
      %v386 = vunpack.c.h.b16 %v222
      %v387 = vunpack.c.l.b16 %v223
      %v388 = vunpack.c.h.b16 %v223
      %v389 = vunpack.c.l.b16 %v224
      %v390 = vunpack.c.h.b16 %v224
      %v391 = vunpack.c.l.b16 %v225
      %v392 = vunpack.c.h.b16 %v225
      %v393 = vunpack.c.l.b16 %v226
      %v394 = vunpack.c.h.b16 %v226
      %v395 = vunpack.c.l.b16 %v227
      %v396 = vunpack.c.h.b16 %v227
      %v397 = vunpack.c.l.b16 %v228
      %v398 = vunpack.c.h.b16 %v228
      %v399 = vunpack.c.l.b16 %v229
      %v400 = vunpack.c.h.b16 %v229
      %v401 = vunpack.c.l.b16 %v230
      %v402 = vunpack.c.h.b16 %v230
      %v403 = vunpack.c.l.b16 %v231
      %v404 = vunpack.c.h.b16 %v231
      %v405 = vunpack.c.l.b16 %v232
      %v406 = vunpack.c.h.b16 %v232
      %v407 = vunpack.c.l.b16 %v233
      %v408 = vunpack.c.h.b16 %v233
      %v409 = vunpack.c.l.b16 %v234
      %v410 = vunpack.c.h.b16 %v234
      %v411 = vunpack.c.l.b16 %v235
      %v412 = vunpack.c.h.b16 %v235
      %v413 = vunpack.c.l.b16 %v236
      %v414 = vunpack.c.h.b16 %v236
      %v415 = vunpack.c.l.b16 %v237
      %v416 = vunpack.c.h.b16 %v237
      %v417 = vunpack.c.l.b16 %v238
      %v418 = vunpack.c.h.b16 %v238
      %v419 = vunpack.c.l.b16 %v239
      %v420 = vunpack.c.h.b16 %v239
      %v421 = vunpack.c.l.b16 %v240
      %v422 = vunpack.c.h.b16 %v240
      %v423 = vunpack.c.l.b16 %v241
      %v424 = vunpack.c.h.b16 %v241
      %v425 = vunpack.c.l.b16 %v242
      %v426 = vunpack.c.h.b16 %v242
      %v427 = vunpack.c.l.b16 %v243
      %v428 = vunpack.c.h.b16 %v243
      %v429 = vunpack.c.l.b16 %v244
      %v430 = vunpack.c.h.b16 %v244
      %v431 = vunpack.c.l.b16 %v245
      %v432 = vunpack.c.h.b16 %v245
      %v433 = vunpack.c.l.b16 %v246
      %v434 = vunpack.c.h.b16 %v246
      %v435 = vunpack.c.l.b16 %v247
      %v436 = vunpack.c.h.b16 %v247
      %v437 = vunpack.c.l.b16 %v248
      %v438 = vunpack.c.h.b16 %v248
      %v439 = vunpack.c.l.b16 %v249
      %v440 = vunpack.c.h.b16 %v249
      %v441 = vunpack.c.l.b16 %v250
      %v442 = vunpack.c.h.b16 %v250
      %v443 = vunpack.c.l.b16 %v251
      %v444 = vunpack.c.h.b16 %v251
      %v445 = vunpack.c.l.b16 %v252
      %v446 = vunpack.c.h.b16 %v252
      %v447 = vunpack.c.l.b16 %v253
      %v448 = vunpack.c.h.b16 %v253
      %v449 = vunpack.c.l.b16 %v254
      %v450 = vunpack.c.h.b16 %v254
      %v451 = vunpack.c.l.b16 %v255
      %v452 = vunpack.c.h.b16 %v255
      %v453 = vunpack.c.l.b16 %v256
      %v454 = vunpack.c.h.b16 %v256
      %v455 = vunpack.c.l.b16 %v257
      %v456 = vunpack.c.h.b16 %v257
      %v457 = vunpack.c.l.b16 %v258
      %v458 = vunpack.c.h.b16 %v258
      %v459 = vunpack.c.l.b16 %v259
      %v460 = vunpack.c.h.b16 %v259
      %v461 = vunpack.c.l.b16 %v260
      %v462 = vunpack.c.h.b16 %v260
      %v463 = vunpack.c.l.b16 %v261
      %v464 = vunpack.c.h.b16 %v261
      %v465 = vunpack.c.l.b16 %v262
      %v466 = vunpack.c.h.b16 %v262
      %v467 = vunpack.c.l.b16 %v263
      %v468 = vunpack.c.h.b16 %v263
      %v469 = vunpack.c.l.b16 %v264
      %v470 = vunpack.c.h.b16 %v264
      %v471 = vunpack.c.l.b16 %v265
      %v472 = vunpack.c.h.b16 %v265
      %v473 = vunpack.c.l.b16 %v266
      %v474 = vunpack.c.h.b16 %v266
      %v475 = vunpack.c.l.b16 %v267
      %v476 = vunpack.c.h.b16 %v267
      %v477 = vunpack.c.l.b16 %v268
      %v478 = vunpack.c.h.b16 %v268
      %v479 = vpack.c.b16 %v353, %v351
      %v480 = vpack.c.b16 %v354, %v352
      %v481 = vpack.c.b16 %v357, %v355
      %v482 = vpack.c.b16 %v358, %v356
      %v483 = vpack.c.b16 %v361, %v359
      %v484 = vpack.c.b16 %v362, %v360
      %v485 = vpack.c.b16 %v365, %v363
      %v486 = vpack.c.b16 %v366, %v364
      %v487 = vpack.c.b16 %v369, %v367
      %v488 = vpack.c.b16 %v370, %v368
      %v489 = vpack.c.b16 %v373, %v371
      %v490 = vpack.c.b16 %v374, %v372
      %v491 = vpack.c.b16 %v377, %v375
      %v492 = vpack.c.b16 %v378, %v376
      %v493 = vpack.c.b16 %v381, %v379
      %v494 = vpack.c.b16 %v382, %v380
      %v495 = vpack.c.b16 %v385, %v383
      %v496 = vpack.c.b16 %v386, %v384
      %v497 = vpack.c.b16 %v389, %v387
      %v498 = vpack.c.b16 %v390, %v388
      %v499 = vpack.c.b16 %v393, %v391
      %v500 = vpack.c.b16 %v394, %v392
      %v501 = vpack.c.b16 %v397, %v395
      %v502 = vpack.c.b16 %v398, %v396
      %v503 = vpack.c.b16 %v401, %v399
      %v504 = vpack.c.b16 %v402, %v400
      %v505 = vpack.c.b16 %v405, %v403
      %v506 = vpack.c.b16 %v406, %v404
      %v507 = vpack.c.b16 %v409, %v407
      %v508 = vpack.c.b16 %v410, %v408
      %v509 = vpack.c.b16 %v413, %v411
      %v510 = vpack.c.b16 %v414, %v412
      %v511 = vpack.c.b16 %v417, %v415
      %v512 = vpack.c.b16 %v418, %v416
      %v513 = vpack.c.b16 %v421, %v419
      %v514 = vpack.c.b16 %v422, %v420
      %v515 = vpack.c.b16 %v425, %v423
      %v516 = vpack.c.b16 %v426, %v424
      %v517 = vpack.c.b16 %v429, %v427
      %v518 = vpack.c.b16 %v430, %v428
      %v519 = vpack.c.b16 %v433, %v431
      %v520 = vpack.c.b16 %v434, %v432
      %v521 = vpack.c.b16 %v437, %v435
      %v522 = vpack.c.b16 %v438, %v436
      %v523 = vpack.c.b16 %v441, %v439
      %v524 = vpack.c.b16 %v442, %v440
      %v525 = vpack.c.b16 %v445, %v443
      %v526 = vpack.c.b16 %v446, %v444
      %v527 = vpack.c.b16 %v449, %v447
      %v528 = vpack.c.b16 %v450, %v448
      %v529 = vpack.c.b16 %v453, %v451
      %v530 = vpack.c.b16 %v454, %v452
      %v531 = vpack.c.b16 %v457, %v455
      %v532 = vpack.c.b16 %v458, %v456
      %v533 = vpack.c.b16 %v461, %v459
      %v534 = vpack.c.b16 %v462, %v460
      %v535 = vpack.c.b16 %v465, %v463
      %v536 = vpack.c.b16 %v466, %v464
      %v537 = vpack.c.b16 %v469, %v467
      %v538 = vpack.c.b16 %v470, %v468
      %v539 = vpack.c.b16 %v473, %v471
      %v540 = vpack.c.b16 %v474, %v472
      %v541 = vpack.c.b16 %v477, %v475
      %v542 = vpack.c.b16 %v478, %v476
      %v593 = vunpack.c.l.b16 %v269
      %v594 = vunpack.c.l.b16 %v270
      %v595 = vunpack.c.l.b16 %v271
      %v596 = vunpack.c.l.b16 %v272
      %v597 = vunpack.c.l.b16 %v273
      %v598 = vunpack.c.l.b16 %v274
      %v599 = vunpack.c.l.b16 %v275
      %v600 = vunpack.c.l.b16 %v276
      %v601 = vunpack.c.l.b16 %v277
      %v602 = vunpack.c.l.b16 %v278
      %v603 = vunpack.c.l.b16 %v279
      %v604 = vunpack.c.l.b16 %v280
      %v605 = vunpack.c.l.b16 %v281
      %v606 = vunpack.c.l.b16 %v282
      %v607 = vunpack.c.l.b16 %v283
      %v608 = vunpack.c.l.b16 %v284
      %v609 = vunpack.c.l.b16 %v285
      %v610 = vunpack.c.l.b16 %v286
      %v611 = vpack.c.b16 %v594, %v593
      %v612 = vpack.c.b16 %v596, %v595
      %v613 = vpack.c.b16 %v598, %v597
      %v614 = vpack.c.b16 %v600, %v599
      %v615 = vpack.c.b16 %v602, %v601
      %v616 = vpack.c.b16 %v604, %v603
      %v617 = vpack.c.b16 %v606, %v605
      %v618 = vpack.c.b16 %v608, %v607
      %v619 = vpack.c.b16 %v610, %v609
      %vm629 = vcmask 130048
      %v631 = vsel %vm629, %v480, 0
      %v634 = vsel %vm629, %v482, 0
      %v637 = vsel %vm629, %v484, 0
      %v640 = vsel %vm629, %v486, 0
      %v643 = vsel %vm629, %v488, 0
      %v646 = vsel %vm629, %v490, 0
      %v649 = vsel %vm629, %v492, 0
      %v652 = vsel %vm629, %v494, 0
      %v655 = vsel %vm629, %v496, 0
      %v658 = vsel %vm629, %v498, 0
      %v661 = vsel %vm629, %v500, 0
      %v664 = vsel %vm629, %v502, 0
      %v667 = vsel %vm629, %v504, 0
      %v670 = vsel %vm629, %v506, 0
      %v673 = vsel %vm629, %v508, 0
      %v676 = vsel %vm629, %v510, 0
      %v679 = vsel %vm629, %v512, 0
      %v682 = vsel %vm629, %v514, 0
      %v685 = vsel %vm629, %v516, 0
      %v688 = vsel %vm629, %v518, 0
      %v691 = vsel %vm629, %v520, 0
      %v694 = vsel %vm629, %v522, 0
      %v697 = vsel %vm629, %v524, 0
      %v700 = vsel %vm629, %v526, 0
      %v703 = vsel %vm629, %v528, 0
      %v706 = vsel %vm629, %v530, 0
      %v709 = vsel %vm629, %v532, 0
      %v712 = vsel %vm629, %v534, 0
      %v715 = vsel %vm629, %v536, 0
      %v718 = vsel %vm629, %v538, 0
      %v721 = vsel %vm629, %v540, 0
      %v724 = vsel %vm629, %v542, 0
      %726 = vmatprep.subr.bf16.mxu0 0
      %727 = vmatpush1.bf16.msra.mxu0 %v611
      %728 = vmatprep.subr.bf16.mxu0 0
      %729 = vmatpush1.bf16.msra.mxu0 %v612
      %730 = vmatprep.subr.bf16.mxu0 0
      %731 = vmatpush1.bf16.msra.mxu0 %v613
      %732 = vmatprep.subr.bf16.mxu0 0
      %733 = vmatpush1.bf16.msra.mxu0 %v614
      %734 = vmatprep.subr.bf16.mxu0 0
      %735 = vmatpush1.bf16.msra.mxu0 %v615
      %736 = vmatprep.subr.bf16.mxu0 0
      %737 = vmatpush1.bf16.msra.mxu0 %v616
      %738 = vmatprep.subr.bf16.mxu0 0
      %739 = vmatpush1.bf16.msra.mxu0 %v617
      %740 = vmatprep.subr.bf16.mxu0 0
      %741 = vmatpush1.bf16.msra.mxu0 %v618
      %742 = vmatprep.subr.bf16.mxu0 0
      %743 = vmatpush1.bf16.msra.mxu0 %v619
      %744 = vmatprep.subr.bf16.mxu0 0
      %745 = vmatpush1.bf16.msra.mxu0 0
      %746 = vmatprep.subr.bf16.mxu0 0
      %747 = vmatpush1.bf16.msra.mxu0 0
      %748 = vmatprep.subr.bf16.mxu0 0
      %749 = vmatpush1.bf16.msra.mxu0 0
      %750 = vmatprep.subr.bf16.mxu0 0
      %751 = vmatpush1.bf16.msra.mxu0 0
      %752 = vmatprep.subr.bf16.mxu0 0
      %753 = vmatpush1.bf16.msra.mxu0 0
      %754 = vmatprep.subr.bf16.mxu0 0
      %755 = vmatpush1.bf16.msra.mxu0 0
      %756 = vmatprep.subr.bf16.mxu0 0
      %757 = vmatpush1.bf16.msra.mxu0 0
      %758 = vmatprep.mubr.bf16.mxu0 %v631
      %759 = vmatmul.mubr.bf16.gmra.mrb[0].mxu0 %v479
      %v760 = vpop.f32.mrb[0].mxu0
      %v761 = vadd.f32 0.0, %v760
      %v762 = vpop.f32.mrb[0].mxu0
      %v763 = vpop.f32.mrb[0].mxu0
      %v764 = vadd.f32 0.0, %v763
      %v765 = vpop.f32.mrb[0].mxu0
      %766 = vmatprep.mubr.bf16.mxu0 %v634
      %767 = vmatmul.mubr.bf16.gmra.mrb[0].mxu0 %v481
      %v768 = vpop.f32.mrb[0].mxu0
      %v769 = vadd.f32 0.0, %v768
      %v770 = vpop.f32.mrb[0].mxu0
      %v771 = vpop.f32.mrb[0].mxu0
      %v772 = vadd.f32 0.0, %v771
      %v773 = vpop.f32.mrb[0].mxu0
      %774 = vmatprep.mubr.bf16.mxu0 %v637
      %775 = vmatmul.mubr.bf16.gmra.mrb[0].mxu0 %v483
      %v776 = vpop.f32.mrb[0].mxu0
      %v777 = vadd.f32 0.0, %v776
      %v778 = vpop.f32.mrb[0].mxu0
      %v779 = vpop.f32.mrb[0].mxu0
      %v780 = vadd.f32 0.0, %v779
      %v781 = vpop.f32.mrb[0].mxu0
      %782 = vmatprep.mubr.bf16.mxu0 %v640
      %783 = vmatmul.mubr.bf16.gmra.mrb[0].mxu0 %v485
      %v784 = vpop.f32.mrb[0].mxu0
      %v785 = vadd.f32 0.0, %v784
      %v786 = vpop.f32.mrb[0].mxu0
      %v787 = vpop.f32.mrb[0].mxu0
      %v788 = vadd.f32 0.0, %v787
      %v789 = vpop.f32.mrb[0].mxu0
      %790 = vmatprep.mubr.bf16.mxu0 %v643
      %791 = vmatmul.mubr.bf16.gmra.mrb[0].mxu0 %v487
      %v792 = vpop.f32.mrb[0].mxu0
      %v793 = vadd.f32 0.0, %v792
      %v794 = vpop.f32.mrb[0].mxu0
      %v795 = vpop.f32.mrb[0].mxu0
      %v796 = vadd.f32 0.0, %v795
      %v797 = vpop.f32.mrb[0].mxu0
      %798 = vmatprep.mubr.bf16.mxu0 %v646
      %799 = vmatmul.mubr.bf16.gmra.mrb[0].mxu0 %v489
      %v800 = vpop.f32.mrb[0].mxu0
      %v801 = vadd.f32 0.0, %v800
      %v802 = vpop.f32.mrb[0].mxu0
      %v803 = vpop.f32.mrb[0].mxu0
      %v804 = vadd.f32 0.0, %v803
      %v805 = vpop.f32.mrb[0].mxu0
      %806 = vmatprep.mubr.bf16.mxu0 %v649
      %807 = vmatmul.mubr.bf16.gmra.mrb[0].mxu0 %v491
      %v808 = vpop.f32.mrb[0].mxu0
      %v809 = vadd.f32 0.0, %v808
      %v810 = vpop.f32.mrb[0].mxu0
      %v811 = vpop.f32.mrb[0].mxu0
      %v812 = vadd.f32 0.0, %v811
      %v813 = vpop.f32.mrb[0].mxu0
      %814 = vmatprep.mubr.bf16.mxu0 %v652
      %815 = vmatmul.mubr.bf16.gmra.mrb[0].mxu0 %v493
      %v816 = vpop.f32.mrb[0].mxu0
      %v817 = vadd.f32 0.0, %v816
      %v818 = vpop.f32.mrb[0].mxu0
      %v819 = vpop.f32.mrb[0].mxu0
      %v820 = vadd.f32 0.0, %v819
      %v821 = vpop.f32.mrb[0].mxu0
      %822 = vmatprep.mubr.bf16.mxu0 %v655
      %823 = vmatmul.mubr.bf16.gmra.mrb[0].mxu0 %v495
      %v824 = vpop.f32.mrb[0].mxu0
      %v825 = vadd.f32 0.0, %v824
      %v826 = vpop.f32.mrb[0].mxu0
      %v827 = vpop.f32.mrb[0].mxu0
      %v828 = vadd.f32 0.0, %v827
      %v829 = vpop.f32.mrb[0].mxu0
      %830 = vmatprep.mubr.bf16.mxu0 %v658
      %831 = vmatmul.mubr.bf16.gmra.mrb[0].mxu0 %v497
      %v832 = vpop.f32.mrb[0].mxu0
      %v833 = vadd.f32 0.0, %v832
      %v834 = vpop.f32.mrb[0].mxu0
      %v835 = vpop.f32.mrb[0].mxu0
      %v836 = vadd.f32 0.0, %v835
      %v837 = vpop.f32.mrb[0].mxu0
      %838 = vmatprep.mubr.bf16.mxu0 %v661
      %839 = vmatmul.mubr.bf16.gmra.mrb[0].mxu0 %v499
      %v840 = vpop.f32.mrb[0].mxu0
      %v841 = vadd.f32 0.0, %v840
      %v842 = vpop.f32.mrb[0].mxu0
      %v843 = vpop.f32.mrb[0].mxu0
      %v844 = vadd.f32 0.0, %v843
      %v845 = vpop.f32.mrb[0].mxu0
      %846 = vmatprep.mubr.bf16.mxu0 %v664
      %847 = vmatmul.mubr.bf16.gmra.mrb[0].mxu0 %v501
      %v848 = vpop.f32.mrb[0].mxu0
      %v849 = vadd.f32 0.0, %v848
      %v850 = vpop.f32.mrb[0].mxu0
      %v851 = vpop.f32.mrb[0].mxu0
      %v852 = vadd.f32 0.0, %v851
      %v853 = vpop.f32.mrb[0].mxu0
      %854 = vmatprep.mubr.bf16.mxu0 %v667
      %855 = vmatmul.mubr.bf16.gmra.mrb[0].mxu0 %v503
      %v856 = vpop.f32.mrb[0].mxu0
      %v857 = vadd.f32 0.0, %v856
      %v858 = vpop.f32.mrb[0].mxu0
      %v859 = vpop.f32.mrb[0].mxu0
      %v860 = vadd.f32 0.0, %v859
      %v861 = vpop.f32.mrb[0].mxu0
      %862 = vmatprep.mubr.bf16.mxu0 %v670
      %863 = vmatmul.mubr.bf16.gmra.mrb[0].mxu0 %v505
      %v864 = vpop.f32.mrb[0].mxu0
      %v865 = vadd.f32 0.0, %v864
      %v866 = vpop.f32.mrb[0].mxu0
      %v867 = vpop.f32.mrb[0].mxu0
      %v868 = vadd.f32 0.0, %v867
      %v869 = vpop.f32.mrb[0].mxu0
      %870 = vmatprep.mubr.bf16.mxu0 %v673
      %871 = vmatmul.mubr.bf16.gmra.mrb[0].mxu0 %v507
      %v872 = vpop.f32.mrb[0].mxu0
      %v873 = vadd.f32 0.0, %v872
      %v874 = vpop.f32.mrb[0].mxu0
      %v875 = vpop.f32.mrb[0].mxu0
      %v876 = vadd.f32 0.0, %v875
      %v877 = vpop.f32.mrb[0].mxu0
      %878 = vmatprep.mubr.bf16.mxu0 %v676
      %879 = vmatmul.mubr.bf16.gmra.mrb[0].mxu0 %v509
      %v880 = vpop.f32.mrb[0].mxu0
      %v881 = vadd.f32 0.0, %v880
      %v882 = vpop.f32.mrb[0].mxu0
      %v883 = vpop.f32.mrb[0].mxu0
      %v884 = vadd.f32 0.0, %v883
      %v885 = vpop.f32.mrb[0].mxu0
      %886 = vmatprep.mubr.bf16.mxu0 %v679
      %887 = vmatmul.mubr.bf16.gmra.mrb[0].mxu0 %v511
      %v888 = vpop.f32.mrb[0].mxu0
      %v889 = vadd.f32 0.0, %v888
      %v890 = vpop.f32.mrb[0].mxu0
      %v891 = vpop.f32.mrb[0].mxu0
      %v892 = vadd.f32 0.0, %v891
      %v893 = vpop.f32.mrb[0].mxu0
      %894 = vmatprep.mubr.bf16.mxu0 %v682
      %895 = vmatmul.mubr.bf16.gmra.mrb[0].mxu0 %v513
      %v896 = vpop.f32.mrb[0].mxu0
      %v897 = vadd.f32 0.0, %v896
      %v898 = vpop.f32.mrb[0].mxu0
      %v899 = vpop.f32.mrb[0].mxu0
      %v900 = vadd.f32 0.0, %v899
      %v901 = vpop.f32.mrb[0].mxu0
      %902 = vmatprep.mubr.bf16.mxu0 %v685
      %903 = vmatmul.mubr.bf16.gmra.mrb[0].mxu0 %v515
      %v904 = vpop.f32.mrb[0].mxu0
      %v905 = vadd.f32 0.0, %v904
      %v906 = vpop.f32.mrb[0].mxu0
      %v907 = vpop.f32.mrb[0].mxu0
      %v908 = vadd.f32 0.0, %v907
      %v909 = vpop.f32.mrb[0].mxu0
      %910 = vmatprep.mubr.bf16.mxu0 %v688
      %911 = vmatmul.mubr.bf16.gmra.mrb[0].mxu0 %v517
      %v912 = vpop.f32.mrb[0].mxu0
      %v913 = vadd.f32 0.0, %v912
      %v914 = vpop.f32.mrb[0].mxu0
      %v915 = vpop.f32.mrb[0].mxu0
      %v916 = vadd.f32 0.0, %v915
      %v917 = vpop.f32.mrb[0].mxu0
      %918 = vmatprep.mubr.bf16.mxu0 %v691
      %919 = vmatmul.mubr.bf16.gmra.mrb[0].mxu0 %v519
      %v920 = vpop.f32.mrb[0].mxu0
      %v921 = vadd.f32 0.0, %v920
      %v922 = vpop.f32.mrb[0].mxu0
      %v923 = vpop.f32.mrb[0].mxu0
      %v924 = vadd.f32 0.0, %v923
      %v925 = vpop.f32.mrb[0].mxu0
      %926 = vmatprep.mubr.bf16.mxu0 %v694
      %927 = vmatmul.mubr.bf16.gmra.mrb[0].mxu0 %v521
      %v928 = vpop.f32.mrb[0].mxu0
      %v929 = vadd.f32 0.0, %v928
      %v930 = vpop.f32.mrb[0].mxu0
      %v931 = vpop.f32.mrb[0].mxu0
      %v932 = vadd.f32 0.0, %v931
      %v933 = vpop.f32.mrb[0].mxu0
      %934 = vmatprep.mubr.bf16.mxu0 %v697
      %935 = vmatmul.mubr.bf16.gmra.mrb[0].mxu0 %v523
      %v936 = vpop.f32.mrb[0].mxu0
      %v937 = vadd.f32 0.0, %v936
      %v938 = vpop.f32.mrb[0].mxu0
      %v939 = vpop.f32.mrb[0].mxu0
      %v940 = vadd.f32 0.0, %v939
      %v941 = vpop.f32.mrb[0].mxu0
      %942 = vmatprep.mubr.bf16.mxu0 %v700
      %943 = vmatmul.mubr.bf16.gmra.mrb[0].mxu0 %v525
      %v944 = vpop.f32.mrb[0].mxu0
      %v945 = vadd.f32 0.0, %v944
      %v946 = vpop.f32.mrb[0].mxu0
      %v947 = vpop.f32.mrb[0].mxu0
      %v948 = vadd.f32 0.0, %v947
      %v949 = vpop.f32.mrb[0].mxu0
      %950 = vmatprep.mubr.bf16.mxu0 %v703
      %951 = vmatmul.mubr.bf16.gmra.mrb[0].mxu0 %v527
      %v952 = vpop.f32.mrb[0].mxu0
      %v953 = vadd.f32 0.0, %v952
      %v954 = vpop.f32.mrb[0].mxu0
      %v955 = vpop.f32.mrb[0].mxu0
      %v956 = vadd.f32 0.0, %v955
      %v957 = vpop.f32.mrb[0].mxu0
      %958 = vmatprep.mubr.bf16.mxu0 %v706
      %959 = vmatmul.mubr.bf16.gmra.mrb[0].mxu0 %v529
      %v960 = vpop.f32.mrb[0].mxu0
      %v961 = vadd.f32 0.0, %v960
      %v962 = vpop.f32.mrb[0].mxu0
      %v963 = vpop.f32.mrb[0].mxu0
      %v964 = vadd.f32 0.0, %v963
      %v965 = vpop.f32.mrb[0].mxu0
      %966 = vmatprep.mubr.bf16.mxu0 %v709
      %967 = vmatmul.mubr.bf16.gmra.mrb[0].mxu0 %v531
      %v968 = vpop.f32.mrb[0].mxu0
      %v969 = vadd.f32 0.0, %v968
      %v970 = vpop.f32.mrb[0].mxu0
      %v971 = vpop.f32.mrb[0].mxu0
      %v972 = vadd.f32 0.0, %v971
      %v973 = vpop.f32.mrb[0].mxu0
      %974 = vmatprep.mubr.bf16.mxu0 %v712
      %975 = vmatmul.mubr.bf16.gmra.mrb[0].mxu0 %v533
      %v976 = vpop.f32.mrb[0].mxu0
      %v977 = vadd.f32 0.0, %v976
      %v978 = vpop.f32.mrb[0].mxu0
      %v979 = vpop.f32.mrb[0].mxu0
      %v980 = vadd.f32 0.0, %v979
      %v981 = vpop.f32.mrb[0].mxu0
      %982 = vmatprep.mubr.bf16.mxu0 %v715
      %983 = vmatmul.mubr.bf16.gmra.mrb[0].mxu0 %v535
      %v984 = vpop.f32.mrb[0].mxu0
      %v985 = vadd.f32 0.0, %v984
      %v986 = vpop.f32.mrb[0].mxu0
      %v987 = vpop.f32.mrb[0].mxu0
      %v988 = vadd.f32 0.0, %v987
      %v989 = vpop.f32.mrb[0].mxu0
      %990 = vmatprep.mubr.bf16.mxu0 %v718
      %991 = vmatmul.mubr.bf16.gmra.mrb[0].mxu0 %v537
      %v992 = vpop.f32.mrb[0].mxu0
      %v993 = vadd.f32 0.0, %v992
      %v994 = vpop.f32.mrb[0].mxu0
      %v995 = vpop.f32.mrb[0].mxu0
      %v996 = vadd.f32 0.0, %v995
      %v997 = vpop.f32.mrb[0].mxu0
      %998 = vmatprep.mubr.bf16.mxu0 %v721
      %999 = vmatmul.mubr.bf16.gmra.mrb[0].mxu0 %v539
      %v1000 = vpop.f32.mrb[0].mxu0
      %v1001 = vadd.f32 0.0, %v1000
      %v1002 = vpop.f32.mrb[0].mxu0
      %v1003 = vpop.f32.mrb[0].mxu0
      %v1004 = vadd.f32 0.0, %v1003
      %v1005 = vpop.f32.mrb[0].mxu0
      %1006 = vmatprep.mubr.bf16.mxu0 %v724
      %1007 = vmatmul.mubr.bf16.gmra.mrb[0].mxu0 %v541
      %v1008 = vpop.f32.mrb[0].mxu0
      %v1009 = vadd.f32 0.0, %v1008
      %v1010 = vpop.f32.mrb[0].mxu0
      %v1011 = vpop.f32.mrb[0].mxu0
      %v1012 = vadd.f32 0.0, %v1011
      %v1013 = vpop.f32.mrb[0].mxu0
      %1014 = vdwg.mxu0
      %v1015 = vld [vmem:[%s2] sm:$0x1]
      %v1017 = vlaneseq
      %v1018 = vshrl.u32 %v1017, 7
      %v1019 = vsub.s32 0, %v1018
      %v1020 = vrot.slane %v1015, %v1019
      %v1022 = vmul.f32 %v761, %v1020
      %v1023 = vmul.f32 %v764, %v1020
      %v1024 = vmul.f32 %v769, %v1020
      %v1025 = vmul.f32 %v772, %v1020
      %v1026 = vmul.f32 %v777, %v1020
      %v1027 = vmul.f32 %v780, %v1020
      %v1028 = vmul.f32 %v785, %v1020
      %v1029 = vmul.f32 %v788, %v1020
      %v1030 = vmul.f32 %v793, %v1020
      %v1031 = vmul.f32 %v796, %v1020
      %v1032 = vmul.f32 %v801, %v1020
      %v1033 = vmul.f32 %v804, %v1020
      %v1034 = vmul.f32 %v809, %v1020
      %v1035 = vmul.f32 %v812, %v1020
      %v1036 = vmul.f32 %v817, %v1020
      %v1037 = vmul.f32 %v820, %v1020
      %v1038 = vmul.f32 %v825, %v1020
      %v1039 = vmul.f32 %v828, %v1020
      %v1040 = vmul.f32 %v833, %v1020
      %v1041 = vmul.f32 %v836, %v1020
      %v1042 = vmul.f32 %v841, %v1020
      %v1043 = vmul.f32 %v844, %v1020
      %v1044 = vmul.f32 %v849, %v1020
      %v1045 = vmul.f32 %v852, %v1020
      %v1046 = vmul.f32 %v857, %v1020
      %v1047 = vmul.f32 %v860, %v1020
      %v1048 = vmul.f32 %v865, %v1020
      %v1049 = vmul.f32 %v868, %v1020
      %v1050 = vmul.f32 %v873, %v1020
      %v1051 = vmul.f32 %v876, %v1020
      %v1052 = vmul.f32 %v881, %v1020
      %v1053 = vmul.f32 %v884, %v1020
      %v1054 = vmul.f32 %v889, %v1020
      %v1055 = vmul.f32 %v892, %v1020
      %v1056 = vmul.f32 %v897, %v1020
      %v1057 = vmul.f32 %v900, %v1020
      %v1058 = vmul.f32 %v905, %v1020
      %v1059 = vmul.f32 %v908, %v1020
      %v1060 = vmul.f32 %v913, %v1020
      %v1061 = vmul.f32 %v916, %v1020
      %v1062 = vmul.f32 %v921, %v1020
      %v1063 = vmul.f32 %v924, %v1020
      %v1064 = vmul.f32 %v929, %v1020
      %v1065 = vmul.f32 %v932, %v1020
      %v1066 = vmul.f32 %v937, %v1020
      %v1067 = vmul.f32 %v940, %v1020
      %v1068 = vmul.f32 %v945, %v1020
      %v1069 = vmul.f32 %v948, %v1020
      %v1070 = vmul.f32 %v953, %v1020
      %v1071 = vmul.f32 %v956, %v1020
      %v1072 = vmul.f32 %v961, %v1020
      %v1073 = vmul.f32 %v964, %v1020
      %v1074 = vmul.f32 %v969, %v1020
      %v1075 = vmul.f32 %v972, %v1020
      %v1076 = vmul.f32 %v977, %v1020
      %v1077 = vmul.f32 %v980, %v1020
      %v1078 = vmul.f32 %v985, %v1020
      %v1079 = vmul.f32 %v988, %v1020
      %v1080 = vmul.f32 %v993, %v1020
      %v1081 = vmul.f32 %v996, %v1020
      %v1082 = vmul.f32 %v1001, %v1020
      %v1083 = vmul.f32 %v1004, %v1020
      %v1084 = vmul.f32 %v1009, %v1020
      %v1085 = vmul.f32 %v1012, %v1020
      %v1086 = vld [vmem:[%s3] sm:$0x1]
      %v1088 = vlaneseq
      %v1089 = vshrl.u32 %v1088, 7
      %v1090 = vsub.s32 0, %v1089
      %v1091 = vrot.slane %v1086, %v1090
      %v1093 = vadd.f32 %v1022, %v1091
      %v1094 = vadd.f32 %v1023, %v1091
      %v1095 = vadd.f32 %v1024, %v1091
      %v1096 = vadd.f32 %v1025, %v1091
      %v1097 = vadd.f32 %v1026, %v1091
      %v1098 = vadd.f32 %v1027, %v1091
      %v1099 = vadd.f32 %v1028, %v1091
      %v1100 = vadd.f32 %v1029, %v1091
      %v1101 = vadd.f32 %v1030, %v1091
      %v1102 = vadd.f32 %v1031, %v1091
      %v1103 = vadd.f32 %v1032, %v1091
      %v1104 = vadd.f32 %v1033, %v1091
      %v1105 = vadd.f32 %v1034, %v1091
      %v1106 = vadd.f32 %v1035, %v1091
      %v1107 = vadd.f32 %v1036, %v1091
      %v1108 = vadd.f32 %v1037, %v1091
      %v1109 = vadd.f32 %v1038, %v1091
      %v1110 = vadd.f32 %v1039, %v1091
      %v1111 = vadd.f32 %v1040, %v1091
      %v1112 = vadd.f32 %v1041, %v1091
      %v1113 = vadd.f32 %v1042, %v1091
      %v1114 = vadd.f32 %v1043, %v1091
      %v1115 = vadd.f32 %v1044, %v1091
      %v1116 = vadd.f32 %v1045, %v1091
      %v1117 = vadd.f32 %v1046, %v1091
      %v1118 = vadd.f32 %v1047, %v1091
      %v1119 = vadd.f32 %v1048, %v1091
      %v1120 = vadd.f32 %v1049, %v1091
      %v1121 = vadd.f32 %v1050, %v1091
      %v1122 = vadd.f32 %v1051, %v1091
      %v1123 = vadd.f32 %v1052, %v1091
      %v1124 = vadd.f32 %v1053, %v1091
      %v1125 = vadd.f32 %v1054, %v1091
      %v1126 = vadd.f32 %v1055, %v1091
      %v1127 = vadd.f32 %v1056, %v1091
      %v1128 = vadd.f32 %v1057, %v1091
      %v1129 = vadd.f32 %v1058, %v1091
      %v1130 = vadd.f32 %v1059, %v1091
      %v1131 = vadd.f32 %v1060, %v1091
      %v1132 = vadd.f32 %v1061, %v1091
      %v1133 = vadd.f32 %v1062, %v1091
      %v1134 = vadd.f32 %v1063, %v1091
      %v1135 = vadd.f32 %v1064, %v1091
      %v1136 = vadd.f32 %v1065, %v1091
      %v1137 = vadd.f32 %v1066, %v1091
      %v1138 = vadd.f32 %v1067, %v1091
      %v1139 = vadd.f32 %v1068, %v1091
      %v1140 = vadd.f32 %v1069, %v1091
      %v1141 = vadd.f32 %v1070, %v1091
      %v1142 = vadd.f32 %v1071, %v1091
      %v1143 = vadd.f32 %v1072, %v1091
      %v1144 = vadd.f32 %v1073, %v1091
      %v1145 = vadd.f32 %v1074, %v1091
      %v1146 = vadd.f32 %v1075, %v1091
      %v1147 = vadd.f32 %v1076, %v1091
      %v1148 = vadd.f32 %v1077, %v1091
      %v1149 = vadd.f32 %v1078, %v1091
      %v1150 = vadd.f32 %v1079, %v1091
      %v1151 = vadd.f32 %v1080, %v1091
      %v1152 = vadd.f32 %v1081, %v1091
      %v1153 = vadd.f32 %v1082, %v1091
      %v1154 = vadd.f32 %v1083, %v1091
      %v1155 = vadd.f32 %v1084, %v1091
      %v1156 = vadd.f32 %v1085, %v1091
      %v1157 = vmax.f32 %v1093, 0.0
      %v1158 = vmax.f32 %v1094, 0.0
      %v1159 = vmax.f32 %v1095, 0.0
      %v1160 = vmax.f32 %v1096, 0.0
      %v1161 = vmax.f32 %v1097, 0.0
      %v1162 = vmax.f32 %v1098, 0.0
      %v1163 = vmax.f32 %v1099, 0.0
      %v1164 = vmax.f32 %v1100, 0.0
      %v1165 = vmax.f32 %v1101, 0.0
      %v1166 = vmax.f32 %v1102, 0.0
      %v1167 = vmax.f32 %v1103, 0.0
      %v1168 = vmax.f32 %v1104, 0.0
      %v1169 = vmax.f32 %v1105, 0.0
      %v1170 = vmax.f32 %v1106, 0.0
      %v1171 = vmax.f32 %v1107, 0.0
      %v1172 = vmax.f32 %v1108, 0.0
      %v1173 = vmax.f32 %v1109, 0.0
      %v1174 = vmax.f32 %v1110, 0.0
      %v1175 = vmax.f32 %v1111, 0.0
      %v1176 = vmax.f32 %v1112, 0.0
      %v1177 = vmax.f32 %v1113, 0.0
      %v1178 = vmax.f32 %v1114, 0.0
      %v1179 = vmax.f32 %v1115, 0.0
      %v1180 = vmax.f32 %v1116, 0.0
      %v1181 = vmax.f32 %v1117, 0.0
      %v1182 = vmax.f32 %v1118, 0.0
      %v1183 = vmax.f32 %v1119, 0.0
      %v1184 = vmax.f32 %v1120, 0.0
      %v1185 = vmax.f32 %v1121, 0.0
      %v1186 = vmax.f32 %v1122, 0.0
      %v1187 = vmax.f32 %v1123, 0.0
      %v1188 = vmax.f32 %v1124, 0.0
      %v1189 = vmax.f32 %v1125, 0.0
      %v1190 = vmax.f32 %v1126, 0.0
      %v1191 = vmax.f32 %v1127, 0.0
      %v1192 = vmax.f32 %v1128, 0.0
      %v1193 = vmax.f32 %v1129, 0.0
      %v1194 = vmax.f32 %v1130, 0.0
      %v1195 = vmax.f32 %v1131, 0.0
      %v1196 = vmax.f32 %v1132, 0.0
      %v1197 = vmax.f32 %v1133, 0.0
      %v1198 = vmax.f32 %v1134, 0.0
      %v1199 = vmax.f32 %v1135, 0.0
      %v1200 = vmax.f32 %v1136, 0.0
      %v1201 = vmax.f32 %v1137, 0.0
      %v1202 = vmax.f32 %v1138, 0.0
      %v1203 = vmax.f32 %v1139, 0.0
      %v1204 = vmax.f32 %v1140, 0.0
      %v1205 = vmax.f32 %v1141, 0.0
      %v1206 = vmax.f32 %v1142, 0.0
      %v1207 = vmax.f32 %v1143, 0.0
      %v1208 = vmax.f32 %v1144, 0.0
      %v1209 = vmax.f32 %v1145, 0.0
      %v1210 = vmax.f32 %v1146, 0.0
      %v1211 = vmax.f32 %v1147, 0.0
      %v1212 = vmax.f32 %v1148, 0.0
      %v1213 = vmax.f32 %v1149, 0.0
      %v1214 = vmax.f32 %v1150, 0.0
      %v1215 = vmax.f32 %v1151, 0.0
      %v1216 = vmax.f32 %v1152, 0.0
      %v1217 = vmax.f32 %v1153, 0.0
      %v1218 = vmax.f32 %v1154, 0.0
      %v1219 = vmax.f32 %v1155, 0.0
      %v1220 = vmax.f32 %v1156, 0.0
      %v1221 = vpack.c.bf16 %v1158, %v1157
      %v1222 = vpack.c.bf16 %v1160, %v1159
      %v1223 = vpack.c.bf16 %v1162, %v1161
      %v1224 = vpack.c.bf16 %v1164, %v1163
      %v1225 = vpack.c.bf16 %v1166, %v1165
      %v1226 = vpack.c.bf16 %v1168, %v1167
      %v1227 = vpack.c.bf16 %v1170, %v1169
      %v1228 = vpack.c.bf16 %v1172, %v1171
      %v1229 = vpack.c.bf16 %v1174, %v1173
      %v1230 = vpack.c.bf16 %v1176, %v1175
      %v1231 = vpack.c.bf16 %v1178, %v1177
      %v1232 = vpack.c.bf16 %v1180, %v1179
      %v1233 = vpack.c.bf16 %v1182, %v1181
      %v1234 = vpack.c.bf16 %v1184, %v1183
      %v1235 = vpack.c.bf16 %v1186, %v1185
      %v1236 = vpack.c.bf16 %v1188, %v1187
      %v1237 = vpack.c.bf16 %v1190, %v1189
      %v1238 = vpack.c.bf16 %v1192, %v1191
      %v1239 = vpack.c.bf16 %v1194, %v1193
      %v1240 = vpack.c.bf16 %v1196, %v1195
      %v1241 = vpack.c.bf16 %v1198, %v1197
      %v1242 = vpack.c.bf16 %v1200, %v1199
      %v1243 = vpack.c.bf16 %v1202, %v1201
      %v1244 = vpack.c.bf16 %v1204, %v1203
      %v1245 = vpack.c.bf16 %v1206, %v1205
      %v1246 = vpack.c.bf16 %v1208, %v1207
      %v1247 = vpack.c.bf16 %v1210, %v1209
      %v1248 = vpack.c.bf16 %v1212, %v1211
      %v1249 = vpack.c.bf16 %v1214, %v1213
      %v1250 = vpack.c.bf16 %v1216, %v1215
      %v1251 = vpack.c.bf16 %v1218, %v1217
      %v1252 = vpack.c.bf16 %v1220, %v1219
      %v1285 = vunpack.c.l.b16 %v1221
      %v1286 = vunpack.c.h.b16 %v1221
      %v1287 = vunpack.c.l.b16 %v1222
      %v1288 = vunpack.c.h.b16 %v1222
      %v1289 = vunpack.c.l.b16 %v1223
      %v1290 = vunpack.c.h.b16 %v1223
      %v1291 = vunpack.c.l.b16 %v1224
      %v1292 = vunpack.c.h.b16 %v1224
      %v1293 = vunpack.c.l.b16 %v1225
      %v1294 = vunpack.c.h.b16 %v1225
      %v1295 = vunpack.c.l.b16 %v1226
      %v1296 = vunpack.c.h.b16 %v1226
      %v1297 = vunpack.c.l.b16 %v1227
      %v1298 = vunpack.c.h.b16 %v1227
      %v1299 = vunpack.c.l.b16 %v1228
      %v1300 = vunpack.c.h.b16 %v1228
      %v1301 = vunpack.c.l.b16 %v1229
      %v1302 = vunpack.c.h.b16 %v1229
      %v1303 = vunpack.c.l.b16 %v1230
      %v1304 = vunpack.c.h.b16 %v1230
      %v1305 = vunpack.c.l.b16 %v1231
      %v1306 = vunpack.c.h.b16 %v1231
      %v1307 = vunpack.c.l.b16 %v1232
      %v1308 = vunpack.c.h.b16 %v1232
      %v1309 = vunpack.c.l.b16 %v1233
      %v1310 = vunpack.c.h.b16 %v1233
      %v1311 = vunpack.c.l.b16 %v1234
      %v1312 = vunpack.c.h.b16 %v1234
      %v1313 = vunpack.c.l.b16 %v1235
      %v1314 = vunpack.c.h.b16 %v1235
      %v1315 = vunpack.c.l.b16 %v1236
      %v1316 = vunpack.c.h.b16 %v1236
      %v1317 = vunpack.c.l.b16 %v1237
      %v1318 = vunpack.c.h.b16 %v1237
      %v1319 = vunpack.c.l.b16 %v1238
      %v1320 = vunpack.c.h.b16 %v1238
      %v1321 = vunpack.c.l.b16 %v1239
      %v1322 = vunpack.c.h.b16 %v1239
      %v1323 = vunpack.c.l.b16 %v1240
      %v1324 = vunpack.c.h.b16 %v1240
      %v1325 = vunpack.c.l.b16 %v1241
      %v1326 = vunpack.c.h.b16 %v1241
      %v1327 = vunpack.c.l.b16 %v1242
      %v1328 = vunpack.c.h.b16 %v1242
      %v1329 = vunpack.c.l.b16 %v1243
      %v1330 = vunpack.c.h.b16 %v1243
      %v1331 = vunpack.c.l.b16 %v1244
      %v1332 = vunpack.c.h.b16 %v1244
      %v1333 = vunpack.c.l.b16 %v1245
      %v1334 = vunpack.c.h.b16 %v1245
      %v1335 = vunpack.c.l.b16 %v1246
      %v1336 = vunpack.c.h.b16 %v1246
      %v1337 = vunpack.c.l.b16 %v1247
      %v1338 = vunpack.c.h.b16 %v1247
      %v1339 = vunpack.c.l.b16 %v1248
      %v1340 = vunpack.c.h.b16 %v1248
      %v1341 = vunpack.c.l.b16 %v1249
      %v1342 = vunpack.c.h.b16 %v1249
      %v1343 = vunpack.c.l.b16 %v1250
      %v1344 = vunpack.c.h.b16 %v1250
      %v1345 = vunpack.c.l.b16 %v1251
      %v1346 = vunpack.c.h.b16 %v1251
      %v1347 = vunpack.c.l.b16 %v1252
      %v1348 = vunpack.c.h.b16 %v1252
      %v1349 = vpack.c.b16 %v1285, %v1285
      %v1350 = vpack.c.b16 %v1286, %v1286
      %v1351 = vpack.c.b16 %v1287, %v1287
      %v1352 = vpack.c.b16 %v1288, %v1288
      %v1353 = vpack.c.b16 %v1289, %v1289
      %v1354 = vpack.c.b16 %v1290, %v1290
      %v1355 = vpack.c.b16 %v1291, %v1291
      %v1356 = vpack.c.b16 %v1292, %v1292
      %v1357 = vpack.c.b16 %v1293, %v1293
      %v1358 = vpack.c.b16 %v1294, %v1294
      %v1359 = vpack.c.b16 %v1295, %v1295
      %v1360 = vpack.c.b16 %v1296, %v1296
      %v1361 = vpack.c.b16 %v1297, %v1297
      %v1362 = vpack.c.b16 %v1298, %v1298
      %v1363 = vpack.c.b16 %v1299, %v1299
      %v1364 = vpack.c.b16 %v1300, %v1300
      %v1365 = vpack.c.b16 %v1301, %v1301
      %v1366 = vpack.c.b16 %v1302, %v1302
      %v1367 = vpack.c.b16 %v1303, %v1303
      %v1368 = vpack.c.b16 %v1304, %v1304
      %v1369 = vpack.c.b16 %v1305, %v1305
      %v1370 = vpack.c.b16 %v1306, %v1306
      %v1371 = vpack.c.b16 %v1307, %v1307
      %v1372 = vpack.c.b16 %v1308, %v1308
      %v1373 = vpack.c.b16 %v1309, %v1309
      %v1374 = vpack.c.b16 %v1310, %v1310
      %v1375 = vpack.c.b16 %v1311, %v1311
      %v1376 = vpack.c.b16 %v1312, %v1312
      %v1377 = vpack.c.b16 %v1313, %v1313
      %v1378 = vpack.c.b16 %v1314, %v1314
      %v1379 = vpack.c.b16 %v1315, %v1315
      %v1380 = vpack.c.b16 %v1316, %v1316
      %v1381 = vpack.c.b16 %v1317, %v1317
      %v1382 = vpack.c.b16 %v1318, %v1318
      %v1383 = vpack.c.b16 %v1319, %v1319
      %v1384 = vpack.c.b16 %v1320, %v1320
      %v1385 = vpack.c.b16 %v1321, %v1321
      %v1386 = vpack.c.b16 %v1322, %v1322
      %v1387 = vpack.c.b16 %v1323, %v1323
      %v1388 = vpack.c.b16 %v1324, %v1324
      %v1389 = vpack.c.b16 %v1325, %v1325
      %v1390 = vpack.c.b16 %v1326, %v1326
      %v1391 = vpack.c.b16 %v1327, %v1327
      %v1392 = vpack.c.b16 %v1328, %v1328
      %v1393 = vpack.c.b16 %v1329, %v1329
      %v1394 = vpack.c.b16 %v1330, %v1330
      %v1395 = vpack.c.b16 %v1331, %v1331
      %v1396 = vpack.c.b16 %v1332, %v1332
      %v1397 = vpack.c.b16 %v1333, %v1333
      %v1398 = vpack.c.b16 %v1334, %v1334
      %v1399 = vpack.c.b16 %v1335, %v1335
      %v1400 = vpack.c.b16 %v1336, %v1336
      %v1401 = vpack.c.b16 %v1337, %v1337
      %v1402 = vpack.c.b16 %v1338, %v1338
      %v1403 = vpack.c.b16 %v1339, %v1339
      %v1404 = vpack.c.b16 %v1340, %v1340
      %v1405 = vpack.c.b16 %v1341, %v1341
      %v1406 = vpack.c.b16 %v1342, %v1342
      %v1407 = vpack.c.b16 %v1343, %v1343
      %v1408 = vpack.c.b16 %v1344, %v1344
      %v1409 = vpack.c.b16 %v1345, %v1345
      %v1410 = vpack.c.b16 %v1346, %v1346
      %v1411 = vpack.c.b16 %v1347, %v1347
      %v1412 = vpack.c.b16 %v1348, %v1348
      %vm1477 = vcmask 257024
      %1478 = vst.msk [vmem:[%s202] sm:$0xf] %vm1477, %v1349
      %1479 = vst.msk [vmem:[%s202 + $0x4] sm:$0xf] %vm1477, %v1350
      %1480 = vst.msk [vmem:[%s202 + $0x8] sm:$0xf] %vm1477, %v1351
      %1481 = vst.msk [vmem:[%s202 + $0xc] sm:$0xf] %vm1477, %v1352
      %1482 = vst.msk [vmem:[%s202 + $0x10] sm:$0xf] %vm1477, %v1353
      %1483 = vst.msk [vmem:[%s202 + $0x14] sm:$0xf] %vm1477, %v1354
      %1484 = vst.msk [vmem:[%s202 + $0x18] sm:$0xf] %vm1477, %v1355
      %1485 = vst.msk [vmem:[%s202 + $0x1c] sm:$0xf] %vm1477, %v1356
      %1486 = vst.msk [vmem:[%s202 + $0x20] sm:$0xf] %vm1477, %v1357
      %1487 = vst.msk [vmem:[%s202 + $0x24] sm:$0xf] %vm1477, %v1358
      %1488 = vst.msk [vmem:[%s202 + $0x28] sm:$0xf] %vm1477, %v1359
      %1489 = vst.msk [vmem:[%s202 + $0x2c] sm:$0xf] %vm1477, %v1360
      %1490 = vst.msk [vmem:[%s202 + $0x30] sm:$0xf] %vm1477, %v1361
      %1491 = vst.msk [vmem:[%s202 + $0x34] sm:$0xf] %vm1477, %v1362
      %1492 = vst.msk [vmem:[%s202 + $0x38] sm:$0xf] %vm1477, %v1363
      %1493 = vst.msk [vmem:[%s202 + $0x3c] sm:$0xf] %vm1477, %v1364
      %1494 = vst.msk [vmem:[%s202 + $0x40] sm:$0xf] %vm1477, %v1365
      %1495 = vst.msk [vmem:[%s202 + $0x44] sm:$0xf] %vm1477, %v1366
      %1496 = vst.msk [vmem:[%s202 + $0x48] sm:$0xf] %vm1477, %v1367
      %1497 = vst.msk [vmem:[%s202 + $0x4c] sm:$0xf] %vm1477, %v1368
      %1498 = vst.msk [vmem:[%s202 + $0x50] sm:$0xf] %vm1477, %v1369
      %1499 = vst.msk [vmem:[%s202 + $0x54] sm:$0xf] %vm1477, %v1370
      %1500 = vst.msk [vmem:[%s202 + $0x58] sm:$0xf] %vm1477, %v1371
      %1501 = vst.msk [vmem:[%s202 + $0x5c] sm:$0xf] %vm1477, %v1372
      %1502 = vst.msk [vmem:[%s202 + $0x60] sm:$0xf] %vm1477, %v1373
      %1503 = vst.msk [vmem:[%s202 + $0x64] sm:$0xf] %vm1477, %v1374
      %1504 = vst.msk [vmem:[%s202 + $0x68] sm:$0xf] %vm1477, %v1375
      %1505 = vst.msk [vmem:[%s202 + $0x6c] sm:$0xf] %vm1477, %v1376
      %1506 = vst.msk [vmem:[%s202 + $0x70] sm:$0xf] %vm1477, %v1377
      %1507 = vst.msk [vmem:[%s202 + $0x74] sm:$0xf] %vm1477, %v1378
      %1508 = vst.msk [vmem:[%s202 + $0x78] sm:$0xf] %vm1477, %v1379
      %1509 = vst.msk [vmem:[%s202 + $0x7c] sm:$0xf] %vm1477, %v1380
      %1510 = vst.msk [vmem:[%s202 + $0x80] sm:$0xf] %vm1477, %v1381
      %1511 = vst.msk [vmem:[%s202 + $0x84] sm:$0xf] %vm1477, %v1382
      %1512 = vst.msk [vmem:[%s202 + $0x88] sm:$0xf] %vm1477, %v1383
      %1513 = vst.msk [vmem:[%s202 + $0x8c] sm:$0xf] %vm1477, %v1384
      %1514 = vst.msk [vmem:[%s202 + $0x90] sm:$0xf] %vm1477, %v1385
      %1515 = vst.msk [vmem:[%s202 + $0x94] sm:$0xf] %vm1477, %v1386
      %1516 = vst.msk [vmem:[%s202 + $0x98] sm:$0xf] %vm1477, %v1387
      %1517 = vst.msk [vmem:[%s202 + $0x9c] sm:$0xf] %vm1477, %v1388
      %1518 = vst.msk [vmem:[%s202 + $0xa0] sm:$0xf] %vm1477, %v1389
      %1519 = vst.msk [vmem:[%s202 + $0xa4] sm:$0xf] %vm1477, %v1390
      %1520 = vst.msk [vmem:[%s202 + $0xa8] sm:$0xf] %vm1477, %v1391
      %1521 = vst.msk [vmem:[%s202 + $0xac] sm:$0xf] %vm1477, %v1392
      %1522 = vst.msk [vmem:[%s202 + $0xb0] sm:$0xf] %vm1477, %v1393
      %1523 = vst.msk [vmem:[%s202 + $0xb4] sm:$0xf] %vm1477, %v1394
      %1524 = vst.msk [vmem:[%s202 + $0xb8] sm:$0xf] %vm1477, %v1395
      %1525 = vst.msk [vmem:[%s202 + $0xbc] sm:$0xf] %vm1477, %v1396
      %1526 = vst.msk [vmem:[%s202 + $0xc0] sm:$0xf] %vm1477, %v1397
      %1527 = vst.msk [vmem:[%s202 + $0xc4] sm:$0xf] %vm1477, %v1398
      %1528 = vst.msk [vmem:[%s202 + $0xc8] sm:$0xf] %vm1477, %v1399
      %1529 = vst.msk [vmem:[%s202 + $0xcc] sm:$0xf] %vm1477, %v1400
      %1530 = vst.msk [vmem:[%s202 + $0xd0] sm:$0xf] %vm1477, %v1401
      %1531 = vst.msk [vmem:[%s202 + $0xd4] sm:$0xf] %vm1477, %v1402
      %1532 = vst.msk [vmem:[%s202 + $0xd8] sm:$0xf] %vm1477, %v1403
      %1533 = vst.msk [vmem:[%s202 + $0xdc] sm:$0xf] %vm1477, %v1404
      %1534 = vst.msk [vmem:[%s202 + $0xe0] sm:$0xf] %vm1477, %v1405
      %1535 = vst.msk [vmem:[%s202 + $0xe4] sm:$0xf] %vm1477, %v1406
      %1536 = vst.msk [vmem:[%s202 + $0xe8] sm:$0xf] %vm1477, %v1407
      %1537 = vst.msk [vmem:[%s202 + $0xec] sm:$0xf] %vm1477, %v1408
      %1538 = vst.msk [vmem:[%s202 + $0xf0] sm:$0xf] %vm1477, %v1409
      %1539 = vst.msk [vmem:[%s202 + $0xf4] sm:$0xf] %vm1477, %v1410
      %1540 = vst.msk [vmem:[%s202 + $0xf8] sm:$0xf] %vm1477, %v1411
      %1541 = vst.msk [vmem:[%s202 + $0xfc] sm:$0xf] %vm1477, %v1412
      %s1542 = smul.u32 64, %s15
      %p1543 = scmp.lt.s32.totalorder %s1542, 255
      %s1544 = scalar_select %p1543, %s1542, 255
      %s1545 = smul.addr %s1544, 4
      %s1546 = scalar_lea.vmem %s4, %s1545
      // Predicated region
      $region37: #{_lambda_.9} parent=35 // pred_check
        %p1547 = pneg %p122
      $region38: #{_lambda_.9} parent=35 // pred_check_branch
        %1549 = sbr.rel (%p1547) target = $region40
      $region39: #{_lambda_.9} parent=35 // pred_region
        %s1550 = smul.u32 64, %s15
      $region40: #{_lambda_.9} parent=35 // pred_fallthru
        _
    $region36: #{_lambda_.9} parent=5 // pred_fallthru
      _
    %p1551 = scmp.le.s32.totalorder 2, %s10
    // Predicated region
    $region41: #{_lambda_.9} parent=5 // pred_check
      %p1552 = pneg %p1551
    $region42: #{_lambda_.9} parent=5 // pred_check_branch
      %1554 = sbr.rel (%p1552) target = $region44
    $region43: #{_lambda_.9} parent=5 // pred_region
      %s1555 = ssub.s32 %s10, 2
      // Predicated region
      $region45: #{_lambda_.9} parent=43 // pred_check
        %p1556 = pneg %p128
      $region46: #{_lambda_.9} parent=43 // pred_check_branch
        %1558 = sbr.rel (%p1556) target = $region48
      $region47: #{_lambda_.9} parent=43 // pred_region
        %s1559 = smul.u32 64, %s16
        %p1560 = scmp.lt.s32.totalorder %s1559, 255
        %s1561 = scalar_select %p1560, %s1559, 255
        %s1562 = smul.addr %s1561, 4
        %s1563 = scalar_lea.vmem %s4, %s1562
      $region48: #{_lambda_.9} parent=43 // pred_fallthru
        _
    $region44: #{_lambda_.9} parent=5 // pred_fallthru
      _
  $region6: #{_lambda_.9} parent=0 // loop_footer
    %s14 = sadd.s32 1, %s10
  $region7: #{_lambda_.9} parent=0 // loop_footer_branch
    %9 = sbr.rel target = $region3
  $region8: #{_lambda_.9} parent=0 // loop_exit
    _

// kernel: _lambda_.10
$region0: #{_lambda_.10}
  #allocation0 [shape = 'u32[]', space=smem, size = 0x4, offset = 0x4, fixed_abs, tag = 'smem constant byte address 0x4 - core index']
  #allocation1 [shape = 'u32[144,128]{1,0:T(1,128)}', space=vmem, size = 0x12000, scoped, tag = 'internal scratch']
  %s0 = inlined_call_operand.vmem [shape: bf16[2048,288], index: 0, kind: input, shape index: {}]
  %s1 = inlined_call_operand.vmem [shape: bf16[288,32], index: 1, kind: input, shape index: {}]
  %s2 = inlined_call_operand.vmem [shape: bf16[2048,16], index: 2, kind: input, shape index: {}]
  %s3 = inlined_call_operand.vmem [shape: bf16[16,32], index: 3, kind: input, shape index: {}]
  %s4 = inlined_call_operand.vmem [shape: f32[2048,32], index: 4, kind: output, shape index: {}]
  %s5 = sld [smem:[#allocation0]]
  $region49: #{_lambda_.10} parent=0
    _
  %s7 = ssub.s32 1, %s5
  %s8 = scalar_select 0, %s7, %s5
  loop: start=0, step=1, limit=6
  $region2: #{_lambda_.10} parent=0 // loop_pre_header
    _
  $region3: #{_lambda_.10} parent=0 // loop_header
    %s10 = sphi 0, %s14
    %p11 = scmp.ge.s32.totalorder %s10, 6
    %s20 = sphi 0, %s22
    %s23 = sphi 0, %s20
    %s24 = sphi 0, %s23
    %s40 = sphi 0, %s24
    %s44 = sphi 0, %s44
    %s46 = sphi 0, %s44
    %s47 = sphi 0, %s46
    %s61 = sphi 0, %s47
    %s67 = sphi 0, %s69
    %s70 = sphi 0, %s67
    %s71 = sphi 0, %s70
    %s87 = sphi 0, %s71
    %s91 = sphi 0, %s91
    %s93 = sphi 0, %s91
    %s94 = sphi 0, %s93
    %s108 = sphi 0, %s94
    %s114 = sphi 0, %s116
    %s117 = sphi 0, %s114
    %s118 = sphi 0, %s117
    %s134 = sphi 0, %s118
  $region4: #{_lambda_.10} parent=0 // loop_header_branch
    %13 = sbr.rel (%p11) target = $region8
  $region5: #{_lambda_.10} parent=0 // loop_body
    %s15 = ssub.s32 %s10, 1
    %s16 = ssub.s32 %s10, 2
    %s17 = sadd.s32 %s10, 1
    %s18 = ssub.s32 %s10, %s17
    %p19 = scmp.eq.s32.totalorder %s18, 0
    %s21 = sadd.s32 %s20, 1
    %s22 = scalar_select %p19, %s20, %s21
    %p25 = pneg %p19
    %p26 = scmp.eq.s32.totalorder %s10, 3
    %p27 = por %p25, %p26
    %p28 = scmp.ne.s32.totalorder %s20, %s23
    %p29 = scmp.eq.s32.totalorder %s10, 0
    %p30 = por %p28, %p29
    %p31 = scmp.ne.s32.totalorder %s20, %s23
    %p32 = scmp.eq.s32.totalorder %s15, 3
    %p33 = por %p31, %p32
    %p34 = scmp.ne.s32.totalorder %s23, %s24
    %p35 = scmp.eq.s32.totalorder %s15, 0
    %p36 = por %p34, %p35
    %p37 = scmp.ne.s32.totalorder %s23, %s24
    %p38 = scmp.eq.s32.totalorder %s16, 3
    %p39 = por %p37, %p38
    %p41 = scmp.ne.s32.totalorder %s24, %s40
    %p42 = scmp.eq.s32.totalorder %s16, 0
    %p43 = por %p41, %p42
    %s45 = sadd.s32 %s44, 1
    %p48 = scmp.eq.s32.totalorder %s10, 3
    %p49 = scmp.ne.s32.totalorder %s44, %s46
    %p50 = scmp.eq.s32.totalorder %s10, 0
    %p51 = por %p49, %p50
    %p52 = scmp.ne.s32.totalorder %s44, %s46
    %p53 = scmp.eq.s32.totalorder %s15, 3
    %p54 = por %p52, %p53
    %p55 = scmp.ne.s32.totalorder %s46, %s47
    %p56 = scmp.eq.s32.totalorder %s15, 0
    %p57 = por %p55, %p56
    %p58 = scmp.ne.s32.totalorder %s46, %s47
    %p59 = scmp.eq.s32.totalorder %s16, 3
    %p60 = por %p58, %p59
    %p62 = scmp.ne.s32.totalorder %s47, %s61
    %p63 = scmp.eq.s32.totalorder %s16, 0
    %p64 = por %p62, %p63
    %s65 = ssub.s32 %s10, %s17
    %p66 = scmp.eq.s32.totalorder %s65, 0
    %s68 = sadd.s32 %s67, 1
    %s69 = scalar_select %p66, %s67, %s68
    %p72 = pneg %p66
    %p73 = scmp.eq.s32.totalorder %s10, 3
    %p74 = por %p72, %p73
    %p75 = scmp.ne.s32.totalorder %s67, %s70
    %p76 = scmp.eq.s32.totalorder %s10, 0
    %p77 = por %p75, %p76
    %p78 = scmp.ne.s32.totalorder %s67, %s70
    %p79 = scmp.eq.s32.totalorder %s15, 3
    %p80 = por %p78, %p79
    %p81 = scmp.ne.s32.totalorder %s70, %s71
    %p82 = scmp.eq.s32.totalorder %s15, 0
    %p83 = por %p81, %p82
    %p84 = scmp.ne.s32.totalorder %s70, %s71
    %p85 = scmp.eq.s32.totalorder %s16, 3
    %p86 = por %p84, %p85
    %p88 = scmp.ne.s32.totalorder %s71, %s87
    %p89 = scmp.eq.s32.totalorder %s16, 0
    %p90 = por %p88, %p89
    %s92 = sadd.s32 %s91, 1
    %p95 = scmp.eq.s32.totalorder %s10, 3
    %p96 = scmp.ne.s32.totalorder %s91, %s93
    %p97 = scmp.eq.s32.totalorder %s10, 0
    %p98 = por %p96, %p97
    %p99 = scmp.ne.s32.totalorder %s91, %s93
    %p100 = scmp.eq.s32.totalorder %s15, 3
    %p101 = por %p99, %p100
    %p102 = scmp.ne.s32.totalorder %s93, %s94
    %p103 = scmp.eq.s32.totalorder %s15, 0
    %p104 = por %p102, %p103
    %p105 = scmp.ne.s32.totalorder %s93, %s94
    %p106 = scmp.eq.s32.totalorder %s16, 3
    %p107 = por %p105, %p106
    %p109 = scmp.ne.s32.totalorder %s94, %s108
    %p110 = scmp.eq.s32.totalorder %s16, 0
    %p111 = por %p109, %p110
    %s112 = ssub.s32 %s10, %s17
    %p113 = scmp.eq.s32.totalorder %s112, 0
    %s115 = sadd.s32 %s114, 1
    %s116 = scalar_select %p113, %s114, %s115
    %p119 = pneg %p113
    %p120 = scmp.eq.s32.totalorder %s10, 3
    %p121 = por %p119, %p120
    %p122 = scmp.ne.s32.totalorder %s114, %s117
    %p123 = scmp.eq.s32.totalorder %s10, 0
    %p124 = por %p122, %p123
    %p125 = scmp.ne.s32.totalorder %s114, %s117
    %p126 = scmp.eq.s32.totalorder %s15, 3
    %p127 = por %p125, %p126
    %p128 = scmp.ne.s32.totalorder %s117, %s118
    %p129 = scmp.eq.s32.totalorder %s15, 0
    %p130 = por %p128, %p129
    %p131 = scmp.ne.s32.totalorder %s117, %s118
    %p132 = scmp.eq.s32.totalorder %s16, 3
    %p133 = por %p131, %p132
    %p135 = scmp.ne.s32.totalorder %s118, %s134
    %p136 = scmp.eq.s32.totalorder %s16, 0
    %p137 = por %p135, %p136
    %p138 = scmp.le.s32.totalorder 1, %s10
    %p139 = scmp.lt.s32.totalorder %s10, 5
    %p140 = pnand %p138, %p139
    %p141 = pneg %p140
    // Predicated region
    $region9: #{_lambda_.10} parent=5 // pred_check
      _
    $region10: #{_lambda_.10} parent=5 // pred_check_branch
      %143 = sbr.rel (%p140) target = $region12
    $region11: #{_lambda_.10} parent=5 // pred_region
      %s144 = ssub.s32 %s10, 1
      // Predicated region
      $region13: #{_lambda_.10} parent=11 // pred_check
        %p145 = pneg %p57
      $region14: #{_lambda_.10} parent=11 // pred_check_branch
        %147 = sbr.rel (%p145) target = $region16
      $region15: #{_lambda_.10} parent=11 // pred_region
        _
      $region16: #{_lambda_.10} parent=11 // pred_fallthru
        _
      // Predicated region
      $region17: #{_lambda_.10} parent=11 // pred_check
        %p148 = pneg %p104
      $region18: #{_lambda_.10} parent=11 // pred_check_branch
        %150 = sbr.rel (%p148) target = $region20
      $region19: #{_lambda_.10} parent=11 // pred_region
        _
      $region20: #{_lambda_.10} parent=11 // pred_fallthru
        _
    $region12: #{_lambda_.10} parent=5 // pred_fallthru
      _
    %p151 = scmp.lt.s32.totalorder %s10, 4
    // Predicated region
    $region21: #{_lambda_.10} parent=5 // pred_check
      %p152 = pneg %p151
    $region22: #{_lambda_.10} parent=5 // pred_check_branch
      %154 = sbr.rel (%p152) target = $region24
    $region23: #{_lambda_.10} parent=5 // pred_region
      // Predicated region
      $region25: #{_lambda_.10} parent=23 // pred_check
        %p155 = pneg %p30
      $region26: #{_lambda_.10} parent=23 // pred_check_branch
        %157 = sbr.rel (%p155) target = $region28
      $region27: #{_lambda_.10} parent=23 // pred_region
        %s158 = smul.u32 64, %s10
        %p159 = scmp.lt.s32.totalorder %s158, 255
        %s160 = scalar_select %p159, %s158, 255
        %s161 = smul.addr %s160, 3
        %s162 = smul.addr %s161, 4
        %s163 = scalar_lea.vmem %s0, %s162
        %s164 = smul.u32 64, %s10
      $region28: #{_lambda_.10} parent=23 // pred_fallthru
        _
      // Predicated region
      $region29: #{_lambda_.10} parent=23 // pred_check
        %p165 = pneg %p77
      $region30: #{_lambda_.10} parent=23 // pred_check_branch
        %167 = sbr.rel (%p165) target = $region32
      $region31: #{_lambda_.10} parent=23 // pred_region
        %s168 = smul.u32 64, %s10
        %p169 = scmp.lt.s32.totalorder %s168, 255
        %s170 = scalar_select %p169, %s168, 255
        %s171 = smul.addr %s170, 4
        %s172 = scalar_lea.vmem %s2, %s171
        %s173 = smul.u32 64, %s10
      $region32: #{_lambda_.10} parent=23 // pred_fallthru
        _
    $region24: #{_lambda_.10} parent=5 // pred_fallthru
      _
    %p174 = scmp.le.s32.totalorder 1, %s10
    %p175 = scmp.lt.s32.totalorder %s10, 5
    %p176 = pnand %p174, %p175
    %p177 = pneg %p176
    // Predicated region
    $region33: #{_lambda_.10} parent=5 // pred_check
      _
    $region34: #{_lambda_.10} parent=5 // pred_check_branch
      %179 = sbr.rel (%p176) target = $region36
    $region35: #{_lambda_.10} parent=5 // pred_region
      %s180 = ssub.s32 %s10, 1
      %s181 = smul.u32 64, %s15
      %p182 = scmp.lt.s32.totalorder %s181, 255
      %s183 = scalar_select %p182, %s181, 255
      %s184 = smul.addr %s183, 3
      %s185 = smul.addr %s184, 4
      %s186 = scalar_lea.vmem %s0, %s185
      %p187 = pneg %p36
      %p188 = pneg %p33
      %p189 = pneg %p57
      %p190 = pneg %p54
      %s191 = smul.u32 64, %s15
      %p192 = scmp.lt.s32.totalorder %s191, 255
      %s193 = scalar_select %p192, %s191, 255
      %s194 = smul.addr %s193, 4
      %s195 = scalar_lea.vmem %s2, %s194
      %p196 = pneg %p83
      %p197 = pneg %p80
      %p198 = pneg %p104
      %p199 = pneg %p101
      %p200 = pneg %p130
      %p201 = pneg %p127
      %s202 = smul.u32 64, %s15
      %p203 = scmp.lt.s32.totalorder %s202, 255
      %s204 = scalar_select %p203, %s202, 255
      %s205 = smul.addr %s204, 8
      %s206 = scalar_lea.vmem %s4, %s205
      %s207 = smul.u32 64, %s15
      %p208 = scmp.lt.s32.totalorder %s207, 255
      %s209 = scalar_select %p208, %s207, 255
      %s210 = smul.addr %s209, 3
      %s211 = smul.addr %s210, 4
      %s212 = scalar_lea.vmem %s0, %s211
      %s213 = smul.u32 64, %s15
      %s214 = smul.u32 64, %s15
      %p215 = scmp.lt.s32.totalorder %s214, 255
      %s216 = scalar_select %p215, %s214, 255
      %s217 = smul.addr %s216, 4
      %s218 = scalar_lea.vmem %s2, %s217
      %s219 = smul.u32 64, %s15
      %s220 = smul.u32 64, %s15
      %p221 = scmp.lt.s32.totalorder %s220, 255
      %s222 = scalar_select %p221, %s220, 255
      %s223 = smul.addr %s222, 8
      %s224 = scalar_lea.vmem %s4, %s223
      %s225 = smul.u32 64, %s15
      %v227 = vld [vmem:[%s212] sm:$0xff]
      %v228 = vld [vmem:[%s212 + $0x8] sm:$0xf]
      %v229 = vld [vmem:[%s212 + $0xc] sm:$0xff]
      %v230 = vld [vmem:[%s212 + $0x14] sm:$0xf]
      %v231 = vld [vmem:[%s212 + $0x18] sm:$0xff]
      %v232 = vld [vmem:[%s212 + $0x20] sm:$0xf]
      %v233 = vld [vmem:[%s212 + $0x24] sm:$0xff]
      %v234 = vld [vmem:[%s212 + $0x2c] sm:$0xf]
      %v235 = vld [vmem:[%s212 + $0x30] sm:$0xff]
      %v236 = vld [vmem:[%s212 + $0x38] sm:$0xf]
      %v237 = vld [vmem:[%s212 + $0x3c] sm:$0xff]
      %v238 = vld [vmem:[%s212 + $0x44] sm:$0xf]
      %v239 = vld [vmem:[%s212 + $0x48] sm:$0xff]
      %v240 = vld [vmem:[%s212 + $0x50] sm:$0xf]
      %v241 = vld [vmem:[%s212 + $0x54] sm:$0xff]
      %v242 = vld [vmem:[%s212 + $0x5c] sm:$0xf]
      %v243 = vld [vmem:[%s212 + $0x60] sm:$0xff]
      %v244 = vld [vmem:[%s212 + $0x68] sm:$0xf]
      %v245 = vld [vmem:[%s212 + $0x6c] sm:$0xff]
      %v246 = vld [vmem:[%s212 + $0x74] sm:$0xf]
      %v247 = vld [vmem:[%s212 + $0x78] sm:$0xff]
      %v248 = vld [vmem:[%s212 + $0x80] sm:$0xf]
      %v249 = vld [vmem:[%s212 + $0x84] sm:$0xff]
      %v250 = vld [vmem:[%s212 + $0x8c] sm:$0xf]
      %v251 = vld [vmem:[%s212 + $0x90] sm:$0xff]
      %v252 = vld [vmem:[%s212 + $0x98] sm:$0xf]
      %v253 = vld [vmem:[%s212 + $0x9c] sm:$0xff]
      %v254 = vld [vmem:[%s212 + $0xa4] sm:$0xf]
      %v255 = vld [vmem:[%s212 + $0xa8] sm:$0xff]
      %v256 = vld [vmem:[%s212 + $0xb0] sm:$0xf]
      %v257 = vld [vmem:[%s212 + $0xb4] sm:$0xff]
      %v258 = vld [vmem:[%s212 + $0xbc] sm:$0xf]
      %v259 = vld [vmem:[%s212 + $0xc0] sm:$0xff]
      %v260 = vld [vmem:[%s212 + $0xc8] sm:$0xf]
      %v261 = vld [vmem:[%s212 + $0xcc] sm:$0xff]
      %v262 = vld [vmem:[%s212 + $0xd4] sm:$0xf]
      %v263 = vld [vmem:[%s212 + $0xd8] sm:$0xff]
      %v264 = vld [vmem:[%s212 + $0xe0] sm:$0xf]
      %v265 = vld [vmem:[%s212 + $0xe4] sm:$0xff]
      %v266 = vld [vmem:[%s212 + $0xec] sm:$0xf]
      %v267 = vld [vmem:[%s212 + $0xf0] sm:$0xff]
      %v268 = vld [vmem:[%s212 + $0xf8] sm:$0xf]
      %v269 = vld [vmem:[%s212 + $0xfc] sm:$0xff]
      %v270 = vld [vmem:[%s212 + $0x104] sm:$0xf]
      %v271 = vld [vmem:[%s212 + $0x108] sm:$0xff]
      %v272 = vld [vmem:[%s212 + $0x110] sm:$0xf]
      %v273 = vld [vmem:[%s212 + $0x114] sm:$0xff]
      %v274 = vld [vmem:[%s212 + $0x11c] sm:$0xf]
      %v275 = vld [vmem:[%s212 + $0x120] sm:$0xff]
      %v276 = vld [vmem:[%s212 + $0x128] sm:$0xf]
      %v277 = vld [vmem:[%s212 + $0x12c] sm:$0xff]
      %v278 = vld [vmem:[%s212 + $0x134] sm:$0xf]
      %v279 = vld [vmem:[%s212 + $0x138] sm:$0xff]
      %v280 = vld [vmem:[%s212 + $0x140] sm:$0xf]
      %v281 = vld [vmem:[%s212 + $0x144] sm:$0xff]
      %v282 = vld [vmem:[%s212 + $0x14c] sm:$0xf]
      %v283 = vld [vmem:[%s212 + $0x150] sm:$0xff]
      %v284 = vld [vmem:[%s212 + $0x158] sm:$0xf]
      %v285 = vld [vmem:[%s212 + $0x15c] sm:$0xff]
      %v286 = vld [vmem:[%s212 + $0x164] sm:$0xf]
      %v287 = vld [vmem:[%s212 + $0x168] sm:$0xff]
      %v288 = vld [vmem:[%s212 + $0x170] sm:$0xf]
      %v289 = vld [vmem:[%s212 + $0x174] sm:$0xff]
      %v290 = vld [vmem:[%s212 + $0x17c] sm:$0xf]
      %v291 = vld [vmem:[%s212 + $0x180] sm:$0xff]
      %v292 = vld [vmem:[%s212 + $0x188] sm:$0xf]
      %v293 = vld [vmem:[%s212 + $0x18c] sm:$0xff]
      %v294 = vld [vmem:[%s212 + $0x194] sm:$0xf]
      %v295 = vld [vmem:[%s212 + $0x198] sm:$0xff]
      %v296 = vld [vmem:[%s212 + $0x1a0] sm:$0xf]
      %v297 = vld [vmem:[%s212 + $0x1a4] sm:$0xff]
      %v298 = vld [vmem:[%s212 + $0x1ac] sm:$0xf]
      %v299 = vld [vmem:[%s212 + $0x1b0] sm:$0xff]
      %v300 = vld [vmem:[%s212 + $0x1b8] sm:$0xf]
      %v301 = vld [vmem:[%s212 + $0x1bc] sm:$0xff]
      %v302 = vld [vmem:[%s212 + $0x1c4] sm:$0xf]
      %v303 = vld [vmem:[%s212 + $0x1c8] sm:$0xff]
      %v304 = vld [vmem:[%s212 + $0x1d0] sm:$0xf]
      %v305 = vld [vmem:[%s212 + $0x1d4] sm:$0xff]
      %v306 = vld [vmem:[%s212 + $0x1dc] sm:$0xf]
      %v307 = vld [vmem:[%s212 + $0x1e0] sm:$0xff]
      %v308 = vld [vmem:[%s212 + $0x1e8] sm:$0xf]
      %v309 = vld [vmem:[%s212 + $0x1ec] sm:$0xff]
      %v310 = vld [vmem:[%s212 + $0x1f4] sm:$0xf]
      %v311 = vld [vmem:[%s212 + $0x1f8] sm:$0xff]
      %v312 = vld [vmem:[%s212 + $0x200] sm:$0xf]
      %v313 = vld [vmem:[%s212 + $0x204] sm:$0xff]
      %v314 = vld [vmem:[%s212 + $0x20c] sm:$0xf]
      %v315 = vld [vmem:[%s212 + $0x210] sm:$0xff]
      %v316 = vld [vmem:[%s212 + $0x218] sm:$0xf]
      %v317 = vld [vmem:[%s212 + $0x21c] sm:$0xff]
      %v318 = vld [vmem:[%s212 + $0x224] sm:$0xf]
      %v319 = vld [vmem:[%s212 + $0x228] sm:$0xff]
      %v320 = vld [vmem:[%s212 + $0x230] sm:$0xf]
      %v321 = vld [vmem:[%s212 + $0x234] sm:$0xff]
      %v322 = vld [vmem:[%s212 + $0x23c] sm:$0xf]
      %v323 = vld [vmem:[%s212 + $0x240] sm:$0xff]
      %v324 = vld [vmem:[%s212 + $0x248] sm:$0xf]
      %v325 = vld [vmem:[%s212 + $0x24c] sm:$0xff]
      %v326 = vld [vmem:[%s212 + $0x254] sm:$0xf]
      %v327 = vld [vmem:[%s212 + $0x258] sm:$0xff]
      %v328 = vld [vmem:[%s212 + $0x260] sm:$0xf]
      %v329 = vld [vmem:[%s212 + $0x264] sm:$0xff]
      %v330 = vld [vmem:[%s212 + $0x26c] sm:$0xf]
      %v331 = vld [vmem:[%s212 + $0x270] sm:$0xff]
      %v332 = vld [vmem:[%s212 + $0x278] sm:$0xf]
      %v333 = vld [vmem:[%s212 + $0x27c] sm:$0xff]
      %v334 = vld [vmem:[%s212 + $0x284] sm:$0xf]
      %v335 = vld [vmem:[%s212 + $0x288] sm:$0xff]
      %v336 = vld [vmem:[%s212 + $0x290] sm:$0xf]
      %v337 = vld [vmem:[%s212 + $0x294] sm:$0xff]
      %v338 = vld [vmem:[%s212 + $0x29c] sm:$0xf]
      %v339 = vld [vmem:[%s212 + $0x2a0] sm:$0xff]
      %v340 = vld [vmem:[%s212 + $0x2a8] sm:$0xf]
      %v341 = vld [vmem:[%s212 + $0x2ac] sm:$0xff]
      %v342 = vld [vmem:[%s212 + $0x2b4] sm:$0xf]
      %v343 = vld [vmem:[%s212 + $0x2b8] sm:$0xff]
      %v344 = vld [vmem:[%s212 + $0x2c0] sm:$0xf]
      %v345 = vld [vmem:[%s212 + $0x2c4] sm:$0xff]
      %v346 = vld [vmem:[%s212 + $0x2cc] sm:$0xf]
      %v347 = vld [vmem:[%s212 + $0x2d0] sm:$0xff]
      %v348 = vld [vmem:[%s212 + $0x2d8] sm:$0xf]
      %v349 = vld [vmem:[%s212 + $0x2dc] sm:$0xff]
      %v350 = vld [vmem:[%s212 + $0x2e4] sm:$0xf]
      %v351 = vld [vmem:[%s212 + $0x2e8] sm:$0xff]
      %v352 = vld [vmem:[%s212 + $0x2f0] sm:$0xf]
      %v353 = vld [vmem:[%s212 + $0x2f4] sm:$0xff]
      %v354 = vld [vmem:[%s212 + $0x2fc] sm:$0xf]
      %v355 = vld [vmem:[%s1] sm:$0xf]
      %v356 = vld [vmem:[%s1 + $0x4] sm:$0xf]
      %v357 = vld [vmem:[%s1 + $0x8] sm:$0xf]
      %v358 = vld [vmem:[%s1 + $0xc] sm:$0xf]
      %v359 = vld [vmem:[%s1 + $0x10] sm:$0xf]
      %v360 = vld [vmem:[%s1 + $0x14] sm:$0xf]
      %v361 = vld [vmem:[%s1 + $0x18] sm:$0xf]
      %v362 = vld [vmem:[%s1 + $0x1c] sm:$0xf]
      %v363 = vld [vmem:[%s1 + $0x20] sm:$0xf]
      %v364 = vld [vmem:[%s1 + $0x24] sm:$0xf]
      %v365 = vld [vmem:[%s1 + $0x28] sm:$0xf]
      %v366 = vld [vmem:[%s1 + $0x2c] sm:$0xf]
      %v367 = vld [vmem:[%s1 + $0x30] sm:$0xf]
      %v368 = vld [vmem:[%s1 + $0x34] sm:$0xf]
      %v369 = vld [vmem:[%s1 + $0x38] sm:$0xf]
      %v370 = vld [vmem:[%s1 + $0x3c] sm:$0xf]
      %v371 = vld [vmem:[%s1 + $0x40] sm:$0xf]
      %v372 = vld [vmem:[%s1 + $0x44] sm:$0xf]
      %v373 = vld [vmem:[%s1 + $0x48] sm:$0xf]
      %v374 = vld [vmem:[%s1 + $0x4c] sm:$0xf]
      %v375 = vld [vmem:[%s1 + $0x50] sm:$0xf]
      %v376 = vld [vmem:[%s1 + $0x54] sm:$0xf]
      %v377 = vld [vmem:[%s1 + $0x58] sm:$0xf]
      %v378 = vld [vmem:[%s1 + $0x5c] sm:$0xf]
      %v379 = vld [vmem:[%s1 + $0x60] sm:$0xf]
      %v380 = vld [vmem:[%s1 + $0x64] sm:$0xf]
      %v381 = vld [vmem:[%s1 + $0x68] sm:$0xf]
      %v382 = vld [vmem:[%s1 + $0x6c] sm:$0xf]
      %v383 = vld [vmem:[%s1 + $0x70] sm:$0xf]
      %v384 = vld [vmem:[%s1 + $0x74] sm:$0xf]
      %v385 = vld [vmem:[%s1 + $0x78] sm:$0xf]
      %v386 = vld [vmem:[%s1 + $0x7c] sm:$0xf]
      %v387 = vld [vmem:[%s1 + $0x80] sm:$0xf]
      %v388 = vld [vmem:[%s1 + $0x84] sm:$0xf]
      %v389 = vld [vmem:[%s1 + $0x88] sm:$0xf]
      %v390 = vld [vmem:[%s1 + $0x8c] sm:$0xf]
      %v391 = vld [vmem:[%s218] sm:$0xf]
      %v392 = vld [vmem:[%s218 + $0x4] sm:$0xf]
      %v393 = vld [vmem:[%s218 + $0x8] sm:$0xf]
      %v394 = vld [vmem:[%s218 + $0xc] sm:$0xf]
      %v395 = vld [vmem:[%s218 + $0x10] sm:$0xf]
      %v396 = vld [vmem:[%s218 + $0x14] sm:$0xf]
      %v397 = vld [vmem:[%s218 + $0x18] sm:$0xf]
      %v398 = vld [vmem:[%s218 + $0x1c] sm:$0xf]
      %v399 = vld [vmem:[%s218 + $0x20] sm:$0xf]
      %v400 = vld [vmem:[%s218 + $0x24] sm:$0xf]
      %v401 = vld [vmem:[%s218 + $0x28] sm:$0xf]
      %v402 = vld [vmem:[%s218 + $0x2c] sm:$0xf]
      %v403 = vld [vmem:[%s218 + $0x30] sm:$0xf]
      %v404 = vld [vmem:[%s218 + $0x34] sm:$0xf]
      %v405 = vld [vmem:[%s218 + $0x38] sm:$0xf]
      %v406 = vld [vmem:[%s218 + $0x3c] sm:$0xf]
      %v407 = vld [vmem:[%s218 + $0x40] sm:$0xf]
      %v408 = vld [vmem:[%s218 + $0x44] sm:$0xf]
      %v409 = vld [vmem:[%s218 + $0x48] sm:$0xf]
      %v410 = vld [vmem:[%s218 + $0x4c] sm:$0xf]
      %v411 = vld [vmem:[%s218 + $0x50] sm:$0xf]
      %v412 = vld [vmem:[%s218 + $0x54] sm:$0xf]
      %v413 = vld [vmem:[%s218 + $0x58] sm:$0xf]
      %v414 = vld [vmem:[%s218 + $0x5c] sm:$0xf]
      %v415 = vld [vmem:[%s218 + $0x60] sm:$0xf]
      %v416 = vld [vmem:[%s218 + $0x64] sm:$0xf]
      %v417 = vld [vmem:[%s218 + $0x68] sm:$0xf]
      %v418 = vld [vmem:[%s218 + $0x6c] sm:$0xf]
      %v419 = vld [vmem:[%s218 + $0x70] sm:$0xf]
      %v420 = vld [vmem:[%s218 + $0x74] sm:$0xf]
      %v421 = vld [vmem:[%s218 + $0x78] sm:$0xf]
      %v422 = vld [vmem:[%s218 + $0x7c] sm:$0xf]
      %v423 = vld [vmem:[%s218 + $0x80] sm:$0xf]
      %v424 = vld [vmem:[%s218 + $0x84] sm:$0xf]
      %v425 = vld [vmem:[%s218 + $0x88] sm:$0xf]
      %v426 = vld [vmem:[%s218 + $0x8c] sm:$0xf]
      %v427 = vld [vmem:[%s218 + $0x90] sm:$0xf]
      %v428 = vld [vmem:[%s218 + $0x94] sm:$0xf]
      %v429 = vld [vmem:[%s218 + $0x98] sm:$0xf]
      %v430 = vld [vmem:[%s218 + $0x9c] sm:$0xf]
      %v431 = vld [vmem:[%s218 + $0xa0] sm:$0xf]
      %v432 = vld [vmem:[%s218 + $0xa4] sm:$0xf]
      %v433 = vld [vmem:[%s218 + $0xa8] sm:$0xf]
      %v434 = vld [vmem:[%s218 + $0xac] sm:$0xf]
      %v435 = vld [vmem:[%s218 + $0xb0] sm:$0xf]
      %v436 = vld [vmem:[%s218 + $0xb4] sm:$0xf]
      %v437 = vld [vmem:[%s218 + $0xb8] sm:$0xf]
      %v438 = vld [vmem:[%s218 + $0xbc] sm:$0xf]
      %v439 = vld [vmem:[%s218 + $0xc0] sm:$0xf]
      %v440 = vld [vmem:[%s218 + $0xc4] sm:$0xf]
      %v441 = vld [vmem:[%s218 + $0xc8] sm:$0xf]
      %v442 = vld [vmem:[%s218 + $0xcc] sm:$0xf]
      %v443 = vld [vmem:[%s218 + $0xd0] sm:$0xf]
      %v444 = vld [vmem:[%s218 + $0xd4] sm:$0xf]
      %v445 = vld [vmem:[%s218 + $0xd8] sm:$0xf]
      %v446 = vld [vmem:[%s218 + $0xdc] sm:$0xf]
      %v447 = vld [vmem:[%s218 + $0xe0] sm:$0xf]
      %v448 = vld [vmem:[%s218 + $0xe4] sm:$0xf]
      %v449 = vld [vmem:[%s218 + $0xe8] sm:$0xf]
      %v450 = vld [vmem:[%s218 + $0xec] sm:$0xf]
      %v451 = vld [vmem:[%s218 + $0xf0] sm:$0xf]
      %v452 = vld [vmem:[%s218 + $0xf4] sm:$0xf]
      %v453 = vld [vmem:[%s218 + $0xf8] sm:$0xf]
      %v454 = vld [vmem:[%s218 + $0xfc] sm:$0xf]
      %v455 = vld [vmem:[%s3] sm:$0xf]
      %v456 = vld [vmem:[%s3 + $0x4] sm:$0xf]
      %v521 = vunpack.c.l.b16 %v391
      %v522 = vunpack.c.l.b16 %v392
      %v523 = vunpack.c.l.b16 %v393
      %v524 = vunpack.c.l.b16 %v394
      %v525 = vunpack.c.l.b16 %v395
      %v526 = vunpack.c.l.b16 %v396
      %v527 = vunpack.c.l.b16 %v397
      %v528 = vunpack.c.l.b16 %v398
      %v529 = vunpack.c.l.b16 %v399
      %v530 = vunpack.c.l.b16 %v400
      %v531 = vunpack.c.l.b16 %v401
      %v532 = vunpack.c.l.b16 %v402
      %v533 = vunpack.c.l.b16 %v403
      %v534 = vunpack.c.l.b16 %v404
      %v535 = vunpack.c.l.b16 %v405
      %v536 = vunpack.c.l.b16 %v406
      %v537 = vunpack.c.l.b16 %v407
      %v538 = vunpack.c.l.b16 %v408
      %v539 = vunpack.c.l.b16 %v409
      %v540 = vunpack.c.l.b16 %v410
      %v541 = vunpack.c.l.b16 %v411
      %v542 = vunpack.c.l.b16 %v412
      %v543 = vunpack.c.l.b16 %v413
      %v544 = vunpack.c.l.b16 %v414
      %v545 = vunpack.c.l.b16 %v415
      %v546 = vunpack.c.l.b16 %v416
      %v547 = vunpack.c.l.b16 %v417
      %v548 = vunpack.c.l.b16 %v418
      %v549 = vunpack.c.l.b16 %v419
      %v550 = vunpack.c.l.b16 %v420
      %v551 = vunpack.c.l.b16 %v421
      %v552 = vunpack.c.l.b16 %v422
      %v553 = vunpack.c.l.b16 %v423
      %v554 = vunpack.c.l.b16 %v424
      %v555 = vunpack.c.l.b16 %v425
      %v556 = vunpack.c.l.b16 %v426
      %v557 = vunpack.c.l.b16 %v427
      %v558 = vunpack.c.l.b16 %v428
      %v559 = vunpack.c.l.b16 %v429
      %v560 = vunpack.c.l.b16 %v430
      %v561 = vunpack.c.l.b16 %v431
      %v562 = vunpack.c.l.b16 %v432
      %v563 = vunpack.c.l.b16 %v433
      %v564 = vunpack.c.l.b16 %v434
      %v565 = vunpack.c.l.b16 %v435
      %v566 = vunpack.c.l.b16 %v436
      %v567 = vunpack.c.l.b16 %v437
      %v568 = vunpack.c.l.b16 %v438
      %v569 = vunpack.c.l.b16 %v439
      %v570 = vunpack.c.l.b16 %v440
      %v571 = vunpack.c.l.b16 %v441
      %v572 = vunpack.c.l.b16 %v442
      %v573 = vunpack.c.l.b16 %v443
      %v574 = vunpack.c.l.b16 %v444
      %v575 = vunpack.c.l.b16 %v445
      %v576 = vunpack.c.l.b16 %v446
      %v577 = vunpack.c.l.b16 %v447
      %v578 = vunpack.c.l.b16 %v448
      %v579 = vunpack.c.l.b16 %v449
      %v580 = vunpack.c.l.b16 %v450
      %v581 = vunpack.c.l.b16 %v451
      %v582 = vunpack.c.l.b16 %v452
      %v583 = vunpack.c.l.b16 %v453
      %v584 = vunpack.c.l.b16 %v454
      %v585 = vpack.c.b16 %v522, %v521
      %v586 = vpack.c.b16 %v524, %v523
      %v587 = vpack.c.b16 %v526, %v525
      %v588 = vpack.c.b16 %v528, %v527
      %v589 = vpack.c.b16 %v530, %v529
      %v590 = vpack.c.b16 %v532, %v531
      %v591 = vpack.c.b16 %v534, %v533
      %v592 = vpack.c.b16 %v536, %v535
      %v593 = vpack.c.b16 %v538, %v537
      %v594 = vpack.c.b16 %v540, %v539
      %v595 = vpack.c.b16 %v542, %v541
      %v596 = vpack.c.b16 %v544, %v543
      %v597 = vpack.c.b16 %v546, %v545
      %v598 = vpack.c.b16 %v548, %v547
      %v599 = vpack.c.b16 %v550, %v549
      %v600 = vpack.c.b16 %v552, %v551
      %v601 = vpack.c.b16 %v554, %v553
      %v602 = vpack.c.b16 %v556, %v555
      %v603 = vpack.c.b16 %v558, %v557
      %v604 = vpack.c.b16 %v560, %v559
      %v605 = vpack.c.b16 %v562, %v561
      %v606 = vpack.c.b16 %v564, %v563
      %v607 = vpack.c.b16 %v566, %v565
      %v608 = vpack.c.b16 %v568, %v567
      %v609 = vpack.c.b16 %v570, %v569
      %v610 = vpack.c.b16 %v572, %v571
      %v611 = vpack.c.b16 %v574, %v573
      %v612 = vpack.c.b16 %v576, %v575
      %v613 = vpack.c.b16 %v578, %v577
      %v614 = vpack.c.b16 %v580, %v579
      %v615 = vpack.c.b16 %v582, %v581
      %v616 = vpack.c.b16 %v584, %v583
      %v619 = vunpack.c.l.b16 %v455
      %v620 = vunpack.c.l.b16 %v456
      %v621 = vpack.c.b16 %v620, %v619
      %vm623 = vcmask 130048
      %v625 = vsel %vm623, %v585, 0
      %v628 = vsel %vm623, %v586, 0
      %v631 = vsel %vm623, %v587, 0
      %v634 = vsel %vm623, %v588, 0
      %v637 = vsel %vm623, %v589, 0
      %v640 = vsel %vm623, %v590, 0
      %v643 = vsel %vm623, %v591, 0
      %v646 = vsel %vm623, %v592, 0
      %v649 = vsel %vm623, %v593, 0
      %v652 = vsel %vm623, %v594, 0
      %v655 = vsel %vm623, %v595, 0
      %v658 = vsel %vm623, %v596, 0
      %v661 = vsel %vm623, %v597, 0
      %v664 = vsel %vm623, %v598, 0
      %v667 = vsel %vm623, %v599, 0
      %v670 = vsel %vm623, %v600, 0
      %v673 = vsel %vm623, %v601, 0
      %v676 = vsel %vm623, %v602, 0
      %v679 = vsel %vm623, %v603, 0
      %v682 = vsel %vm623, %v604, 0
      %v685 = vsel %vm623, %v605, 0
      %v688 = vsel %vm623, %v606, 0
      %v691 = vsel %vm623, %v607, 0
      %v694 = vsel %vm623, %v608, 0
      %v697 = vsel %vm623, %v609, 0
      %v700 = vsel %vm623, %v610, 0
      %v703 = vsel %vm623, %v611, 0
      %v706 = vsel %vm623, %v612, 0
      %v709 = vsel %vm623, %v613, 0
      %v712 = vsel %vm623, %v614, 0
      %v715 = vsel %vm623, %v615, 0
      %v718 = vsel %vm623, %v616, 0
      %720 = vmatprep.subr.bf16.mxu0 0
      %721 = vmatpush1.bf16.msra.mxu0 %v621
      %722 = vmatprep.subr.bf16.mxu0 0
      %723 = vmatpush1.bf16.msra.mxu0 0
      %724 = vmatprep.subr.bf16.mxu0 0
      %725 = vmatpush1.bf16.msra.mxu0 0
      %726 = vmatprep.subr.bf16.mxu0 0
      %727 = vmatpush1.bf16.msra.mxu0 0
      %728 = vmatprep.subr.bf16.mxu0 0
      %729 = vmatpush1.bf16.msra.mxu0 0
      %730 = vmatprep.subr.bf16.mxu0 0
      %731 = vmatpush1.bf16.msra.mxu0 0
      %732 = vmatprep.subr.bf16.mxu0 0
      %733 = vmatpush1.bf16.msra.mxu0 0
      %734 = vmatprep.subr.bf16.mxu0 0
      %735 = vmatpush1.bf16.msra.mxu0 0
      %736 = vmatprep.subr.bf16.mxu0 0
      %737 = vmatpush1.bf16.msra.mxu0 0
      %738 = vmatprep.subr.bf16.mxu0 0
      %739 = vmatpush1.bf16.msra.mxu0 0
      %740 = vmatprep.subr.bf16.mxu0 0
      %741 = vmatpush1.bf16.msra.mxu0 0
      %742 = vmatprep.subr.bf16.mxu0 0
      %743 = vmatpush1.bf16.msra.mxu0 0
      %744 = vmatprep.subr.bf16.mxu0 0
      %745 = vmatpush1.bf16.msra.mxu0 0
      %746 = vmatprep.subr.bf16.mxu0 0
      %747 = vmatpush1.bf16.msra.mxu0 0
      %748 = vmatprep.subr.bf16.mxu0 0
      %749 = vmatpush1.bf16.msra.mxu0 0
      %750 = vmatprep.subr.bf16.mxu0 0
      %751 = vmatpush1.bf16.msra.mxu0 0
      %752 = vmatprep.mubr.bf16.mxu0 0
      %753 = vmatmul.mubr.bf16.gmra.mrb[0].mxu0 %v625
      %v754 = vpop.f32.mrb[0].mxu0
      %v755 = vadd.f32 0.0, %v754
      %v756 = vpop.f32.mrb[0].mxu0
      %v757 = vpop.f32.mrb[0].mxu0
      %v758 = vadd.f32 0.0, %v757
      %v759 = vpop.f32.mrb[0].mxu0
      %760 = vmatprep.mubr.bf16.mxu0 0
      %761 = vmatmul.mubr.bf16.gmra.mrb[0].mxu0 %v628
      %v762 = vpop.f32.mrb[0].mxu0
      %v763 = vadd.f32 0.0, %v762
      %v764 = vpop.f32.mrb[0].mxu0
      %v765 = vpop.f32.mrb[0].mxu0
      %v766 = vadd.f32 0.0, %v765
      %v767 = vpop.f32.mrb[0].mxu0
      %768 = vmatprep.mubr.bf16.mxu0 0
      %769 = vmatmul.mubr.bf16.gmra.mrb[0].mxu0 %v631
      %v770 = vpop.f32.mrb[0].mxu0
      %v771 = vadd.f32 0.0, %v770
      %v772 = vpop.f32.mrb[0].mxu0
      %v773 = vpop.f32.mrb[0].mxu0
      %v774 = vadd.f32 0.0, %v773
      %v775 = vpop.f32.mrb[0].mxu0
      %776 = vmatprep.mubr.bf16.mxu0 0
      %777 = vmatmul.mubr.bf16.gmra.mrb[0].mxu0 %v634
      %v778 = vpop.f32.mrb[0].mxu0
      %v779 = vadd.f32 0.0, %v778
      %v780 = vpop.f32.mrb[0].mxu0
      %v781 = vpop.f32.mrb[0].mxu0
      %v782 = vadd.f32 0.0, %v781
      %v783 = vpop.f32.mrb[0].mxu0
      %784 = vmatprep.mubr.bf16.mxu0 0
      %785 = vmatmul.mubr.bf16.gmra.mrb[0].mxu0 %v637
      %v786 = vpop.f32.mrb[0].mxu0
      %v787 = vadd.f32 0.0, %v786
      %v788 = vpop.f32.mrb[0].mxu0
      %v789 = vpop.f32.mrb[0].mxu0
      %v790 = vadd.f32 0.0, %v789
      %v791 = vpop.f32.mrb[0].mxu0
      %792 = vmatprep.mubr.bf16.mxu0 0
      %793 = vmatmul.mubr.bf16.gmra.mrb[0].mxu0 %v640
      %v794 = vpop.f32.mrb[0].mxu0
      %v795 = vadd.f32 0.0, %v794
      %v796 = vpop.f32.mrb[0].mxu0
      %v797 = vpop.f32.mrb[0].mxu0
      %v798 = vadd.f32 0.0, %v797
      %v799 = vpop.f32.mrb[0].mxu0
      %800 = vmatprep.mubr.bf16.mxu0 0
      %801 = vmatmul.mubr.bf16.gmra.mrb[0].mxu0 %v643
      %v802 = vpop.f32.mrb[0].mxu0
      %v803 = vadd.f32 0.0, %v802
      %v804 = vpop.f32.mrb[0].mxu0
      %v805 = vpop.f32.mrb[0].mxu0
      %v806 = vadd.f32 0.0, %v805
      %v807 = vpop.f32.mrb[0].mxu0
      %808 = vmatprep.mubr.bf16.mxu0 0
      %809 = vmatmul.mubr.bf16.gmra.mrb[0].mxu0 %v646
      %v810 = vpop.f32.mrb[0].mxu0
      %v811 = vadd.f32 0.0, %v810
      %v812 = vpop.f32.mrb[0].mxu0
      %v813 = vpop.f32.mrb[0].mxu0
      %v814 = vadd.f32 0.0, %v813
      %v815 = vpop.f32.mrb[0].mxu0
      %816 = vmatprep.mubr.bf16.mxu0 0
      %817 = vmatmul.mubr.bf16.gmra.mrb[0].mxu0 %v649
      %v818 = vpop.f32.mrb[0].mxu0
      %v819 = vadd.f32 0.0, %v818
      %v820 = vpop.f32.mrb[0].mxu0
      %v821 = vpop.f32.mrb[0].mxu0
      %v822 = vadd.f32 0.0, %v821
      %v823 = vpop.f32.mrb[0].mxu0
      %824 = vmatprep.mubr.bf16.mxu0 0
      %825 = vmatmul.mubr.bf16.gmra.mrb[0].mxu0 %v652
      %v826 = vpop.f32.mrb[0].mxu0
      %v827 = vadd.f32 0.0, %v826
      %v828 = vpop.f32.mrb[0].mxu0
      %v829 = vpop.f32.mrb[0].mxu0
      %v830 = vadd.f32 0.0, %v829
      %v831 = vpop.f32.mrb[0].mxu0
      %832 = vmatprep.mubr.bf16.mxu0 0
      %833 = vmatmul.mubr.bf16.gmra.mrb[0].mxu0 %v655
      %v834 = vpop.f32.mrb[0].mxu0
      %v835 = vadd.f32 0.0, %v834
      %v836 = vpop.f32.mrb[0].mxu0
      %v837 = vpop.f32.mrb[0].mxu0
      %v838 = vadd.f32 0.0, %v837
      %v839 = vpop.f32.mrb[0].mxu0
      %840 = vmatprep.mubr.bf16.mxu0 0
      %841 = vmatmul.mubr.bf16.gmra.mrb[0].mxu0 %v658
      %v842 = vpop.f32.mrb[0].mxu0
      %v843 = vadd.f32 0.0, %v842
      %v844 = vpop.f32.mrb[0].mxu0
      %v845 = vpop.f32.mrb[0].mxu0
      %v846 = vadd.f32 0.0, %v845
      %v847 = vpop.f32.mrb[0].mxu0
      %848 = vmatprep.mubr.bf16.mxu0 0
      %849 = vmatmul.mubr.bf16.gmra.mrb[0].mxu0 %v661
      %v850 = vpop.f32.mrb[0].mxu0
      %v851 = vadd.f32 0.0, %v850
      %v852 = vpop.f32.mrb[0].mxu0
      %v853 = vpop.f32.mrb[0].mxu0
      %v854 = vadd.f32 0.0, %v853
      %v855 = vpop.f32.mrb[0].mxu0
      %856 = vmatprep.mubr.bf16.mxu0 0
      %857 = vmatmul.mubr.bf16.gmra.mrb[0].mxu0 %v664
      %v858 = vpop.f32.mrb[0].mxu0
      %v859 = vadd.f32 0.0, %v858
      %v860 = vpop.f32.mrb[0].mxu0
      %v861 = vpop.f32.mrb[0].mxu0
      %v862 = vadd.f32 0.0, %v861
      %v863 = vpop.f32.mrb[0].mxu0
      %864 = vmatprep.mubr.bf16.mxu0 0
      %865 = vmatmul.mubr.bf16.gmra.mrb[0].mxu0 %v667
      %v866 = vpop.f32.mrb[0].mxu0
      %v867 = vadd.f32 0.0, %v866
      %v868 = vpop.f32.mrb[0].mxu0
      %v869 = vpop.f32.mrb[0].mxu0
      %v870 = vadd.f32 0.0, %v869
      %v871 = vpop.f32.mrb[0].mxu0
      %872 = vmatprep.mubr.bf16.mxu0 0
      %873 = vmatmul.mubr.bf16.gmra.mrb[0].mxu0 %v670
      %v874 = vpop.f32.mrb[0].mxu0
      %v875 = vadd.f32 0.0, %v874
      %v876 = vpop.f32.mrb[0].mxu0
      %v877 = vpop.f32.mrb[0].mxu0
      %v878 = vadd.f32 0.0, %v877
      %v879 = vpop.f32.mrb[0].mxu0
      %880 = vmatprep.mubr.bf16.mxu0 0
      %881 = vmatmul.mubr.bf16.gmra.mrb[0].mxu0 %v673
      %v882 = vpop.f32.mrb[0].mxu0
      %v883 = vadd.f32 0.0, %v882
      %v884 = vpop.f32.mrb[0].mxu0
      %v885 = vpop.f32.mrb[0].mxu0
      %v886 = vadd.f32 0.0, %v885
      %v887 = vpop.f32.mrb[0].mxu0
      %888 = vmatprep.mubr.bf16.mxu0 0
      %889 = vmatmul.mubr.bf16.gmra.mrb[0].mxu0 %v676
      %v890 = vpop.f32.mrb[0].mxu0
      %v891 = vadd.f32 0.0, %v890
      %v892 = vpop.f32.mrb[0].mxu0
      %v893 = vpop.f32.mrb[0].mxu0
      %v894 = vadd.f32 0.0, %v893
      %v895 = vpop.f32.mrb[0].mxu0
      %896 = vmatprep.mubr.bf16.mxu0 0
      %897 = vmatmul.mubr.bf16.gmra.mrb[0].mxu0 %v679
      %v898 = vpop.f32.mrb[0].mxu0
      %v899 = vadd.f32 0.0, %v898
      %v900 = vpop.f32.mrb[0].mxu0
      %v901 = vpop.f32.mrb[0].mxu0
      %v902 = vadd.f32 0.0, %v901
      %v903 = vpop.f32.mrb[0].mxu0
      %904 = vmatprep.mubr.bf16.mxu0 0
      %905 = vmatmul.mubr.bf16.gmra.mrb[0].mxu0 %v682
      %v906 = vpop.f32.mrb[0].mxu0
      %v907 = vadd.f32 0.0, %v906
      %v908 = vpop.f32.mrb[0].mxu0
      %v909 = vpop.f32.mrb[0].mxu0
      %v910 = vadd.f32 0.0, %v909
      %v911 = vpop.f32.mrb[0].mxu0
      %912 = vmatprep.mubr.bf16.mxu0 0
      %913 = vmatmul.mubr.bf16.gmra.mrb[0].mxu0 %v685
      %v914 = vpop.f32.mrb[0].mxu0
      %v915 = vadd.f32 0.0, %v914
      %v916 = vpop.f32.mrb[0].mxu0
      %v917 = vpop.f32.mrb[0].mxu0
      %v918 = vadd.f32 0.0, %v917
      %v919 = vpop.f32.mrb[0].mxu0
      %920 = vmatprep.mubr.bf16.mxu0 0
      %921 = vmatmul.mubr.bf16.gmra.mrb[0].mxu0 %v688
      %v922 = vpop.f32.mrb[0].mxu0
      %v923 = vadd.f32 0.0, %v922
      %v924 = vpop.f32.mrb[0].mxu0
      %v925 = vpop.f32.mrb[0].mxu0
      %v926 = vadd.f32 0.0, %v925
      %v927 = vpop.f32.mrb[0].mxu0
      %928 = vmatprep.mubr.bf16.mxu0 0
      %929 = vmatmul.mubr.bf16.gmra.mrb[0].mxu0 %v691
      %v930 = vpop.f32.mrb[0].mxu0
      %v931 = vadd.f32 0.0, %v930
      %v932 = vpop.f32.mrb[0].mxu0
      %v933 = vpop.f32.mrb[0].mxu0
      %v934 = vadd.f32 0.0, %v933
      %v935 = vpop.f32.mrb[0].mxu0
      %936 = vmatprep.mubr.bf16.mxu0 0
      %937 = vmatmul.mubr.bf16.gmra.mrb[0].mxu0 %v694
      %v938 = vpop.f32.mrb[0].mxu0
      %v939 = vadd.f32 0.0, %v938
      %v940 = vpop.f32.mrb[0].mxu0
      %v941 = vpop.f32.mrb[0].mxu0
      %v942 = vadd.f32 0.0, %v941
      %v943 = vpop.f32.mrb[0].mxu0
      %944 = vmatprep.mubr.bf16.mxu0 0
      %945 = vmatmul.mubr.bf16.gmra.mrb[0].mxu0 %v697
      %v946 = vpop.f32.mrb[0].mxu0
      %v947 = vadd.f32 0.0, %v946
      %v948 = vpop.f32.mrb[0].mxu0
      %v949 = vpop.f32.mrb[0].mxu0
      %v950 = vadd.f32 0.0, %v949
      %v951 = vpop.f32.mrb[0].mxu0
      %952 = vmatprep.mubr.bf16.mxu0 0
      %953 = vmatmul.mubr.bf16.gmra.mrb[0].mxu0 %v700
      %v954 = vpop.f32.mrb[0].mxu0
      %v955 = vadd.f32 0.0, %v954
      %v956 = vpop.f32.mrb[0].mxu0
      %v957 = vpop.f32.mrb[0].mxu0
      %v958 = vadd.f32 0.0, %v957
      %v959 = vpop.f32.mrb[0].mxu0
      %960 = vmatprep.mubr.bf16.mxu0 0
      %961 = vmatmul.mubr.bf16.gmra.mrb[0].mxu0 %v703
      %v962 = vpop.f32.mrb[0].mxu0
      %v963 = vadd.f32 0.0, %v962
      %v964 = vpop.f32.mrb[0].mxu0
      %v965 = vpop.f32.mrb[0].mxu0
      %v966 = vadd.f32 0.0, %v965
      %v967 = vpop.f32.mrb[0].mxu0
      %968 = vmatprep.mubr.bf16.mxu0 0
      %969 = vmatmul.mubr.bf16.gmra.mrb[0].mxu0 %v706
      %v970 = vpop.f32.mrb[0].mxu0
      %v971 = vadd.f32 0.0, %v970
      %v972 = vpop.f32.mrb[0].mxu0
      %v973 = vpop.f32.mrb[0].mxu0
      %v974 = vadd.f32 0.0, %v973
      %v975 = vpop.f32.mrb[0].mxu0
      %976 = vmatprep.mubr.bf16.mxu0 0
      %977 = vmatmul.mubr.bf16.gmra.mrb[0].mxu0 %v709
      %v978 = vpop.f32.mrb[0].mxu0
      %v979 = vadd.f32 0.0, %v978
      %v980 = vpop.f32.mrb[0].mxu0
      %v981 = vpop.f32.mrb[0].mxu0
      %v982 = vadd.f32 0.0, %v981
      %v983 = vpop.f32.mrb[0].mxu0
      %984 = vmatprep.mubr.bf16.mxu0 0
      %985 = vmatmul.mubr.bf16.gmra.mrb[0].mxu0 %v712
      %v986 = vpop.f32.mrb[0].mxu0
      %v987 = vadd.f32 0.0, %v986
      %v988 = vpop.f32.mrb[0].mxu0
      %v989 = vpop.f32.mrb[0].mxu0
      %v990 = vadd.f32 0.0, %v989
      %v991 = vpop.f32.mrb[0].mxu0
      %992 = vmatprep.mubr.bf16.mxu0 0
      %993 = vmatmul.mubr.bf16.gmra.mrb[0].mxu0 %v715
      %v994 = vpop.f32.mrb[0].mxu0
      %v995 = vadd.f32 0.0, %v994
      %v996 = vpop.f32.mrb[0].mxu0
      %v997 = vpop.f32.mrb[0].mxu0
      %v998 = vadd.f32 0.0, %v997
      %v999 = vpop.f32.mrb[0].mxu0
      %1000 = vmatprep.mubr.bf16.mxu0 0
      %1001 = vmatmul.mubr.bf16.gmra.mrb[0].mxu0 %v718
      %v1002 = vpop.f32.mrb[0].mxu0
      %v1003 = vadd.f32 0.0, %v1002
      %v1004 = vpop.f32.mrb[0].mxu0
      %v1005 = vpop.f32.mrb[0].mxu0
      %v1006 = vadd.f32 0.0, %v1005
      %v1007 = vpop.f32.mrb[0].mxu0
      %1008 = vdwg.mxu0
      %v1137 = vunpack.c.l.b16 %v227
      %v1138 = vunpack.c.h.b16 %v227
      %v1139 = vunpack.c.l.b16 %v228
      %v1140 = vunpack.c.l.b16 %v229
      %v1141 = vunpack.c.h.b16 %v229
      %v1142 = vunpack.c.l.b16 %v230
      %v1143 = vunpack.c.l.b16 %v231
      %v1144 = vunpack.c.h.b16 %v231
      %v1145 = vunpack.c.l.b16 %v232
      %v1146 = vunpack.c.l.b16 %v233
      %v1147 = vunpack.c.h.b16 %v233
      %v1148 = vunpack.c.l.b16 %v234
      %v1149 = vunpack.c.l.b16 %v235
      %v1150 = vunpack.c.h.b16 %v235
      %v1151 = vunpack.c.l.b16 %v236
      %v1152 = vunpack.c.l.b16 %v237
      %v1153 = vunpack.c.h.b16 %v237
      %v1154 = vunpack.c.l.b16 %v238
      %v1155 = vunpack.c.l.b16 %v239
      %v1156 = vunpack.c.h.b16 %v239
      %v1157 = vunpack.c.l.b16 %v240
      %v1158 = vunpack.c.l.b16 %v241
      %v1159 = vunpack.c.h.b16 %v241
      %v1160 = vunpack.c.l.b16 %v242
      %v1161 = vunpack.c.l.b16 %v243
      %v1162 = vunpack.c.h.b16 %v243
      %v1163 = vunpack.c.l.b16 %v244
      %v1164 = vunpack.c.l.b16 %v245
      %v1165 = vunpack.c.h.b16 %v245
      %v1166 = vunpack.c.l.b16 %v246
      %v1167 = vunpack.c.l.b16 %v247
      %v1168 = vunpack.c.h.b16 %v247
      %v1169 = vunpack.c.l.b16 %v248
      %v1170 = vunpack.c.l.b16 %v249
      %v1171 = vunpack.c.h.b16 %v249
      %v1172 = vunpack.c.l.b16 %v250
      %v1173 = vunpack.c.l.b16 %v251
      %v1174 = vunpack.c.h.b16 %v251
      %v1175 = vunpack.c.l.b16 %v252
      %v1176 = vunpack.c.l.b16 %v253
      %v1177 = vunpack.c.h.b16 %v253
      %v1178 = vunpack.c.l.b16 %v254
      %v1179 = vunpack.c.l.b16 %v255
      %v1180 = vunpack.c.h.b16 %v255
      %v1181 = vunpack.c.l.b16 %v256
      %v1182 = vunpack.c.l.b16 %v257
      %v1183 = vunpack.c.h.b16 %v257
      %v1184 = vunpack.c.l.b16 %v258
      %v1185 = vunpack.c.l.b16 %v259
      %v1186 = vunpack.c.h.b16 %v259
      %v1187 = vunpack.c.l.b16 %v260
      %v1188 = vunpack.c.l.b16 %v261
      %v1189 = vunpack.c.h.b16 %v261
      %v1190 = vunpack.c.l.b16 %v262
      %v1191 = vunpack.c.l.b16 %v263
      %v1192 = vunpack.c.h.b16 %v263
      %v1193 = vunpack.c.l.b16 %v264
      %v1194 = vunpack.c.l.b16 %v265
      %v1195 = vunpack.c.h.b16 %v265
      %v1196 = vunpack.c.l.b16 %v266
      %v1197 = vunpack.c.l.b16 %v267
      %v1198 = vunpack.c.h.b16 %v267
      %v1199 = vunpack.c.l.b16 %v268
      %v1200 = vunpack.c.l.b16 %v269
      %v1201 = vunpack.c.h.b16 %v269
      %v1202 = vunpack.c.l.b16 %v270
      %v1203 = vunpack.c.l.b16 %v271
      %v1204 = vunpack.c.h.b16 %v271
      %v1205 = vunpack.c.l.b16 %v272
      %v1206 = vunpack.c.l.b16 %v273
      %v1207 = vunpack.c.h.b16 %v273
      %v1208 = vunpack.c.l.b16 %v274
      %v1209 = vunpack.c.l.b16 %v275
      %v1210 = vunpack.c.h.b16 %v275
      %v1211 = vunpack.c.l.b16 %v276
      %v1212 = vunpack.c.l.b16 %v277
      %v1213 = vunpack.c.h.b16 %v277
      %v1214 = vunpack.c.l.b16 %v278
      %v1215 = vunpack.c.l.b16 %v279
      %v1216 = vunpack.c.h.b16 %v279
      %v1217 = vunpack.c.l.b16 %v280
      %v1218 = vunpack.c.l.b16 %v281
      %v1219 = vunpack.c.h.b16 %v281
      %v1220 = vunpack.c.l.b16 %v282
      %v1221 = vunpack.c.l.b16 %v283
      %v1222 = vunpack.c.h.b16 %v283
      %v1223 = vunpack.c.l.b16 %v284
      %v1224 = vunpack.c.l.b16 %v285
      %v1225 = vunpack.c.h.b16 %v285
      %v1226 = vunpack.c.l.b16 %v286
      %v1227 = vunpack.c.l.b16 %v287
      %v1228 = vunpack.c.h.b16 %v287
      %v1229 = vunpack.c.l.b16 %v288
      %v1230 = vunpack.c.l.b16 %v289
      %v1231 = vunpack.c.h.b16 %v289
      %v1232 = vunpack.c.l.b16 %v290
      %v1233 = vunpack.c.l.b16 %v291
      %v1234 = vunpack.c.h.b16 %v291
      %v1235 = vunpack.c.l.b16 %v292
      %v1236 = vunpack.c.l.b16 %v293
      %v1237 = vunpack.c.h.b16 %v293
      %v1238 = vunpack.c.l.b16 %v294
      %v1239 = vunpack.c.l.b16 %v295
      %v1240 = vunpack.c.h.b16 %v295
      %v1241 = vunpack.c.l.b16 %v296
      %v1242 = vunpack.c.l.b16 %v297
      %v1243 = vunpack.c.h.b16 %v297
      %v1244 = vunpack.c.l.b16 %v298
      %v1245 = vunpack.c.l.b16 %v299
      %v1246 = vunpack.c.h.b16 %v299
      %v1247 = vunpack.c.l.b16 %v300
      %v1248 = vunpack.c.l.b16 %v301
      %v1249 = vunpack.c.h.b16 %v301
      %v1250 = vunpack.c.l.b16 %v302
      %v1251 = vunpack.c.l.b16 %v303
      %v1252 = vunpack.c.h.b16 %v303
      %v1253 = vunpack.c.l.b16 %v304
      %v1254 = vunpack.c.l.b16 %v305
      %v1255 = vunpack.c.h.b16 %v305
      %v1256 = vunpack.c.l.b16 %v306
      %v1257 = vunpack.c.l.b16 %v307
      %v1258 = vunpack.c.h.b16 %v307
      %v1259 = vunpack.c.l.b16 %v308
      %v1260 = vunpack.c.l.b16 %v309
      %v1261 = vunpack.c.h.b16 %v309
      %v1262 = vunpack.c.l.b16 %v310
      %v1263 = vunpack.c.l.b16 %v311
      %v1264 = vunpack.c.h.b16 %v311
      %v1265 = vunpack.c.l.b16 %v312
      %v1266 = vunpack.c.l.b16 %v313
      %v1267 = vunpack.c.h.b16 %v313
      %v1268 = vunpack.c.l.b16 %v314
      %v1269 = vunpack.c.l.b16 %v315
      %v1270 = vunpack.c.h.b16 %v315
      %v1271 = vunpack.c.l.b16 %v316
      %v1272 = vunpack.c.l.b16 %v317
      %v1273 = vunpack.c.h.b16 %v317
      %v1274 = vunpack.c.l.b16 %v318
      %v1275 = vunpack.c.l.b16 %v319
      %v1276 = vunpack.c.h.b16 %v319
      %v1277 = vunpack.c.l.b16 %v320
      %v1278 = vunpack.c.l.b16 %v321
      %v1279 = vunpack.c.h.b16 %v321
      %v1280 = vunpack.c.l.b16 %v322
      %v1281 = vunpack.c.l.b16 %v323
      %v1282 = vunpack.c.h.b16 %v323
      %v1283 = vunpack.c.l.b16 %v324
      %v1284 = vunpack.c.l.b16 %v325
      %v1285 = vunpack.c.h.b16 %v325
      %v1286 = vunpack.c.l.b16 %v326
      %v1287 = vunpack.c.l.b16 %v327
      %v1288 = vunpack.c.h.b16 %v327
      %v1289 = vunpack.c.l.b16 %v328
      %v1290 = vunpack.c.l.b16 %v329
      %v1291 = vunpack.c.h.b16 %v329
      %v1292 = vunpack.c.l.b16 %v330
      %v1293 = vunpack.c.l.b16 %v331
      %v1294 = vunpack.c.h.b16 %v331
      %v1295 = vunpack.c.l.b16 %v332
      %v1296 = vunpack.c.l.b16 %v333
      %v1297 = vunpack.c.h.b16 %v333
      %v1298 = vunpack.c.l.b16 %v334
      %v1299 = vunpack.c.l.b16 %v335
      %v1300 = vunpack.c.h.b16 %v335
      %v1301 = vunpack.c.l.b16 %v336
      %v1302 = vunpack.c.l.b16 %v337
      %v1303 = vunpack.c.h.b16 %v337
      %v1304 = vunpack.c.l.b16 %v338
      %v1305 = vunpack.c.l.b16 %v339
      %v1306 = vunpack.c.h.b16 %v339
      %v1307 = vunpack.c.l.b16 %v340
      %v1308 = vunpack.c.l.b16 %v341
      %v1309 = vunpack.c.h.b16 %v341
      %v1310 = vunpack.c.l.b16 %v342
      %v1311 = vunpack.c.l.b16 %v343
      %v1312 = vunpack.c.h.b16 %v343
      %v1313 = vunpack.c.l.b16 %v344
      %v1314 = vunpack.c.l.b16 %v345
      %v1315 = vunpack.c.h.b16 %v345
      %v1316 = vunpack.c.l.b16 %v346
      %v1317 = vunpack.c.l.b16 %v347
      %v1318 = vunpack.c.h.b16 %v347
      %v1319 = vunpack.c.l.b16 %v348
      %v1320 = vunpack.c.l.b16 %v349
      %v1321 = vunpack.c.h.b16 %v349
      %v1322 = vunpack.c.l.b16 %v350
      %v1323 = vunpack.c.l.b16 %v351
      %v1324 = vunpack.c.h.b16 %v351
      %v1325 = vunpack.c.l.b16 %v352
      %v1326 = vunpack.c.l.b16 %v353
      %v1327 = vunpack.c.h.b16 %v353
      %v1328 = vunpack.c.l.b16 %v354
      %v1329 = vpack.c.b16 %v1140, %v1137
      %v1330 = vpack.c.b16 %v1141, %v1138
      %v1331 = vpack.c.b16 %v1142, %v1139
      %v1332 = vpack.c.b16 %v1146, %v1143
      %v1333 = vpack.c.b16 %v1147, %v1144
      %v1334 = vpack.c.b16 %v1148, %v1145
      %v1335 = vpack.c.b16 %v1152, %v1149
      %v1336 = vpack.c.b16 %v1153, %v1150
      %v1337 = vpack.c.b16 %v1154, %v1151
      %v1338 = vpack.c.b16 %v1158, %v1155
      %v1339 = vpack.c.b16 %v1159, %v1156
      %v1340 = vpack.c.b16 %v1160, %v1157
      %v1341 = vpack.c.b16 %v1164, %v1161
      %v1342 = vpack.c.b16 %v1165, %v1162
      %v1343 = vpack.c.b16 %v1166, %v1163
      %v1344 = vpack.c.b16 %v1170, %v1167
      %v1345 = vpack.c.b16 %v1171, %v1168
      %v1346 = vpack.c.b16 %v1172, %v1169
      %v1347 = vpack.c.b16 %v1176, %v1173
      %v1348 = vpack.c.b16 %v1177, %v1174
      %v1349 = vpack.c.b16 %v1178, %v1175
      %v1350 = vpack.c.b16 %v1182, %v1179
      %v1351 = vpack.c.b16 %v1183, %v1180
      %v1352 = vpack.c.b16 %v1184, %v1181
      %v1353 = vpack.c.b16 %v1188, %v1185
      %v1354 = vpack.c.b16 %v1189, %v1186
      %v1355 = vpack.c.b16 %v1190, %v1187
      %v1356 = vpack.c.b16 %v1194, %v1191
      %v1357 = vpack.c.b16 %v1195, %v1192
      %v1358 = vpack.c.b16 %v1196, %v1193
      %v1359 = vpack.c.b16 %v1200, %v1197
      %v1360 = vpack.c.b16 %v1201, %v1198
      %v1361 = vpack.c.b16 %v1202, %v1199
      %v1362 = vpack.c.b16 %v1206, %v1203
      %v1363 = vpack.c.b16 %v1207, %v1204
      %v1364 = vpack.c.b16 %v1208, %v1205
      %v1365 = vpack.c.b16 %v1212, %v1209
      %v1366 = vpack.c.b16 %v1213, %v1210
      %v1367 = vpack.c.b16 %v1214, %v1211
      %v1368 = vpack.c.b16 %v1218, %v1215
      %v1369 = vpack.c.b16 %v1219, %v1216
      %v1370 = vpack.c.b16 %v1220, %v1217
      %v1371 = vpack.c.b16 %v1224, %v1221
      %v1372 = vpack.c.b16 %v1225, %v1222
      %v1373 = vpack.c.b16 %v1226, %v1223
      %v1374 = vpack.c.b16 %v1230, %v1227
      %v1375 = vpack.c.b16 %v1231, %v1228
      %v1376 = vpack.c.b16 %v1232, %v1229
      %v1377 = vpack.c.b16 %v1236, %v1233
      %v1378 = vpack.c.b16 %v1237, %v1234
      %v1379 = vpack.c.b16 %v1238, %v1235
      %v1380 = vpack.c.b16 %v1242, %v1239
      %v1381 = vpack.c.b16 %v1243, %v1240
      %v1382 = vpack.c.b16 %v1244, %v1241
      %v1383 = vpack.c.b16 %v1248, %v1245
      %v1384 = vpack.c.b16 %v1249, %v1246
      %v1385 = vpack.c.b16 %v1250, %v1247
      %v1386 = vpack.c.b16 %v1254, %v1251
      %v1387 = vpack.c.b16 %v1255, %v1252
      %v1388 = vpack.c.b16 %v1256, %v1253
      %v1389 = vpack.c.b16 %v1260, %v1257
      %v1390 = vpack.c.b16 %v1261, %v1258
      %v1391 = vpack.c.b16 %v1262, %v1259
      %v1392 = vpack.c.b16 %v1266, %v1263
      %v1393 = vpack.c.b16 %v1267, %v1264
      %v1394 = vpack.c.b16 %v1268, %v1265
      %v1395 = vpack.c.b16 %v1272, %v1269
      %v1396 = vpack.c.b16 %v1273, %v1270
      %v1397 = vpack.c.b16 %v1274, %v1271
      %v1398 = vpack.c.b16 %v1278, %v1275
      %v1399 = vpack.c.b16 %v1279, %v1276
      %v1400 = vpack.c.b16 %v1280, %v1277
      %v1401 = vpack.c.b16 %v1284, %v1281
      %v1402 = vpack.c.b16 %v1285, %v1282
      %v1403 = vpack.c.b16 %v1286, %v1283
      %v1404 = vpack.c.b16 %v1290, %v1287
      %v1405 = vpack.c.b16 %v1291, %v1288
      %v1406 = vpack.c.b16 %v1292, %v1289
      %v1407 = vpack.c.b16 %v1296, %v1293
      %v1408 = vpack.c.b16 %v1297, %v1294
      %v1409 = vpack.c.b16 %v1298, %v1295
      %v1410 = vpack.c.b16 %v1302, %v1299
      %v1411 = vpack.c.b16 %v1303, %v1300
      %v1412 = vpack.c.b16 %v1304, %v1301
      %v1413 = vpack.c.b16 %v1308, %v1305
      %v1414 = vpack.c.b16 %v1309, %v1306
      %v1415 = vpack.c.b16 %v1310, %v1307
      %v1416 = vpack.c.b16 %v1314, %v1311
      %v1417 = vpack.c.b16 %v1315, %v1312
      %v1418 = vpack.c.b16 %v1316, %v1313
      %v1419 = vpack.c.b16 %v1320, %v1317
      %v1420 = vpack.c.b16 %v1321, %v1318
      %v1421 = vpack.c.b16 %v1322, %v1319
      %v1422 = vpack.c.b16 %v1326, %v1323
      %v1423 = vpack.c.b16 %v1327, %v1324
      %v1424 = vpack.c.b16 %v1328, %v1325
      %v1525 = vunpack.c.l.b16 %v355
      %v1526 = vunpack.c.l.b16 %v356
      %v1527 = vunpack.c.l.b16 %v357
      %v1528 = vunpack.c.l.b16 %v358
      %v1529 = vunpack.c.l.b16 %v359
      %v1530 = vunpack.c.l.b16 %v360
      %v1531 = vunpack.c.l.b16 %v361
      %v1532 = vunpack.c.l.b16 %v362
      %v1533 = vunpack.c.l.b16 %v363
      %v1534 = vunpack.c.l.b16 %v364
      %v1535 = vunpack.c.l.b16 %v365
      %v1536 = vunpack.c.l.b16 %v366
      %v1537 = vunpack.c.l.b16 %v367
      %v1538 = vunpack.c.l.b16 %v368
      %v1539 = vunpack.c.l.b16 %v369
      %v1540 = vunpack.c.l.b16 %v370
      %v1541 = vunpack.c.l.b16 %v371
      %v1542 = vunpack.c.l.b16 %v372
      %v1543 = vunpack.c.l.b16 %v373
      %v1544 = vunpack.c.l.b16 %v374
      %v1545 = vunpack.c.l.b16 %v375
      %v1546 = vunpack.c.l.b16 %v376
      %v1547 = vunpack.c.l.b16 %v377
      %v1548 = vunpack.c.l.b16 %v378
      %v1549 = vunpack.c.l.b16 %v379
      %v1550 = vunpack.c.l.b16 %v380
      %v1551 = vunpack.c.l.b16 %v381
      %v1552 = vunpack.c.l.b16 %v382
      %v1553 = vunpack.c.l.b16 %v383
      %v1554 = vunpack.c.l.b16 %v384
      %v1555 = vunpack.c.l.b16 %v385
      %v1556 = vunpack.c.l.b16 %v386
      %v1557 = vunpack.c.l.b16 %v387
      %v1558 = vunpack.c.l.b16 %v388
      %v1559 = vunpack.c.l.b16 %v389
      %v1560 = vunpack.c.l.b16 %v390
      %v1561 = vpack.c.b16 %v1526, %v1525
      %v1562 = vpack.c.b16 %v1528, %v1527
      %v1563 = vpack.c.b16 %v1530, %v1529
      %v1564 = vpack.c.b16 %v1532, %v1531
      %v1565 = vpack.c.b16 %v1534, %v1533
      %v1566 = vpack.c.b16 %v1536, %v1535
      %v1567 = vpack.c.b16 %v1538, %v1537
      %v1568 = vpack.c.b16 %v1540, %v1539
      %v1569 = vpack.c.b16 %v1542, %v1541
      %v1570 = vpack.c.b16 %v1544, %v1543
      %v1571 = vpack.c.b16 %v1546, %v1545
      %v1572 = vpack.c.b16 %v1548, %v1547
      %v1573 = vpack.c.b16 %v1550, %v1549
      %v1574 = vpack.c.b16 %v1552, %v1551
      %v1575 = vpack.c.b16 %v1554, %v1553
      %v1576 = vpack.c.b16 %v1556, %v1555
      %v1577 = vpack.c.b16 %v1558, %v1557
      %v1578 = vpack.c.b16 %v1560, %v1559
      %vm1597 = vcmask 261120
      %v1599 = vsel %vm1597, %v1331, 0
      %v1602 = vsel %vm1597, %v1334, 0
      %v1605 = vsel %vm1597, %v1337, 0
      %v1608 = vsel %vm1597, %v1340, 0
      %v1611 = vsel %vm1597, %v1343, 0
      %v1614 = vsel %vm1597, %v1346, 0
      %v1617 = vsel %vm1597, %v1349, 0
      %v1620 = vsel %vm1597, %v1352, 0
      %v1623 = vsel %vm1597, %v1355, 0
      %v1626 = vsel %vm1597, %v1358, 0
      %v1629 = vsel %vm1597, %v1361, 0
      %v1632 = vsel %vm1597, %v1364, 0
      %v1635 = vsel %vm1597, %v1367, 0
      %v1638 = vsel %vm1597, %v1370, 0
      %v1641 = vsel %vm1597, %v1373, 0
      %v1644 = vsel %vm1597, %v1376, 0
      %v1647 = vsel %vm1597, %v1379, 0
      %v1650 = vsel %vm1597, %v1382, 0
      %v1653 = vsel %vm1597, %v1385, 0
      %v1656 = vsel %vm1597, %v1388, 0
      %v1659 = vsel %vm1597, %v1391, 0
      %v1662 = vsel %vm1597, %v1394, 0
      %v1665 = vsel %vm1597, %v1397, 0
      %v1668 = vsel %vm1597, %v1400, 0
      %v1671 = vsel %vm1597, %v1403, 0
      %v1674 = vsel %vm1597, %v1406, 0
      %v1677 = vsel %vm1597, %v1409, 0
      %v1680 = vsel %vm1597, %v1412, 0
      %v1683 = vsel %vm1597, %v1415, 0
      %v1686 = vsel %vm1597, %v1418, 0
      %v1689 = vsel %vm1597, %v1421, 0
      %v1692 = vsel %vm1597, %v1424, 0
      %1694 = vmatprep.subr.bf16.mxu0 0
      %1695 = vmatpush1.bf16.msra.mxu0 %v1561
      %1696 = vmatprep.subr.bf16.mxu0 0
      %1697 = vmatpush1.bf16.msra.mxu0 %v1562
      %1698 = vmatprep.subr.bf16.mxu0 0
      %1699 = vmatpush1.bf16.msra.mxu0 %v1563
      %1700 = vmatprep.subr.bf16.mxu0 0
      %1701 = vmatpush1.bf16.msra.mxu0 %v1564
      %1702 = vmatprep.subr.bf16.mxu0 0
      %1703 = vmatpush1.bf16.msra.mxu0 %v1565
      %1704 = vmatprep.subr.bf16.mxu0 0
      %1705 = vmatpush1.bf16.msra.mxu0 %v1566
      %1706 = vmatprep.subr.bf16.mxu0 0
      %1707 = vmatpush1.bf16.msra.mxu0 %v1567
      %1708 = vmatprep.subr.bf16.mxu0 0
      %1709 = vmatpush1.bf16.msra.mxu0 %v1568
      %1710 = vmatprep.subr.bf16.mxu0 0
      %1711 = vmatpush1.bf16.msra.mxu0 %v1569
      %1712 = vmatprep.subr.bf16.mxu0 0
      %1713 = vmatpush1.bf16.msra.mxu0 %v1570
      %1714 = vmatprep.subr.bf16.mxu0 0
      %1715 = vmatpush1.bf16.msra.mxu0 %v1571
      %1716 = vmatprep.subr.bf16.mxu0 0
      %1717 = vmatpush1.bf16.msra.mxu0 %v1572
      %1718 = vmatprep.subr.bf16.mxu0 0
      %1719 = vmatpush1.bf16.msra.mxu0 %v1573
      %1720 = vmatprep.subr.bf16.mxu0 0
      %1721 = vmatpush1.bf16.msra.mxu0 %v1574
      %1722 = vmatprep.subr.bf16.mxu0 0
      %1723 = vmatpush1.bf16.msra.mxu0 %v1575
      %1724 = vmatprep.subr.bf16.mxu0 0
      %1725 = vmatpush1.bf16.msra.mxu0 %v1576
      %1726 = vmatprep.mubr.bf16.mxu0 %v1330
      %1727 = vmatmul.mubr.bf16.gmra.mrb[0].mxu0 %v1329
      %v1728 = vpop.f32.mrb[0].mxu0
      %v1729 = vadd.f32 %v755, %v1728
      %v1730 = vpop.f32.mrb[0].mxu0
      %v1731 = vpop.f32.mrb[0].mxu0
      %v1732 = vadd.f32 %v758, %v1731
      %v1733 = vpop.f32.mrb[0].mxu0
      %1734 = vmatprep.mubr.bf16.mxu0 %v1333
      %1735 = vmatmul.mubr.bf16.gmra.mrb[0].mxu0 %v1332
      %v1736 = vpop.f32.mrb[0].mxu0
      %v1737 = vadd.f32 %v763, %v1736
      %v1738 = vpop.f32.mrb[0].mxu0
      %v1739 = vpop.f32.mrb[0].mxu0
      %v1740 = vadd.f32 %v766, %v1739
      %v1741 = vpop.f32.mrb[0].mxu0
      %1742 = vmatprep.mubr.bf16.mxu0 %v1336
      %1743 = vmatmul.mubr.bf16.gmra.mrb[0].mxu0 %v1335
      %v1744 = vpop.f32.mrb[0].mxu0
      %v1745 = vadd.f32 %v771, %v1744
      %v1746 = vpop.f32.mrb[0].mxu0
      %v1747 = vpop.f32.mrb[0].mxu0
      %v1748 = vadd.f32 %v774, %v1747
      %v1749 = vpop.f32.mrb[0].mxu0
      %1750 = vmatprep.mubr.bf16.mxu0 %v1339
      %1751 = vmatmul.mubr.bf16.gmra.mrb[0].mxu0 %v1338
      %v1752 = vpop.f32.mrb[0].mxu0
      %v1753 = vadd.f32 %v779, %v1752
      %v1754 = vpop.f32.mrb[0].mxu0
      %v1755 = vpop.f32.mrb[0].mxu0
      %v1756 = vadd.f32 %v782, %v1755
      %v1757 = vpop.f32.mrb[0].mxu0
      %1758 = vmatprep.mubr.bf16.mxu0 %v1342
      %1759 = vmatmul.mubr.bf16.gmra.mrb[0].mxu0 %v1341
      %v1760 = vpop.f32.mrb[0].mxu0
      %v1761 = vadd.f32 %v787, %v1760
      %v1762 = vpop.f32.mrb[0].mxu0
      %v1763 = vpop.f32.mrb[0].mxu0
      %v1764 = vadd.f32 %v790, %v1763
      %v1765 = vpop.f32.mrb[0].mxu0
      %1766 = vmatprep.mubr.bf16.mxu0 %v1345
      %1767 = vmatmul.mubr.bf16.gmra.mrb[0].mxu0 %v1344
      %v1768 = vpop.f32.mrb[0].mxu0
      %v1769 = vadd.f32 %v795, %v1768
      %v1770 = vpop.f32.mrb[0].mxu0
      %v1771 = vpop.f32.mrb[0].mxu0
      %v1772 = vadd.f32 %v798, %v1771
      %v1773 = vpop.f32.mrb[0].mxu0
      %1774 = vmatprep.mubr.bf16.mxu0 %v1348
      %1775 = vmatmul.mubr.bf16.gmra.mrb[0].mxu0 %v1347
      %v1776 = vpop.f32.mrb[0].mxu0
      %v1777 = vadd.f32 %v803, %v1776
      %v1778 = vpop.f32.mrb[0].mxu0
      %v1779 = vpop.f32.mrb[0].mxu0
      %v1780 = vadd.f32 %v806, %v1779
      %v1781 = vpop.f32.mrb[0].mxu0
      %1782 = vmatprep.mubr.bf16.mxu0 %v1351
      %1783 = vmatmul.mubr.bf16.gmra.mrb[0].mxu0 %v1350
      %v1784 = vpop.f32.mrb[0].mxu0
      %v1785 = vadd.f32 %v811, %v1784
      %v1786 = vpop.f32.mrb[0].mxu0
      %v1787 = vpop.f32.mrb[0].mxu0
      %v1788 = vadd.f32 %v814, %v1787
      %v1789 = vpop.f32.mrb[0].mxu0
      %1790 = vmatprep.mubr.bf16.mxu0 %v1354
      %1791 = vmatmul.mubr.bf16.gmra.mrb[0].mxu0 %v1353
      %v1792 = vpop.f32.mrb[0].mxu0
      %v1793 = vadd.f32 %v819, %v1792
      %v1794 = vpop.f32.mrb[0].mxu0
      %v1795 = vpop.f32.mrb[0].mxu0
      %v1796 = vadd.f32 %v822, %v1795
      %v1797 = vpop.f32.mrb[0].mxu0
      %1798 = vmatprep.mubr.bf16.mxu0 %v1357
      %1799 = vmatmul.mubr.bf16.gmra.mrb[0].mxu0 %v1356
      %v1800 = vpop.f32.mrb[0].mxu0
      %v1801 = vadd.f32 %v827, %v1800
      %v1802 = vpop.f32.mrb[0].mxu0
      %v1803 = vpop.f32.mrb[0].mxu0
      %v1804 = vadd.f32 %v830, %v1803
      %v1805 = vpop.f32.mrb[0].mxu0
      %1806 = vmatprep.mubr.bf16.mxu0 %v1360
      %1807 = vmatmul.mubr.bf16.gmra.mrb[0].mxu0 %v1359
      %v1808 = vpop.f32.mrb[0].mxu0
      %v1809 = vadd.f32 %v835, %v1808
      %v1810 = vpop.f32.mrb[0].mxu0
      %v1811 = vpop.f32.mrb[0].mxu0
      %v1812 = vadd.f32 %v838, %v1811
      %v1813 = vpop.f32.mrb[0].mxu0
      %1814 = vmatprep.mubr.bf16.mxu0 %v1363
      %1815 = vmatmul.mubr.bf16.gmra.mrb[0].mxu0 %v1362
      %v1816 = vpop.f32.mrb[0].mxu0
      %v1817 = vadd.f32 %v843, %v1816
      %v1818 = vpop.f32.mrb[0].mxu0
      %v1819 = vpop.f32.mrb[0].mxu0
      %v1820 = vadd.f32 %v846, %v1819
      %v1821 = vpop.f32.mrb[0].mxu0
      %1822 = vmatprep.mubr.bf16.mxu0 %v1366
      %1823 = vmatmul.mubr.bf16.gmra.mrb[0].mxu0 %v1365
      %v1824 = vpop.f32.mrb[0].mxu0
      %v1825 = vadd.f32 %v851, %v1824
      %v1826 = vpop.f32.mrb[0].mxu0
      %v1827 = vpop.f32.mrb[0].mxu0
      %v1828 = vadd.f32 %v854, %v1827
      %v1829 = vpop.f32.mrb[0].mxu0
      %1830 = vmatprep.mubr.bf16.mxu0 %v1369
      %1831 = vmatmul.mubr.bf16.gmra.mrb[0].mxu0 %v1368
      %v1832 = vpop.f32.mrb[0].mxu0
      %v1833 = vadd.f32 %v859, %v1832
      %v1834 = vpop.f32.mrb[0].mxu0
      %v1835 = vpop.f32.mrb[0].mxu0
      %v1836 = vadd.f32 %v862, %v1835
      %v1837 = vpop.f32.mrb[0].mxu0
      %1838 = vmatprep.mubr.bf16.mxu0 %v1372
      %1839 = vmatmul.mubr.bf16.gmra.mrb[0].mxu0 %v1371
      %v1840 = vpop.f32.mrb[0].mxu0
      %v1841 = vadd.f32 %v867, %v1840
      %v1842 = vpop.f32.mrb[0].mxu0
      %v1843 = vpop.f32.mrb[0].mxu0
      %v1844 = vadd.f32 %v870, %v1843
      %v1845 = vpop.f32.mrb[0].mxu0
      %1846 = vmatprep.mubr.bf16.mxu0 %v1375
      %1847 = vmatmul.mubr.bf16.gmra.mrb[0].mxu0 %v1374
      %v1848 = vpop.f32.mrb[0].mxu0
      %v1849 = vadd.f32 %v875, %v1848
      %v1850 = vpop.f32.mrb[0].mxu0
      %v1851 = vpop.f32.mrb[0].mxu0
      %v1852 = vadd.f32 %v878, %v1851
      %v1853 = vpop.f32.mrb[0].mxu0
      %1854 = vmatprep.mubr.bf16.mxu0 %v1378
      %1855 = vmatmul.mubr.bf16.gmra.mrb[0].mxu0 %v1377
      %v1856 = vpop.f32.mrb[0].mxu0
      %v1857 = vadd.f32 %v883, %v1856
      %v1858 = vpop.f32.mrb[0].mxu0
      %v1859 = vpop.f32.mrb[0].mxu0
      %v1860 = vadd.f32 %v886, %v1859
      %v1861 = vpop.f32.mrb[0].mxu0
      %1862 = vmatprep.mubr.bf16.mxu0 %v1381
      %1863 = vmatmul.mubr.bf16.gmra.mrb[0].mxu0 %v1380
      %v1864 = vpop.f32.mrb[0].mxu0
      %v1865 = vadd.f32 %v891, %v1864
      %v1866 = vpop.f32.mrb[0].mxu0
      %v1867 = vpop.f32.mrb[0].mxu0
      %v1868 = vadd.f32 %v894, %v1867
      %v1869 = vpop.f32.mrb[0].mxu0
      %1870 = vmatprep.mubr.bf16.mxu0 %v1384
      %1871 = vmatmul.mubr.bf16.gmra.mrb[0].mxu0 %v1383
      %v1872 = vpop.f32.mrb[0].mxu0
      %v1873 = vadd.f32 %v899, %v1872
      %v1874 = vpop.f32.mrb[0].mxu0
      %v1875 = vpop.f32.mrb[0].mxu0
      %v1876 = vadd.f32 %v902, %v1875
      %v1877 = vpop.f32.mrb[0].mxu0
      %1878 = vmatprep.mubr.bf16.mxu0 %v1387
      %1879 = vmatmul.mubr.bf16.gmra.mrb[0].mxu0 %v1386
      %v1880 = vpop.f32.mrb[0].mxu0
      %v1881 = vadd.f32 %v907, %v1880
      %v1882 = vpop.f32.mrb[0].mxu0
      %v1883 = vpop.f32.mrb[0].mxu0
      %v1884 = vadd.f32 %v910, %v1883
      %v1885 = vpop.f32.mrb[0].mxu0
      %1886 = vmatprep.mubr.bf16.mxu0 %v1390
      %1887 = vmatmul.mubr.bf16.gmra.mrb[0].mxu0 %v1389
      %v1888 = vpop.f32.mrb[0].mxu0
      %v1889 = vadd.f32 %v915, %v1888
      %v1890 = vpop.f32.mrb[0].mxu0
      %v1891 = vpop.f32.mrb[0].mxu0
      %v1892 = vadd.f32 %v918, %v1891
      %v1893 = vpop.f32.mrb[0].mxu0
      %1894 = vmatprep.mubr.bf16.mxu0 %v1393
      %1895 = vmatmul.mubr.bf16.gmra.mrb[0].mxu0 %v1392
      %v1896 = vpop.f32.mrb[0].mxu0
      %v1897 = vadd.f32 %v923, %v1896
      %v1898 = vpop.f32.mrb[0].mxu0
      %v1899 = vpop.f32.mrb[0].mxu0
      %v1900 = vadd.f32 %v926, %v1899
      %v1901 = vpop.f32.mrb[0].mxu0
      %1902 = vmatprep.mubr.bf16.mxu0 %v1396
      %1903 = vmatmul.mubr.bf16.gmra.mrb[0].mxu0 %v1395
      %v1904 = vpop.f32.mrb[0].mxu0
      %v1905 = vadd.f32 %v931, %v1904
      %v1906 = vpop.f32.mrb[0].mxu0
      %v1907 = vpop.f32.mrb[0].mxu0
      %v1908 = vadd.f32 %v934, %v1907
      %v1909 = vpop.f32.mrb[0].mxu0
      %1910 = vmatprep.mubr.bf16.mxu0 %v1399
      %1911 = vmatmul.mubr.bf16.gmra.mrb[0].mxu0 %v1398
      %v1912 = vpop.f32.mrb[0].mxu0
      %v1913 = vadd.f32 %v939, %v1912
      %v1914 = vpop.f32.mrb[0].mxu0
      %v1915 = vpop.f32.mrb[0].mxu0
      %v1916 = vadd.f32 %v942, %v1915
      %v1917 = vpop.f32.mrb[0].mxu0
      %1918 = vmatprep.mubr.bf16.mxu0 %v1402
      %1919 = vmatmul.mubr.bf16.gmra.mrb[0].mxu0 %v1401
      %v1920 = vpop.f32.mrb[0].mxu0
      %v1921 = vadd.f32 %v947, %v1920
      %v1922 = vpop.f32.mrb[0].mxu0
      %v1923 = vpop.f32.mrb[0].mxu0
      %v1924 = vadd.f32 %v950, %v1923
      %v1925 = vpop.f32.mrb[0].mxu0
      %1926 = vmatprep.mubr.bf16.mxu0 %v1405
      %1927 = vmatmul.mubr.bf16.gmra.mrb[0].mxu0 %v1404
      %v1928 = vpop.f32.mrb[0].mxu0
      %v1929 = vadd.f32 %v955, %v1928
      %v1930 = vpop.f32.mrb[0].mxu0
      %v1931 = vpop.f32.mrb[0].mxu0
      %v1932 = vadd.f32 %v958, %v1931
      %v1933 = vpop.f32.mrb[0].mxu0
      %1934 = vmatprep.mubr.bf16.mxu0 %v1408
      %1935 = vmatmul.mubr.bf16.gmra.mrb[0].mxu0 %v1407
      %v1936 = vpop.f32.mrb[0].mxu0
      %v1937 = vadd.f32 %v963, %v1936
      %v1938 = vpop.f32.mrb[0].mxu0
      %v1939 = vpop.f32.mrb[0].mxu0
      %v1940 = vadd.f32 %v966, %v1939
      %v1941 = vpop.f32.mrb[0].mxu0
      %1942 = vmatprep.mubr.bf16.mxu0 %v1411
      %1943 = vmatmul.mubr.bf16.gmra.mrb[0].mxu0 %v1410
      %v1944 = vpop.f32.mrb[0].mxu0
      %v1945 = vadd.f32 %v971, %v1944
      %v1946 = vpop.f32.mrb[0].mxu0
      %v1947 = vpop.f32.mrb[0].mxu0
      %v1948 = vadd.f32 %v974, %v1947
      %v1949 = vpop.f32.mrb[0].mxu0
      %1950 = vmatprep.mubr.bf16.mxu0 %v1414
      %1951 = vmatmul.mubr.bf16.gmra.mrb[0].mxu0 %v1413
      %v1952 = vpop.f32.mrb[0].mxu0
      %v1953 = vadd.f32 %v979, %v1952
      %v1954 = vpop.f32.mrb[0].mxu0
      %v1955 = vpop.f32.mrb[0].mxu0
      %v1956 = vadd.f32 %v982, %v1955
      %v1957 = vpop.f32.mrb[0].mxu0
      %1958 = vmatprep.mubr.bf16.mxu0 %v1417
      %1959 = vmatmul.mubr.bf16.gmra.mrb[0].mxu0 %v1416
      %v1960 = vpop.f32.mrb[0].mxu0
      %v1961 = vadd.f32 %v987, %v1960
      %v1962 = vpop.f32.mrb[0].mxu0
      %v1963 = vpop.f32.mrb[0].mxu0
      %v1964 = vadd.f32 %v990, %v1963
      %v1965 = vpop.f32.mrb[0].mxu0
      %1966 = vmatprep.mubr.bf16.mxu0 %v1420
      %1967 = vmatmul.mubr.bf16.gmra.mrb[0].mxu0 %v1419
      %v1968 = vpop.f32.mrb[0].mxu0
      %v1969 = vadd.f32 %v995, %v1968
      %v1970 = vpop.f32.mrb[0].mxu0
      %v1971 = vpop.f32.mrb[0].mxu0
      %v1972 = vadd.f32 %v998, %v1971
      %v1973 = vpop.f32.mrb[0].mxu0
      %1974 = vmatprep.mubr.bf16.mxu0 %v1423
      %1975 = vmatmul.mubr.bf16.gmra.mrb[0].mxu0 %v1422
      %v1976 = vpop.f32.mrb[0].mxu0
      %v1977 = vadd.f32 %v1003, %v1976
      %v1978 = vpop.f32.mrb[0].mxu0
      %v1979 = vpop.f32.mrb[0].mxu0
      %v1980 = vadd.f32 %v1006, %v1979
      %v1981 = vpop.f32.mrb[0].mxu0
      %1982 = vdwg.mxu0
      %1983 = vmatprep.subr.bf16.mxu0 0
      %1984 = vmatpush1.bf16.msra.mxu0 %v1577
      %1985 = vmatprep.subr.bf16.mxu0 0
      %1986 = vmatpush1.bf16.msra.mxu0 %v1578
      %1987 = vmatprep.subr.bf16.mxu0 0
      %1988 = vmatpush1.bf16.msra.mxu0 0
      %1989 = vmatprep.subr.bf16.mxu0 0
      %1990 = vmatpush1.bf16.msra.mxu0 0
      %1991 = vmatprep.subr.bf16.mxu0 0
      %1992 = vmatpush1.bf16.msra.mxu0 0
      %1993 = vmatprep.subr.bf16.mxu0 0
      %1994 = vmatpush1.bf16.msra.mxu0 0
      %1995 = vmatprep.subr.bf16.mxu0 0
      %1996 = vmatpush1.bf16.msra.mxu0 0
      %1997 = vmatprep.subr.bf16.mxu0 0
      %1998 = vmatpush1.bf16.msra.mxu0 0
      %1999 = vmatprep.subr.bf16.mxu0 0
      %2000 = vmatpush1.bf16.msra.mxu0 0
      %2001 = vmatprep.subr.bf16.mxu0 0
      %2002 = vmatpush1.bf16.msra.mxu0 0
      %2003 = vmatprep.subr.bf16.mxu0 0
      %2004 = vmatpush1.bf16.msra.mxu0 0
      %2005 = vmatprep.subr.bf16.mxu0 0
      %2006 = vmatpush1.bf16.msra.mxu0 0
      %2007 = vmatprep.subr.bf16.mxu0 0
      %2008 = vmatpush1.bf16.msra.mxu0 0
      %2009 = vmatprep.subr.bf16.mxu0 0
      %2010 = vmatpush1.bf16.msra.mxu0 0
      %2011 = vmatprep.subr.bf16.mxu0 0
      %2012 = vmatpush1.bf16.msra.mxu0 0
      %2013 = vmatprep.subr.bf16.mxu0 0
      %2014 = vmatpush1.bf16.msra.mxu0 0
      %2015 = vmatprep.mubr.bf16.mxu0 0
      %2016 = vmatmul.mubr.bf16.gmra.mrb[0].mxu0 %v1599
      %v2017 = vpop.f32.mrb[0].mxu0
      %v2018 = vadd.f32 %v1729, %v2017
      %v2019 = vpop.f32.mrb[0].mxu0
      %v2020 = vpop.f32.mrb[0].mxu0
      %v2021 = vadd.f32 %v1732, %v2020
      %v2022 = vpop.f32.mrb[0].mxu0
      %2023 = vmatprep.mubr.bf16.mxu0 0
      %2024 = vmatmul.mubr.bf16.gmra.mrb[0].mxu0 %v1602
      %v2025 = vpop.f32.mrb[0].mxu0
      %v2026 = vadd.f32 %v1737, %v2025
      %v2027 = vpop.f32.mrb[0].mxu0
      %v2028 = vpop.f32.mrb[0].mxu0
      %v2029 = vadd.f32 %v1740, %v2028
      %v2030 = vpop.f32.mrb[0].mxu0
      %2031 = vmatprep.mubr.bf16.mxu0 0
      %2032 = vmatmul.mubr.bf16.gmra.mrb[0].mxu0 %v1605
      %v2033 = vpop.f32.mrb[0].mxu0
      %v2034 = vadd.f32 %v1745, %v2033
      %v2035 = vpop.f32.mrb[0].mxu0
      %v2036 = vpop.f32.mrb[0].mxu0
      %v2037 = vadd.f32 %v1748, %v2036
      %v2038 = vpop.f32.mrb[0].mxu0
      %2039 = vmatprep.mubr.bf16.mxu0 0
      %2040 = vmatmul.mubr.bf16.gmra.mrb[0].mxu0 %v1608
      %v2041 = vpop.f32.mrb[0].mxu0
      %v2042 = vadd.f32 %v1753, %v2041
      %v2043 = vpop.f32.mrb[0].mxu0
      %v2044 = vpop.f32.mrb[0].mxu0
      %v2045 = vadd.f32 %v1756, %v2044
      %v2046 = vpop.f32.mrb[0].mxu0
      %2047 = vmatprep.mubr.bf16.mxu0 0
      %2048 = vmatmul.mubr.bf16.gmra.mrb[0].mxu0 %v1611
      %v2049 = vpop.f32.mrb[0].mxu0
      %v2050 = vadd.f32 %v1761, %v2049
      %v2051 = vpop.f32.mrb[0].mxu0
      %v2052 = vpop.f32.mrb[0].mxu0
      %v2053 = vadd.f32 %v1764, %v2052
      %v2054 = vpop.f32.mrb[0].mxu0
      %2055 = vmatprep.mubr.bf16.mxu0 0
      %2056 = vmatmul.mubr.bf16.gmra.mrb[0].mxu0 %v1614
      %v2057 = vpop.f32.mrb[0].mxu0
      %v2058 = vadd.f32 %v1769, %v2057
      %v2059 = vpop.f32.mrb[0].mxu0
      %v2060 = vpop.f32.mrb[0].mxu0
      %v2061 = vadd.f32 %v1772, %v2060
      %v2062 = vpop.f32.mrb[0].mxu0
      %2063 = vmatprep.mubr.bf16.mxu0 0
      %2064 = vmatmul.mubr.bf16.gmra.mrb[0].mxu0 %v1617
      %v2065 = vpop.f32.mrb[0].mxu0
      %v2066 = vadd.f32 %v1777, %v2065
      %v2067 = vpop.f32.mrb[0].mxu0
      %v2068 = vpop.f32.mrb[0].mxu0
      %v2069 = vadd.f32 %v1780, %v2068
      %v2070 = vpop.f32.mrb[0].mxu0
      %2071 = vmatprep.mubr.bf16.mxu0 0
      %2072 = vmatmul.mubr.bf16.gmra.mrb[0].mxu0 %v1620
      %v2073 = vpop.f32.mrb[0].mxu0
      %v2074 = vadd.f32 %v1785, %v2073
      %v2075 = vpop.f32.mrb[0].mxu0
      %v2076 = vpop.f32.mrb[0].mxu0
      %v2077 = vadd.f32 %v1788, %v2076
      %v2078 = vpop.f32.mrb[0].mxu0
      %2079 = vmatprep.mubr.bf16.mxu0 0
      %2080 = vmatmul.mubr.bf16.gmra.mrb[0].mxu0 %v1623
      %v2081 = vpop.f32.mrb[0].mxu0
      %v2082 = vadd.f32 %v1793, %v2081
      %v2083 = vpop.f32.mrb[0].mxu0
      %v2084 = vpop.f32.mrb[0].mxu0
      %v2085 = vadd.f32 %v1796, %v2084
      %v2086 = vpop.f32.mrb[0].mxu0
      %2087 = vmatprep.mubr.bf16.mxu0 0
      %2088 = vmatmul.mubr.bf16.gmra.mrb[0].mxu0 %v1626
      %v2089 = vpop.f32.mrb[0].mxu0
      %v2090 = vadd.f32 %v1801, %v2089
      %v2091 = vpop.f32.mrb[0].mxu0
      %v2092 = vpop.f32.mrb[0].mxu0
      %v2093 = vadd.f32 %v1804, %v2092
      %v2094 = vpop.f32.mrb[0].mxu0
      %2095 = vmatprep.mubr.bf16.mxu0 0
      %2096 = vmatmul.mubr.bf16.gmra.mrb[0].mxu0 %v1629
      %v2097 = vpop.f32.mrb[0].mxu0
      %v2098 = vadd.f32 %v1809, %v2097
      %v2099 = vpop.f32.mrb[0].mxu0
      %v2100 = vpop.f32.mrb[0].mxu0
      %v2101 = vadd.f32 %v1812, %v2100
      %v2102 = vpop.f32.mrb[0].mxu0
      %2103 = vmatprep.mubr.bf16.mxu0 0
      %2104 = vmatmul.mubr.bf16.gmra.mrb[0].mxu0 %v1632
      %v2105 = vpop.f32.mrb[0].mxu0
      %v2106 = vadd.f32 %v1817, %v2105
      %v2107 = vpop.f32.mrb[0].mxu0
      %v2108 = vpop.f32.mrb[0].mxu0
      %v2109 = vadd.f32 %v1820, %v2108
      %v2110 = vpop.f32.mrb[0].mxu0
      %2111 = vmatprep.mubr.bf16.mxu0 0
      %2112 = vmatmul.mubr.bf16.gmra.mrb[0].mxu0 %v1635
      %v2113 = vpop.f32.mrb[0].mxu0
      %v2114 = vadd.f32 %v1825, %v2113
      %v2115 = vpop.f32.mrb[0].mxu0
      %v2116 = vpop.f32.mrb[0].mxu0
      %v2117 = vadd.f32 %v1828, %v2116
      %v2118 = vpop.f32.mrb[0].mxu0
      %2119 = vmatprep.mubr.bf16.mxu0 0
      %2120 = vmatmul.mubr.bf16.gmra.mrb[0].mxu0 %v1638
      %v2121 = vpop.f32.mrb[0].mxu0
      %v2122 = vadd.f32 %v1833, %v2121
      %v2123 = vpop.f32.mrb[0].mxu0
      %v2124 = vpop.f32.mrb[0].mxu0
      %v2125 = vadd.f32 %v1836, %v2124
      %v2126 = vpop.f32.mrb[0].mxu0
      %2127 = vmatprep.mubr.bf16.mxu0 0
      %2128 = vmatmul.mubr.bf16.gmra.mrb[0].mxu0 %v1641
      %v2129 = vpop.f32.mrb[0].mxu0
      %v2130 = vadd.f32 %v1841, %v2129
      %v2131 = vpop.f32.mrb[0].mxu0
      %v2132 = vpop.f32.mrb[0].mxu0
      %v2133 = vadd.f32 %v1844, %v2132
      %v2134 = vpop.f32.mrb[0].mxu0
      %2135 = vmatprep.mubr.bf16.mxu0 0
      %2136 = vmatmul.mubr.bf16.gmra.mrb[0].mxu0 %v1644
      %v2137 = vpop.f32.mrb[0].mxu0
      %v2138 = vadd.f32 %v1849, %v2137
      %v2139 = vpop.f32.mrb[0].mxu0
      %v2140 = vpop.f32.mrb[0].mxu0
      %v2141 = vadd.f32 %v1852, %v2140
      %v2142 = vpop.f32.mrb[0].mxu0
      %2143 = vmatprep.mubr.bf16.mxu0 0
      %2144 = vmatmul.mubr.bf16.gmra.mrb[0].mxu0 %v1647
      %v2145 = vpop.f32.mrb[0].mxu0
      %v2146 = vadd.f32 %v1857, %v2145
      %v2147 = vpop.f32.mrb[0].mxu0
      %v2148 = vpop.f32.mrb[0].mxu0
      %v2149 = vadd.f32 %v1860, %v2148
      %v2150 = vpop.f32.mrb[0].mxu0
      %2151 = vmatprep.mubr.bf16.mxu0 0
      %2152 = vmatmul.mubr.bf16.gmra.mrb[0].mxu0 %v1650
      %v2153 = vpop.f32.mrb[0].mxu0
      %v2154 = vadd.f32 %v1865, %v2153
      %v2155 = vpop.f32.mrb[0].mxu0
      %v2156 = vpop.f32.mrb[0].mxu0
      %v2157 = vadd.f32 %v1868, %v2156
      %v2158 = vpop.f32.mrb[0].mxu0
      %2159 = vmatprep.mubr.bf16.mxu0 0
      %2160 = vmatmul.mubr.bf16.gmra.mrb[0].mxu0 %v1653
      %v2161 = vpop.f32.mrb[0].mxu0
      %v2162 = vadd.f32 %v1873, %v2161
      %v2163 = vpop.f32.mrb[0].mxu0
      %v2164 = vpop.f32.mrb[0].mxu0
      %v2165 = vadd.f32 %v1876, %v2164
      %v2166 = vpop.f32.mrb[0].mxu0
      %2167 = vmatprep.mubr.bf16.mxu0 0
      %2168 = vmatmul.mubr.bf16.gmra.mrb[0].mxu0 %v1656
      %v2169 = vpop.f32.mrb[0].mxu0
      %v2170 = vadd.f32 %v1881, %v2169
      %v2171 = vpop.f32.mrb[0].mxu0
      %v2172 = vpop.f32.mrb[0].mxu0
      %v2173 = vadd.f32 %v1884, %v2172
      %v2174 = vpop.f32.mrb[0].mxu0
      %2175 = vmatprep.mubr.bf16.mxu0 0
      %2176 = vmatmul.mubr.bf16.gmra.mrb[0].mxu0 %v1659
      %v2177 = vpop.f32.mrb[0].mxu0
      %v2178 = vadd.f32 %v1889, %v2177
      %v2179 = vpop.f32.mrb[0].mxu0
      %v2180 = vpop.f32.mrb[0].mxu0
      %v2181 = vadd.f32 %v1892, %v2180
      %v2182 = vpop.f32.mrb[0].mxu0
      %2183 = vmatprep.mubr.bf16.mxu0 0
      %2184 = vmatmul.mubr.bf16.gmra.mrb[0].mxu0 %v1662
      %v2185 = vpop.f32.mrb[0].mxu0
      %v2186 = vadd.f32 %v1897, %v2185
      %v2187 = vpop.f32.mrb[0].mxu0
      %v2188 = vpop.f32.mrb[0].mxu0
      %v2189 = vadd.f32 %v1900, %v2188
      %v2190 = vpop.f32.mrb[0].mxu0
      %2191 = vmatprep.mubr.bf16.mxu0 0
      %2192 = vmatmul.mubr.bf16.gmra.mrb[0].mxu0 %v1665
      %v2193 = vpop.f32.mrb[0].mxu0
      %v2194 = vadd.f32 %v1905, %v2193
      %v2195 = vpop.f32.mrb[0].mxu0
      %v2196 = vpop.f32.mrb[0].mxu0
      %v2197 = vadd.f32 %v1908, %v2196
      %v2198 = vpop.f32.mrb[0].mxu0
      %2199 = vmatprep.mubr.bf16.mxu0 0
      %2200 = vmatmul.mubr.bf16.gmra.mrb[0].mxu0 %v1668
      %v2201 = vpop.f32.mrb[0].mxu0
      %v2202 = vadd.f32 %v1913, %v2201
      %v2203 = vpop.f32.mrb[0].mxu0
      %v2204 = vpop.f32.mrb[0].mxu0
      %v2205 = vadd.f32 %v1916, %v2204
      %v2206 = vpop.f32.mrb[0].mxu0
      %2207 = vmatprep.mubr.bf16.mxu0 0
      %2208 = vmatmul.mubr.bf16.gmra.mrb[0].mxu0 %v1671
      %v2209 = vpop.f32.mrb[0].mxu0
      %v2210 = vadd.f32 %v1921, %v2209
      %v2211 = vpop.f32.mrb[0].mxu0
      %v2212 = vpop.f32.mrb[0].mxu0
      %v2213 = vadd.f32 %v1924, %v2212
      %v2214 = vpop.f32.mrb[0].mxu0
      %2215 = vmatprep.mubr.bf16.mxu0 0
      %2216 = vmatmul.mubr.bf16.gmra.mrb[0].mxu0 %v1674
      %v2217 = vpop.f32.mrb[0].mxu0
      %v2218 = vadd.f32 %v1929, %v2217
      %v2219 = vpop.f32.mrb[0].mxu0
      %v2220 = vpop.f32.mrb[0].mxu0
      %v2221 = vadd.f32 %v1932, %v2220
      %v2222 = vpop.f32.mrb[0].mxu0
      %2223 = vmatprep.mubr.bf16.mxu0 0
      %2224 = vmatmul.mubr.bf16.gmra.mrb[0].mxu0 %v1677
      %v2225 = vpop.f32.mrb[0].mxu0
      %v2226 = vadd.f32 %v1937, %v2225
      %v2227 = vpop.f32.mrb[0].mxu0
      %v2228 = vpop.f32.mrb[0].mxu0
      %v2229 = vadd.f32 %v1940, %v2228
      %v2230 = vpop.f32.mrb[0].mxu0
      %2231 = vmatprep.mubr.bf16.mxu0 0
      %2232 = vmatmul.mubr.bf16.gmra.mrb[0].mxu0 %v1680
      %v2233 = vpop.f32.mrb[0].mxu0
      %v2234 = vadd.f32 %v1945, %v2233
      %v2235 = vpop.f32.mrb[0].mxu0
      %v2236 = vpop.f32.mrb[0].mxu0
      %v2237 = vadd.f32 %v1948, %v2236
      %v2238 = vpop.f32.mrb[0].mxu0
      %2239 = vmatprep.mubr.bf16.mxu0 0
      %2240 = vmatmul.mubr.bf16.gmra.mrb[0].mxu0 %v1683
      %v2241 = vpop.f32.mrb[0].mxu0
      %v2242 = vadd.f32 %v1953, %v2241
      %v2243 = vpop.f32.mrb[0].mxu0
      %v2244 = vpop.f32.mrb[0].mxu0
      %v2245 = vadd.f32 %v1956, %v2244
      %v2246 = vpop.f32.mrb[0].mxu0
      %2247 = vmatprep.mubr.bf16.mxu0 0
      %2248 = vmatmul.mubr.bf16.gmra.mrb[0].mxu0 %v1686
      %v2249 = vpop.f32.mrb[0].mxu0
      %v2250 = vadd.f32 %v1961, %v2249
      %v2251 = vpop.f32.mrb[0].mxu0
      %v2252 = vpop.f32.mrb[0].mxu0
      %v2253 = vadd.f32 %v1964, %v2252
      %v2254 = vpop.f32.mrb[0].mxu0
      %2255 = vmatprep.mubr.bf16.mxu0 0
      %2256 = vmatmul.mubr.bf16.gmra.mrb[0].mxu0 %v1689
      %v2257 = vpop.f32.mrb[0].mxu0
      %v2258 = vadd.f32 %v1969, %v2257
      %v2259 = vpop.f32.mrb[0].mxu0
      %v2260 = vpop.f32.mrb[0].mxu0
      %v2261 = vadd.f32 %v1972, %v2260
      %v2262 = vpop.f32.mrb[0].mxu0
      %2263 = vmatprep.mubr.bf16.mxu0 0
      %2264 = vmatmul.mubr.bf16.gmra.mrb[0].mxu0 %v1692
      %v2265 = vpop.f32.mrb[0].mxu0
      %v2266 = vadd.f32 %v1977, %v2265
      %v2267 = vpop.f32.mrb[0].mxu0
      %v2268 = vpop.f32.mrb[0].mxu0
      %v2269 = vadd.f32 %v1980, %v2268
      %v2270 = vpop.f32.mrb[0].mxu0
      %2271 = vdwg.mxu0
      %2272 = vst.msk [vmem:[%s224] sm:$0xff] %vm1597, %v2018
      %2273 = vst.msk [vmem:[%s224 + $0x8] sm:$0xff] %vm1597, %v2021
      %2274 = vst.msk [vmem:[%s224 + $0x10] sm:$0xff] %vm1597, %v2026
      %2275 = vst.msk [vmem:[%s224 + $0x18] sm:$0xff] %vm1597, %v2029
      %2276 = vst.msk [vmem:[%s224 + $0x20] sm:$0xff] %vm1597, %v2034
      %2277 = vst.msk [vmem:[%s224 + $0x28] sm:$0xff] %vm1597, %v2037
      %2278 = vst.msk [vmem:[%s224 + $0x30] sm:$0xff] %vm1597, %v2042
      %2279 = vst.msk [vmem:[%s224 + $0x38] sm:$0xff] %vm1597, %v2045
      %2280 = vst.msk [vmem:[%s224 + $0x40] sm:$0xff] %vm1597, %v2050
      %2281 = vst.msk [vmem:[%s224 + $0x48] sm:$0xff] %vm1597, %v2053
      %2282 = vst.msk [vmem:[%s224 + $0x50] sm:$0xff] %vm1597, %v2058
      %2283 = vst.msk [vmem:[%s224 + $0x58] sm:$0xff] %vm1597, %v2061
      %2284 = vst.msk [vmem:[%s224 + $0x60] sm:$0xff] %vm1597, %v2066
      %2285 = vst.msk [vmem:[%s224 + $0x68] sm:$0xff] %vm1597, %v2069
      %2286 = vst.msk [vmem:[%s224 + $0x70] sm:$0xff] %vm1597, %v2074
      %2287 = vst.msk [vmem:[%s224 + $0x78] sm:$0xff] %vm1597, %v2077
      %2288 = vst.msk [vmem:[%s224 + $0x80] sm:$0xff] %vm1597, %v2082
      %2289 = vst.msk [vmem:[%s224 + $0x88] sm:$0xff] %vm1597, %v2085
      %2290 = vst.msk [vmem:[%s224 + $0x90] sm:$0xff] %vm1597, %v2090
      %2291 = vst.msk [vmem:[%s224 + $0x98] sm:$0xff] %vm1597, %v2093
      %2292 = vst.msk [vmem:[%s224 + $0xa0] sm:$0xff] %vm1597, %v2098
      %2293 = vst.msk [vmem:[%s224 + $0xa8] sm:$0xff] %vm1597, %v2101
      %2294 = vst.msk [vmem:[%s224 + $0xb0] sm:$0xff] %vm1597, %v2106
      %2295 = vst.msk [vmem:[%s224 + $0xb8] sm:$0xff] %vm1597, %v2109
      %2296 = vst.msk [vmem:[%s224 + $0xc0] sm:$0xff] %vm1597, %v2114
      %2297 = vst.msk [vmem:[%s224 + $0xc8] sm:$0xff] %vm1597, %v2117
      %2298 = vst.msk [vmem:[%s224 + $0xd0] sm:$0xff] %vm1597, %v2122
      %2299 = vst.msk [vmem:[%s224 + $0xd8] sm:$0xff] %vm1597, %v2125
      %2300 = vst.msk [vmem:[%s224 + $0xe0] sm:$0xff] %vm1597, %v2130
      %2301 = vst.msk [vmem:[%s224 + $0xe8] sm:$0xff] %vm1597, %v2133
      %2302 = vst.msk [vmem:[%s224 + $0xf0] sm:$0xff] %vm1597, %v2138
      %2303 = vst.msk [vmem:[%s224 + $0xf8] sm:$0xff] %vm1597, %v2141
      %2304 = vst.msk [vmem:[%s224 + $0x100] sm:$0xff] %vm1597, %v2146
      %2305 = vst.msk [vmem:[%s224 + $0x108] sm:$0xff] %vm1597, %v2149
      %2306 = vst.msk [vmem:[%s224 + $0x110] sm:$0xff] %vm1597, %v2154
      %2307 = vst.msk [vmem:[%s224 + $0x118] sm:$0xff] %vm1597, %v2157
      %2308 = vst.msk [vmem:[%s224 + $0x120] sm:$0xff] %vm1597, %v2162
      %2309 = vst.msk [vmem:[%s224 + $0x128] sm:$0xff] %vm1597, %v2165
      %2310 = vst.msk [vmem:[%s224 + $0x130] sm:$0xff] %vm1597, %v2170
      %2311 = vst.msk [vmem:[%s224 + $0x138] sm:$0xff] %vm1597, %v2173
      %2312 = vst.msk [vmem:[%s224 + $0x140] sm:$0xff] %vm1597, %v2178
      %2313 = vst.msk [vmem:[%s224 + $0x148] sm:$0xff] %vm1597, %v2181
      %2314 = vst.msk [vmem:[%s224 + $0x150] sm:$0xff] %vm1597, %v2186
      %2315 = vst.msk [vmem:[%s224 + $0x158] sm:$0xff] %vm1597, %v2189
      %2316 = vst.msk [vmem:[%s224 + $0x160] sm:$0xff] %vm1597, %v2194
      %2317 = vst.msk [vmem:[%s224 + $0x168] sm:$0xff] %vm1597, %v2197
      %2318 = vst.msk [vmem:[%s224 + $0x170] sm:$0xff] %vm1597, %v2202
      %2319 = vst.msk [vmem:[%s224 + $0x178] sm:$0xff] %vm1597, %v2205
      %2320 = vst.msk [vmem:[%s224 + $0x180] sm:$0xff] %vm1597, %v2210
      %2321 = vst.msk [vmem:[%s224 + $0x188] sm:$0xff] %vm1597, %v2213
      %2322 = vst.msk [vmem:[%s224 + $0x190] sm:$0xff] %vm1597, %v2218
      %2323 = vst.msk [vmem:[%s224 + $0x198] sm:$0xff] %vm1597, %v2221
      %2324 = vst.msk [vmem:[%s224 + $0x1a0] sm:$0xff] %vm1597, %v2226
      %2325 = vst.msk [vmem:[%s224 + $0x1a8] sm:$0xff] %vm1597, %v2229
      %2326 = vst.msk [vmem:[%s224 + $0x1b0] sm:$0xff] %vm1597, %v2234
      %2327 = vst.msk [vmem:[%s224 + $0x1b8] sm:$0xff] %vm1597, %v2237
      %2328 = vst.msk [vmem:[%s224 + $0x1c0] sm:$0xff] %vm1597, %v2242
      %2329 = vst.msk [vmem:[%s224 + $0x1c8] sm:$0xff] %vm1597, %v2245
      %2330 = vst.msk [vmem:[%s224 + $0x1d0] sm:$0xff] %vm1597, %v2250
      %2331 = vst.msk [vmem:[%s224 + $0x1d8] sm:$0xff] %vm1597, %v2253
      %2332 = vst.msk [vmem:[%s224 + $0x1e0] sm:$0xff] %vm1597, %v2258
      %2333 = vst.msk [vmem:[%s224 + $0x1e8] sm:$0xff] %vm1597, %v2261
      %2334 = vst.msk [vmem:[%s224 + $0x1f0] sm:$0xff] %vm1597, %v2266
      %2335 = vst.msk [vmem:[%s224 + $0x1f8] sm:$0xff] %vm1597, %v2269
      %s2336 = smul.u32 64, %s15
      %p2337 = scmp.lt.s32.totalorder %s2336, 255
      %s2338 = scalar_select %p2337, %s2336, 255
      %s2339 = smul.addr %s2338, 8
      %s2340 = scalar_lea.vmem %s4, %s2339
      // Predicated region
      $region37: #{_lambda_.10} parent=35 // pred_check
        %p2341 = pneg %p127
      $region38: #{_lambda_.10} parent=35 // pred_check_branch
        %2343 = sbr.rel (%p2341) target = $region40
      $region39: #{_lambda_.10} parent=35 // pred_region
        %s2344 = smul.u32 64, %s15
      $region40: #{_lambda_.10} parent=35 // pred_fallthru
        _
    $region36: #{_lambda_.10} parent=5 // pred_fallthru
      _
    %p2345 = scmp.le.s32.totalorder 2, %s10
    // Predicated region
    $region41: #{_lambda_.10} parent=5 // pred_check
      %p2346 = pneg %p2345
    $region42: #{_lambda_.10} parent=5 // pred_check_branch
      %2348 = sbr.rel (%p2346) target = $region44
    $region43: #{_lambda_.10} parent=5 // pred_region
      %s2349 = ssub.s32 %s10, 2
      // Predicated region
      $region45: #{_lambda_.10} parent=43 // pred_check
        %p2350 = pneg %p133
      $region46: #{_lambda_.10} parent=43 // pred_check_branch
        %2352 = sbr.rel (%p2350) target = $region48
      $region47: #{_lambda_.10} parent=43 // pred_region
        %s2353 = smul.u32 64, %s16
        %p2354 = scmp.lt.s32.totalorder %s2353, 255
        %s2355 = scalar_select %p2354, %s2353, 255
        %s2356 = smul.addr %s2355, 8
        %s2357 = scalar_lea.vmem %s4, %s2356
      $region48: #{_lambda_.10} parent=43 // pred_fallthru
        _
    $region44: #{_lambda_.10} parent=5 // pred_fallthru
      _
  $region6: #{_lambda_.10} parent=0 // loop_footer
    %s14 = sadd.s32 1, %s10
  $region7: #{_lambda_.10} parent=0 // loop_footer_branch
    %9 = sbr.rel target = $region3
  $region8: #{_lambda_.10} parent=0 // loop_exit
    _

// kernel: _lambda_.11
$region0: #{_lambda_.11}
  #allocation0 [shape = 'u32[]', space=smem, size = 0x4, offset = 0x4, fixed_abs, tag = 'smem constant byte address 0x4 - core index']
  #allocation1 [shape = 'u32[144,128]{1,0:T(1,128)}', space=vmem, size = 0x12000, scoped, tag = 'internal scratch']
  %s0 = inlined_call_operand.vmem [shape: bf16[512,288], index: 0, kind: input, shape index: {}]
  %s1 = inlined_call_operand.vmem [shape: bf16[288,64], index: 1, kind: input, shape index: {}]
  %s2 = inlined_call_operand.vmem [shape: f32[1,64], index: 2, kind: input, shape index: {}]
  %s3 = inlined_call_operand.vmem [shape: f32[1,64], index: 3, kind: input, shape index: {}]
  %s4 = inlined_call_operand.vmem [shape: bf16[512,64], index: 4, kind: output, shape index: {}]
  %s5 = sld [smem:[#allocation0]]
  $region49: #{_lambda_.11} parent=0
    _
  %s7 = ssub.s32 1, %s5
  %s8 = scalar_select 0, %s7, %s5
  loop: start=0, step=1, limit=4
  $region2: #{_lambda_.11} parent=0 // loop_pre_header
    _
  $region3: #{_lambda_.11} parent=0 // loop_header
    %s10 = sphi 0, %s14
    %p11 = scmp.ge.s32.totalorder %s10, 4
    %s20 = sphi 0, %s22
    %s23 = sphi 0, %s20
    %s24 = sphi 0, %s23
    %s40 = sphi 0, %s24
    %s44 = sphi 0, %s44
    %s46 = sphi 0, %s44
    %s47 = sphi 0, %s46
    %s61 = sphi 0, %s47
    %s65 = sphi 0, %s65
    %s67 = sphi 0, %s65
    %s68 = sphi 0, %s67
    %s82 = sphi 0, %s68
    %s86 = sphi 0, %s86
    %s88 = sphi 0, %s86
    %s89 = sphi 0, %s88
    %s103 = sphi 0, %s89
    %s109 = sphi 0, %s111
    %s112 = sphi 0, %s109
    %s113 = sphi 0, %s112
    %s129 = sphi 0, %s113
  $region4: #{_lambda_.11} parent=0 // loop_header_branch
    %13 = sbr.rel (%p11) target = $region8
  $region5: #{_lambda_.11} parent=0 // loop_body
    %s15 = ssub.s32 %s10, 1
    %s16 = ssub.s32 %s10, 2
    %s17 = sadd.s32 %s10, 1
    %s18 = ssub.s32 %s10, %s17
    %p19 = scmp.eq.s32.totalorder %s18, 0
    %s21 = sadd.s32 %s20, 1
    %s22 = scalar_select %p19, %s20, %s21
    %p25 = pneg %p19
    %p26 = scmp.eq.s32.totalorder %s10, 1
    %p27 = por %p25, %p26
    %p28 = scmp.ne.s32.totalorder %s20, %s23
    %p29 = scmp.eq.s32.totalorder %s10, 0
    %p30 = por %p28, %p29
    %p31 = scmp.ne.s32.totalorder %s20, %s23
    %p32 = scmp.eq.s32.totalorder %s15, 1
    %p33 = por %p31, %p32
    %p34 = scmp.ne.s32.totalorder %s23, %s24
    %p35 = scmp.eq.s32.totalorder %s15, 0
    %p36 = por %p34, %p35
    %p37 = scmp.ne.s32.totalorder %s23, %s24
    %p38 = scmp.eq.s32.totalorder %s16, 1
    %p39 = por %p37, %p38
    %p41 = scmp.ne.s32.totalorder %s24, %s40
    %p42 = scmp.eq.s32.totalorder %s16, 0
    %p43 = por %p41, %p42
    %s45 = sadd.s32 %s44, 1
    %p48 = scmp.eq.s32.totalorder %s10, 1
    %p49 = scmp.ne.s32.totalorder %s44, %s46
    %p50 = scmp.eq.s32.totalorder %s10, 0
    %p51 = por %p49, %p50
    %p52 = scmp.ne.s32.totalorder %s44, %s46
    %p53 = scmp.eq.s32.totalorder %s15, 1
    %p54 = por %p52, %p53
    %p55 = scmp.ne.s32.totalorder %s46, %s47
    %p56 = scmp.eq.s32.totalorder %s15, 0
    %p57 = por %p55, %p56
    %p58 = scmp.ne.s32.totalorder %s46, %s47
    %p59 = scmp.eq.s32.totalorder %s16, 1
    %p60 = por %p58, %p59
    %p62 = scmp.ne.s32.totalorder %s47, %s61
    %p63 = scmp.eq.s32.totalorder %s16, 0
    %p64 = por %p62, %p63
    %s66 = sadd.s32 %s65, 1
    %p69 = scmp.eq.s32.totalorder %s10, 1
    %p70 = scmp.ne.s32.totalorder %s65, %s67
    %p71 = scmp.eq.s32.totalorder %s10, 0
    %p72 = por %p70, %p71
    %p73 = scmp.ne.s32.totalorder %s65, %s67
    %p74 = scmp.eq.s32.totalorder %s15, 1
    %p75 = por %p73, %p74
    %p76 = scmp.ne.s32.totalorder %s67, %s68
    %p77 = scmp.eq.s32.totalorder %s15, 0
    %p78 = por %p76, %p77
    %p79 = scmp.ne.s32.totalorder %s67, %s68
    %p80 = scmp.eq.s32.totalorder %s16, 1
    %p81 = por %p79, %p80
    %p83 = scmp.ne.s32.totalorder %s68, %s82
    %p84 = scmp.eq.s32.totalorder %s16, 0
    %p85 = por %p83, %p84
    %s87 = sadd.s32 %s86, 1
    %p90 = scmp.eq.s32.totalorder %s10, 1
    %p91 = scmp.ne.s32.totalorder %s86, %s88
    %p92 = scmp.eq.s32.totalorder %s10, 0
    %p93 = por %p91, %p92
    %p94 = scmp.ne.s32.totalorder %s86, %s88
    %p95 = scmp.eq.s32.totalorder %s15, 1
    %p96 = por %p94, %p95
    %p97 = scmp.ne.s32.totalorder %s88, %s89
    %p98 = scmp.eq.s32.totalorder %s15, 0
    %p99 = por %p97, %p98
    %p100 = scmp.ne.s32.totalorder %s88, %s89
    %p101 = scmp.eq.s32.totalorder %s16, 1
    %p102 = por %p100, %p101
    %p104 = scmp.ne.s32.totalorder %s89, %s103
    %p105 = scmp.eq.s32.totalorder %s16, 0
    %p106 = por %p104, %p105
    %s107 = ssub.s32 %s10, %s17
    %p108 = scmp.eq.s32.totalorder %s107, 0
    %s110 = sadd.s32 %s109, 1
    %s111 = scalar_select %p108, %s109, %s110
    %p114 = pneg %p108
    %p115 = scmp.eq.s32.totalorder %s10, 1
    %p116 = por %p114, %p115
    %p117 = scmp.ne.s32.totalorder %s109, %s112
    %p118 = scmp.eq.s32.totalorder %s10, 0
    %p119 = por %p117, %p118
    %p120 = scmp.ne.s32.totalorder %s109, %s112
    %p121 = scmp.eq.s32.totalorder %s15, 1
    %p122 = por %p120, %p121
    %p123 = scmp.ne.s32.totalorder %s112, %s113
    %p124 = scmp.eq.s32.totalorder %s15, 0
    %p125 = por %p123, %p124
    %p126 = scmp.ne.s32.totalorder %s112, %s113
    %p127 = scmp.eq.s32.totalorder %s16, 1
    %p128 = por %p126, %p127
    %p130 = scmp.ne.s32.totalorder %s113, %s129
    %p131 = scmp.eq.s32.totalorder %s16, 0
    %p132 = por %p130, %p131
    %p133 = scmp.le.s32.totalorder 1, %s10
    %p134 = scmp.lt.s32.totalorder %s10, 3
    %p135 = pnand %p133, %p134
    %p136 = pneg %p135
    // Predicated region
    $region9: #{_lambda_.11} parent=5 // pred_check
      _
    $region10: #{_lambda_.11} parent=5 // pred_check_branch
      %138 = sbr.rel (%p135) target = $region12
    $region11: #{_lambda_.11} parent=5 // pred_region
      %s139 = ssub.s32 %s10, 1
      // Predicated region
      $region13: #{_lambda_.11} parent=11 // pred_check
        %p140 = pneg %p57
      $region14: #{_lambda_.11} parent=11 // pred_check_branch
        %142 = sbr.rel (%p140) target = $region16
      $region15: #{_lambda_.11} parent=11 // pred_region
        _
      $region16: #{_lambda_.11} parent=11 // pred_fallthru
        _
      // Predicated region
      $region17: #{_lambda_.11} parent=11 // pred_check
        %p143 = pneg %p78
      $region18: #{_lambda_.11} parent=11 // pred_check_branch
        %145 = sbr.rel (%p143) target = $region20
      $region19: #{_lambda_.11} parent=11 // pred_region
        _
      $region20: #{_lambda_.11} parent=11 // pred_fallthru
        _
      // Predicated region
      $region21: #{_lambda_.11} parent=11 // pred_check
        %p146 = pneg %p99
      $region22: #{_lambda_.11} parent=11 // pred_check_branch
        %148 = sbr.rel (%p146) target = $region24
      $region23: #{_lambda_.11} parent=11 // pred_region
        _
      $region24: #{_lambda_.11} parent=11 // pred_fallthru
        _
    $region12: #{_lambda_.11} parent=5 // pred_fallthru
      _
    %p149 = scmp.lt.s32.totalorder %s10, 2
    // Predicated region
    $region25: #{_lambda_.11} parent=5 // pred_check
      %p150 = pneg %p149
    $region26: #{_lambda_.11} parent=5 // pred_check_branch
      %152 = sbr.rel (%p150) target = $region28
    $region27: #{_lambda_.11} parent=5 // pred_region
      // Predicated region
      $region29: #{_lambda_.11} parent=27 // pred_check
        %p153 = pneg %p30
      $region30: #{_lambda_.11} parent=27 // pred_check_branch
        %155 = sbr.rel (%p153) target = $region32
      $region31: #{_lambda_.11} parent=27 // pred_region
        %s156 = smul.u32 32, %s10
        %p157 = scmp.lt.s32.totalorder %s156, 63
        %s158 = scalar_select %p157, %s156, 63
        %s159 = smul.addr %s158, 3
        %s160 = smul.addr %s159, 4
        %s161 = scalar_lea.vmem %s0, %s160
        %s162 = smul.u32 32, %s10
      $region32: #{_lambda_.11} parent=27 // pred_fallthru
        _
    $region28: #{_lambda_.11} parent=5 // pred_fallthru
      _
    %p163 = scmp.le.s32.totalorder 1, %s10
    %p164 = scmp.lt.s32.totalorder %s10, 3
    %p165 = pnand %p163, %p164
    %p166 = pneg %p165
    // Predicated region
    $region33: #{_lambda_.11} parent=5 // pred_check
      _
    $region34: #{_lambda_.11} parent=5 // pred_check_branch
      %168 = sbr.rel (%p165) target = $region36
    $region35: #{_lambda_.11} parent=5 // pred_region
      %s169 = ssub.s32 %s10, 1
      %s170 = smul.u32 32, %s15
      %p171 = scmp.lt.s32.totalorder %s170, 63
      %s172 = scalar_select %p171, %s170, 63
      %s173 = smul.addr %s172, 3
      %s174 = smul.addr %s173, 4
      %s175 = scalar_lea.vmem %s0, %s174
      %p176 = pneg %p36
      %p177 = pneg %p33
      %p178 = pneg %p57
      %p179 = pneg %p54
      %p180 = pneg %p78
      %p181 = pneg %p75
      %p182 = pneg %p99
      %p183 = pneg %p96
      %p184 = pneg %p125
      %p185 = pneg %p122
      %s186 = smul.u32 32, %s15
      %p187 = scmp.lt.s32.totalorder %s186, 63
      %s188 = scalar_select %p187, %s186, 63
      %s189 = smul.addr %s188, 4
      %s190 = scalar_lea.vmem %s4, %s189
      %s191 = smul.u32 32, %s15
      %p192 = scmp.lt.s32.totalorder %s191, 63
      %s193 = scalar_select %p192, %s191, 63
      %s194 = smul.addr %s193, 3
      %s195 = smul.addr %s194, 4
      %s196 = scalar_lea.vmem %s0, %s195
      %s197 = smul.u32 32, %s15
      %s198 = smul.u32 32, %s15
      %p199 = scmp.lt.s32.totalorder %s198, 63
      %s200 = scalar_select %p199, %s198, 63
      %s201 = smul.addr %s200, 4
      %s202 = scalar_lea.vmem %s4, %s201
      %s203 = smul.u32 32, %s15
      %v205 = vld [vmem:[%s196] sm:$0xff]
      %v206 = vld [vmem:[%s196 + $0x8] sm:$0xf]
      %v207 = vld [vmem:[%s196 + $0xc] sm:$0xff]
      %v208 = vld [vmem:[%s196 + $0x14] sm:$0xf]
      %v209 = vld [vmem:[%s196 + $0x18] sm:$0xff]
      %v210 = vld [vmem:[%s196 + $0x20] sm:$0xf]
      %v211 = vld [vmem:[%s196 + $0x24] sm:$0xff]
      %v212 = vld [vmem:[%s196 + $0x2c] sm:$0xf]
      %v213 = vld [vmem:[%s196 + $0x30] sm:$0xff]
      %v214 = vld [vmem:[%s196 + $0x38] sm:$0xf]
      %v215 = vld [vmem:[%s196 + $0x3c] sm:$0xff]
      %v216 = vld [vmem:[%s196 + $0x44] sm:$0xf]
      %v217 = vld [vmem:[%s196 + $0x48] sm:$0xff]
      %v218 = vld [vmem:[%s196 + $0x50] sm:$0xf]
      %v219 = vld [vmem:[%s196 + $0x54] sm:$0xff]
      %v220 = vld [vmem:[%s196 + $0x5c] sm:$0xf]
      %v221 = vld [vmem:[%s196 + $0x60] sm:$0xff]
      %v222 = vld [vmem:[%s196 + $0x68] sm:$0xf]
      %v223 = vld [vmem:[%s196 + $0x6c] sm:$0xff]
      %v224 = vld [vmem:[%s196 + $0x74] sm:$0xf]
      %v225 = vld [vmem:[%s196 + $0x78] sm:$0xff]
      %v226 = vld [vmem:[%s196 + $0x80] sm:$0xf]
      %v227 = vld [vmem:[%s196 + $0x84] sm:$0xff]
      %v228 = vld [vmem:[%s196 + $0x8c] sm:$0xf]
      %v229 = vld [vmem:[%s196 + $0x90] sm:$0xff]
      %v230 = vld [vmem:[%s196 + $0x98] sm:$0xf]
      %v231 = vld [vmem:[%s196 + $0x9c] sm:$0xff]
      %v232 = vld [vmem:[%s196 + $0xa4] sm:$0xf]
      %v233 = vld [vmem:[%s196 + $0xa8] sm:$0xff]
      %v234 = vld [vmem:[%s196 + $0xb0] sm:$0xf]
      %v235 = vld [vmem:[%s196 + $0xb4] sm:$0xff]
      %v236 = vld [vmem:[%s196 + $0xbc] sm:$0xf]
      %v237 = vld [vmem:[%s196 + $0xc0] sm:$0xff]
      %v238 = vld [vmem:[%s196 + $0xc8] sm:$0xf]
      %v239 = vld [vmem:[%s196 + $0xcc] sm:$0xff]
      %v240 = vld [vmem:[%s196 + $0xd4] sm:$0xf]
      %v241 = vld [vmem:[%s196 + $0xd8] sm:$0xff]
      %v242 = vld [vmem:[%s196 + $0xe0] sm:$0xf]
      %v243 = vld [vmem:[%s196 + $0xe4] sm:$0xff]
      %v244 = vld [vmem:[%s196 + $0xec] sm:$0xf]
      %v245 = vld [vmem:[%s196 + $0xf0] sm:$0xff]
      %v246 = vld [vmem:[%s196 + $0xf8] sm:$0xf]
      %v247 = vld [vmem:[%s196 + $0xfc] sm:$0xff]
      %v248 = vld [vmem:[%s196 + $0x104] sm:$0xf]
      %v249 = vld [vmem:[%s196 + $0x108] sm:$0xff]
      %v250 = vld [vmem:[%s196 + $0x110] sm:$0xf]
      %v251 = vld [vmem:[%s196 + $0x114] sm:$0xff]
      %v252 = vld [vmem:[%s196 + $0x11c] sm:$0xf]
      %v253 = vld [vmem:[%s196 + $0x120] sm:$0xff]
      %v254 = vld [vmem:[%s196 + $0x128] sm:$0xf]
      %v255 = vld [vmem:[%s196 + $0x12c] sm:$0xff]
      %v256 = vld [vmem:[%s196 + $0x134] sm:$0xf]
      %v257 = vld [vmem:[%s196 + $0x138] sm:$0xff]
      %v258 = vld [vmem:[%s196 + $0x140] sm:$0xf]
      %v259 = vld [vmem:[%s196 + $0x144] sm:$0xff]
      %v260 = vld [vmem:[%s196 + $0x14c] sm:$0xf]
      %v261 = vld [vmem:[%s196 + $0x150] sm:$0xff]
      %v262 = vld [vmem:[%s196 + $0x158] sm:$0xf]
      %v263 = vld [vmem:[%s196 + $0x15c] sm:$0xff]
      %v264 = vld [vmem:[%s196 + $0x164] sm:$0xf]
      %v265 = vld [vmem:[%s196 + $0x168] sm:$0xff]
      %v266 = vld [vmem:[%s196 + $0x170] sm:$0xf]
      %v267 = vld [vmem:[%s196 + $0x174] sm:$0xff]
      %v268 = vld [vmem:[%s196 + $0x17c] sm:$0xf]
      %v269 = vld [vmem:[%s1] sm:$0xf]
      %v270 = vld [vmem:[%s1 + $0x4] sm:$0xf]
      %v271 = vld [vmem:[%s1 + $0x8] sm:$0xf]
      %v272 = vld [vmem:[%s1 + $0xc] sm:$0xf]
      %v273 = vld [vmem:[%s1 + $0x10] sm:$0xf]
      %v274 = vld [vmem:[%s1 + $0x14] sm:$0xf]
      %v275 = vld [vmem:[%s1 + $0x18] sm:$0xf]
      %v276 = vld [vmem:[%s1 + $0x1c] sm:$0xf]
      %v277 = vld [vmem:[%s1 + $0x20] sm:$0xf]
      %v278 = vld [vmem:[%s1 + $0x24] sm:$0xf]
      %v279 = vld [vmem:[%s1 + $0x28] sm:$0xf]
      %v280 = vld [vmem:[%s1 + $0x2c] sm:$0xf]
      %v281 = vld [vmem:[%s1 + $0x30] sm:$0xf]
      %v282 = vld [vmem:[%s1 + $0x34] sm:$0xf]
      %v283 = vld [vmem:[%s1 + $0x38] sm:$0xf]
      %v284 = vld [vmem:[%s1 + $0x3c] sm:$0xf]
      %v285 = vld [vmem:[%s1 + $0x40] sm:$0xf]
      %v286 = vld [vmem:[%s1 + $0x44] sm:$0xf]
      %v287 = vld [vmem:[%s1 + $0x48] sm:$0xf]
      %v288 = vld [vmem:[%s1 + $0x4c] sm:$0xf]
      %v289 = vld [vmem:[%s1 + $0x50] sm:$0xf]
      %v290 = vld [vmem:[%s1 + $0x54] sm:$0xf]
      %v291 = vld [vmem:[%s1 + $0x58] sm:$0xf]
      %v292 = vld [vmem:[%s1 + $0x5c] sm:$0xf]
      %v293 = vld [vmem:[%s1 + $0x60] sm:$0xf]
      %v294 = vld [vmem:[%s1 + $0x64] sm:$0xf]
      %v295 = vld [vmem:[%s1 + $0x68] sm:$0xf]
      %v296 = vld [vmem:[%s1 + $0x6c] sm:$0xf]
      %v297 = vld [vmem:[%s1 + $0x70] sm:$0xf]
      %v298 = vld [vmem:[%s1 + $0x74] sm:$0xf]
      %v299 = vld [vmem:[%s1 + $0x78] sm:$0xf]
      %v300 = vld [vmem:[%s1 + $0x7c] sm:$0xf]
      %v301 = vld [vmem:[%s1 + $0x80] sm:$0xf]
      %v302 = vld [vmem:[%s1 + $0x84] sm:$0xf]
      %v303 = vld [vmem:[%s1 + $0x88] sm:$0xf]
      %v304 = vld [vmem:[%s1 + $0x8c] sm:$0xf]
      %v369 = vunpack.c.l.b16 %v205
      %v370 = vunpack.c.h.b16 %v205
      %v371 = vunpack.c.l.b16 %v206
      %v372 = vunpack.c.l.b16 %v207
      %v373 = vunpack.c.h.b16 %v207
      %v374 = vunpack.c.l.b16 %v208
      %v375 = vunpack.c.l.b16 %v209
      %v376 = vunpack.c.h.b16 %v209
      %v377 = vunpack.c.l.b16 %v210
      %v378 = vunpack.c.l.b16 %v211
      %v379 = vunpack.c.h.b16 %v211
      %v380 = vunpack.c.l.b16 %v212
      %v381 = vunpack.c.l.b16 %v213
      %v382 = vunpack.c.h.b16 %v213
      %v383 = vunpack.c.l.b16 %v214
      %v384 = vunpack.c.l.b16 %v215
      %v385 = vunpack.c.h.b16 %v215
      %v386 = vunpack.c.l.b16 %v216
      %v387 = vunpack.c.l.b16 %v217
      %v388 = vunpack.c.h.b16 %v217
      %v389 = vunpack.c.l.b16 %v218
      %v390 = vunpack.c.l.b16 %v219
      %v391 = vunpack.c.h.b16 %v219
      %v392 = vunpack.c.l.b16 %v220
      %v393 = vunpack.c.l.b16 %v221
      %v394 = vunpack.c.h.b16 %v221
      %v395 = vunpack.c.l.b16 %v222
      %v396 = vunpack.c.l.b16 %v223
      %v397 = vunpack.c.h.b16 %v223
      %v398 = vunpack.c.l.b16 %v224
      %v399 = vunpack.c.l.b16 %v225
      %v400 = vunpack.c.h.b16 %v225
      %v401 = vunpack.c.l.b16 %v226
      %v402 = vunpack.c.l.b16 %v227
      %v403 = vunpack.c.h.b16 %v227
      %v404 = vunpack.c.l.b16 %v228
      %v405 = vunpack.c.l.b16 %v229
      %v406 = vunpack.c.h.b16 %v229
      %v407 = vunpack.c.l.b16 %v230
      %v408 = vunpack.c.l.b16 %v231
      %v409 = vunpack.c.h.b16 %v231
      %v410 = vunpack.c.l.b16 %v232
      %v411 = vunpack.c.l.b16 %v233
      %v412 = vunpack.c.h.b16 %v233
      %v413 = vunpack.c.l.b16 %v234
      %v414 = vunpack.c.l.b16 %v235
      %v415 = vunpack.c.h.b16 %v235
      %v416 = vunpack.c.l.b16 %v236
      %v417 = vunpack.c.l.b16 %v237
      %v418 = vunpack.c.h.b16 %v237
      %v419 = vunpack.c.l.b16 %v238
      %v420 = vunpack.c.l.b16 %v239
      %v421 = vunpack.c.h.b16 %v239
      %v422 = vunpack.c.l.b16 %v240
      %v423 = vunpack.c.l.b16 %v241
      %v424 = vunpack.c.h.b16 %v241
      %v425 = vunpack.c.l.b16 %v242
      %v426 = vunpack.c.l.b16 %v243
      %v427 = vunpack.c.h.b16 %v243
      %v428 = vunpack.c.l.b16 %v244
      %v429 = vunpack.c.l.b16 %v245
      %v430 = vunpack.c.h.b16 %v245
      %v431 = vunpack.c.l.b16 %v246
      %v432 = vunpack.c.l.b16 %v247
      %v433 = vunpack.c.h.b16 %v247
      %v434 = vunpack.c.l.b16 %v248
      %v435 = vunpack.c.l.b16 %v249
      %v436 = vunpack.c.h.b16 %v249
      %v437 = vunpack.c.l.b16 %v250
      %v438 = vunpack.c.l.b16 %v251
      %v439 = vunpack.c.h.b16 %v251
      %v440 = vunpack.c.l.b16 %v252
      %v441 = vunpack.c.l.b16 %v253
      %v442 = vunpack.c.h.b16 %v253
      %v443 = vunpack.c.l.b16 %v254
      %v444 = vunpack.c.l.b16 %v255
      %v445 = vunpack.c.h.b16 %v255
      %v446 = vunpack.c.l.b16 %v256
      %v447 = vunpack.c.l.b16 %v257
      %v448 = vunpack.c.h.b16 %v257
      %v449 = vunpack.c.l.b16 %v258
      %v450 = vunpack.c.l.b16 %v259
      %v451 = vunpack.c.h.b16 %v259
      %v452 = vunpack.c.l.b16 %v260
      %v453 = vunpack.c.l.b16 %v261
      %v454 = vunpack.c.h.b16 %v261
      %v455 = vunpack.c.l.b16 %v262
      %v456 = vunpack.c.l.b16 %v263
      %v457 = vunpack.c.h.b16 %v263
      %v458 = vunpack.c.l.b16 %v264
      %v459 = vunpack.c.l.b16 %v265
      %v460 = vunpack.c.h.b16 %v265
      %v461 = vunpack.c.l.b16 %v266
      %v462 = vunpack.c.l.b16 %v267
      %v463 = vunpack.c.h.b16 %v267
      %v464 = vunpack.c.l.b16 %v268
      %v465 = vpack.c.b16 %v372, %v369
      %v466 = vpack.c.b16 %v373, %v370
      %v467 = vpack.c.b16 %v374, %v371
      %v468 = vpack.c.b16 %v378, %v375
      %v469 = vpack.c.b16 %v379, %v376
      %v470 = vpack.c.b16 %v380, %v377
      %v471 = vpack.c.b16 %v384, %v381
      %v472 = vpack.c.b16 %v385, %v382
      %v473 = vpack.c.b16 %v386, %v383
      %v474 = vpack.c.b16 %v390, %v387
      %v475 = vpack.c.b16 %v391, %v388
      %v476 = vpack.c.b16 %v392, %v389
      %v477 = vpack.c.b16 %v396, %v393
      %v478 = vpack.c.b16 %v397, %v394
      %v479 = vpack.c.b16 %v398, %v395
      %v480 = vpack.c.b16 %v402, %v399
      %v481 = vpack.c.b16 %v403, %v400
      %v482 = vpack.c.b16 %v404, %v401
      %v483 = vpack.c.b16 %v408, %v405
      %v484 = vpack.c.b16 %v409, %v406
      %v485 = vpack.c.b16 %v410, %v407
      %v486 = vpack.c.b16 %v414, %v411
      %v487 = vpack.c.b16 %v415, %v412
      %v488 = vpack.c.b16 %v416, %v413
      %v489 = vpack.c.b16 %v420, %v417
      %v490 = vpack.c.b16 %v421, %v418
      %v491 = vpack.c.b16 %v422, %v419
      %v492 = vpack.c.b16 %v426, %v423
      %v493 = vpack.c.b16 %v427, %v424
      %v494 = vpack.c.b16 %v428, %v425
      %v495 = vpack.c.b16 %v432, %v429
      %v496 = vpack.c.b16 %v433, %v430
      %v497 = vpack.c.b16 %v434, %v431
      %v498 = vpack.c.b16 %v438, %v435
      %v499 = vpack.c.b16 %v439, %v436
      %v500 = vpack.c.b16 %v440, %v437
      %v501 = vpack.c.b16 %v444, %v441
      %v502 = vpack.c.b16 %v445, %v442
      %v503 = vpack.c.b16 %v446, %v443
      %v504 = vpack.c.b16 %v450, %v447
      %v505 = vpack.c.b16 %v451, %v448
      %v506 = vpack.c.b16 %v452, %v449
      %v507 = vpack.c.b16 %v456, %v453
      %v508 = vpack.c.b16 %v457, %v454
      %v509 = vpack.c.b16 %v458, %v455
      %v510 = vpack.c.b16 %v462, %v459
      %v511 = vpack.c.b16 %v463, %v460
      %v512 = vpack.c.b16 %v464, %v461
      %v581 = vunpack.c.l.b16 %v269
      %v582 = vunpack.c.l.b16 %v270
      %v583 = vunpack.c.l.b16 %v271
      %v584 = vunpack.c.l.b16 %v272
      %v585 = vunpack.c.l.b16 %v273
      %v586 = vunpack.c.l.b16 %v274
      %v587 = vunpack.c.l.b16 %v275
      %v588 = vunpack.c.l.b16 %v276
      %v589 = vunpack.c.l.b16 %v277
      %v590 = vunpack.c.l.b16 %v278
      %v591 = vunpack.c.l.b16 %v279
      %v592 = vunpack.c.l.b16 %v280
      %v593 = vunpack.c.l.b16 %v281
      %v594 = vunpack.c.l.b16 %v282
      %v595 = vunpack.c.l.b16 %v283
      %v596 = vunpack.c.l.b16 %v284
      %v597 = vunpack.c.l.b16 %v285
      %v598 = vunpack.c.l.b16 %v286
      %v599 = vunpack.c.l.b16 %v287
      %v600 = vunpack.c.l.b16 %v288
      %v601 = vunpack.c.l.b16 %v289
      %v602 = vunpack.c.l.b16 %v290
      %v603 = vunpack.c.l.b16 %v291
      %v604 = vunpack.c.l.b16 %v292
      %v605 = vunpack.c.l.b16 %v293
      %v606 = vunpack.c.l.b16 %v294
      %v607 = vunpack.c.l.b16 %v295
      %v608 = vunpack.c.l.b16 %v296
      %v609 = vunpack.c.l.b16 %v297
      %v610 = vunpack.c.l.b16 %v298
      %v611 = vunpack.c.l.b16 %v299
      %v612 = vunpack.c.l.b16 %v300
      %v613 = vunpack.c.l.b16 %v301
      %v614 = vunpack.c.l.b16 %v302
      %v615 = vunpack.c.l.b16 %v303
      %v616 = vunpack.c.l.b16 %v304
      %v617 = vpack.c.b16 %v582, %v581
      %v618 = vpack.c.b16 %v584, %v583
      %v619 = vpack.c.b16 %v586, %v585
      %v620 = vpack.c.b16 %v588, %v587
      %v621 = vpack.c.b16 %v590, %v589
      %v622 = vpack.c.b16 %v592, %v591
      %v623 = vpack.c.b16 %v594, %v593
      %v624 = vpack.c.b16 %v596, %v595
      %v625 = vpack.c.b16 %v598, %v597
      %v626 = vpack.c.b16 %v600, %v599
      %v627 = vpack.c.b16 %v602, %v601
      %v628 = vpack.c.b16 %v604, %v603
      %v629 = vpack.c.b16 %v606, %v605
      %v630 = vpack.c.b16 %v608, %v607
      %v631 = vpack.c.b16 %v610, %v609
      %v632 = vpack.c.b16 %v612, %v611
      %v633 = vpack.c.b16 %v614, %v613
      %v634 = vpack.c.b16 %v616, %v615
      %vm653 = vcmask 261120
      %v655 = vsel %vm653, %v467, 0
      %v658 = vsel %vm653, %v470, 0
      %v661 = vsel %vm653, %v473, 0
      %v664 = vsel %vm653, %v476, 0
      %v667 = vsel %vm653, %v479, 0
      %v670 = vsel %vm653, %v482, 0
      %v673 = vsel %vm653, %v485, 0
      %v676 = vsel %vm653, %v488, 0
      %v679 = vsel %vm653, %v491, 0
      %v682 = vsel %vm653, %v494, 0
      %v685 = vsel %vm653, %v497, 0
      %v688 = vsel %vm653, %v500, 0
      %v691 = vsel %vm653, %v503, 0
      %v694 = vsel %vm653, %v506, 0
      %v697 = vsel %vm653, %v509, 0
      %v700 = vsel %vm653, %v512, 0
      %702 = vmatprep.subr.bf16.mxu0 0
      %703 = vmatpush1.bf16.msra.mxu0 %v617
      %704 = vmatprep.subr.bf16.mxu0 0
      %705 = vmatpush1.bf16.msra.mxu0 %v618
      %706 = vmatprep.subr.bf16.mxu0 0
      %707 = vmatpush1.bf16.msra.mxu0 %v619
      %708 = vmatprep.subr.bf16.mxu0 0
      %709 = vmatpush1.bf16.msra.mxu0 %v620
      %710 = vmatprep.subr.bf16.mxu0 0
      %711 = vmatpush1.bf16.msra.mxu0 %v621
      %712 = vmatprep.subr.bf16.mxu0 0
      %713 = vmatpush1.bf16.msra.mxu0 %v622
      %714 = vmatprep.subr.bf16.mxu0 0
      %715 = vmatpush1.bf16.msra.mxu0 %v623
      %716 = vmatprep.subr.bf16.mxu0 0
      %717 = vmatpush1.bf16.msra.mxu0 %v624
      %718 = vmatprep.subr.bf16.mxu0 0
      %719 = vmatpush1.bf16.msra.mxu0 %v625
      %720 = vmatprep.subr.bf16.mxu0 0
      %721 = vmatpush1.bf16.msra.mxu0 %v626
      %722 = vmatprep.subr.bf16.mxu0 0
      %723 = vmatpush1.bf16.msra.mxu0 %v627
      %724 = vmatprep.subr.bf16.mxu0 0
      %725 = vmatpush1.bf16.msra.mxu0 %v628
      %726 = vmatprep.subr.bf16.mxu0 0
      %727 = vmatpush1.bf16.msra.mxu0 %v629
      %728 = vmatprep.subr.bf16.mxu0 0
      %729 = vmatpush1.bf16.msra.mxu0 %v630
      %730 = vmatprep.subr.bf16.mxu0 0
      %731 = vmatpush1.bf16.msra.mxu0 %v631
      %732 = vmatprep.subr.bf16.mxu0 0
      %733 = vmatpush1.bf16.msra.mxu0 %v632
      %734 = vmatprep.mubr.bf16.mxu0 %v466
      %735 = vmatmul.mubr.bf16.gmra.mrb[0].mxu0 %v465
      %v736 = vpop.f32.mrb[0].mxu0
      %v737 = vadd.f32 0.0, %v736
      %v738 = vpop.f32.mrb[0].mxu0
      %v739 = vpop.f32.mrb[0].mxu0
      %v740 = vadd.f32 0.0, %v739
      %v741 = vpop.f32.mrb[0].mxu0
      %742 = vmatprep.mubr.bf16.mxu0 %v469
      %743 = vmatmul.mubr.bf16.gmra.mrb[0].mxu0 %v468
      %v744 = vpop.f32.mrb[0].mxu0
      %v745 = vadd.f32 0.0, %v744
      %v746 = vpop.f32.mrb[0].mxu0
      %v747 = vpop.f32.mrb[0].mxu0
      %v748 = vadd.f32 0.0, %v747
      %v749 = vpop.f32.mrb[0].mxu0
      %750 = vmatprep.mubr.bf16.mxu0 %v472
      %751 = vmatmul.mubr.bf16.gmra.mrb[0].mxu0 %v471
      %v752 = vpop.f32.mrb[0].mxu0
      %v753 = vadd.f32 0.0, %v752
      %v754 = vpop.f32.mrb[0].mxu0
      %v755 = vpop.f32.mrb[0].mxu0
      %v756 = vadd.f32 0.0, %v755
      %v757 = vpop.f32.mrb[0].mxu0
      %758 = vmatprep.mubr.bf16.mxu0 %v475
      %759 = vmatmul.mubr.bf16.gmra.mrb[0].mxu0 %v474
      %v760 = vpop.f32.mrb[0].mxu0
      %v761 = vadd.f32 0.0, %v760
      %v762 = vpop.f32.mrb[0].mxu0
      %v763 = vpop.f32.mrb[0].mxu0
      %v764 = vadd.f32 0.0, %v763
      %v765 = vpop.f32.mrb[0].mxu0
      %766 = vmatprep.mubr.bf16.mxu0 %v478
      %767 = vmatmul.mubr.bf16.gmra.mrb[0].mxu0 %v477
      %v768 = vpop.f32.mrb[0].mxu0
      %v769 = vadd.f32 0.0, %v768
      %v770 = vpop.f32.mrb[0].mxu0
      %v771 = vpop.f32.mrb[0].mxu0
      %v772 = vadd.f32 0.0, %v771
      %v773 = vpop.f32.mrb[0].mxu0
      %774 = vmatprep.mubr.bf16.mxu0 %v481
      %775 = vmatmul.mubr.bf16.gmra.mrb[0].mxu0 %v480
      %v776 = vpop.f32.mrb[0].mxu0
      %v777 = vadd.f32 0.0, %v776
      %v778 = vpop.f32.mrb[0].mxu0
      %v779 = vpop.f32.mrb[0].mxu0
      %v780 = vadd.f32 0.0, %v779
      %v781 = vpop.f32.mrb[0].mxu0
      %782 = vmatprep.mubr.bf16.mxu0 %v484
      %783 = vmatmul.mubr.bf16.gmra.mrb[0].mxu0 %v483
      %v784 = vpop.f32.mrb[0].mxu0
      %v785 = vadd.f32 0.0, %v784
      %v786 = vpop.f32.mrb[0].mxu0
      %v787 = vpop.f32.mrb[0].mxu0
      %v788 = vadd.f32 0.0, %v787
      %v789 = vpop.f32.mrb[0].mxu0
      %790 = vmatprep.mubr.bf16.mxu0 %v487
      %791 = vmatmul.mubr.bf16.gmra.mrb[0].mxu0 %v486
      %v792 = vpop.f32.mrb[0].mxu0
      %v793 = vadd.f32 0.0, %v792
      %v794 = vpop.f32.mrb[0].mxu0
      %v795 = vpop.f32.mrb[0].mxu0
      %v796 = vadd.f32 0.0, %v795
      %v797 = vpop.f32.mrb[0].mxu0
      %798 = vmatprep.mubr.bf16.mxu0 %v490
      %799 = vmatmul.mubr.bf16.gmra.mrb[0].mxu0 %v489
      %v800 = vpop.f32.mrb[0].mxu0
      %v801 = vadd.f32 0.0, %v800
      %v802 = vpop.f32.mrb[0].mxu0
      %v803 = vpop.f32.mrb[0].mxu0
      %v804 = vadd.f32 0.0, %v803
      %v805 = vpop.f32.mrb[0].mxu0
      %806 = vmatprep.mubr.bf16.mxu0 %v493
      %807 = vmatmul.mubr.bf16.gmra.mrb[0].mxu0 %v492
      %v808 = vpop.f32.mrb[0].mxu0
      %v809 = vadd.f32 0.0, %v808
      %v810 = vpop.f32.mrb[0].mxu0
      %v811 = vpop.f32.mrb[0].mxu0
      %v812 = vadd.f32 0.0, %v811
      %v813 = vpop.f32.mrb[0].mxu0
      %814 = vmatprep.mubr.bf16.mxu0 %v496
      %815 = vmatmul.mubr.bf16.gmra.mrb[0].mxu0 %v495
      %v816 = vpop.f32.mrb[0].mxu0
      %v817 = vadd.f32 0.0, %v816
      %v818 = vpop.f32.mrb[0].mxu0
      %v819 = vpop.f32.mrb[0].mxu0
      %v820 = vadd.f32 0.0, %v819
      %v821 = vpop.f32.mrb[0].mxu0
      %822 = vmatprep.mubr.bf16.mxu0 %v499
      %823 = vmatmul.mubr.bf16.gmra.mrb[0].mxu0 %v498
      %v824 = vpop.f32.mrb[0].mxu0
      %v825 = vadd.f32 0.0, %v824
      %v826 = vpop.f32.mrb[0].mxu0
      %v827 = vpop.f32.mrb[0].mxu0
      %v828 = vadd.f32 0.0, %v827
      %v829 = vpop.f32.mrb[0].mxu0
      %830 = vmatprep.mubr.bf16.mxu0 %v502
      %831 = vmatmul.mubr.bf16.gmra.mrb[0].mxu0 %v501
      %v832 = vpop.f32.mrb[0].mxu0
      %v833 = vadd.f32 0.0, %v832
      %v834 = vpop.f32.mrb[0].mxu0
      %v835 = vpop.f32.mrb[0].mxu0
      %v836 = vadd.f32 0.0, %v835
      %v837 = vpop.f32.mrb[0].mxu0
      %838 = vmatprep.mubr.bf16.mxu0 %v505
      %839 = vmatmul.mubr.bf16.gmra.mrb[0].mxu0 %v504
      %v840 = vpop.f32.mrb[0].mxu0
      %v841 = vadd.f32 0.0, %v840
      %v842 = vpop.f32.mrb[0].mxu0
      %v843 = vpop.f32.mrb[0].mxu0
      %v844 = vadd.f32 0.0, %v843
      %v845 = vpop.f32.mrb[0].mxu0
      %846 = vmatprep.mubr.bf16.mxu0 %v508
      %847 = vmatmul.mubr.bf16.gmra.mrb[0].mxu0 %v507
      %v848 = vpop.f32.mrb[0].mxu0
      %v849 = vadd.f32 0.0, %v848
      %v850 = vpop.f32.mrb[0].mxu0
      %v851 = vpop.f32.mrb[0].mxu0
      %v852 = vadd.f32 0.0, %v851
      %v853 = vpop.f32.mrb[0].mxu0
      %854 = vmatprep.mubr.bf16.mxu0 %v511
      %855 = vmatmul.mubr.bf16.gmra.mrb[0].mxu0 %v510
      %v856 = vpop.f32.mrb[0].mxu0
      %v857 = vadd.f32 0.0, %v856
      %v858 = vpop.f32.mrb[0].mxu0
      %v859 = vpop.f32.mrb[0].mxu0
      %v860 = vadd.f32 0.0, %v859
      %v861 = vpop.f32.mrb[0].mxu0
      %862 = vdwg.mxu0
      %863 = vmatprep.subr.bf16.mxu0 0
      %864 = vmatpush1.bf16.msra.mxu0 %v633
      %865 = vmatprep.subr.bf16.mxu0 0
      %866 = vmatpush1.bf16.msra.mxu0 %v634
      %867 = vmatprep.subr.bf16.mxu0 0
      %868 = vmatpush1.bf16.msra.mxu0 0
      %869 = vmatprep.subr.bf16.mxu0 0
      %870 = vmatpush1.bf16.msra.mxu0 0
      %871 = vmatprep.subr.bf16.mxu0 0
      %872 = vmatpush1.bf16.msra.mxu0 0
      %873 = vmatprep.subr.bf16.mxu0 0
      %874 = vmatpush1.bf16.msra.mxu0 0
      %875 = vmatprep.subr.bf16.mxu0 0
      %876 = vmatpush1.bf16.msra.mxu0 0
      %877 = vmatprep.subr.bf16.mxu0 0
      %878 = vmatpush1.bf16.msra.mxu0 0
      %879 = vmatprep.subr.bf16.mxu0 0
      %880 = vmatpush1.bf16.msra.mxu0 0
      %881 = vmatprep.subr.bf16.mxu0 0
      %882 = vmatpush1.bf16.msra.mxu0 0
      %883 = vmatprep.subr.bf16.mxu0 0
      %884 = vmatpush1.bf16.msra.mxu0 0
      %885 = vmatprep.subr.bf16.mxu0 0
      %886 = vmatpush1.bf16.msra.mxu0 0
      %887 = vmatprep.subr.bf16.mxu0 0
      %888 = vmatpush1.bf16.msra.mxu0 0
      %889 = vmatprep.subr.bf16.mxu0 0
      %890 = vmatpush1.bf16.msra.mxu0 0
      %891 = vmatprep.subr.bf16.mxu0 0
      %892 = vmatpush1.bf16.msra.mxu0 0
      %893 = vmatprep.subr.bf16.mxu0 0
      %894 = vmatpush1.bf16.msra.mxu0 0
      %895 = vmatprep.mubr.bf16.mxu0 0
      %896 = vmatmul.mubr.bf16.gmra.mrb[0].mxu0 %v655
      %v897 = vpop.f32.mrb[0].mxu0
      %v898 = vadd.f32 %v737, %v897
      %v899 = vpop.f32.mrb[0].mxu0
      %v900 = vpop.f32.mrb[0].mxu0
      %v901 = vadd.f32 %v740, %v900
      %v902 = vpop.f32.mrb[0].mxu0
      %903 = vmatprep.mubr.bf16.mxu0 0
      %904 = vmatmul.mubr.bf16.gmra.mrb[0].mxu0 %v658
      %v905 = vpop.f32.mrb[0].mxu0
      %v906 = vadd.f32 %v745, %v905
      %v907 = vpop.f32.mrb[0].mxu0
      %v908 = vpop.f32.mrb[0].mxu0
      %v909 = vadd.f32 %v748, %v908
      %v910 = vpop.f32.mrb[0].mxu0
      %911 = vmatprep.mubr.bf16.mxu0 0
      %912 = vmatmul.mubr.bf16.gmra.mrb[0].mxu0 %v661
      %v913 = vpop.f32.mrb[0].mxu0
      %v914 = vadd.f32 %v753, %v913
      %v915 = vpop.f32.mrb[0].mxu0
      %v916 = vpop.f32.mrb[0].mxu0
      %v917 = vadd.f32 %v756, %v916
      %v918 = vpop.f32.mrb[0].mxu0
      %919 = vmatprep.mubr.bf16.mxu0 0
      %920 = vmatmul.mubr.bf16.gmra.mrb[0].mxu0 %v664
      %v921 = vpop.f32.mrb[0].mxu0
      %v922 = vadd.f32 %v761, %v921
      %v923 = vpop.f32.mrb[0].mxu0
      %v924 = vpop.f32.mrb[0].mxu0
      %v925 = vadd.f32 %v764, %v924
      %v926 = vpop.f32.mrb[0].mxu0
      %927 = vmatprep.mubr.bf16.mxu0 0
      %928 = vmatmul.mubr.bf16.gmra.mrb[0].mxu0 %v667
      %v929 = vpop.f32.mrb[0].mxu0
      %v930 = vadd.f32 %v769, %v929
      %v931 = vpop.f32.mrb[0].mxu0
      %v932 = vpop.f32.mrb[0].mxu0
      %v933 = vadd.f32 %v772, %v932
      %v934 = vpop.f32.mrb[0].mxu0
      %935 = vmatprep.mubr.bf16.mxu0 0
      %936 = vmatmul.mubr.bf16.gmra.mrb[0].mxu0 %v670
      %v937 = vpop.f32.mrb[0].mxu0
      %v938 = vadd.f32 %v777, %v937
      %v939 = vpop.f32.mrb[0].mxu0
      %v940 = vpop.f32.mrb[0].mxu0
      %v941 = vadd.f32 %v780, %v940
      %v942 = vpop.f32.mrb[0].mxu0
      %943 = vmatprep.mubr.bf16.mxu0 0
      %944 = vmatmul.mubr.bf16.gmra.mrb[0].mxu0 %v673
      %v945 = vpop.f32.mrb[0].mxu0
      %v946 = vadd.f32 %v785, %v945
      %v947 = vpop.f32.mrb[0].mxu0
      %v948 = vpop.f32.mrb[0].mxu0
      %v949 = vadd.f32 %v788, %v948
      %v950 = vpop.f32.mrb[0].mxu0
      %951 = vmatprep.mubr.bf16.mxu0 0
      %952 = vmatmul.mubr.bf16.gmra.mrb[0].mxu0 %v676
      %v953 = vpop.f32.mrb[0].mxu0
      %v954 = vadd.f32 %v793, %v953
      %v955 = vpop.f32.mrb[0].mxu0
      %v956 = vpop.f32.mrb[0].mxu0
      %v957 = vadd.f32 %v796, %v956
      %v958 = vpop.f32.mrb[0].mxu0
      %959 = vmatprep.mubr.bf16.mxu0 0
      %960 = vmatmul.mubr.bf16.gmra.mrb[0].mxu0 %v679
      %v961 = vpop.f32.mrb[0].mxu0
      %v962 = vadd.f32 %v801, %v961
      %v963 = vpop.f32.mrb[0].mxu0
      %v964 = vpop.f32.mrb[0].mxu0
      %v965 = vadd.f32 %v804, %v964
      %v966 = vpop.f32.mrb[0].mxu0
      %967 = vmatprep.mubr.bf16.mxu0 0
      %968 = vmatmul.mubr.bf16.gmra.mrb[0].mxu0 %v682
      %v969 = vpop.f32.mrb[0].mxu0
      %v970 = vadd.f32 %v809, %v969
      %v971 = vpop.f32.mrb[0].mxu0
      %v972 = vpop.f32.mrb[0].mxu0
      %v973 = vadd.f32 %v812, %v972
      %v974 = vpop.f32.mrb[0].mxu0
      %975 = vmatprep.mubr.bf16.mxu0 0
      %976 = vmatmul.mubr.bf16.gmra.mrb[0].mxu0 %v685
      %v977 = vpop.f32.mrb[0].mxu0
      %v978 = vadd.f32 %v817, %v977
      %v979 = vpop.f32.mrb[0].mxu0
      %v980 = vpop.f32.mrb[0].mxu0
      %v981 = vadd.f32 %v820, %v980
      %v982 = vpop.f32.mrb[0].mxu0
      %983 = vmatprep.mubr.bf16.mxu0 0
      %984 = vmatmul.mubr.bf16.gmra.mrb[0].mxu0 %v688
      %v985 = vpop.f32.mrb[0].mxu0
      %v986 = vadd.f32 %v825, %v985
      %v987 = vpop.f32.mrb[0].mxu0
      %v988 = vpop.f32.mrb[0].mxu0
      %v989 = vadd.f32 %v828, %v988
      %v990 = vpop.f32.mrb[0].mxu0
      %991 = vmatprep.mubr.bf16.mxu0 0
      %992 = vmatmul.mubr.bf16.gmra.mrb[0].mxu0 %v691
      %v993 = vpop.f32.mrb[0].mxu0
      %v994 = vadd.f32 %v833, %v993
      %v995 = vpop.f32.mrb[0].mxu0
      %v996 = vpop.f32.mrb[0].mxu0
      %v997 = vadd.f32 %v836, %v996
      %v998 = vpop.f32.mrb[0].mxu0
      %999 = vmatprep.mubr.bf16.mxu0 0
      %1000 = vmatmul.mubr.bf16.gmra.mrb[0].mxu0 %v694
      %v1001 = vpop.f32.mrb[0].mxu0
      %v1002 = vadd.f32 %v841, %v1001
      %v1003 = vpop.f32.mrb[0].mxu0
      %v1004 = vpop.f32.mrb[0].mxu0
      %v1005 = vadd.f32 %v844, %v1004
      %v1006 = vpop.f32.mrb[0].mxu0
      %1007 = vmatprep.mubr.bf16.mxu0 0
      %1008 = vmatmul.mubr.bf16.gmra.mrb[0].mxu0 %v697
      %v1009 = vpop.f32.mrb[0].mxu0
      %v1010 = vadd.f32 %v849, %v1009
      %v1011 = vpop.f32.mrb[0].mxu0
      %v1012 = vpop.f32.mrb[0].mxu0
      %v1013 = vadd.f32 %v852, %v1012
      %v1014 = vpop.f32.mrb[0].mxu0
      %1015 = vmatprep.mubr.bf16.mxu0 0
      %1016 = vmatmul.mubr.bf16.gmra.mrb[0].mxu0 %v700
      %v1017 = vpop.f32.mrb[0].mxu0
      %v1018 = vadd.f32 %v857, %v1017
      %v1019 = vpop.f32.mrb[0].mxu0
      %v1020 = vpop.f32.mrb[0].mxu0
      %v1021 = vadd.f32 %v860, %v1020
      %v1022 = vpop.f32.mrb[0].mxu0
      %1023 = vdwg.mxu0
      %v1024 = vld [vmem:[%s2] sm:$0x1]
      %v1026 = vlaneseq
      %v1027 = vshrl.u32 %v1026, 7
      %v1028 = vsub.s32 0, %v1027
      %v1029 = vrot.slane %v1024, %v1028
      %v1031 = vmul.f32 %v898, %v1029
      %v1032 = vmul.f32 %v901, %v1029
      %v1033 = vmul.f32 %v906, %v1029
      %v1034 = vmul.f32 %v909, %v1029
      %v1035 = vmul.f32 %v914, %v1029
      %v1036 = vmul.f32 %v917, %v1029
      %v1037 = vmul.f32 %v922, %v1029
      %v1038 = vmul.f32 %v925, %v1029
      %v1039 = vmul.f32 %v930, %v1029
      %v1040 = vmul.f32 %v933, %v1029
      %v1041 = vmul.f32 %v938, %v1029
      %v1042 = vmul.f32 %v941, %v1029
      %v1043 = vmul.f32 %v946, %v1029
      %v1044 = vmul.f32 %v949, %v1029
      %v1045 = vmul.f32 %v954, %v1029
      %v1046 = vmul.f32 %v957, %v1029
      %v1047 = vmul.f32 %v962, %v1029
      %v1048 = vmul.f32 %v965, %v1029
      %v1049 = vmul.f32 %v970, %v1029
      %v1050 = vmul.f32 %v973, %v1029
      %v1051 = vmul.f32 %v978, %v1029
      %v1052 = vmul.f32 %v981, %v1029
      %v1053 = vmul.f32 %v986, %v1029
      %v1054 = vmul.f32 %v989, %v1029
      %v1055 = vmul.f32 %v994, %v1029
      %v1056 = vmul.f32 %v997, %v1029
      %v1057 = vmul.f32 %v1002, %v1029
      %v1058 = vmul.f32 %v1005, %v1029
      %v1059 = vmul.f32 %v1010, %v1029
      %v1060 = vmul.f32 %v1013, %v1029
      %v1061 = vmul.f32 %v1018, %v1029
      %v1062 = vmul.f32 %v1021, %v1029
      %v1063 = vld [vmem:[%s3] sm:$0x1]
      %v1065 = vlaneseq
      %v1066 = vshrl.u32 %v1065, 7
      %v1067 = vsub.s32 0, %v1066
      %v1068 = vrot.slane %v1063, %v1067
      %v1070 = vadd.f32 %v1031, %v1068
      %v1071 = vadd.f32 %v1032, %v1068
      %v1072 = vadd.f32 %v1033, %v1068
      %v1073 = vadd.f32 %v1034, %v1068
      %v1074 = vadd.f32 %v1035, %v1068
      %v1075 = vadd.f32 %v1036, %v1068
      %v1076 = vadd.f32 %v1037, %v1068
      %v1077 = vadd.f32 %v1038, %v1068
      %v1078 = vadd.f32 %v1039, %v1068
      %v1079 = vadd.f32 %v1040, %v1068
      %v1080 = vadd.f32 %v1041, %v1068
      %v1081 = vadd.f32 %v1042, %v1068
      %v1082 = vadd.f32 %v1043, %v1068
      %v1083 = vadd.f32 %v1044, %v1068
      %v1084 = vadd.f32 %v1045, %v1068
      %v1085 = vadd.f32 %v1046, %v1068
      %v1086 = vadd.f32 %v1047, %v1068
      %v1087 = vadd.f32 %v1048, %v1068
      %v1088 = vadd.f32 %v1049, %v1068
      %v1089 = vadd.f32 %v1050, %v1068
      %v1090 = vadd.f32 %v1051, %v1068
      %v1091 = vadd.f32 %v1052, %v1068
      %v1092 = vadd.f32 %v1053, %v1068
      %v1093 = vadd.f32 %v1054, %v1068
      %v1094 = vadd.f32 %v1055, %v1068
      %v1095 = vadd.f32 %v1056, %v1068
      %v1096 = vadd.f32 %v1057, %v1068
      %v1097 = vadd.f32 %v1058, %v1068
      %v1098 = vadd.f32 %v1059, %v1068
      %v1099 = vadd.f32 %v1060, %v1068
      %v1100 = vadd.f32 %v1061, %v1068
      %v1101 = vadd.f32 %v1062, %v1068
      %v1102 = vmax.f32 %v1070, 0.0
      %v1103 = vmax.f32 %v1071, 0.0
      %v1104 = vmax.f32 %v1072, 0.0
      %v1105 = vmax.f32 %v1073, 0.0
      %v1106 = vmax.f32 %v1074, 0.0
      %v1107 = vmax.f32 %v1075, 0.0
      %v1108 = vmax.f32 %v1076, 0.0
      %v1109 = vmax.f32 %v1077, 0.0
      %v1110 = vmax.f32 %v1078, 0.0
      %v1111 = vmax.f32 %v1079, 0.0
      %v1112 = vmax.f32 %v1080, 0.0
      %v1113 = vmax.f32 %v1081, 0.0
      %v1114 = vmax.f32 %v1082, 0.0
      %v1115 = vmax.f32 %v1083, 0.0
      %v1116 = vmax.f32 %v1084, 0.0
      %v1117 = vmax.f32 %v1085, 0.0
      %v1118 = vmax.f32 %v1086, 0.0
      %v1119 = vmax.f32 %v1087, 0.0
      %v1120 = vmax.f32 %v1088, 0.0
      %v1121 = vmax.f32 %v1089, 0.0
      %v1122 = vmax.f32 %v1090, 0.0
      %v1123 = vmax.f32 %v1091, 0.0
      %v1124 = vmax.f32 %v1092, 0.0
      %v1125 = vmax.f32 %v1093, 0.0
      %v1126 = vmax.f32 %v1094, 0.0
      %v1127 = vmax.f32 %v1095, 0.0
      %v1128 = vmax.f32 %v1096, 0.0
      %v1129 = vmax.f32 %v1097, 0.0
      %v1130 = vmax.f32 %v1098, 0.0
      %v1131 = vmax.f32 %v1099, 0.0
      %v1132 = vmax.f32 %v1100, 0.0
      %v1133 = vmax.f32 %v1101, 0.0
      %v1134 = vpack.c.bf16 %v1103, %v1102
      %v1135 = vpack.c.bf16 %v1105, %v1104
      %v1136 = vpack.c.bf16 %v1107, %v1106
      %v1137 = vpack.c.bf16 %v1109, %v1108
      %v1138 = vpack.c.bf16 %v1111, %v1110
      %v1139 = vpack.c.bf16 %v1113, %v1112
      %v1140 = vpack.c.bf16 %v1115, %v1114
      %v1141 = vpack.c.bf16 %v1117, %v1116
      %v1142 = vpack.c.bf16 %v1119, %v1118
      %v1143 = vpack.c.bf16 %v1121, %v1120
      %v1144 = vpack.c.bf16 %v1123, %v1122
      %v1145 = vpack.c.bf16 %v1125, %v1124
      %v1146 = vpack.c.bf16 %v1127, %v1126
      %v1147 = vpack.c.bf16 %v1129, %v1128
      %v1148 = vpack.c.bf16 %v1131, %v1130
      %v1149 = vpack.c.bf16 %v1133, %v1132
      %v1166 = vunpack.c.l.b16 %v1134
      %v1167 = vunpack.c.h.b16 %v1134
      %v1168 = vunpack.c.l.b16 %v1135
      %v1169 = vunpack.c.h.b16 %v1135
      %v1170 = vunpack.c.l.b16 %v1136
      %v1171 = vunpack.c.h.b16 %v1136
      %v1172 = vunpack.c.l.b16 %v1137
      %v1173 = vunpack.c.h.b16 %v1137
      %v1174 = vunpack.c.l.b16 %v1138
      %v1175 = vunpack.c.h.b16 %v1138
      %v1176 = vunpack.c.l.b16 %v1139
      %v1177 = vunpack.c.h.b16 %v1139
      %v1178 = vunpack.c.l.b16 %v1140
      %v1179 = vunpack.c.h.b16 %v1140
      %v1180 = vunpack.c.l.b16 %v1141
      %v1181 = vunpack.c.h.b16 %v1141
      %v1182 = vunpack.c.l.b16 %v1142
      %v1183 = vunpack.c.h.b16 %v1142
      %v1184 = vunpack.c.l.b16 %v1143
      %v1185 = vunpack.c.h.b16 %v1143
      %v1186 = vunpack.c.l.b16 %v1144
      %v1187 = vunpack.c.h.b16 %v1144
      %v1188 = vunpack.c.l.b16 %v1145
      %v1189 = vunpack.c.h.b16 %v1145
      %v1190 = vunpack.c.l.b16 %v1146
      %v1191 = vunpack.c.h.b16 %v1146
      %v1192 = vunpack.c.l.b16 %v1147
      %v1193 = vunpack.c.h.b16 %v1147
      %v1194 = vunpack.c.l.b16 %v1148
      %v1195 = vunpack.c.h.b16 %v1148
      %v1196 = vunpack.c.l.b16 %v1149
      %v1197 = vunpack.c.h.b16 %v1149
      %v1198 = vpack.c.b16 %v1166, %v1166
      %v1199 = vpack.c.b16 %v1167, %v1167
      %v1200 = vpack.c.b16 %v1168, %v1168
      %v1201 = vpack.c.b16 %v1169, %v1169
      %v1202 = vpack.c.b16 %v1170, %v1170
      %v1203 = vpack.c.b16 %v1171, %v1171
      %v1204 = vpack.c.b16 %v1172, %v1172
      %v1205 = vpack.c.b16 %v1173, %v1173
      %v1206 = vpack.c.b16 %v1174, %v1174
      %v1207 = vpack.c.b16 %v1175, %v1175
      %v1208 = vpack.c.b16 %v1176, %v1176
      %v1209 = vpack.c.b16 %v1177, %v1177
      %v1210 = vpack.c.b16 %v1178, %v1178
      %v1211 = vpack.c.b16 %v1179, %v1179
      %v1212 = vpack.c.b16 %v1180, %v1180
      %v1213 = vpack.c.b16 %v1181, %v1181
      %v1214 = vpack.c.b16 %v1182, %v1182
      %v1215 = vpack.c.b16 %v1183, %v1183
      %v1216 = vpack.c.b16 %v1184, %v1184
      %v1217 = vpack.c.b16 %v1185, %v1185
      %v1218 = vpack.c.b16 %v1186, %v1186
      %v1219 = vpack.c.b16 %v1187, %v1187
      %v1220 = vpack.c.b16 %v1188, %v1188
      %v1221 = vpack.c.b16 %v1189, %v1189
      %v1222 = vpack.c.b16 %v1190, %v1190
      %v1223 = vpack.c.b16 %v1191, %v1191
      %v1224 = vpack.c.b16 %v1192, %v1192
      %v1225 = vpack.c.b16 %v1193, %v1193
      %v1226 = vpack.c.b16 %v1194, %v1194
      %v1227 = vpack.c.b16 %v1195, %v1195
      %v1228 = vpack.c.b16 %v1196, %v1196
      %v1229 = vpack.c.b16 %v1197, %v1197
      %vm1262 = vcmask 519168
      %1263 = vst.msk [vmem:[%s202] sm:$0xf] %vm1262, %v1198
      %1264 = vst.msk [vmem:[%s202 + $0x4] sm:$0xf] %vm1262, %v1199
      %1265 = vst.msk [vmem:[%s202 + $0x8] sm:$0xf] %vm1262, %v1200
      %1266 = vst.msk [vmem:[%s202 + $0xc] sm:$0xf] %vm1262, %v1201
      %1267 = vst.msk [vmem:[%s202 + $0x10] sm:$0xf] %vm1262, %v1202
      %1268 = vst.msk [vmem:[%s202 + $0x14] sm:$0xf] %vm1262, %v1203
      %1269 = vst.msk [vmem:[%s202 + $0x18] sm:$0xf] %vm1262, %v1204
      %1270 = vst.msk [vmem:[%s202 + $0x1c] sm:$0xf] %vm1262, %v1205
      %1271 = vst.msk [vmem:[%s202 + $0x20] sm:$0xf] %vm1262, %v1206
      %1272 = vst.msk [vmem:[%s202 + $0x24] sm:$0xf] %vm1262, %v1207
      %1273 = vst.msk [vmem:[%s202 + $0x28] sm:$0xf] %vm1262, %v1208
      %1274 = vst.msk [vmem:[%s202 + $0x2c] sm:$0xf] %vm1262, %v1209
      %1275 = vst.msk [vmem:[%s202 + $0x30] sm:$0xf] %vm1262, %v1210
      %1276 = vst.msk [vmem:[%s202 + $0x34] sm:$0xf] %vm1262, %v1211
      %1277 = vst.msk [vmem:[%s202 + $0x38] sm:$0xf] %vm1262, %v1212
      %1278 = vst.msk [vmem:[%s202 + $0x3c] sm:$0xf] %vm1262, %v1213
      %1279 = vst.msk [vmem:[%s202 + $0x40] sm:$0xf] %vm1262, %v1214
      %1280 = vst.msk [vmem:[%s202 + $0x44] sm:$0xf] %vm1262, %v1215
      %1281 = vst.msk [vmem:[%s202 + $0x48] sm:$0xf] %vm1262, %v1216
      %1282 = vst.msk [vmem:[%s202 + $0x4c] sm:$0xf] %vm1262, %v1217
      %1283 = vst.msk [vmem:[%s202 + $0x50] sm:$0xf] %vm1262, %v1218
      %1284 = vst.msk [vmem:[%s202 + $0x54] sm:$0xf] %vm1262, %v1219
      %1285 = vst.msk [vmem:[%s202 + $0x58] sm:$0xf] %vm1262, %v1220
      %1286 = vst.msk [vmem:[%s202 + $0x5c] sm:$0xf] %vm1262, %v1221
      %1287 = vst.msk [vmem:[%s202 + $0x60] sm:$0xf] %vm1262, %v1222
      %1288 = vst.msk [vmem:[%s202 + $0x64] sm:$0xf] %vm1262, %v1223
      %1289 = vst.msk [vmem:[%s202 + $0x68] sm:$0xf] %vm1262, %v1224
      %1290 = vst.msk [vmem:[%s202 + $0x6c] sm:$0xf] %vm1262, %v1225
      %1291 = vst.msk [vmem:[%s202 + $0x70] sm:$0xf] %vm1262, %v1226
      %1292 = vst.msk [vmem:[%s202 + $0x74] sm:$0xf] %vm1262, %v1227
      %1293 = vst.msk [vmem:[%s202 + $0x78] sm:$0xf] %vm1262, %v1228
      %1294 = vst.msk [vmem:[%s202 + $0x7c] sm:$0xf] %vm1262, %v1229
      %s1295 = smul.u32 32, %s15
      %p1296 = scmp.lt.s32.totalorder %s1295, 63
      %s1297 = scalar_select %p1296, %s1295, 63
      %s1298 = smul.addr %s1297, 4
      %s1299 = scalar_lea.vmem %s4, %s1298
      // Predicated region
      $region37: #{_lambda_.11} parent=35 // pred_check
        %p1300 = pneg %p122
      $region38: #{_lambda_.11} parent=35 // pred_check_branch
        %1302 = sbr.rel (%p1300) target = $region40
      $region39: #{_lambda_.11} parent=35 // pred_region
        %s1303 = smul.u32 32, %s15
      $region40: #{_lambda_.11} parent=35 // pred_fallthru
        _
    $region36: #{_lambda_.11} parent=5 // pred_fallthru
      _
    %p1304 = scmp.le.s32.totalorder 2, %s10
    // Predicated region
    $region41: #{_lambda_.11} parent=5 // pred_check
      %p1305 = pneg %p1304
    $region42: #{_lambda_.11} parent=5 // pred_check_branch
      %1307 = sbr.rel (%p1305) target = $region44
    $region43: #{_lambda_.11} parent=5 // pred_region
      %s1308 = ssub.s32 %s10, 2
      // Predicated region
      $region45: #{_lambda_.11} parent=43 // pred_check
        %p1309 = pneg %p128
      $region46: #{_lambda_.11} parent=43 // pred_check_branch
        %1311 = sbr.rel (%p1309) target = $region48
      $region47: #{_lambda_.11} parent=43 // pred_region
        %s1312 = smul.u32 32, %s16
        %p1313 = scmp.lt.s32.totalorder %s1312, 63
        %s1314 = scalar_select %p1313, %s1312, 63
        %s1315 = smul.addr %s1314, 4
        %s1316 = scalar_lea.vmem %s4, %s1315
      $region48: #{_lambda_.11} parent=43 // pred_fallthru
        _
    $region44: #{_lambda_.11} parent=5 // pred_fallthru
      _
  $region6: #{_lambda_.11} parent=0 // loop_footer
    %s14 = sadd.s32 1, %s10
  $region7: #{_lambda_.11} parent=0 // loop_footer_branch
    %9 = sbr.rel target = $region3
  $region8: #{_lambda_.11} parent=0 // loop_exit
    _

// kernel: _lambda_.12
$region0: #{_lambda_.12}
  #allocation0 [shape = 'u32[]', space=smem, size = 0x4, offset = 0x4, fixed_abs, tag = 'smem constant byte address 0x4 - core index']
  #allocation1 [shape = 'u32[144,128]{1,0:T(1,128)}', space=vmem, size = 0x12000, scoped, tag = 'internal scratch']
  %s0 = inlined_call_operand.vmem [shape: bf16[512,576], index: 0, kind: input, shape index: {}]
  %s1 = inlined_call_operand.vmem [shape: bf16[576,64], index: 1, kind: input, shape index: {}]
  %s2 = inlined_call_operand.vmem [shape: bf16[512,32], index: 2, kind: input, shape index: {}]
  %s3 = inlined_call_operand.vmem [shape: bf16[32,64], index: 3, kind: input, shape index: {}]
  %s4 = inlined_call_operand.vmem [shape: f32[512,64], index: 4, kind: output, shape index: {}]
  %s5 = sld [smem:[#allocation0]]
  $region49: #{_lambda_.12} parent=0
    _
  %s7 = ssub.s32 1, %s5
  %s8 = scalar_select 0, %s7, %s5
  loop: start=0, step=1, limit=4
  $region2: #{_lambda_.12} parent=0 // loop_pre_header
    _
  $region3: #{_lambda_.12} parent=0 // loop_header
    %s10 = sphi 0, %s14
    %p11 = scmp.ge.s32.totalorder %s10, 4
    %s20 = sphi 0, %s22
    %s23 = sphi 0, %s20
    %s24 = sphi 0, %s23
    %s40 = sphi 0, %s24
    %s44 = sphi 0, %s44
    %s46 = sphi 0, %s44
    %s47 = sphi 0, %s46
    %s61 = sphi 0, %s47
    %s67 = sphi 0, %s69
    %s70 = sphi 0, %s67
    %s71 = sphi 0, %s70
    %s87 = sphi 0, %s71
    %s91 = sphi 0, %s91
    %s93 = sphi 0, %s91
    %s94 = sphi 0, %s93
    %s108 = sphi 0, %s94
    %s114 = sphi 0, %s116
    %s117 = sphi 0, %s114
    %s118 = sphi 0, %s117
    %s134 = sphi 0, %s118
  $region4: #{_lambda_.12} parent=0 // loop_header_branch
    %13 = sbr.rel (%p11) target = $region8
  $region5: #{_lambda_.12} parent=0 // loop_body
    %s15 = ssub.s32 %s10, 1
    %s16 = ssub.s32 %s10, 2
    %s17 = sadd.s32 %s10, 1
    %s18 = ssub.s32 %s10, %s17
    %p19 = scmp.eq.s32.totalorder %s18, 0
    %s21 = sadd.s32 %s20, 1
    %s22 = scalar_select %p19, %s20, %s21
    %p25 = pneg %p19
    %p26 = scmp.eq.s32.totalorder %s10, 1
    %p27 = por %p25, %p26
    %p28 = scmp.ne.s32.totalorder %s20, %s23
    %p29 = scmp.eq.s32.totalorder %s10, 0
    %p30 = por %p28, %p29
    %p31 = scmp.ne.s32.totalorder %s20, %s23
    %p32 = scmp.eq.s32.totalorder %s15, 1
    %p33 = por %p31, %p32
    %p34 = scmp.ne.s32.totalorder %s23, %s24
    %p35 = scmp.eq.s32.totalorder %s15, 0
    %p36 = por %p34, %p35
    %p37 = scmp.ne.s32.totalorder %s23, %s24
    %p38 = scmp.eq.s32.totalorder %s16, 1
    %p39 = por %p37, %p38
    %p41 = scmp.ne.s32.totalorder %s24, %s40
    %p42 = scmp.eq.s32.totalorder %s16, 0
    %p43 = por %p41, %p42
    %s45 = sadd.s32 %s44, 1
    %p48 = scmp.eq.s32.totalorder %s10, 1
    %p49 = scmp.ne.s32.totalorder %s44, %s46
    %p50 = scmp.eq.s32.totalorder %s10, 0
    %p51 = por %p49, %p50
    %p52 = scmp.ne.s32.totalorder %s44, %s46
    %p53 = scmp.eq.s32.totalorder %s15, 1
    %p54 = por %p52, %p53
    %p55 = scmp.ne.s32.totalorder %s46, %s47
    %p56 = scmp.eq.s32.totalorder %s15, 0
    %p57 = por %p55, %p56
    %p58 = scmp.ne.s32.totalorder %s46, %s47
    %p59 = scmp.eq.s32.totalorder %s16, 1
    %p60 = por %p58, %p59
    %p62 = scmp.ne.s32.totalorder %s47, %s61
    %p63 = scmp.eq.s32.totalorder %s16, 0
    %p64 = por %p62, %p63
    %s65 = ssub.s32 %s10, %s17
    %p66 = scmp.eq.s32.totalorder %s65, 0
    %s68 = sadd.s32 %s67, 1
    %s69 = scalar_select %p66, %s67, %s68
    %p72 = pneg %p66
    %p73 = scmp.eq.s32.totalorder %s10, 1
    %p74 = por %p72, %p73
    %p75 = scmp.ne.s32.totalorder %s67, %s70
    %p76 = scmp.eq.s32.totalorder %s10, 0
    %p77 = por %p75, %p76
    %p78 = scmp.ne.s32.totalorder %s67, %s70
    %p79 = scmp.eq.s32.totalorder %s15, 1
    %p80 = por %p78, %p79
    %p81 = scmp.ne.s32.totalorder %s70, %s71
    %p82 = scmp.eq.s32.totalorder %s15, 0
    %p83 = por %p81, %p82
    %p84 = scmp.ne.s32.totalorder %s70, %s71
    %p85 = scmp.eq.s32.totalorder %s16, 1
    %p86 = por %p84, %p85
    %p88 = scmp.ne.s32.totalorder %s71, %s87
    %p89 = scmp.eq.s32.totalorder %s16, 0
    %p90 = por %p88, %p89
    %s92 = sadd.s32 %s91, 1
    %p95 = scmp.eq.s32.totalorder %s10, 1
    %p96 = scmp.ne.s32.totalorder %s91, %s93
    %p97 = scmp.eq.s32.totalorder %s10, 0
    %p98 = por %p96, %p97
    %p99 = scmp.ne.s32.totalorder %s91, %s93
    %p100 = scmp.eq.s32.totalorder %s15, 1
    %p101 = por %p99, %p100
    %p102 = scmp.ne.s32.totalorder %s93, %s94
    %p103 = scmp.eq.s32.totalorder %s15, 0
    %p104 = por %p102, %p103
    %p105 = scmp.ne.s32.totalorder %s93, %s94
    %p106 = scmp.eq.s32.totalorder %s16, 1
    %p107 = por %p105, %p106
    %p109 = scmp.ne.s32.totalorder %s94, %s108
    %p110 = scmp.eq.s32.totalorder %s16, 0
    %p111 = por %p109, %p110
    %s112 = ssub.s32 %s10, %s17
    %p113 = scmp.eq.s32.totalorder %s112, 0
    %s115 = sadd.s32 %s114, 1
    %s116 = scalar_select %p113, %s114, %s115
    %p119 = pneg %p113
    %p120 = scmp.eq.s32.totalorder %s10, 1
    %p121 = por %p119, %p120
    %p122 = scmp.ne.s32.totalorder %s114, %s117
    %p123 = scmp.eq.s32.totalorder %s10, 0
    %p124 = por %p122, %p123
    %p125 = scmp.ne.s32.totalorder %s114, %s117
    %p126 = scmp.eq.s32.totalorder %s15, 1
    %p127 = por %p125, %p126
    %p128 = scmp.ne.s32.totalorder %s117, %s118
    %p129 = scmp.eq.s32.totalorder %s15, 0
    %p130 = por %p128, %p129
    %p131 = scmp.ne.s32.totalorder %s117, %s118
    %p132 = scmp.eq.s32.totalorder %s16, 1
    %p133 = por %p131, %p132
    %p135 = scmp.ne.s32.totalorder %s118, %s134
    %p136 = scmp.eq.s32.totalorder %s16, 0
    %p137 = por %p135, %p136
    %p138 = scmp.le.s32.totalorder 1, %s10
    %p139 = scmp.lt.s32.totalorder %s10, 3
    %p140 = pnand %p138, %p139
    %p141 = pneg %p140
    // Predicated region
    $region9: #{_lambda_.12} parent=5 // pred_check
      _
    $region10: #{_lambda_.12} parent=5 // pred_check_branch
      %143 = sbr.rel (%p140) target = $region12
    $region11: #{_lambda_.12} parent=5 // pred_region
      %s144 = ssub.s32 %s10, 1
      // Predicated region
      $region13: #{_lambda_.12} parent=11 // pred_check
        %p145 = pneg %p57
      $region14: #{_lambda_.12} parent=11 // pred_check_branch
        %147 = sbr.rel (%p145) target = $region16
      $region15: #{_lambda_.12} parent=11 // pred_region
        _
      $region16: #{_lambda_.12} parent=11 // pred_fallthru
        _
      // Predicated region
      $region17: #{_lambda_.12} parent=11 // pred_check
        %p148 = pneg %p104
      $region18: #{_lambda_.12} parent=11 // pred_check_branch
        %150 = sbr.rel (%p148) target = $region20
      $region19: #{_lambda_.12} parent=11 // pred_region
        _
      $region20: #{_lambda_.12} parent=11 // pred_fallthru
        _
    $region12: #{_lambda_.12} parent=5 // pred_fallthru
      _
    %p151 = scmp.lt.s32.totalorder %s10, 2
    // Predicated region
    $region21: #{_lambda_.12} parent=5 // pred_check
      %p152 = pneg %p151
    $region22: #{_lambda_.12} parent=5 // pred_check_branch
      %154 = sbr.rel (%p152) target = $region24
    $region23: #{_lambda_.12} parent=5 // pred_region
      // Predicated region
      $region25: #{_lambda_.12} parent=23 // pred_check
        %p155 = pneg %p30
      $region26: #{_lambda_.12} parent=23 // pred_check_branch
        %157 = sbr.rel (%p155) target = $region28
      $region27: #{_lambda_.12} parent=23 // pred_region
        %s158 = smul.u32 32, %s10
        %p159 = scmp.lt.s32.totalorder %s158, 63
        %s160 = scalar_select %p159, %s158, 63
        %s161 = smul.addr %s160, 5
        %s162 = smul.addr %s161, 4
        %s163 = scalar_lea.vmem %s0, %s162
        %s164 = smul.u32 32, %s10
      $region28: #{_lambda_.12} parent=23 // pred_fallthru
        _
      // Predicated region
      $region29: #{_lambda_.12} parent=23 // pred_check
        %p165 = pneg %p77
      $region30: #{_lambda_.12} parent=23 // pred_check_branch
        %167 = sbr.rel (%p165) target = $region32
      $region31: #{_lambda_.12} parent=23 // pred_region
        %s168 = smul.u32 32, %s10
        %p169 = scmp.lt.s32.totalorder %s168, 63
        %s170 = scalar_select %p169, %s168, 63
        %s171 = smul.addr %s170, 4
        %s172 = scalar_lea.vmem %s2, %s171
        %s173 = smul.u32 32, %s10
      $region32: #{_lambda_.12} parent=23 // pred_fallthru
        _
    $region24: #{_lambda_.12} parent=5 // pred_fallthru
      _
    %p174 = scmp.le.s32.totalorder 1, %s10
    %p175 = scmp.lt.s32.totalorder %s10, 3
    %p176 = pnand %p174, %p175
    %p177 = pneg %p176
    // Predicated region
    $region33: #{_lambda_.12} parent=5 // pred_check
      _
    $region34: #{_lambda_.12} parent=5 // pred_check_branch
      %179 = sbr.rel (%p176) target = $region36
    $region35: #{_lambda_.12} parent=5 // pred_region
      %s180 = ssub.s32 %s10, 1
      %s181 = smul.u32 32, %s15
      %p182 = scmp.lt.s32.totalorder %s181, 63
      %s183 = scalar_select %p182, %s181, 63
      %s184 = smul.addr %s183, 5
      %s185 = smul.addr %s184, 4
      %s186 = scalar_lea.vmem %s0, %s185
      %p187 = pneg %p36
      %p188 = pneg %p33
      %p189 = pneg %p57
      %p190 = pneg %p54
      %s191 = smul.u32 32, %s15
      %p192 = scmp.lt.s32.totalorder %s191, 63
      %s193 = scalar_select %p192, %s191, 63
      %s194 = smul.addr %s193, 4
      %s195 = scalar_lea.vmem %s2, %s194
      %p196 = pneg %p83
      %p197 = pneg %p80
      %p198 = pneg %p104
      %p199 = pneg %p101
      %p200 = pneg %p130
      %p201 = pneg %p127
      %s202 = smul.u32 32, %s15
      %p203 = scmp.lt.s32.totalorder %s202, 63
      %s204 = scalar_select %p203, %s202, 63
      %s205 = smul.addr %s204, 8
      %s206 = scalar_lea.vmem %s4, %s205
      %s207 = smul.u32 32, %s15
      %p208 = scmp.lt.s32.totalorder %s207, 63
      %s209 = scalar_select %p208, %s207, 63
      %s210 = smul.addr %s209, 5
      %s211 = smul.addr %s210, 4
      %s212 = scalar_lea.vmem %s0, %s211
      %s213 = smul.u32 32, %s15
      %s214 = smul.u32 32, %s15
      %p215 = scmp.lt.s32.totalorder %s214, 63
      %s216 = scalar_select %p215, %s214, 63
      %s217 = smul.addr %s216, 4
      %s218 = scalar_lea.vmem %s2, %s217
      %s219 = smul.u32 32, %s15
      %s220 = smul.u32 32, %s15
      %p221 = scmp.lt.s32.totalorder %s220, 63
      %s222 = scalar_select %p221, %s220, 63
      %s223 = smul.addr %s222, 8
      %s224 = scalar_lea.vmem %s4, %s223
      %s225 = smul.u32 32, %s15
      %v227 = vld [vmem:[%s212] sm:$0xff]
      %v228 = vld [vmem:[%s212 + $0x8] sm:$0xff]
      %v229 = vld [vmem:[%s212 + $0x10] sm:$0xf]
      %v230 = vld [vmem:[%s212 + $0x14] sm:$0xff]
      %v231 = vld [vmem:[%s212 + $0x1c] sm:$0xff]
      %v232 = vld [vmem:[%s212 + $0x24] sm:$0xf]
      %v233 = vld [vmem:[%s212 + $0x28] sm:$0xff]
      %v234 = vld [vmem:[%s212 + $0x30] sm:$0xff]
      %v235 = vld [vmem:[%s212 + $0x38] sm:$0xf]
      %v236 = vld [vmem:[%s212 + $0x3c] sm:$0xff]
      %v237 = vld [vmem:[%s212 + $0x44] sm:$0xff]
      %v238 = vld [vmem:[%s212 + $0x4c] sm:$0xf]
      %v239 = vld [vmem:[%s212 + $0x50] sm:$0xff]
      %v240 = vld [vmem:[%s212 + $0x58] sm:$0xff]
      %v241 = vld [vmem:[%s212 + $0x60] sm:$0xf]
      %v242 = vld [vmem:[%s212 + $0x64] sm:$0xff]
      %v243 = vld [vmem:[%s212 + $0x6c] sm:$0xff]
      %v244 = vld [vmem:[%s212 + $0x74] sm:$0xf]
      %v245 = vld [vmem:[%s212 + $0x78] sm:$0xff]
      %v246 = vld [vmem:[%s212 + $0x80] sm:$0xff]
      %v247 = vld [vmem:[%s212 + $0x88] sm:$0xf]
      %v248 = vld [vmem:[%s212 + $0x8c] sm:$0xff]
      %v249 = vld [vmem:[%s212 + $0x94] sm:$0xff]
      %v250 = vld [vmem:[%s212 + $0x9c] sm:$0xf]
      %v251 = vld [vmem:[%s212 + $0xa0] sm:$0xff]
      %v252 = vld [vmem:[%s212 + $0xa8] sm:$0xff]
      %v253 = vld [vmem:[%s212 + $0xb0] sm:$0xf]
      %v254 = vld [vmem:[%s212 + $0xb4] sm:$0xff]
      %v255 = vld [vmem:[%s212 + $0xbc] sm:$0xff]
      %v256 = vld [vmem:[%s212 + $0xc4] sm:$0xf]
      %v257 = vld [vmem:[%s212 + $0xc8] sm:$0xff]
      %v258 = vld [vmem:[%s212 + $0xd0] sm:$0xff]
      %v259 = vld [vmem:[%s212 + $0xd8] sm:$0xf]
      %v260 = vld [vmem:[%s212 + $0xdc] sm:$0xff]
      %v261 = vld [vmem:[%s212 + $0xe4] sm:$0xff]
      %v262 = vld [vmem:[%s212 + $0xec] sm:$0xf]
      %v263 = vld [vmem:[%s212 + $0xf0] sm:$0xff]
      %v264 = vld [vmem:[%s212 + $0xf8] sm:$0xff]
      %v265 = vld [vmem:[%s212 + $0x100] sm:$0xf]
      %v266 = vld [vmem:[%s212 + $0x104] sm:$0xff]
      %v267 = vld [vmem:[%s212 + $0x10c] sm:$0xff]
      %v268 = vld [vmem:[%s212 + $0x114] sm:$0xf]
      %v269 = vld [vmem:[%s212 + $0x118] sm:$0xff]
      %v270 = vld [vmem:[%s212 + $0x120] sm:$0xff]
      %v271 = vld [vmem:[%s212 + $0x128] sm:$0xf]
      %v272 = vld [vmem:[%s212 + $0x12c] sm:$0xff]
      %v273 = vld [vmem:[%s212 + $0x134] sm:$0xff]
      %v274 = vld [vmem:[%s212 + $0x13c] sm:$0xf]
      %v275 = vld [vmem:[%s212 + $0x140] sm:$0xff]
      %v276 = vld [vmem:[%s212 + $0x148] sm:$0xff]
      %v277 = vld [vmem:[%s212 + $0x150] sm:$0xf]
      %v278 = vld [vmem:[%s212 + $0x154] sm:$0xff]
      %v279 = vld [vmem:[%s212 + $0x15c] sm:$0xff]
      %v280 = vld [vmem:[%s212 + $0x164] sm:$0xf]
      %v281 = vld [vmem:[%s212 + $0x168] sm:$0xff]
      %v282 = vld [vmem:[%s212 + $0x170] sm:$0xff]
      %v283 = vld [vmem:[%s212 + $0x178] sm:$0xf]
      %v284 = vld [vmem:[%s212 + $0x17c] sm:$0xff]
      %v285 = vld [vmem:[%s212 + $0x184] sm:$0xff]
      %v286 = vld [vmem:[%s212 + $0x18c] sm:$0xf]
      %v287 = vld [vmem:[%s212 + $0x190] sm:$0xff]
      %v288 = vld [vmem:[%s212 + $0x198] sm:$0xff]
      %v289 = vld [vmem:[%s212 + $0x1a0] sm:$0xf]
      %v290 = vld [vmem:[%s212 + $0x1a4] sm:$0xff]
      %v291 = vld [vmem:[%s212 + $0x1ac] sm:$0xff]
      %v292 = vld [vmem:[%s212 + $0x1b4] sm:$0xf]
      %v293 = vld [vmem:[%s212 + $0x1b8] sm:$0xff]
      %v294 = vld [vmem:[%s212 + $0x1c0] sm:$0xff]
      %v295 = vld [vmem:[%s212 + $0x1c8] sm:$0xf]
      %v296 = vld [vmem:[%s212 + $0x1cc] sm:$0xff]
      %v297 = vld [vmem:[%s212 + $0x1d4] sm:$0xff]
      %v298 = vld [vmem:[%s212 + $0x1dc] sm:$0xf]
      %v299 = vld [vmem:[%s212 + $0x1e0] sm:$0xff]
      %v300 = vld [vmem:[%s212 + $0x1e8] sm:$0xff]
      %v301 = vld [vmem:[%s212 + $0x1f0] sm:$0xf]
      %v302 = vld [vmem:[%s212 + $0x1f4] sm:$0xff]
      %v303 = vld [vmem:[%s212 + $0x1fc] sm:$0xff]
      %v304 = vld [vmem:[%s212 + $0x204] sm:$0xf]
      %v305 = vld [vmem:[%s212 + $0x208] sm:$0xff]
      %v306 = vld [vmem:[%s212 + $0x210] sm:$0xff]
      %v307 = vld [vmem:[%s212 + $0x218] sm:$0xf]
      %v308 = vld [vmem:[%s212 + $0x21c] sm:$0xff]
      %v309 = vld [vmem:[%s212 + $0x224] sm:$0xff]
      %v310 = vld [vmem:[%s212 + $0x22c] sm:$0xf]
      %v311 = vld [vmem:[%s212 + $0x230] sm:$0xff]
      %v312 = vld [vmem:[%s212 + $0x238] sm:$0xff]
      %v313 = vld [vmem:[%s212 + $0x240] sm:$0xf]
      %v314 = vld [vmem:[%s212 + $0x244] sm:$0xff]
      %v315 = vld [vmem:[%s212 + $0x24c] sm:$0xff]
      %v316 = vld [vmem:[%s212 + $0x254] sm:$0xf]
      %v317 = vld [vmem:[%s212 + $0x258] sm:$0xff]
      %v318 = vld [vmem:[%s212 + $0x260] sm:$0xff]
      %v319 = vld [vmem:[%s212 + $0x268] sm:$0xf]
      %v320 = vld [vmem:[%s212 + $0x26c] sm:$0xff]
      %v321 = vld [vmem:[%s212 + $0x274] sm:$0xff]
      %v322 = vld [vmem:[%s212 + $0x27c] sm:$0xf]
      %v323 = vld [vmem:[%s1] sm:$0xf]
      %v324 = vld [vmem:[%s1 + $0x4] sm:$0xf]
      %v325 = vld [vmem:[%s1 + $0x8] sm:$0xf]
      %v326 = vld [vmem:[%s1 + $0xc] sm:$0xf]
      %v327 = vld [vmem:[%s1 + $0x10] sm:$0xf]
      %v328 = vld [vmem:[%s1 + $0x14] sm:$0xf]
      %v329 = vld [vmem:[%s1 + $0x18] sm:$0xf]
      %v330 = vld [vmem:[%s1 + $0x1c] sm:$0xf]
      %v331 = vld [vmem:[%s1 + $0x20] sm:$0xf]
      %v332 = vld [vmem:[%s1 + $0x24] sm:$0xf]
      %v333 = vld [vmem:[%s1 + $0x28] sm:$0xf]
      %v334 = vld [vmem:[%s1 + $0x2c] sm:$0xf]
      %v335 = vld [vmem:[%s1 + $0x30] sm:$0xf]
      %v336 = vld [vmem:[%s1 + $0x34] sm:$0xf]
      %v337 = vld [vmem:[%s1 + $0x38] sm:$0xf]
      %v338 = vld [vmem:[%s1 + $0x3c] sm:$0xf]
      %v339 = vld [vmem:[%s1 + $0x40] sm:$0xf]
      %v340 = vld [vmem:[%s1 + $0x44] sm:$0xf]
      %v341 = vld [vmem:[%s1 + $0x48] sm:$0xf]
      %v342 = vld [vmem:[%s1 + $0x4c] sm:$0xf]
      %v343 = vld [vmem:[%s1 + $0x50] sm:$0xf]
      %v344 = vld [vmem:[%s1 + $0x54] sm:$0xf]
      %v345 = vld [vmem:[%s1 + $0x58] sm:$0xf]
      %v346 = vld [vmem:[%s1 + $0x5c] sm:$0xf]
      %v347 = vld [vmem:[%s1 + $0x60] sm:$0xf]
      %v348 = vld [vmem:[%s1 + $0x64] sm:$0xf]
      %v349 = vld [vmem:[%s1 + $0x68] sm:$0xf]
      %v350 = vld [vmem:[%s1 + $0x6c] sm:$0xf]
      %v351 = vld [vmem:[%s1 + $0x70] sm:$0xf]
      %v352 = vld [vmem:[%s1 + $0x74] sm:$0xf]
      %v353 = vld [vmem:[%s1 + $0x78] sm:$0xf]
      %v354 = vld [vmem:[%s1 + $0x7c] sm:$0xf]
      %v355 = vld [vmem:[%s1 + $0x80] sm:$0xf]
      %v356 = vld [vmem:[%s1 + $0x84] sm:$0xf]
      %v357 = vld [vmem:[%s1 + $0x88] sm:$0xf]
      %v358 = vld [vmem:[%s1 + $0x8c] sm:$0xf]
      %v359 = vld [vmem:[%s1 + $0x90] sm:$0xf]
      %v360 = vld [vmem:[%s1 + $0x94] sm:$0xf]
      %v361 = vld [vmem:[%s1 + $0x98] sm:$0xf]
      %v362 = vld [vmem:[%s1 + $0x9c] sm:$0xf]
      %v363 = vld [vmem:[%s1 + $0xa0] sm:$0xf]
      %v364 = vld [vmem:[%s1 + $0xa4] sm:$0xf]
      %v365 = vld [vmem:[%s1 + $0xa8] sm:$0xf]
      %v366 = vld [vmem:[%s1 + $0xac] sm:$0xf]
      %v367 = vld [vmem:[%s1 + $0xb0] sm:$0xf]
      %v368 = vld [vmem:[%s1 + $0xb4] sm:$0xf]
      %v369 = vld [vmem:[%s1 + $0xb8] sm:$0xf]
      %v370 = vld [vmem:[%s1 + $0xbc] sm:$0xf]
      %v371 = vld [vmem:[%s1 + $0xc0] sm:$0xf]
      %v372 = vld [vmem:[%s1 + $0xc4] sm:$0xf]
      %v373 = vld [vmem:[%s1 + $0xc8] sm:$0xf]
      %v374 = vld [vmem:[%s1 + $0xcc] sm:$0xf]
      %v375 = vld [vmem:[%s1 + $0xd0] sm:$0xf]
      %v376 = vld [vmem:[%s1 + $0xd4] sm:$0xf]
      %v377 = vld [vmem:[%s1 + $0xd8] sm:$0xf]
      %v378 = vld [vmem:[%s1 + $0xdc] sm:$0xf]
      %v379 = vld [vmem:[%s1 + $0xe0] sm:$0xf]
      %v380 = vld [vmem:[%s1 + $0xe4] sm:$0xf]
      %v381 = vld [vmem:[%s1 + $0xe8] sm:$0xf]
      %v382 = vld [vmem:[%s1 + $0xec] sm:$0xf]
      %v383 = vld [vmem:[%s1 + $0xf0] sm:$0xf]
      %v384 = vld [vmem:[%s1 + $0xf4] sm:$0xf]
      %v385 = vld [vmem:[%s1 + $0xf8] sm:$0xf]
      %v386 = vld [vmem:[%s1 + $0xfc] sm:$0xf]
      %v387 = vld [vmem:[%s1 + $0x100] sm:$0xf]
      %v388 = vld [vmem:[%s1 + $0x104] sm:$0xf]
      %v389 = vld [vmem:[%s1 + $0x108] sm:$0xf]
      %v390 = vld [vmem:[%s1 + $0x10c] sm:$0xf]
      %v391 = vld [vmem:[%s1 + $0x110] sm:$0xf]
      %v392 = vld [vmem:[%s1 + $0x114] sm:$0xf]
      %v393 = vld [vmem:[%s1 + $0x118] sm:$0xf]
      %v394 = vld [vmem:[%s1 + $0x11c] sm:$0xf]
      %v395 = vld [vmem:[%s218] sm:$0xf]
      %v396 = vld [vmem:[%s218 + $0x4] sm:$0xf]
      %v397 = vld [vmem:[%s218 + $0x8] sm:$0xf]
      %v398 = vld [vmem:[%s218 + $0xc] sm:$0xf]
      %v399 = vld [vmem:[%s218 + $0x10] sm:$0xf]
      %v400 = vld [vmem:[%s218 + $0x14] sm:$0xf]
      %v401 = vld [vmem:[%s218 + $0x18] sm:$0xf]
      %v402 = vld [vmem:[%s218 + $0x1c] sm:$0xf]
      %v403 = vld [vmem:[%s218 + $0x20] sm:$0xf]
      %v404 = vld [vmem:[%s218 + $0x24] sm:$0xf]
      %v405 = vld [vmem:[%s218 + $0x28] sm:$0xf]
      %v406 = vld [vmem:[%s218 + $0x2c] sm:$0xf]
      %v407 = vld [vmem:[%s218 + $0x30] sm:$0xf]
      %v408 = vld [vmem:[%s218 + $0x34] sm:$0xf]
      %v409 = vld [vmem:[%s218 + $0x38] sm:$0xf]
      %v410 = vld [vmem:[%s218 + $0x3c] sm:$0xf]
      %v411 = vld [vmem:[%s218 + $0x40] sm:$0xf]
      %v412 = vld [vmem:[%s218 + $0x44] sm:$0xf]
      %v413 = vld [vmem:[%s218 + $0x48] sm:$0xf]
      %v414 = vld [vmem:[%s218 + $0x4c] sm:$0xf]
      %v415 = vld [vmem:[%s218 + $0x50] sm:$0xf]
      %v416 = vld [vmem:[%s218 + $0x54] sm:$0xf]
      %v417 = vld [vmem:[%s218 + $0x58] sm:$0xf]
      %v418 = vld [vmem:[%s218 + $0x5c] sm:$0xf]
      %v419 = vld [vmem:[%s218 + $0x60] sm:$0xf]
      %v420 = vld [vmem:[%s218 + $0x64] sm:$0xf]
      %v421 = vld [vmem:[%s218 + $0x68] sm:$0xf]
      %v422 = vld [vmem:[%s218 + $0x6c] sm:$0xf]
      %v423 = vld [vmem:[%s218 + $0x70] sm:$0xf]
      %v424 = vld [vmem:[%s218 + $0x74] sm:$0xf]
      %v425 = vld [vmem:[%s218 + $0x78] sm:$0xf]
      %v426 = vld [vmem:[%s218 + $0x7c] sm:$0xf]
      %v427 = vld [vmem:[%s3] sm:$0xf]
      %v428 = vld [vmem:[%s3 + $0x4] sm:$0xf]
      %v429 = vld [vmem:[%s3 + $0x8] sm:$0xf]
      %v430 = vld [vmem:[%s3 + $0xc] sm:$0xf]
      %v463 = vunpack.c.l.b16 %v395
      %v464 = vunpack.c.l.b16 %v396
      %v465 = vunpack.c.l.b16 %v397
      %v466 = vunpack.c.l.b16 %v398
      %v467 = vunpack.c.l.b16 %v399
      %v468 = vunpack.c.l.b16 %v400
      %v469 = vunpack.c.l.b16 %v401
      %v470 = vunpack.c.l.b16 %v402
      %v471 = vunpack.c.l.b16 %v403
      %v472 = vunpack.c.l.b16 %v404
      %v473 = vunpack.c.l.b16 %v405
      %v474 = vunpack.c.l.b16 %v406
      %v475 = vunpack.c.l.b16 %v407
      %v476 = vunpack.c.l.b16 %v408
      %v477 = vunpack.c.l.b16 %v409
      %v478 = vunpack.c.l.b16 %v410
      %v479 = vunpack.c.l.b16 %v411
      %v480 = vunpack.c.l.b16 %v412
      %v481 = vunpack.c.l.b16 %v413
      %v482 = vunpack.c.l.b16 %v414
      %v483 = vunpack.c.l.b16 %v415
      %v484 = vunpack.c.l.b16 %v416
      %v485 = vunpack.c.l.b16 %v417
      %v486 = vunpack.c.l.b16 %v418
      %v487 = vunpack.c.l.b16 %v419
      %v488 = vunpack.c.l.b16 %v420
      %v489 = vunpack.c.l.b16 %v421
      %v490 = vunpack.c.l.b16 %v422
      %v491 = vunpack.c.l.b16 %v423
      %v492 = vunpack.c.l.b16 %v424
      %v493 = vunpack.c.l.b16 %v425
      %v494 = vunpack.c.l.b16 %v426
      %v495 = vpack.c.b16 %v464, %v463
      %v496 = vpack.c.b16 %v466, %v465
      %v497 = vpack.c.b16 %v468, %v467
      %v498 = vpack.c.b16 %v470, %v469
      %v499 = vpack.c.b16 %v472, %v471
      %v500 = vpack.c.b16 %v474, %v473
      %v501 = vpack.c.b16 %v476, %v475
      %v502 = vpack.c.b16 %v478, %v477
      %v503 = vpack.c.b16 %v480, %v479
      %v504 = vpack.c.b16 %v482, %v481
      %v505 = vpack.c.b16 %v484, %v483
      %v506 = vpack.c.b16 %v486, %v485
      %v507 = vpack.c.b16 %v488, %v487
      %v508 = vpack.c.b16 %v490, %v489
      %v509 = vpack.c.b16 %v492, %v491
      %v510 = vpack.c.b16 %v494, %v493
      %v515 = vunpack.c.l.b16 %v427
      %v516 = vunpack.c.l.b16 %v428
      %v517 = vunpack.c.l.b16 %v429
      %v518 = vunpack.c.l.b16 %v430
      %v519 = vpack.c.b16 %v516, %v515
      %v520 = vpack.c.b16 %v518, %v517
      %vm523 = vcmask 261120
      %v525 = vsel %vm523, %v495, 0
      %v528 = vsel %vm523, %v496, 0
      %v531 = vsel %vm523, %v497, 0
      %v534 = vsel %vm523, %v498, 0
      %v537 = vsel %vm523, %v499, 0
      %v540 = vsel %vm523, %v500, 0
      %v543 = vsel %vm523, %v501, 0
      %v546 = vsel %vm523, %v502, 0
      %v549 = vsel %vm523, %v503, 0
      %v552 = vsel %vm523, %v504, 0
      %v555 = vsel %vm523, %v505, 0
      %v558 = vsel %vm523, %v506, 0
      %v561 = vsel %vm523, %v507, 0
      %v564 = vsel %vm523, %v508, 0
      %v567 = vsel %vm523, %v509, 0
      %v570 = vsel %vm523, %v510, 0
      %572 = vmatprep.subr.bf16.mxu0 0
      %573 = vmatpush1.bf16.msra.mxu0 %v519
      %574 = vmatprep.subr.bf16.mxu0 0
      %575 = vmatpush1.bf16.msra.mxu0 %v520
      %576 = vmatprep.subr.bf16.mxu0 0
      %577 = vmatpush1.bf16.msra.mxu0 0
      %578 = vmatprep.subr.bf16.mxu0 0
      %579 = vmatpush1.bf16.msra.mxu0 0
      %580 = vmatprep.subr.bf16.mxu0 0
      %581 = vmatpush1.bf16.msra.mxu0 0
      %582 = vmatprep.subr.bf16.mxu0 0
      %583 = vmatpush1.bf16.msra.mxu0 0
      %584 = vmatprep.subr.bf16.mxu0 0
      %585 = vmatpush1.bf16.msra.mxu0 0
      %586 = vmatprep.subr.bf16.mxu0 0
      %587 = vmatpush1.bf16.msra.mxu0 0
      %588 = vmatprep.subr.bf16.mxu0 0
      %589 = vmatpush1.bf16.msra.mxu0 0
      %590 = vmatprep.subr.bf16.mxu0 0
      %591 = vmatpush1.bf16.msra.mxu0 0
      %592 = vmatprep.subr.bf16.mxu0 0
      %593 = vmatpush1.bf16.msra.mxu0 0
      %594 = vmatprep.subr.bf16.mxu0 0
      %595 = vmatpush1.bf16.msra.mxu0 0
      %596 = vmatprep.subr.bf16.mxu0 0
      %597 = vmatpush1.bf16.msra.mxu0 0
      %598 = vmatprep.subr.bf16.mxu0 0
      %599 = vmatpush1.bf16.msra.mxu0 0
      %600 = vmatprep.subr.bf16.mxu0 0
      %601 = vmatpush1.bf16.msra.mxu0 0
      %602 = vmatprep.subr.bf16.mxu0 0
      %603 = vmatpush1.bf16.msra.mxu0 0
      %604 = vmatprep.mubr.bf16.mxu0 0
      %605 = vmatmul.mubr.bf16.gmra.mrb[0].mxu0 %v525
      %v606 = vpop.f32.mrb[0].mxu0
      %v607 = vadd.f32 0.0, %v606
      %v608 = vpop.f32.mrb[0].mxu0
      %v609 = vpop.f32.mrb[0].mxu0
      %v610 = vadd.f32 0.0, %v609
      %v611 = vpop.f32.mrb[0].mxu0
      %612 = vmatprep.mubr.bf16.mxu0 0
      %613 = vmatmul.mubr.bf16.gmra.mrb[0].mxu0 %v528
      %v614 = vpop.f32.mrb[0].mxu0
      %v615 = vadd.f32 0.0, %v614
      %v616 = vpop.f32.mrb[0].mxu0
      %v617 = vpop.f32.mrb[0].mxu0
      %v618 = vadd.f32 0.0, %v617
      %v619 = vpop.f32.mrb[0].mxu0
      %620 = vmatprep.mubr.bf16.mxu0 0
      %621 = vmatmul.mubr.bf16.gmra.mrb[0].mxu0 %v531
      %v622 = vpop.f32.mrb[0].mxu0
      %v623 = vadd.f32 0.0, %v622
      %v624 = vpop.f32.mrb[0].mxu0
      %v625 = vpop.f32.mrb[0].mxu0
      %v626 = vadd.f32 0.0, %v625
      %v627 = vpop.f32.mrb[0].mxu0
      %628 = vmatprep.mubr.bf16.mxu0 0
      %629 = vmatmul.mubr.bf16.gmra.mrb[0].mxu0 %v534
      %v630 = vpop.f32.mrb[0].mxu0
      %v631 = vadd.f32 0.0, %v630
      %v632 = vpop.f32.mrb[0].mxu0
      %v633 = vpop.f32.mrb[0].mxu0
      %v634 = vadd.f32 0.0, %v633
      %v635 = vpop.f32.mrb[0].mxu0
      %636 = vmatprep.mubr.bf16.mxu0 0
      %637 = vmatmul.mubr.bf16.gmra.mrb[0].mxu0 %v537
      %v638 = vpop.f32.mrb[0].mxu0
      %v639 = vadd.f32 0.0, %v638
      %v640 = vpop.f32.mrb[0].mxu0
      %v641 = vpop.f32.mrb[0].mxu0
      %v642 = vadd.f32 0.0, %v641
      %v643 = vpop.f32.mrb[0].mxu0
      %644 = vmatprep.mubr.bf16.mxu0 0
      %645 = vmatmul.mubr.bf16.gmra.mrb[0].mxu0 %v540
      %v646 = vpop.f32.mrb[0].mxu0
      %v647 = vadd.f32 0.0, %v646
      %v648 = vpop.f32.mrb[0].mxu0
      %v649 = vpop.f32.mrb[0].mxu0
      %v650 = vadd.f32 0.0, %v649
      %v651 = vpop.f32.mrb[0].mxu0
      %652 = vmatprep.mubr.bf16.mxu0 0
      %653 = vmatmul.mubr.bf16.gmra.mrb[0].mxu0 %v543
      %v654 = vpop.f32.mrb[0].mxu0
      %v655 = vadd.f32 0.0, %v654
      %v656 = vpop.f32.mrb[0].mxu0
      %v657 = vpop.f32.mrb[0].mxu0
      %v658 = vadd.f32 0.0, %v657
      %v659 = vpop.f32.mrb[0].mxu0
      %660 = vmatprep.mubr.bf16.mxu0 0
      %661 = vmatmul.mubr.bf16.gmra.mrb[0].mxu0 %v546
      %v662 = vpop.f32.mrb[0].mxu0
      %v663 = vadd.f32 0.0, %v662
      %v664 = vpop.f32.mrb[0].mxu0
      %v665 = vpop.f32.mrb[0].mxu0
      %v666 = vadd.f32 0.0, %v665
      %v667 = vpop.f32.mrb[0].mxu0
      %668 = vmatprep.mubr.bf16.mxu0 0
      %669 = vmatmul.mubr.bf16.gmra.mrb[0].mxu0 %v549
      %v670 = vpop.f32.mrb[0].mxu0
      %v671 = vadd.f32 0.0, %v670
      %v672 = vpop.f32.mrb[0].mxu0
      %v673 = vpop.f32.mrb[0].mxu0
      %v674 = vadd.f32 0.0, %v673
      %v675 = vpop.f32.mrb[0].mxu0
      %676 = vmatprep.mubr.bf16.mxu0 0
      %677 = vmatmul.mubr.bf16.gmra.mrb[0].mxu0 %v552
      %v678 = vpop.f32.mrb[0].mxu0
      %v679 = vadd.f32 0.0, %v678
      %v680 = vpop.f32.mrb[0].mxu0
      %v681 = vpop.f32.mrb[0].mxu0
      %v682 = vadd.f32 0.0, %v681
      %v683 = vpop.f32.mrb[0].mxu0
      %684 = vmatprep.mubr.bf16.mxu0 0
      %685 = vmatmul.mubr.bf16.gmra.mrb[0].mxu0 %v555
      %v686 = vpop.f32.mrb[0].mxu0
      %v687 = vadd.f32 0.0, %v686
      %v688 = vpop.f32.mrb[0].mxu0
      %v689 = vpop.f32.mrb[0].mxu0
      %v690 = vadd.f32 0.0, %v689
      %v691 = vpop.f32.mrb[0].mxu0
      %692 = vmatprep.mubr.bf16.mxu0 0
      %693 = vmatmul.mubr.bf16.gmra.mrb[0].mxu0 %v558
      %v694 = vpop.f32.mrb[0].mxu0
      %v695 = vadd.f32 0.0, %v694
      %v696 = vpop.f32.mrb[0].mxu0
      %v697 = vpop.f32.mrb[0].mxu0
      %v698 = vadd.f32 0.0, %v697
      %v699 = vpop.f32.mrb[0].mxu0
      %700 = vmatprep.mubr.bf16.mxu0 0
      %701 = vmatmul.mubr.bf16.gmra.mrb[0].mxu0 %v561
      %v702 = vpop.f32.mrb[0].mxu0
      %v703 = vadd.f32 0.0, %v702
      %v704 = vpop.f32.mrb[0].mxu0
      %v705 = vpop.f32.mrb[0].mxu0
      %v706 = vadd.f32 0.0, %v705
      %v707 = vpop.f32.mrb[0].mxu0
      %708 = vmatprep.mubr.bf16.mxu0 0
      %709 = vmatmul.mubr.bf16.gmra.mrb[0].mxu0 %v564
      %v710 = vpop.f32.mrb[0].mxu0
      %v711 = vadd.f32 0.0, %v710
      %v712 = vpop.f32.mrb[0].mxu0
      %v713 = vpop.f32.mrb[0].mxu0
      %v714 = vadd.f32 0.0, %v713
      %v715 = vpop.f32.mrb[0].mxu0
      %716 = vmatprep.mubr.bf16.mxu0 0
      %717 = vmatmul.mubr.bf16.gmra.mrb[0].mxu0 %v567
      %v718 = vpop.f32.mrb[0].mxu0
      %v719 = vadd.f32 0.0, %v718
      %v720 = vpop.f32.mrb[0].mxu0
      %v721 = vpop.f32.mrb[0].mxu0
      %v722 = vadd.f32 0.0, %v721
      %v723 = vpop.f32.mrb[0].mxu0
      %724 = vmatprep.mubr.bf16.mxu0 0
      %725 = vmatmul.mubr.bf16.gmra.mrb[0].mxu0 %v570
      %v726 = vpop.f32.mrb[0].mxu0
      %v727 = vadd.f32 0.0, %v726
      %v728 = vpop.f32.mrb[0].mxu0
      %v729 = vpop.f32.mrb[0].mxu0
      %v730 = vadd.f32 0.0, %v729
      %v731 = vpop.f32.mrb[0].mxu0
      %732 = vdwg.mxu0
      %v829 = vunpack.c.l.b16 %v227
      %v830 = vunpack.c.h.b16 %v227
      %v831 = vunpack.c.l.b16 %v228
      %v832 = vunpack.c.h.b16 %v228
      %v833 = vunpack.c.l.b16 %v229
      %v834 = vunpack.c.l.b16 %v230
      %v835 = vunpack.c.h.b16 %v230
      %v836 = vunpack.c.l.b16 %v231
      %v837 = vunpack.c.h.b16 %v231
      %v838 = vunpack.c.l.b16 %v232
      %v839 = vunpack.c.l.b16 %v233
      %v840 = vunpack.c.h.b16 %v233
      %v841 = vunpack.c.l.b16 %v234
      %v842 = vunpack.c.h.b16 %v234
      %v843 = vunpack.c.l.b16 %v235
      %v844 = vunpack.c.l.b16 %v236
      %v845 = vunpack.c.h.b16 %v236
      %v846 = vunpack.c.l.b16 %v237
      %v847 = vunpack.c.h.b16 %v237
      %v848 = vunpack.c.l.b16 %v238
      %v849 = vunpack.c.l.b16 %v239
      %v850 = vunpack.c.h.b16 %v239
      %v851 = vunpack.c.l.b16 %v240
      %v852 = vunpack.c.h.b16 %v240
      %v853 = vunpack.c.l.b16 %v241
      %v854 = vunpack.c.l.b16 %v242
      %v855 = vunpack.c.h.b16 %v242
      %v856 = vunpack.c.l.b16 %v243
      %v857 = vunpack.c.h.b16 %v243
      %v858 = vunpack.c.l.b16 %v244
      %v859 = vunpack.c.l.b16 %v245
      %v860 = vunpack.c.h.b16 %v245
      %v861 = vunpack.c.l.b16 %v246
      %v862 = vunpack.c.h.b16 %v246
      %v863 = vunpack.c.l.b16 %v247
      %v864 = vunpack.c.l.b16 %v248
      %v865 = vunpack.c.h.b16 %v248
      %v866 = vunpack.c.l.b16 %v249
      %v867 = vunpack.c.h.b16 %v249
      %v868 = vunpack.c.l.b16 %v250
      %v869 = vunpack.c.l.b16 %v251
      %v870 = vunpack.c.h.b16 %v251
      %v871 = vunpack.c.l.b16 %v252
      %v872 = vunpack.c.h.b16 %v252
      %v873 = vunpack.c.l.b16 %v253
      %v874 = vunpack.c.l.b16 %v254
      %v875 = vunpack.c.h.b16 %v254
      %v876 = vunpack.c.l.b16 %v255
      %v877 = vunpack.c.h.b16 %v255
      %v878 = vunpack.c.l.b16 %v256
      %v879 = vunpack.c.l.b16 %v257
      %v880 = vunpack.c.h.b16 %v257
      %v881 = vunpack.c.l.b16 %v258
      %v882 = vunpack.c.h.b16 %v258
      %v883 = vunpack.c.l.b16 %v259
      %v884 = vunpack.c.l.b16 %v260
      %v885 = vunpack.c.h.b16 %v260
      %v886 = vunpack.c.l.b16 %v261
      %v887 = vunpack.c.h.b16 %v261
      %v888 = vunpack.c.l.b16 %v262
      %v889 = vunpack.c.l.b16 %v263
      %v890 = vunpack.c.h.b16 %v263
      %v891 = vunpack.c.l.b16 %v264
      %v892 = vunpack.c.h.b16 %v264
      %v893 = vunpack.c.l.b16 %v265
      %v894 = vunpack.c.l.b16 %v266
      %v895 = vunpack.c.h.b16 %v266
      %v896 = vunpack.c.l.b16 %v267
      %v897 = vunpack.c.h.b16 %v267
      %v898 = vunpack.c.l.b16 %v268
      %v899 = vunpack.c.l.b16 %v269
      %v900 = vunpack.c.h.b16 %v269
      %v901 = vunpack.c.l.b16 %v270
      %v902 = vunpack.c.h.b16 %v270
      %v903 = vunpack.c.l.b16 %v271
      %v904 = vunpack.c.l.b16 %v272
      %v905 = vunpack.c.h.b16 %v272
      %v906 = vunpack.c.l.b16 %v273
      %v907 = vunpack.c.h.b16 %v273
      %v908 = vunpack.c.l.b16 %v274
      %v909 = vunpack.c.l.b16 %v275
      %v910 = vunpack.c.h.b16 %v275
      %v911 = vunpack.c.l.b16 %v276
      %v912 = vunpack.c.h.b16 %v276
      %v913 = vunpack.c.l.b16 %v277
      %v914 = vunpack.c.l.b16 %v278
      %v915 = vunpack.c.h.b16 %v278
      %v916 = vunpack.c.l.b16 %v279
      %v917 = vunpack.c.h.b16 %v279
      %v918 = vunpack.c.l.b16 %v280
      %v919 = vunpack.c.l.b16 %v281
      %v920 = vunpack.c.h.b16 %v281
      %v921 = vunpack.c.l.b16 %v282
      %v922 = vunpack.c.h.b16 %v282
      %v923 = vunpack.c.l.b16 %v283
      %v924 = vunpack.c.l.b16 %v284
      %v925 = vunpack.c.h.b16 %v284
      %v926 = vunpack.c.l.b16 %v285
      %v927 = vunpack.c.h.b16 %v285
      %v928 = vunpack.c.l.b16 %v286
      %v929 = vunpack.c.l.b16 %v287
      %v930 = vunpack.c.h.b16 %v287
      %v931 = vunpack.c.l.b16 %v288
      %v932 = vunpack.c.h.b16 %v288
      %v933 = vunpack.c.l.b16 %v289
      %v934 = vunpack.c.l.b16 %v290
      %v935 = vunpack.c.h.b16 %v290
      %v936 = vunpack.c.l.b16 %v291
      %v937 = vunpack.c.h.b16 %v291
      %v938 = vunpack.c.l.b16 %v292
      %v939 = vunpack.c.l.b16 %v293
      %v940 = vunpack.c.h.b16 %v293
      %v941 = vunpack.c.l.b16 %v294
      %v942 = vunpack.c.h.b16 %v294
      %v943 = vunpack.c.l.b16 %v295
      %v944 = vunpack.c.l.b16 %v296
      %v945 = vunpack.c.h.b16 %v296
      %v946 = vunpack.c.l.b16 %v297
      %v947 = vunpack.c.h.b16 %v297
      %v948 = vunpack.c.l.b16 %v298
      %v949 = vunpack.c.l.b16 %v299
      %v950 = vunpack.c.h.b16 %v299
      %v951 = vunpack.c.l.b16 %v300
      %v952 = vunpack.c.h.b16 %v300
      %v953 = vunpack.c.l.b16 %v301
      %v954 = vunpack.c.l.b16 %v302
      %v955 = vunpack.c.h.b16 %v302
      %v956 = vunpack.c.l.b16 %v303
      %v957 = vunpack.c.h.b16 %v303
      %v958 = vunpack.c.l.b16 %v304
      %v959 = vunpack.c.l.b16 %v305
      %v960 = vunpack.c.h.b16 %v305
      %v961 = vunpack.c.l.b16 %v306
      %v962 = vunpack.c.h.b16 %v306
      %v963 = vunpack.c.l.b16 %v307
      %v964 = vunpack.c.l.b16 %v308
      %v965 = vunpack.c.h.b16 %v308
      %v966 = vunpack.c.l.b16 %v309
      %v967 = vunpack.c.h.b16 %v309
      %v968 = vunpack.c.l.b16 %v310
      %v969 = vunpack.c.l.b16 %v311
      %v970 = vunpack.c.h.b16 %v311
      %v971 = vunpack.c.l.b16 %v312
      %v972 = vunpack.c.h.b16 %v312
      %v973 = vunpack.c.l.b16 %v313
      %v974 = vunpack.c.l.b16 %v314
      %v975 = vunpack.c.h.b16 %v314
      %v976 = vunpack.c.l.b16 %v315
      %v977 = vunpack.c.h.b16 %v315
      %v978 = vunpack.c.l.b16 %v316
      %v979 = vunpack.c.l.b16 %v317
      %v980 = vunpack.c.h.b16 %v317
      %v981 = vunpack.c.l.b16 %v318
      %v982 = vunpack.c.h.b16 %v318
      %v983 = vunpack.c.l.b16 %v319
      %v984 = vunpack.c.l.b16 %v320
      %v985 = vunpack.c.h.b16 %v320
      %v986 = vunpack.c.l.b16 %v321
      %v987 = vunpack.c.h.b16 %v321
      %v988 = vunpack.c.l.b16 %v322
      %v989 = vpack.c.b16 %v834, %v829
      %v990 = vpack.c.b16 %v835, %v830
      %v991 = vpack.c.b16 %v836, %v831
      %v992 = vpack.c.b16 %v837, %v832
      %v993 = vpack.c.b16 %v838, %v833
      %v994 = vpack.c.b16 %v844, %v839
      %v995 = vpack.c.b16 %v845, %v840
      %v996 = vpack.c.b16 %v846, %v841
      %v997 = vpack.c.b16 %v847, %v842
      %v998 = vpack.c.b16 %v848, %v843
      %v999 = vpack.c.b16 %v854, %v849
      %v1000 = vpack.c.b16 %v855, %v850
      %v1001 = vpack.c.b16 %v856, %v851
      %v1002 = vpack.c.b16 %v857, %v852
      %v1003 = vpack.c.b16 %v858, %v853
      %v1004 = vpack.c.b16 %v864, %v859
      %v1005 = vpack.c.b16 %v865, %v860
      %v1006 = vpack.c.b16 %v866, %v861
      %v1007 = vpack.c.b16 %v867, %v862
      %v1008 = vpack.c.b16 %v868, %v863
      %v1009 = vpack.c.b16 %v874, %v869
      %v1010 = vpack.c.b16 %v875, %v870
      %v1011 = vpack.c.b16 %v876, %v871
      %v1012 = vpack.c.b16 %v877, %v872
      %v1013 = vpack.c.b16 %v878, %v873
      %v1014 = vpack.c.b16 %v884, %v879
      %v1015 = vpack.c.b16 %v885, %v880
      %v1016 = vpack.c.b16 %v886, %v881
      %v1017 = vpack.c.b16 %v887, %v882
      %v1018 = vpack.c.b16 %v888, %v883
      %v1019 = vpack.c.b16 %v894, %v889
      %v1020 = vpack.c.b16 %v895, %v890
      %v1021 = vpack.c.b16 %v896, %v891
      %v1022 = vpack.c.b16 %v897, %v892
      %v1023 = vpack.c.b16 %v898, %v893
      %v1024 = vpack.c.b16 %v904, %v899
      %v1025 = vpack.c.b16 %v905, %v900
      %v1026 = vpack.c.b16 %v906, %v901
      %v1027 = vpack.c.b16 %v907, %v902
      %v1028 = vpack.c.b16 %v908, %v903
      %v1029 = vpack.c.b16 %v914, %v909
      %v1030 = vpack.c.b16 %v915, %v910
      %v1031 = vpack.c.b16 %v916, %v911
      %v1032 = vpack.c.b16 %v917, %v912
      %v1033 = vpack.c.b16 %v918, %v913
      %v1034 = vpack.c.b16 %v924, %v919
      %v1035 = vpack.c.b16 %v925, %v920
      %v1036 = vpack.c.b16 %v926, %v921
      %v1037 = vpack.c.b16 %v927, %v922
      %v1038 = vpack.c.b16 %v928, %v923
      %v1039 = vpack.c.b16 %v934, %v929
      %v1040 = vpack.c.b16 %v935, %v930
      %v1041 = vpack.c.b16 %v936, %v931
      %v1042 = vpack.c.b16 %v937, %v932
      %v1043 = vpack.c.b16 %v938, %v933
      %v1044 = vpack.c.b16 %v944, %v939
      %v1045 = vpack.c.b16 %v945, %v940
      %v1046 = vpack.c.b16 %v946, %v941
      %v1047 = vpack.c.b16 %v947, %v942
      %v1048 = vpack.c.b16 %v948, %v943
      %v1049 = vpack.c.b16 %v954, %v949
      %v1050 = vpack.c.b16 %v955, %v950
      %v1051 = vpack.c.b16 %v956, %v951
      %v1052 = vpack.c.b16 %v957, %v952
      %v1053 = vpack.c.b16 %v958, %v953
      %v1054 = vpack.c.b16 %v964, %v959
      %v1055 = vpack.c.b16 %v965, %v960
      %v1056 = vpack.c.b16 %v966, %v961
      %v1057 = vpack.c.b16 %v967, %v962
      %v1058 = vpack.c.b16 %v968, %v963
      %v1059 = vpack.c.b16 %v974, %v969
      %v1060 = vpack.c.b16 %v975, %v970
      %v1061 = vpack.c.b16 %v976, %v971
      %v1062 = vpack.c.b16 %v977, %v972
      %v1063 = vpack.c.b16 %v978, %v973
      %v1064 = vpack.c.b16 %v984, %v979
      %v1065 = vpack.c.b16 %v985, %v980
      %v1066 = vpack.c.b16 %v986, %v981
      %v1067 = vpack.c.b16 %v987, %v982
      %v1068 = vpack.c.b16 %v988, %v983
      %v1205 = vunpack.c.l.b16 %v323
      %v1206 = vunpack.c.l.b16 %v324
      %v1207 = vunpack.c.l.b16 %v325
      %v1208 = vunpack.c.l.b16 %v326
      %v1209 = vunpack.c.l.b16 %v327
      %v1210 = vunpack.c.l.b16 %v328
      %v1211 = vunpack.c.l.b16 %v329
      %v1212 = vunpack.c.l.b16 %v330
      %v1213 = vunpack.c.l.b16 %v331
      %v1214 = vunpack.c.l.b16 %v332
      %v1215 = vunpack.c.l.b16 %v333
      %v1216 = vunpack.c.l.b16 %v334
      %v1217 = vunpack.c.l.b16 %v335
      %v1218 = vunpack.c.l.b16 %v336
      %v1219 = vunpack.c.l.b16 %v337
      %v1220 = vunpack.c.l.b16 %v338
      %v1221 = vunpack.c.l.b16 %v339
      %v1222 = vunpack.c.l.b16 %v340
      %v1223 = vunpack.c.l.b16 %v341
      %v1224 = vunpack.c.l.b16 %v342
      %v1225 = vunpack.c.l.b16 %v343
      %v1226 = vunpack.c.l.b16 %v344
      %v1227 = vunpack.c.l.b16 %v345
      %v1228 = vunpack.c.l.b16 %v346
      %v1229 = vunpack.c.l.b16 %v347
      %v1230 = vunpack.c.l.b16 %v348
      %v1231 = vunpack.c.l.b16 %v349
      %v1232 = vunpack.c.l.b16 %v350
      %v1233 = vunpack.c.l.b16 %v351
      %v1234 = vunpack.c.l.b16 %v352
      %v1235 = vunpack.c.l.b16 %v353
      %v1236 = vunpack.c.l.b16 %v354
      %v1237 = vunpack.c.l.b16 %v355
      %v1238 = vunpack.c.l.b16 %v356
      %v1239 = vunpack.c.l.b16 %v357
      %v1240 = vunpack.c.l.b16 %v358
      %v1241 = vunpack.c.l.b16 %v359
      %v1242 = vunpack.c.l.b16 %v360
      %v1243 = vunpack.c.l.b16 %v361
      %v1244 = vunpack.c.l.b16 %v362
      %v1245 = vunpack.c.l.b16 %v363
      %v1246 = vunpack.c.l.b16 %v364
      %v1247 = vunpack.c.l.b16 %v365
      %v1248 = vunpack.c.l.b16 %v366
      %v1249 = vunpack.c.l.b16 %v367
      %v1250 = vunpack.c.l.b16 %v368
      %v1251 = vunpack.c.l.b16 %v369
      %v1252 = vunpack.c.l.b16 %v370
      %v1253 = vunpack.c.l.b16 %v371
      %v1254 = vunpack.c.l.b16 %v372
      %v1255 = vunpack.c.l.b16 %v373
      %v1256 = vunpack.c.l.b16 %v374
      %v1257 = vunpack.c.l.b16 %v375
      %v1258 = vunpack.c.l.b16 %v376
      %v1259 = vunpack.c.l.b16 %v377
      %v1260 = vunpack.c.l.b16 %v378
      %v1261 = vunpack.c.l.b16 %v379
      %v1262 = vunpack.c.l.b16 %v380
      %v1263 = vunpack.c.l.b16 %v381
      %v1264 = vunpack.c.l.b16 %v382
      %v1265 = vunpack.c.l.b16 %v383
      %v1266 = vunpack.c.l.b16 %v384
      %v1267 = vunpack.c.l.b16 %v385
      %v1268 = vunpack.c.l.b16 %v386
      %v1269 = vunpack.c.l.b16 %v387
      %v1270 = vunpack.c.l.b16 %v388
      %v1271 = vunpack.c.l.b16 %v389
      %v1272 = vunpack.c.l.b16 %v390
      %v1273 = vunpack.c.l.b16 %v391
      %v1274 = vunpack.c.l.b16 %v392
      %v1275 = vunpack.c.l.b16 %v393
      %v1276 = vunpack.c.l.b16 %v394
      %v1277 = vpack.c.b16 %v1206, %v1205
      %v1278 = vpack.c.b16 %v1208, %v1207
      %v1279 = vpack.c.b16 %v1210, %v1209
      %v1280 = vpack.c.b16 %v1212, %v1211
      %v1281 = vpack.c.b16 %v1214, %v1213
      %v1282 = vpack.c.b16 %v1216, %v1215
      %v1283 = vpack.c.b16 %v1218, %v1217
      %v1284 = vpack.c.b16 %v1220, %v1219
      %v1285 = vpack.c.b16 %v1222, %v1221
      %v1286 = vpack.c.b16 %v1224, %v1223
      %v1287 = vpack.c.b16 %v1226, %v1225
      %v1288 = vpack.c.b16 %v1228, %v1227
      %v1289 = vpack.c.b16 %v1230, %v1229
      %v1290 = vpack.c.b16 %v1232, %v1231
      %v1291 = vpack.c.b16 %v1234, %v1233
      %v1292 = vpack.c.b16 %v1236, %v1235
      %v1293 = vpack.c.b16 %v1238, %v1237
      %v1294 = vpack.c.b16 %v1240, %v1239
      %v1295 = vpack.c.b16 %v1242, %v1241
      %v1296 = vpack.c.b16 %v1244, %v1243
      %v1297 = vpack.c.b16 %v1246, %v1245
      %v1298 = vpack.c.b16 %v1248, %v1247
      %v1299 = vpack.c.b16 %v1250, %v1249
      %v1300 = vpack.c.b16 %v1252, %v1251
      %v1301 = vpack.c.b16 %v1254, %v1253
      %v1302 = vpack.c.b16 %v1256, %v1255
      %v1303 = vpack.c.b16 %v1258, %v1257
      %v1304 = vpack.c.b16 %v1260, %v1259
      %v1305 = vpack.c.b16 %v1262, %v1261
      %v1306 = vpack.c.b16 %v1264, %v1263
      %v1307 = vpack.c.b16 %v1266, %v1265
      %v1308 = vpack.c.b16 %v1268, %v1267
      %v1309 = vpack.c.b16 %v1270, %v1269
      %v1310 = vpack.c.b16 %v1272, %v1271
      %v1311 = vpack.c.b16 %v1274, %v1273
      %v1312 = vpack.c.b16 %v1276, %v1275
      %vm1349 = vcmask 523264
      %v1351 = vsel %vm1349, %v993, 0
      %v1354 = vsel %vm1349, %v998, 0
      %v1357 = vsel %vm1349, %v1003, 0
      %v1360 = vsel %vm1349, %v1008, 0
      %v1363 = vsel %vm1349, %v1013, 0
      %v1366 = vsel %vm1349, %v1018, 0
      %v1369 = vsel %vm1349, %v1023, 0
      %v1372 = vsel %vm1349, %v1028, 0
      %v1375 = vsel %vm1349, %v1033, 0
      %v1378 = vsel %vm1349, %v1038, 0
      %v1381 = vsel %vm1349, %v1043, 0
      %v1384 = vsel %vm1349, %v1048, 0
      %v1387 = vsel %vm1349, %v1053, 0
      %v1390 = vsel %vm1349, %v1058, 0
      %v1393 = vsel %vm1349, %v1063, 0
      %v1396 = vsel %vm1349, %v1068, 0
      %1398 = vmatprep.subr.bf16.mxu0 0
      %1399 = vmatpush1.bf16.msra.mxu0 %v1277
      %1400 = vmatprep.subr.bf16.mxu0 0
      %1401 = vmatpush1.bf16.msra.mxu0 %v1278
      %1402 = vmatprep.subr.bf16.mxu0 0
      %1403 = vmatpush1.bf16.msra.mxu0 %v1279
      %1404 = vmatprep.subr.bf16.mxu0 0
      %1405 = vmatpush1.bf16.msra.mxu0 %v1280
      %1406 = vmatprep.subr.bf16.mxu0 0
      %1407 = vmatpush1.bf16.msra.mxu0 %v1281
      %1408 = vmatprep.subr.bf16.mxu0 0
      %1409 = vmatpush1.bf16.msra.mxu0 %v1282
      %1410 = vmatprep.subr.bf16.mxu0 0
      %1411 = vmatpush1.bf16.msra.mxu0 %v1283
      %1412 = vmatprep.subr.bf16.mxu0 0
      %1413 = vmatpush1.bf16.msra.mxu0 %v1284
      %1414 = vmatprep.subr.bf16.mxu0 0
      %1415 = vmatpush1.bf16.msra.mxu0 %v1285
      %1416 = vmatprep.subr.bf16.mxu0 0
      %1417 = vmatpush1.bf16.msra.mxu0 %v1286
      %1418 = vmatprep.subr.bf16.mxu0 0
      %1419 = vmatpush1.bf16.msra.mxu0 %v1287
      %1420 = vmatprep.subr.bf16.mxu0 0
      %1421 = vmatpush1.bf16.msra.mxu0 %v1288
      %1422 = vmatprep.subr.bf16.mxu0 0
      %1423 = vmatpush1.bf16.msra.mxu0 %v1289
      %1424 = vmatprep.subr.bf16.mxu0 0
      %1425 = vmatpush1.bf16.msra.mxu0 %v1290
      %1426 = vmatprep.subr.bf16.mxu0 0
      %1427 = vmatpush1.bf16.msra.mxu0 %v1291
      %1428 = vmatprep.subr.bf16.mxu0 0
      %1429 = vmatpush1.bf16.msra.mxu0 %v1292
      %1430 = vmatprep.mubr.bf16.mxu0 %v990
      %1431 = vmatmul.mubr.bf16.gmra.mrb[0].mxu0 %v989
      %v1432 = vpop.f32.mrb[0].mxu0
      %v1433 = vadd.f32 %v607, %v1432
      %v1434 = vpop.f32.mrb[0].mxu0
      %v1435 = vpop.f32.mrb[0].mxu0
      %v1436 = vadd.f32 %v610, %v1435
      %v1437 = vpop.f32.mrb[0].mxu0
      %1438 = vmatprep.mubr.bf16.mxu0 %v995
      %1439 = vmatmul.mubr.bf16.gmra.mrb[0].mxu0 %v994
      %v1440 = vpop.f32.mrb[0].mxu0
      %v1441 = vadd.f32 %v615, %v1440
      %v1442 = vpop.f32.mrb[0].mxu0
      %v1443 = vpop.f32.mrb[0].mxu0
      %v1444 = vadd.f32 %v618, %v1443
      %v1445 = vpop.f32.mrb[0].mxu0
      %1446 = vmatprep.mubr.bf16.mxu0 %v1000
      %1447 = vmatmul.mubr.bf16.gmra.mrb[0].mxu0 %v999
      %v1448 = vpop.f32.mrb[0].mxu0
      %v1449 = vadd.f32 %v623, %v1448
      %v1450 = vpop.f32.mrb[0].mxu0
      %v1451 = vpop.f32.mrb[0].mxu0
      %v1452 = vadd.f32 %v626, %v1451
      %v1453 = vpop.f32.mrb[0].mxu0
      %1454 = vmatprep.mubr.bf16.mxu0 %v1005
      %1455 = vmatmul.mubr.bf16.gmra.mrb[0].mxu0 %v1004
      %v1456 = vpop.f32.mrb[0].mxu0
      %v1457 = vadd.f32 %v631, %v1456
      %v1458 = vpop.f32.mrb[0].mxu0
      %v1459 = vpop.f32.mrb[0].mxu0
      %v1460 = vadd.f32 %v634, %v1459
      %v1461 = vpop.f32.mrb[0].mxu0
      %1462 = vmatprep.mubr.bf16.mxu0 %v1010
      %1463 = vmatmul.mubr.bf16.gmra.mrb[0].mxu0 %v1009
      %v1464 = vpop.f32.mrb[0].mxu0
      %v1465 = vadd.f32 %v639, %v1464
      %v1466 = vpop.f32.mrb[0].mxu0
      %v1467 = vpop.f32.mrb[0].mxu0
      %v1468 = vadd.f32 %v642, %v1467
      %v1469 = vpop.f32.mrb[0].mxu0
      %1470 = vmatprep.mubr.bf16.mxu0 %v1015
      %1471 = vmatmul.mubr.bf16.gmra.mrb[0].mxu0 %v1014
      %v1472 = vpop.f32.mrb[0].mxu0
      %v1473 = vadd.f32 %v647, %v1472
      %v1474 = vpop.f32.mrb[0].mxu0
      %v1475 = vpop.f32.mrb[0].mxu0
      %v1476 = vadd.f32 %v650, %v1475
      %v1477 = vpop.f32.mrb[0].mxu0
      %1478 = vmatprep.mubr.bf16.mxu0 %v1020
      %1479 = vmatmul.mubr.bf16.gmra.mrb[0].mxu0 %v1019
      %v1480 = vpop.f32.mrb[0].mxu0
      %v1481 = vadd.f32 %v655, %v1480
      %v1482 = vpop.f32.mrb[0].mxu0
      %v1483 = vpop.f32.mrb[0].mxu0
      %v1484 = vadd.f32 %v658, %v1483
      %v1485 = vpop.f32.mrb[0].mxu0
      %1486 = vmatprep.mubr.bf16.mxu0 %v1025
      %1487 = vmatmul.mubr.bf16.gmra.mrb[0].mxu0 %v1024
      %v1488 = vpop.f32.mrb[0].mxu0
      %v1489 = vadd.f32 %v663, %v1488
      %v1490 = vpop.f32.mrb[0].mxu0
      %v1491 = vpop.f32.mrb[0].mxu0
      %v1492 = vadd.f32 %v666, %v1491
      %v1493 = vpop.f32.mrb[0].mxu0
      %1494 = vmatprep.mubr.bf16.mxu0 %v1030
      %1495 = vmatmul.mubr.bf16.gmra.mrb[0].mxu0 %v1029
      %v1496 = vpop.f32.mrb[0].mxu0
      %v1497 = vadd.f32 %v671, %v1496
      %v1498 = vpop.f32.mrb[0].mxu0
      %v1499 = vpop.f32.mrb[0].mxu0
      %v1500 = vadd.f32 %v674, %v1499
      %v1501 = vpop.f32.mrb[0].mxu0
      %1502 = vmatprep.mubr.bf16.mxu0 %v1035
      %1503 = vmatmul.mubr.bf16.gmra.mrb[0].mxu0 %v1034
      %v1504 = vpop.f32.mrb[0].mxu0
      %v1505 = vadd.f32 %v679, %v1504
      %v1506 = vpop.f32.mrb[0].mxu0
      %v1507 = vpop.f32.mrb[0].mxu0
      %v1508 = vadd.f32 %v682, %v1507
      %v1509 = vpop.f32.mrb[0].mxu0
      %1510 = vmatprep.mubr.bf16.mxu0 %v1040
      %1511 = vmatmul.mubr.bf16.gmra.mrb[0].mxu0 %v1039
      %v1512 = vpop.f32.mrb[0].mxu0
      %v1513 = vadd.f32 %v687, %v1512
      %v1514 = vpop.f32.mrb[0].mxu0
      %v1515 = vpop.f32.mrb[0].mxu0
      %v1516 = vadd.f32 %v690, %v1515
      %v1517 = vpop.f32.mrb[0].mxu0
      %1518 = vmatprep.mubr.bf16.mxu0 %v1045
      %1519 = vmatmul.mubr.bf16.gmra.mrb[0].mxu0 %v1044
      %v1520 = vpop.f32.mrb[0].mxu0
      %v1521 = vadd.f32 %v695, %v1520
      %v1522 = vpop.f32.mrb[0].mxu0
      %v1523 = vpop.f32.mrb[0].mxu0
      %v1524 = vadd.f32 %v698, %v1523
      %v1525 = vpop.f32.mrb[0].mxu0
      %1526 = vmatprep.mubr.bf16.mxu0 %v1050
      %1527 = vmatmul.mubr.bf16.gmra.mrb[0].mxu0 %v1049
      %v1528 = vpop.f32.mrb[0].mxu0
      %v1529 = vadd.f32 %v703, %v1528
      %v1530 = vpop.f32.mrb[0].mxu0
      %v1531 = vpop.f32.mrb[0].mxu0
      %v1532 = vadd.f32 %v706, %v1531
      %v1533 = vpop.f32.mrb[0].mxu0
      %1534 = vmatprep.mubr.bf16.mxu0 %v1055
      %1535 = vmatmul.mubr.bf16.gmra.mrb[0].mxu0 %v1054
      %v1536 = vpop.f32.mrb[0].mxu0
      %v1537 = vadd.f32 %v711, %v1536
      %v1538 = vpop.f32.mrb[0].mxu0
      %v1539 = vpop.f32.mrb[0].mxu0
      %v1540 = vadd.f32 %v714, %v1539
      %v1541 = vpop.f32.mrb[0].mxu0
      %1542 = vmatprep.mubr.bf16.mxu0 %v1060
      %1543 = vmatmul.mubr.bf16.gmra.mrb[0].mxu0 %v1059
      %v1544 = vpop.f32.mrb[0].mxu0
      %v1545 = vadd.f32 %v719, %v1544
      %v1546 = vpop.f32.mrb[0].mxu0
      %v1547 = vpop.f32.mrb[0].mxu0
      %v1548 = vadd.f32 %v722, %v1547
      %v1549 = vpop.f32.mrb[0].mxu0
      %1550 = vmatprep.mubr.bf16.mxu0 %v1065
      %1551 = vmatmul.mubr.bf16.gmra.mrb[0].mxu0 %v1064
      %v1552 = vpop.f32.mrb[0].mxu0
      %v1553 = vadd.f32 %v727, %v1552
      %v1554 = vpop.f32.mrb[0].mxu0
      %v1555 = vpop.f32.mrb[0].mxu0
      %v1556 = vadd.f32 %v730, %v1555
      %v1557 = vpop.f32.mrb[0].mxu0
      %1558 = vdwg.mxu0
      %1559 = vmatprep.subr.bf16.mxu0 0
      %1560 = vmatpush1.bf16.msra.mxu0 %v1293
      %1561 = vmatprep.subr.bf16.mxu0 0
      %1562 = vmatpush1.bf16.msra.mxu0 %v1294
      %1563 = vmatprep.subr.bf16.mxu0 0
      %1564 = vmatpush1.bf16.msra.mxu0 %v1295
      %1565 = vmatprep.subr.bf16.mxu0 0
      %1566 = vmatpush1.bf16.msra.mxu0 %v1296
      %1567 = vmatprep.subr.bf16.mxu0 0
      %1568 = vmatpush1.bf16.msra.mxu0 %v1297
      %1569 = vmatprep.subr.bf16.mxu0 0
      %1570 = vmatpush1.bf16.msra.mxu0 %v1298
      %1571 = vmatprep.subr.bf16.mxu0 0
      %1572 = vmatpush1.bf16.msra.mxu0 %v1299
      %1573 = vmatprep.subr.bf16.mxu0 0
      %1574 = vmatpush1.bf16.msra.mxu0 %v1300
      %1575 = vmatprep.subr.bf16.mxu0 0
      %1576 = vmatpush1.bf16.msra.mxu0 %v1301
      %1577 = vmatprep.subr.bf16.mxu0 0
      %1578 = vmatpush1.bf16.msra.mxu0 %v1302
      %1579 = vmatprep.subr.bf16.mxu0 0
      %1580 = vmatpush1.bf16.msra.mxu0 %v1303
      %1581 = vmatprep.subr.bf16.mxu0 0
      %1582 = vmatpush1.bf16.msra.mxu0 %v1304
      %1583 = vmatprep.subr.bf16.mxu0 0
      %1584 = vmatpush1.bf16.msra.mxu0 %v1305
      %1585 = vmatprep.subr.bf16.mxu0 0
      %1586 = vmatpush1.bf16.msra.mxu0 %v1306
      %1587 = vmatprep.subr.bf16.mxu0 0
      %1588 = vmatpush1.bf16.msra.mxu0 %v1307
      %1589 = vmatprep.subr.bf16.mxu0 0
      %1590 = vmatpush1.bf16.msra.mxu0 %v1308
      %1591 = vmatprep.mubr.bf16.mxu0 %v992
      %1592 = vmatmul.mubr.bf16.gmra.mrb[0].mxu0 %v991
      %v1593 = vpop.f32.mrb[0].mxu0
      %v1594 = vadd.f32 %v1433, %v1593
      %v1595 = vpop.f32.mrb[0].mxu0
      %v1596 = vpop.f32.mrb[0].mxu0
      %v1597 = vadd.f32 %v1436, %v1596
      %v1598 = vpop.f32.mrb[0].mxu0
      %1599 = vmatprep.mubr.bf16.mxu0 %v997
      %1600 = vmatmul.mubr.bf16.gmra.mrb[0].mxu0 %v996
      %v1601 = vpop.f32.mrb[0].mxu0
      %v1602 = vadd.f32 %v1441, %v1601
      %v1603 = vpop.f32.mrb[0].mxu0
      %v1604 = vpop.f32.mrb[0].mxu0
      %v1605 = vadd.f32 %v1444, %v1604
      %v1606 = vpop.f32.mrb[0].mxu0
      %1607 = vmatprep.mubr.bf16.mxu0 %v1002
      %1608 = vmatmul.mubr.bf16.gmra.mrb[0].mxu0 %v1001
      %v1609 = vpop.f32.mrb[0].mxu0
      %v1610 = vadd.f32 %v1449, %v1609
      %v1611 = vpop.f32.mrb[0].mxu0
      %v1612 = vpop.f32.mrb[0].mxu0
      %v1613 = vadd.f32 %v1452, %v1612
      %v1614 = vpop.f32.mrb[0].mxu0
      %1615 = vmatprep.mubr.bf16.mxu0 %v1007
      %1616 = vmatmul.mubr.bf16.gmra.mrb[0].mxu0 %v1006
      %v1617 = vpop.f32.mrb[0].mxu0
      %v1618 = vadd.f32 %v1457, %v1617
      %v1619 = vpop.f32.mrb[0].mxu0
      %v1620 = vpop.f32.mrb[0].mxu0
      %v1621 = vadd.f32 %v1460, %v1620
      %v1622 = vpop.f32.mrb[0].mxu0
      %1623 = vmatprep.mubr.bf16.mxu0 %v1012
      %1624 = vmatmul.mubr.bf16.gmra.mrb[0].mxu0 %v1011
      %v1625 = vpop.f32.mrb[0].mxu0
      %v1626 = vadd.f32 %v1465, %v1625
      %v1627 = vpop.f32.mrb[0].mxu0
      %v1628 = vpop.f32.mrb[0].mxu0
      %v1629 = vadd.f32 %v1468, %v1628
      %v1630 = vpop.f32.mrb[0].mxu0
      %1631 = vmatprep.mubr.bf16.mxu0 %v1017
      %1632 = vmatmul.mubr.bf16.gmra.mrb[0].mxu0 %v1016
      %v1633 = vpop.f32.mrb[0].mxu0
      %v1634 = vadd.f32 %v1473, %v1633
      %v1635 = vpop.f32.mrb[0].mxu0
      %v1636 = vpop.f32.mrb[0].mxu0
      %v1637 = vadd.f32 %v1476, %v1636
      %v1638 = vpop.f32.mrb[0].mxu0
      %1639 = vmatprep.mubr.bf16.mxu0 %v1022
      %1640 = vmatmul.mubr.bf16.gmra.mrb[0].mxu0 %v1021
      %v1641 = vpop.f32.mrb[0].mxu0
      %v1642 = vadd.f32 %v1481, %v1641
      %v1643 = vpop.f32.mrb[0].mxu0
      %v1644 = vpop.f32.mrb[0].mxu0
      %v1645 = vadd.f32 %v1484, %v1644
      %v1646 = vpop.f32.mrb[0].mxu0
      %1647 = vmatprep.mubr.bf16.mxu0 %v1027
      %1648 = vmatmul.mubr.bf16.gmra.mrb[0].mxu0 %v1026
      %v1649 = vpop.f32.mrb[0].mxu0
      %v1650 = vadd.f32 %v1489, %v1649
      %v1651 = vpop.f32.mrb[0].mxu0
      %v1652 = vpop.f32.mrb[0].mxu0
      %v1653 = vadd.f32 %v1492, %v1652
      %v1654 = vpop.f32.mrb[0].mxu0
      %1655 = vmatprep.mubr.bf16.mxu0 %v1032
      %1656 = vmatmul.mubr.bf16.gmra.mrb[0].mxu0 %v1031
      %v1657 = vpop.f32.mrb[0].mxu0
      %v1658 = vadd.f32 %v1497, %v1657
      %v1659 = vpop.f32.mrb[0].mxu0
      %v1660 = vpop.f32.mrb[0].mxu0
      %v1661 = vadd.f32 %v1500, %v1660
      %v1662 = vpop.f32.mrb[0].mxu0
      %1663 = vmatprep.mubr.bf16.mxu0 %v1037
      %1664 = vmatmul.mubr.bf16.gmra.mrb[0].mxu0 %v1036
      %v1665 = vpop.f32.mrb[0].mxu0
      %v1666 = vadd.f32 %v1505, %v1665
      %v1667 = vpop.f32.mrb[0].mxu0
      %v1668 = vpop.f32.mrb[0].mxu0
      %v1669 = vadd.f32 %v1508, %v1668
      %v1670 = vpop.f32.mrb[0].mxu0
      %1671 = vmatprep.mubr.bf16.mxu0 %v1042
      %1672 = vmatmul.mubr.bf16.gmra.mrb[0].mxu0 %v1041
      %v1673 = vpop.f32.mrb[0].mxu0
      %v1674 = vadd.f32 %v1513, %v1673
      %v1675 = vpop.f32.mrb[0].mxu0
      %v1676 = vpop.f32.mrb[0].mxu0
      %v1677 = vadd.f32 %v1516, %v1676
      %v1678 = vpop.f32.mrb[0].mxu0
      %1679 = vmatprep.mubr.bf16.mxu0 %v1047
      %1680 = vmatmul.mubr.bf16.gmra.mrb[0].mxu0 %v1046
      %v1681 = vpop.f32.mrb[0].mxu0
      %v1682 = vadd.f32 %v1521, %v1681
      %v1683 = vpop.f32.mrb[0].mxu0
      %v1684 = vpop.f32.mrb[0].mxu0
      %v1685 = vadd.f32 %v1524, %v1684
      %v1686 = vpop.f32.mrb[0].mxu0
      %1687 = vmatprep.mubr.bf16.mxu0 %v1052
      %1688 = vmatmul.mubr.bf16.gmra.mrb[0].mxu0 %v1051
      %v1689 = vpop.f32.mrb[0].mxu0
      %v1690 = vadd.f32 %v1529, %v1689
      %v1691 = vpop.f32.mrb[0].mxu0
      %v1692 = vpop.f32.mrb[0].mxu0
      %v1693 = vadd.f32 %v1532, %v1692
      %v1694 = vpop.f32.mrb[0].mxu0
      %1695 = vmatprep.mubr.bf16.mxu0 %v1057
      %1696 = vmatmul.mubr.bf16.gmra.mrb[0].mxu0 %v1056
      %v1697 = vpop.f32.mrb[0].mxu0
      %v1698 = vadd.f32 %v1537, %v1697
      %v1699 = vpop.f32.mrb[0].mxu0
      %v1700 = vpop.f32.mrb[0].mxu0
      %v1701 = vadd.f32 %v1540, %v1700
      %v1702 = vpop.f32.mrb[0].mxu0
      %1703 = vmatprep.mubr.bf16.mxu0 %v1062
      %1704 = vmatmul.mubr.bf16.gmra.mrb[0].mxu0 %v1061
      %v1705 = vpop.f32.mrb[0].mxu0
      %v1706 = vadd.f32 %v1545, %v1705
      %v1707 = vpop.f32.mrb[0].mxu0
      %v1708 = vpop.f32.mrb[0].mxu0
      %v1709 = vadd.f32 %v1548, %v1708
      %v1710 = vpop.f32.mrb[0].mxu0
      %1711 = vmatprep.mubr.bf16.mxu0 %v1067
      %1712 = vmatmul.mubr.bf16.gmra.mrb[0].mxu0 %v1066
      %v1713 = vpop.f32.mrb[0].mxu0
      %v1714 = vadd.f32 %v1553, %v1713
      %v1715 = vpop.f32.mrb[0].mxu0
      %v1716 = vpop.f32.mrb[0].mxu0
      %v1717 = vadd.f32 %v1556, %v1716
      %v1718 = vpop.f32.mrb[0].mxu0
      %1719 = vdwg.mxu0
      %1720 = vmatprep.subr.bf16.mxu0 0
      %1721 = vmatpush1.bf16.msra.mxu0 %v1309
      %1722 = vmatprep.subr.bf16.mxu0 0
      %1723 = vmatpush1.bf16.msra.mxu0 %v1310
      %1724 = vmatprep.subr.bf16.mxu0 0
      %1725 = vmatpush1.bf16.msra.mxu0 %v1311
      %1726 = vmatprep.subr.bf16.mxu0 0
      %1727 = vmatpush1.bf16.msra.mxu0 %v1312
      %1728 = vmatprep.subr.bf16.mxu0 0
      %1729 = vmatpush1.bf16.msra.mxu0 0
      %1730 = vmatprep.subr.bf16.mxu0 0
      %1731 = vmatpush1.bf16.msra.mxu0 0
      %1732 = vmatprep.subr.bf16.mxu0 0
      %1733 = vmatpush1.bf16.msra.mxu0 0
      %1734 = vmatprep.subr.bf16.mxu0 0
      %1735 = vmatpush1.bf16.msra.mxu0 0
      %1736 = vmatprep.subr.bf16.mxu0 0
      %1737 = vmatpush1.bf16.msra.mxu0 0
      %1738 = vmatprep.subr.bf16.mxu0 0
      %1739 = vmatpush1.bf16.msra.mxu0 0
      %1740 = vmatprep.subr.bf16.mxu0 0
      %1741 = vmatpush1.bf16.msra.mxu0 0
      %1742 = vmatprep.subr.bf16.mxu0 0
      %1743 = vmatpush1.bf16.msra.mxu0 0
      %1744 = vmatprep.subr.bf16.mxu0 0
      %1745 = vmatpush1.bf16.msra.mxu0 0
      %1746 = vmatprep.subr.bf16.mxu0 0
      %1747 = vmatpush1.bf16.msra.mxu0 0
      %1748 = vmatprep.subr.bf16.mxu0 0
      %1749 = vmatpush1.bf16.msra.mxu0 0
      %1750 = vmatprep.subr.bf16.mxu0 0
      %1751 = vmatpush1.bf16.msra.mxu0 0
      %1752 = vmatprep.mubr.bf16.mxu0 0
      %1753 = vmatmul.mubr.bf16.gmra.mrb[0].mxu0 %v1351
      %v1754 = vpop.f32.mrb[0].mxu0
      %v1755 = vadd.f32 %v1594, %v1754
      %v1756 = vpop.f32.mrb[0].mxu0
      %v1757 = vpop.f32.mrb[0].mxu0
      %v1758 = vadd.f32 %v1597, %v1757
      %v1759 = vpop.f32.mrb[0].mxu0
      %1760 = vmatprep.mubr.bf16.mxu0 0
      %1761 = vmatmul.mubr.bf16.gmra.mrb[0].mxu0 %v1354
      %v1762 = vpop.f32.mrb[0].mxu0
      %v1763 = vadd.f32 %v1602, %v1762
      %v1764 = vpop.f32.mrb[0].mxu0
      %v1765 = vpop.f32.mrb[0].mxu0
      %v1766 = vadd.f32 %v1605, %v1765
      %v1767 = vpop.f32.mrb[0].mxu0
      %1768 = vmatprep.mubr.bf16.mxu0 0
      %1769 = vmatmul.mubr.bf16.gmra.mrb[0].mxu0 %v1357
      %v1770 = vpop.f32.mrb[0].mxu0
      %v1771 = vadd.f32 %v1610, %v1770
      %v1772 = vpop.f32.mrb[0].mxu0
      %v1773 = vpop.f32.mrb[0].mxu0
      %v1774 = vadd.f32 %v1613, %v1773
      %v1775 = vpop.f32.mrb[0].mxu0
      %1776 = vmatprep.mubr.bf16.mxu0 0
      %1777 = vmatmul.mubr.bf16.gmra.mrb[0].mxu0 %v1360
      %v1778 = vpop.f32.mrb[0].mxu0
      %v1779 = vadd.f32 %v1618, %v1778
      %v1780 = vpop.f32.mrb[0].mxu0
      %v1781 = vpop.f32.mrb[0].mxu0
      %v1782 = vadd.f32 %v1621, %v1781
      %v1783 = vpop.f32.mrb[0].mxu0
      %1784 = vmatprep.mubr.bf16.mxu0 0
      %1785 = vmatmul.mubr.bf16.gmra.mrb[0].mxu0 %v1363
      %v1786 = vpop.f32.mrb[0].mxu0
      %v1787 = vadd.f32 %v1626, %v1786
      %v1788 = vpop.f32.mrb[0].mxu0
      %v1789 = vpop.f32.mrb[0].mxu0
      %v1790 = vadd.f32 %v1629, %v1789
      %v1791 = vpop.f32.mrb[0].mxu0
      %1792 = vmatprep.mubr.bf16.mxu0 0
      %1793 = vmatmul.mubr.bf16.gmra.mrb[0].mxu0 %v1366
      %v1794 = vpop.f32.mrb[0].mxu0
      %v1795 = vadd.f32 %v1634, %v1794
      %v1796 = vpop.f32.mrb[0].mxu0
      %v1797 = vpop.f32.mrb[0].mxu0
      %v1798 = vadd.f32 %v1637, %v1797
      %v1799 = vpop.f32.mrb[0].mxu0
      %1800 = vmatprep.mubr.bf16.mxu0 0
      %1801 = vmatmul.mubr.bf16.gmra.mrb[0].mxu0 %v1369
      %v1802 = vpop.f32.mrb[0].mxu0
      %v1803 = vadd.f32 %v1642, %v1802
      %v1804 = vpop.f32.mrb[0].mxu0
      %v1805 = vpop.f32.mrb[0].mxu0
      %v1806 = vadd.f32 %v1645, %v1805
      %v1807 = vpop.f32.mrb[0].mxu0
      %1808 = vmatprep.mubr.bf16.mxu0 0
      %1809 = vmatmul.mubr.bf16.gmra.mrb[0].mxu0 %v1372
      %v1810 = vpop.f32.mrb[0].mxu0
      %v1811 = vadd.f32 %v1650, %v1810
      %v1812 = vpop.f32.mrb[0].mxu0
      %v1813 = vpop.f32.mrb[0].mxu0
      %v1814 = vadd.f32 %v1653, %v1813
      %v1815 = vpop.f32.mrb[0].mxu0
      %1816 = vmatprep.mubr.bf16.mxu0 0
      %1817 = vmatmul.mubr.bf16.gmra.mrb[0].mxu0 %v1375
      %v1818 = vpop.f32.mrb[0].mxu0
      %v1819 = vadd.f32 %v1658, %v1818
      %v1820 = vpop.f32.mrb[0].mxu0
      %v1821 = vpop.f32.mrb[0].mxu0
      %v1822 = vadd.f32 %v1661, %v1821
      %v1823 = vpop.f32.mrb[0].mxu0
      %1824 = vmatprep.mubr.bf16.mxu0 0
      %1825 = vmatmul.mubr.bf16.gmra.mrb[0].mxu0 %v1378
      %v1826 = vpop.f32.mrb[0].mxu0
      %v1827 = vadd.f32 %v1666, %v1826
      %v1828 = vpop.f32.mrb[0].mxu0
      %v1829 = vpop.f32.mrb[0].mxu0
      %v1830 = vadd.f32 %v1669, %v1829
      %v1831 = vpop.f32.mrb[0].mxu0
      %1832 = vmatprep.mubr.bf16.mxu0 0
      %1833 = vmatmul.mubr.bf16.gmra.mrb[0].mxu0 %v1381
      %v1834 = vpop.f32.mrb[0].mxu0
      %v1835 = vadd.f32 %v1674, %v1834
      %v1836 = vpop.f32.mrb[0].mxu0
      %v1837 = vpop.f32.mrb[0].mxu0
      %v1838 = vadd.f32 %v1677, %v1837
      %v1839 = vpop.f32.mrb[0].mxu0
      %1840 = vmatprep.mubr.bf16.mxu0 0
      %1841 = vmatmul.mubr.bf16.gmra.mrb[0].mxu0 %v1384
      %v1842 = vpop.f32.mrb[0].mxu0
      %v1843 = vadd.f32 %v1682, %v1842
      %v1844 = vpop.f32.mrb[0].mxu0
      %v1845 = vpop.f32.mrb[0].mxu0
      %v1846 = vadd.f32 %v1685, %v1845
      %v1847 = vpop.f32.mrb[0].mxu0
      %1848 = vmatprep.mubr.bf16.mxu0 0
      %1849 = vmatmul.mubr.bf16.gmra.mrb[0].mxu0 %v1387
      %v1850 = vpop.f32.mrb[0].mxu0
      %v1851 = vadd.f32 %v1690, %v1850
      %v1852 = vpop.f32.mrb[0].mxu0
      %v1853 = vpop.f32.mrb[0].mxu0
      %v1854 = vadd.f32 %v1693, %v1853
      %v1855 = vpop.f32.mrb[0].mxu0
      %1856 = vmatprep.mubr.bf16.mxu0 0
      %1857 = vmatmul.mubr.bf16.gmra.mrb[0].mxu0 %v1390
      %v1858 = vpop.f32.mrb[0].mxu0
      %v1859 = vadd.f32 %v1698, %v1858
      %v1860 = vpop.f32.mrb[0].mxu0
      %v1861 = vpop.f32.mrb[0].mxu0
      %v1862 = vadd.f32 %v1701, %v1861
      %v1863 = vpop.f32.mrb[0].mxu0
      %1864 = vmatprep.mubr.bf16.mxu0 0
      %1865 = vmatmul.mubr.bf16.gmra.mrb[0].mxu0 %v1393
      %v1866 = vpop.f32.mrb[0].mxu0
      %v1867 = vadd.f32 %v1706, %v1866
      %v1868 = vpop.f32.mrb[0].mxu0
      %v1869 = vpop.f32.mrb[0].mxu0
      %v1870 = vadd.f32 %v1709, %v1869
      %v1871 = vpop.f32.mrb[0].mxu0
      %1872 = vmatprep.mubr.bf16.mxu0 0
      %1873 = vmatmul.mubr.bf16.gmra.mrb[0].mxu0 %v1396
      %v1874 = vpop.f32.mrb[0].mxu0
      %v1875 = vadd.f32 %v1714, %v1874
      %v1876 = vpop.f32.mrb[0].mxu0
      %v1877 = vpop.f32.mrb[0].mxu0
      %v1878 = vadd.f32 %v1717, %v1877
      %v1879 = vpop.f32.mrb[0].mxu0
      %1880 = vdwg.mxu0
      %1881 = vst.msk [vmem:[%s224] sm:$0xff] %vm1349, %v1755
      %1882 = vst.msk [vmem:[%s224 + $0x8] sm:$0xff] %vm1349, %v1758
      %1883 = vst.msk [vmem:[%s224 + $0x10] sm:$0xff] %vm1349, %v1763
      %1884 = vst.msk [vmem:[%s224 + $0x18] sm:$0xff] %vm1349, %v1766
      %1885 = vst.msk [vmem:[%s224 + $0x20] sm:$0xff] %vm1349, %v1771
      %1886 = vst.msk [vmem:[%s224 + $0x28] sm:$0xff] %vm1349, %v1774
      %1887 = vst.msk [vmem:[%s224 + $0x30] sm:$0xff] %vm1349, %v1779
      %1888 = vst.msk [vmem:[%s224 + $0x38] sm:$0xff] %vm1349, %v1782
      %1889 = vst.msk [vmem:[%s224 + $0x40] sm:$0xff] %vm1349, %v1787
      %1890 = vst.msk [vmem:[%s224 + $0x48] sm:$0xff] %vm1349, %v1790
      %1891 = vst.msk [vmem:[%s224 + $0x50] sm:$0xff] %vm1349, %v1795
      %1892 = vst.msk [vmem:[%s224 + $0x58] sm:$0xff] %vm1349, %v1798
      %1893 = vst.msk [vmem:[%s224 + $0x60] sm:$0xff] %vm1349, %v1803
      %1894 = vst.msk [vmem:[%s224 + $0x68] sm:$0xff] %vm1349, %v1806
      %1895 = vst.msk [vmem:[%s224 + $0x70] sm:$0xff] %vm1349, %v1811
      %1896 = vst.msk [vmem:[%s224 + $0x78] sm:$0xff] %vm1349, %v1814
      %1897 = vst.msk [vmem:[%s224 + $0x80] sm:$0xff] %vm1349, %v1819
      %1898 = vst.msk [vmem:[%s224 + $0x88] sm:$0xff] %vm1349, %v1822
      %1899 = vst.msk [vmem:[%s224 + $0x90] sm:$0xff] %vm1349, %v1827
      %1900 = vst.msk [vmem:[%s224 + $0x98] sm:$0xff] %vm1349, %v1830
      %1901 = vst.msk [vmem:[%s224 + $0xa0] sm:$0xff] %vm1349, %v1835
      %1902 = vst.msk [vmem:[%s224 + $0xa8] sm:$0xff] %vm1349, %v1838
      %1903 = vst.msk [vmem:[%s224 + $0xb0] sm:$0xff] %vm1349, %v1843
      %1904 = vst.msk [vmem:[%s224 + $0xb8] sm:$0xff] %vm1349, %v1846
      %1905 = vst.msk [vmem:[%s224 + $0xc0] sm:$0xff] %vm1349, %v1851
      %1906 = vst.msk [vmem:[%s224 + $0xc8] sm:$0xff] %vm1349, %v1854
      %1907 = vst.msk [vmem:[%s224 + $0xd0] sm:$0xff] %vm1349, %v1859
      %1908 = vst.msk [vmem:[%s224 + $0xd8] sm:$0xff] %vm1349, %v1862
      %1909 = vst.msk [vmem:[%s224 + $0xe0] sm:$0xff] %vm1349, %v1867
      %1910 = vst.msk [vmem:[%s224 + $0xe8] sm:$0xff] %vm1349, %v1870
      %1911 = vst.msk [vmem:[%s224 + $0xf0] sm:$0xff] %vm1349, %v1875
      %1912 = vst.msk [vmem:[%s224 + $0xf8] sm:$0xff] %vm1349, %v1878
      %s1913 = smul.u32 32, %s15
      %p1914 = scmp.lt.s32.totalorder %s1913, 63
      %s1915 = scalar_select %p1914, %s1913, 63
      %s1916 = smul.addr %s1915, 8
      %s1917 = scalar_lea.vmem %s4, %s1916
      // Predicated region
      $region37: #{_lambda_.12} parent=35 // pred_check
        %p1918 = pneg %p127
      $region38: #{_lambda_.12} parent=35 // pred_check_branch
        %1920 = sbr.rel (%p1918) target = $region40
      $region39: #{_lambda_.12} parent=35 // pred_region
        %s1921 = smul.u32 32, %s15
      $region40: #{_lambda_.12} parent=35 // pred_fallthru
        _
    $region36: #{_lambda_.12} parent=5 // pred_fallthru
      _
    %p1922 = scmp.le.s32.totalorder 2, %s10
    // Predicated region
    $region41: #{_lambda_.12} parent=5 // pred_check
      %p1923 = pneg %p1922
    $region42: #{_lambda_.12} parent=5 // pred_check_branch
      %1925 = sbr.rel (%p1923) target = $region44
    $region43: #{_lambda_.12} parent=5 // pred_region
      %s1926 = ssub.s32 %s10, 2
      // Predicated region
      $region45: #{_lambda_.12} parent=43 // pred_check
        %p1927 = pneg %p133
      $region46: #{_lambda_.12} parent=43 // pred_check_branch
        %1929 = sbr.rel (%p1927) target = $region48
      $region47: #{_lambda_.12} parent=43 // pred_region
        %s1930 = smul.u32 32, %s16
        %p1931 = scmp.lt.s32.totalorder %s1930, 63
        %s1932 = scalar_select %p1931, %s1930, 63
        %s1933 = smul.addr %s1932, 8
        %s1934 = scalar_lea.vmem %s4, %s1933
      $region48: #{_lambda_.12} parent=43 // pred_fallthru
        _
    $region44: #{_lambda_.12} parent=5 // pred_fallthru
      _
  $region6: #{_lambda_.12} parent=0 // loop_footer
    %s14 = sadd.s32 1, %s10
  $region7: #{_lambda_.12} parent=0 // loop_footer_branch
    %9 = sbr.rel target = $region3
  $region8: #{_lambda_.12} parent=0 // loop_exit
    _

// kernel: _lambda_.15
$region0: #{_lambda_.15}
  #allocation0 [shape = 'u32[]', space=smem, size = 0x4, offset = 0x4, fixed_abs, tag = 'smem constant byte address 0x4 - core index']
  #allocation1 [shape = 'u32[144,128]{1,0:T(1,128)}', space=vmem, size = 0x12000, scoped, tag = 'internal scratch']
  %s0 = inlined_call_operand.vmem [shape: f32[2,64,128], index: 0, kind: input, shape index: {}]
  %s1 = inlined_call_operand.vmem [shape: f32[1,1,128], index: 1, kind: input, shape index: {}]
  %s2 = inlined_call_operand.vmem [shape: f32[1,1,128], index: 2, kind: input, shape index: {}]
  %s3 = inlined_call_operand.vmem [shape: bf16[128,10], index: 3, kind: input, shape index: {}]
  %s4 = inlined_call_operand.vmem [shape: f32[1,10], index: 4, kind: input, shape index: {}]
  %s5 = inlined_call_operand.hbm [shape: f32[2,10], index: 5, kind: output, shape index: {}]
  %s6 = sld [smem:[#allocation0]]
  $region30: #{_lambda_.15} parent=0
    _
  %s8 = ssub.s32 1, %s6
  %s9 = scalar_select 0, %s8, %s6
  $region1: #{_lambda_.15} parent=0
    #allocation2 [shape = 'u8[1024]{0}', space=vmem, size = 0x400, scoped, tag = 'output window, operand 0, single buffered']
    #allocation3 [shape = 's32[1]{0}', space=sflag, size = 0x4, scoped, tag = 'scoped memory for _lambda_.15']
    %10 = vsyncpa [#allocation3], 0
    // Predicated region
    $region2: #{_lambda_.15} parent=1 // pred_check
      _
    $region3: #{_lambda_.15} parent=1 // pred_check_branch
      %12 = sbr.rel (0) target = $region5
    $region4: #{_lambda_.15} parent=1 // pred_region
      _
    $region5: #{_lambda_.15} parent=1 // pred_fallthru
      _
    // Predicated region
    $region6: #{_lambda_.15} parent=1 // pred_check
      _
    $region7: #{_lambda_.15} parent=1 // pred_check_branch
      %14 = sbr.rel (0) target = $region9
    $region8: #{_lambda_.15} parent=1 // pred_region
      _
    $region9: #{_lambda_.15} parent=1 // pred_fallthru
      _
    // Predicated region
    $region10: #{_lambda_.15} parent=1 // pred_check
      _
    $region11: #{_lambda_.15} parent=1 // pred_check_branch
      %16 = sbr.rel (0) target = $region13
    $region12: #{_lambda_.15} parent=1 // pred_region
      _
    $region13: #{_lambda_.15} parent=1 // pred_fallthru
      _
    // Predicated region
    $region14: #{_lambda_.15} parent=1 // pred_check
      _
    $region15: #{_lambda_.15} parent=1 // pred_check_branch
      %18 = sbr.rel (0) target = $region17
    $region16: #{_lambda_.15} parent=1 // pred_region
      _
    $region17: #{_lambda_.15} parent=1 // pred_fallthru
      _
    // Predicated region
    $region18: #{_lambda_.15} parent=1 // pred_check
      _
    $region19: #{_lambda_.15} parent=1 // pred_check_branch
      %20 = sbr.rel (0) target = $region21
    $region20: #{_lambda_.15} parent=1 // pred_region
      _
    $region21: #{_lambda_.15} parent=1 // pred_fallthru
      _
    %v22 = vld [vmem:[%s0] sm:$0xff]
    %v23 = vld [vmem:[%s0 + $0x8] sm:$0xff]
    %v24 = vld [vmem:[%s0 + $0x10] sm:$0xff]
    %v25 = vld [vmem:[%s0 + $0x18] sm:$0xff]
    %v26 = vld [vmem:[%s0 + $0x20] sm:$0xff]
    %v27 = vld [vmem:[%s0 + $0x28] sm:$0xff]
    %v28 = vld [vmem:[%s0 + $0x30] sm:$0xff]
    %v29 = vld [vmem:[%s0 + $0x38] sm:$0xff]
    %v30 = vld [vmem:[%s0 + $0x40] sm:$0xff]
    %v31 = vld [vmem:[%s0 + $0x48] sm:$0xff]
    %v32 = vld [vmem:[%s0 + $0x50] sm:$0xff]
    %v33 = vld [vmem:[%s0 + $0x58] sm:$0xff]
    %v34 = vld [vmem:[%s0 + $0x60] sm:$0xff]
    %v35 = vld [vmem:[%s0 + $0x68] sm:$0xff]
    %v36 = vld [vmem:[%s0 + $0x70] sm:$0xff]
    %v37 = vld [vmem:[%s0 + $0x78] sm:$0xff]
    %v38 = vld [vmem:[%s1] sm:$0x1]
    %v40 = vlaneseq
    %v41 = vshrl.u32 %v40, 7
    %v42 = vsub.s32 0, %v41
    %v43 = vrot.slane %v38, %v42
    %v45 = vmul.f32 %v22, %v43
    %v46 = vmul.f32 %v23, %v43
    %v47 = vmul.f32 %v24, %v43
    %v48 = vmul.f32 %v25, %v43
    %v49 = vmul.f32 %v26, %v43
    %v50 = vmul.f32 %v27, %v43
    %v51 = vmul.f32 %v28, %v43
    %v52 = vmul.f32 %v29, %v43
    %v53 = vmul.f32 %v30, %v43
    %v54 = vmul.f32 %v31, %v43
    %v55 = vmul.f32 %v32, %v43
    %v56 = vmul.f32 %v33, %v43
    %v57 = vmul.f32 %v34, %v43
    %v58 = vmul.f32 %v35, %v43
    %v59 = vmul.f32 %v36, %v43
    %v60 = vmul.f32 %v37, %v43
    %v61 = vld [vmem:[%s2] sm:$0x1]
    %v63 = vlaneseq
    %v64 = vshrl.u32 %v63, 7
    %v65 = vsub.s32 0, %v64
    %v66 = vrot.slane %v61, %v65
    %v68 = vadd.f32 %v45, %v66
    %v69 = vadd.f32 %v46, %v66
    %v70 = vadd.f32 %v47, %v66
    %v71 = vadd.f32 %v48, %v66
    %v72 = vadd.f32 %v49, %v66
    %v73 = vadd.f32 %v50, %v66
    %v74 = vadd.f32 %v51, %v66
    %v75 = vadd.f32 %v52, %v66
    %v76 = vadd.f32 %v53, %v66
    %v77 = vadd.f32 %v54, %v66
    %v78 = vadd.f32 %v55, %v66
    %v79 = vadd.f32 %v56, %v66
    %v80 = vadd.f32 %v57, %v66
    %v81 = vadd.f32 %v58, %v66
    %v82 = vadd.f32 %v59, %v66
    %v83 = vadd.f32 %v60, %v66
    %v84 = vmax.f32 %v68, 0.0
    %v85 = vmax.f32 %v69, 0.0
    %v86 = vmax.f32 %v70, 0.0
    %v87 = vmax.f32 %v71, 0.0
    %v88 = vmax.f32 %v72, 0.0
    %v89 = vmax.f32 %v73, 0.0
    %v90 = vmax.f32 %v74, 0.0
    %v91 = vmax.f32 %v75, 0.0
    %v92 = vmax.f32 %v76, 0.0
    %v93 = vmax.f32 %v77, 0.0
    %v94 = vmax.f32 %v78, 0.0
    %v95 = vmax.f32 %v79, 0.0
    %v96 = vmax.f32 %v80, 0.0
    %v97 = vmax.f32 %v81, 0.0
    %v98 = vmax.f32 %v82, 0.0
    %v99 = vmax.f32 %v83, 0.0
    %v100 = vadd.f32 %v84, %v85
    %v101 = vadd.f32 %v100, %v86
    %v102 = vadd.f32 %v101, %v87
    %v103 = vadd.f32 %v102, %v88
    %v104 = vadd.f32 %v103, %v89
    %v105 = vadd.f32 %v104, %v90
    %v106 = vadd.f32 %v105, %v91
    %v107 = vrot.slane %v106, 4
    %v108 = vadd.f32 %v106, %v107
    %v109 = vrot.slane %v108, 2
    %v110 = vadd.f32 %v108, %v109
    %v111 = vrot.slane %v110, 1
    %v112 = vadd.f32 %v110, %v111
    %v113 = vadd.f32 %v92, %v93
    %v114 = vadd.f32 %v113, %v94
    %v115 = vadd.f32 %v114, %v95
    %v116 = vadd.f32 %v115, %v96
    %v117 = vadd.f32 %v116, %v97
    %v118 = vadd.f32 %v117, %v98
    %v119 = vadd.f32 %v118, %v99
    %v120 = vrot.slane %v119, 4
    %v121 = vadd.f32 %v119, %v120
    %v122 = vrot.slane %v121, 2
    %v123 = vadd.f32 %v121, %v122
    %v124 = vrot.slane %v123, 1
    %v125 = vadd.f32 %v123, %v124
    %v126 = vrcp.pop 64.0
    %v127 = vmul.f32 %v112, %v126
    %v128 = vmul.f32 %v125, %v126
    %v129 = vpack.c.bf16 %v127, %v127
    %v130 = vpack.c.bf16 %v128, %v128
    %v131 = vld [vmem:[%s3] sm:$0xf]
    %v132 = vld [vmem:[%s3 + $0x4] sm:$0xf]
    %v133 = vld [vmem:[%s3 + $0x8] sm:$0xf]
    %v134 = vld [vmem:[%s3 + $0xc] sm:$0xf]
    %v135 = vld [vmem:[%s3 + $0x10] sm:$0xf]
    %v136 = vld [vmem:[%s3 + $0x14] sm:$0xf]
    %v137 = vld [vmem:[%s3 + $0x18] sm:$0xf]
    %v138 = vld [vmem:[%s3 + $0x1c] sm:$0xf]
    %v139 = vld [vmem:[%s3 + $0x20] sm:$0xf]
    %v140 = vld [vmem:[%s3 + $0x24] sm:$0xf]
    %v141 = vld [vmem:[%s3 + $0x28] sm:$0xf]
    %v142 = vld [vmem:[%s3 + $0x2c] sm:$0xf]
    %v143 = vld [vmem:[%s3 + $0x30] sm:$0xf]
    %v144 = vld [vmem:[%s3 + $0x34] sm:$0xf]
    %v145 = vld [vmem:[%s3 + $0x38] sm:$0xf]
    %v146 = vld [vmem:[%s3 + $0x3c] sm:$0xf]
    %v147 = vld [vmem:[%s4] sm:$0x1]
    %v149 = vlaneseq
    %v150 = vshrl.u32 %v149, 7
    %v151 = vsub.s32 0, %v150
    %v152 = vrot.slane %v147, %v151
    %v156 = vunpack.c.l.b16 %v129
    %v157 = vunpack.c.l.b16 %v130
    %vm158 = vcmask 1041409
    %v159 = vsel %vm158, %v157, %v156
    %v160 = vpack.c.b16 %v159, %v159
    %v178 = vunpack.c.l.b16 %v131
    %v179 = vunpack.c.l.b16 %v132
    %v180 = vunpack.c.l.b16 %v133
    %v181 = vunpack.c.l.b16 %v134
    %v182 = vunpack.c.l.b16 %v135
    %v183 = vunpack.c.l.b16 %v136
    %v184 = vunpack.c.l.b16 %v137
    %v185 = vunpack.c.l.b16 %v138
    %v186 = vunpack.c.l.b16 %v139
    %v187 = vunpack.c.l.b16 %v140
    %v188 = vunpack.c.l.b16 %v141
    %v189 = vunpack.c.l.b16 %v142
    %v190 = vunpack.c.l.b16 %v143
    %v191 = vunpack.c.l.b16 %v144
    %v192 = vunpack.c.l.b16 %v145
    %v193 = vunpack.c.l.b16 %v146
    %v194 = vpack.c.b16 %v179, %v178
    %v195 = vpack.c.b16 %v181, %v180
    %v196 = vpack.c.b16 %v183, %v182
    %v197 = vpack.c.b16 %v185, %v184
    %v198 = vpack.c.b16 %v187, %v186
    %v199 = vpack.c.b16 %v189, %v188
    %v200 = vpack.c.b16 %v191, %v190
    %v201 = vpack.c.b16 %v193, %v192
    %210 = vmatprep.subr.bf16.mxu0 0
    %211 = vmatpush1.bf16.msra.mxu0 %v194
    %212 = vmatprep.subr.bf16.mxu0 0
    %213 = vmatpush1.bf16.msra.mxu0 %v195
    %214 = vmatprep.subr.bf16.mxu0 0
    %215 = vmatpush1.bf16.msra.mxu0 %v196
    %216 = vmatprep.subr.bf16.mxu0 0
    %217 = vmatpush1.bf16.msra.mxu0 %v197
    %218 = vmatprep.subr.bf16.mxu0 0
    %219 = vmatpush1.bf16.msra.mxu0 %v198
    %220 = vmatprep.subr.bf16.mxu0 0
    %221 = vmatpush1.bf16.msra.mxu0 %v199
    %222 = vmatprep.subr.bf16.mxu0 0
    %223 = vmatpush1.bf16.msra.mxu0 %v200
    %224 = vmatprep.subr.bf16.mxu0 0
    %225 = vmatpush1.bf16.msra.mxu0 %v201
    %226 = vmatprep.subr.bf16.mxu0 0
    %227 = vmatpush1.bf16.msra.mxu0 0
    %228 = vmatprep.subr.bf16.mxu0 0
    %229 = vmatpush1.bf16.msra.mxu0 0
    %230 = vmatprep.subr.bf16.mxu0 0
    %231 = vmatpush1.bf16.msra.mxu0 0
    %232 = vmatprep.subr.bf16.mxu0 0
    %233 = vmatpush1.bf16.msra.mxu0 0
    %234 = vmatprep.subr.bf16.mxu0 0
    %235 = vmatpush1.bf16.msra.mxu0 0
    %236 = vmatprep.subr.bf16.mxu0 0
    %237 = vmatpush1.bf16.msra.mxu0 0
    %238 = vmatprep.subr.bf16.mxu0 0
    %239 = vmatpush1.bf16.msra.mxu0 0
    %240 = vmatprep.subr.bf16.mxu0 0
    %241 = vmatpush1.bf16.msra.mxu0 0
    %242 = vmatprep.mubr.bf16.mxu0 0
    %243 = vmatmul.mubr.bf16.gmra.mrb[0].mxu0 %v160
    %v244 = vpop.f32.mrb[0].mxu0
    %v245 = vadd.f32 %v152, %v244
    %v246 = vpop.f32.mrb[0].mxu0
    %v247 = vpop.f32.mrb[0].mxu0
    %v248 = vpop.f32.mrb[0].mxu0
    %249 = vdwg.mxu0
    %vm250 = vcmask 74752
    %251 = vst.msk [vmem:[#allocation2] sm:$0x3] %vm250, %v245
    // Predicated region
    $region22: #{_lambda_.15} parent=1 // pred_check
      _
    $region23: #{_lambda_.15} parent=1 // pred_check_branch
      %253 = sbr.rel (0) target = $region25
    $region24: #{_lambda_.15} parent=1 // pred_region
      %s255 = ssub.s32 32, 32
      %256 = vsyncadd [#allocation3], %s255
      %s258 = sshll.u32 [#allocation2], 4
      %s259 = int_to_ptr.vmem [resolvable:$true] %s258
      %261 = dma.vmem_to_hbm [thread:$0]  %s259, 32, %s5, [#allocation3]
    $region25: #{_lambda_.15} parent=1 // pred_fallthru
      _
    // Predicated region
    $region26: #{_lambda_.15} parent=1 // pred_check
      _
    $region27: #{_lambda_.15} parent=1 // pred_check_branch
      %263 = sbr.rel (0) target = $region29
    $region28: #{_lambda_.15} parent=1 // pred_region
      %264 = dma.done [#allocation3], 32
    $region29: #{_lambda_.15} parent=1 // pred_fallthru
      _
    %265 = vsyncpa [#allocation3], 1

// kernel: _lambda_.13
$region0: #{_lambda_.13}
  #allocation0 [shape = 'u32[]', space=smem, size = 0x4, offset = 0x4, fixed_abs, tag = 'smem constant byte address 0x4 - core index']
  #allocation1 [shape = 'u32[144,128]{1,0:T(1,128)}', space=vmem, size = 0x12000, scoped, tag = 'internal scratch']
  %s0 = inlined_call_operand.vmem [shape: bf16[128,576], index: 0, kind: input, shape index: {}]
  %s1 = inlined_call_operand.vmem [shape: bf16[576,128], index: 1, kind: input, shape index: {}]
  %s2 = inlined_call_operand.vmem [shape: f32[1,128], index: 2, kind: input, shape index: {}]
  %s3 = inlined_call_operand.vmem [shape: f32[1,128], index: 3, kind: input, shape index: {}]
  %s4 = inlined_call_operand.vmem [shape: bf16[128,128], index: 4, kind: output, shape index: {}]
  %s5 = sld [smem:[#allocation0]]
  $region26: #{_lambda_.13} parent=0
    _
  %s7 = ssub.s32 1, %s5
  %s8 = scalar_select 0, %s7, %s5
  // Predicated region
  $region2: #{_lambda_.13} parent=0 // pred_check
    _
  $region3: #{_lambda_.13} parent=0 // pred_check_branch
    %10 = sbr.rel (0) target = $region5
  $region4: #{_lambda_.13} parent=0 // pred_region
    _
  $region5: #{_lambda_.13} parent=0 // pred_fallthru
    _
  // Predicated region
  $region6: #{_lambda_.13} parent=0 // pred_check
    _
  $region7: #{_lambda_.13} parent=0 // pred_check_branch
    %12 = sbr.rel (0) target = $region9
  $region8: #{_lambda_.13} parent=0 // pred_region
    _
  $region9: #{_lambda_.13} parent=0 // pred_fallthru
    _
  // Predicated region
  $region10: #{_lambda_.13} parent=0 // pred_check
    _
  $region11: #{_lambda_.13} parent=0 // pred_check_branch
    %14 = sbr.rel (0) target = $region13
  $region12: #{_lambda_.13} parent=0 // pred_region
    _
  $region13: #{_lambda_.13} parent=0 // pred_fallthru
    _
  // Predicated region
  $region14: #{_lambda_.13} parent=0 // pred_check
    _
  $region15: #{_lambda_.13} parent=0 // pred_check_branch
    %16 = sbr.rel (0) target = $region17
  $region16: #{_lambda_.13} parent=0 // pred_region
    _
  $region17: #{_lambda_.13} parent=0 // pred_fallthru
    _
  %v18 = vld [vmem:[%s0] sm:$0xff]
  %v19 = vld [vmem:[%s0 + $0x8] sm:$0xff]
  %v20 = vld [vmem:[%s0 + $0x10] sm:$0xf]
  %v21 = vld [vmem:[%s0 + $0x14] sm:$0xff]
  %v22 = vld [vmem:[%s0 + $0x1c] sm:$0xff]
  %v23 = vld [vmem:[%s0 + $0x24] sm:$0xf]
  %v24 = vld [vmem:[%s0 + $0x28] sm:$0xff]
  %v25 = vld [vmem:[%s0 + $0x30] sm:$0xff]
  %v26 = vld [vmem:[%s0 + $0x38] sm:$0xf]
  %v27 = vld [vmem:[%s0 + $0x3c] sm:$0xff]
  %v28 = vld [vmem:[%s0 + $0x44] sm:$0xff]
  %v29 = vld [vmem:[%s0 + $0x4c] sm:$0xf]
  %v30 = vld [vmem:[%s0 + $0x50] sm:$0xff]
  %v31 = vld [vmem:[%s0 + $0x58] sm:$0xff]
  %v32 = vld [vmem:[%s0 + $0x60] sm:$0xf]
  %v33 = vld [vmem:[%s0 + $0x64] sm:$0xff]
  %v34 = vld [vmem:[%s0 + $0x6c] sm:$0xff]
  %v35 = vld [vmem:[%s0 + $0x74] sm:$0xf]
  %v36 = vld [vmem:[%s0 + $0x78] sm:$0xff]
  %v37 = vld [vmem:[%s0 + $0x80] sm:$0xff]
  %v38 = vld [vmem:[%s0 + $0x88] sm:$0xf]
  %v39 = vld [vmem:[%s0 + $0x8c] sm:$0xff]
  %v40 = vld [vmem:[%s0 + $0x94] sm:$0xff]
  %v41 = vld [vmem:[%s0 + $0x9c] sm:$0xf]
  %v42 = vld [vmem:[%s0 + $0xa0] sm:$0xff]
  %v43 = vld [vmem:[%s0 + $0xa8] sm:$0xff]
  %v44 = vld [vmem:[%s0 + $0xb0] sm:$0xf]
  %v45 = vld [vmem:[%s0 + $0xb4] sm:$0xff]
  %v46 = vld [vmem:[%s0 + $0xbc] sm:$0xff]
  %v47 = vld [vmem:[%s0 + $0xc4] sm:$0xf]
  %v48 = vld [vmem:[%s0 + $0xc8] sm:$0xff]
  %v49 = vld [vmem:[%s0 + $0xd0] sm:$0xff]
  %v50 = vld [vmem:[%s0 + $0xd8] sm:$0xf]
  %v51 = vld [vmem:[%s0 + $0xdc] sm:$0xff]
  %v52 = vld [vmem:[%s0 + $0xe4] sm:$0xff]
  %v53 = vld [vmem:[%s0 + $0xec] sm:$0xf]
  %v54 = vld [vmem:[%s0 + $0xf0] sm:$0xff]
  %v55 = vld [vmem:[%s0 + $0xf8] sm:$0xff]
  %v56 = vld [vmem:[%s0 + $0x100] sm:$0xf]
  %v57 = vld [vmem:[%s0 + $0x104] sm:$0xff]
  %v58 = vld [vmem:[%s0 + $0x10c] sm:$0xff]
  %v59 = vld [vmem:[%s0 + $0x114] sm:$0xf]
  %v60 = vld [vmem:[%s0 + $0x118] sm:$0xff]
  %v61 = vld [vmem:[%s0 + $0x120] sm:$0xff]
  %v62 = vld [vmem:[%s0 + $0x128] sm:$0xf]
  %v63 = vld [vmem:[%s0 + $0x12c] sm:$0xff]
  %v64 = vld [vmem:[%s0 + $0x134] sm:$0xff]
  %v65 = vld [vmem:[%s0 + $0x13c] sm:$0xf]
  %v66 = vld [vmem:[%s1] sm:$0xf]
  %v67 = vld [vmem:[%s1 + $0x4] sm:$0xf]
  %v68 = vld [vmem:[%s1 + $0x8] sm:$0xf]
  %v69 = vld [vmem:[%s1 + $0xc] sm:$0xf]
  %v70 = vld [vmem:[%s1 + $0x10] sm:$0xf]
  %v71 = vld [vmem:[%s1 + $0x14] sm:$0xf]
  %v72 = vld [vmem:[%s1 + $0x18] sm:$0xf]
  %v73 = vld [vmem:[%s1 + $0x1c] sm:$0xf]
  %v74 = vld [vmem:[%s1 + $0x20] sm:$0xf]
  %v75 = vld [vmem:[%s1 + $0x24] sm:$0xf]
  %v76 = vld [vmem:[%s1 + $0x28] sm:$0xf]
  %v77 = vld [vmem:[%s1 + $0x2c] sm:$0xf]
  %v78 = vld [vmem:[%s1 + $0x30] sm:$0xf]
  %v79 = vld [vmem:[%s1 + $0x34] sm:$0xf]
  %v80 = vld [vmem:[%s1 + $0x38] sm:$0xf]
  %v81 = vld [vmem:[%s1 + $0x3c] sm:$0xf]
  %v82 = vld [vmem:[%s1 + $0x40] sm:$0xf]
  %v83 = vld [vmem:[%s1 + $0x44] sm:$0xf]
  %v84 = vld [vmem:[%s1 + $0x48] sm:$0xf]
  %v85 = vld [vmem:[%s1 + $0x4c] sm:$0xf]
  %v86 = vld [vmem:[%s1 + $0x50] sm:$0xf]
  %v87 = vld [vmem:[%s1 + $0x54] sm:$0xf]
  %v88 = vld [vmem:[%s1 + $0x58] sm:$0xf]
  %v89 = vld [vmem:[%s1 + $0x5c] sm:$0xf]
  %v90 = vld [vmem:[%s1 + $0x60] sm:$0xf]
  %v91 = vld [vmem:[%s1 + $0x64] sm:$0xf]
  %v92 = vld [vmem:[%s1 + $0x68] sm:$0xf]
  %v93 = vld [vmem:[%s1 + $0x6c] sm:$0xf]
  %v94 = vld [vmem:[%s1 + $0x70] sm:$0xf]
  %v95 = vld [vmem:[%s1 + $0x74] sm:$0xf]
  %v96 = vld [vmem:[%s1 + $0x78] sm:$0xf]
  %v97 = vld [vmem:[%s1 + $0x7c] sm:$0xf]
  %v98 = vld [vmem:[%s1 + $0x80] sm:$0xf]
  %v99 = vld [vmem:[%s1 + $0x84] sm:$0xf]
  %v100 = vld [vmem:[%s1 + $0x88] sm:$0xf]
  %v101 = vld [vmem:[%s1 + $0x8c] sm:$0xf]
  %v102 = vld [vmem:[%s1 + $0x90] sm:$0xf]
  %v103 = vld [vmem:[%s1 + $0x94] sm:$0xf]
  %v104 = vld [vmem:[%s1 + $0x98] sm:$0xf]
  %v105 = vld [vmem:[%s1 + $0x9c] sm:$0xf]
  %v106 = vld [vmem:[%s1 + $0xa0] sm:$0xf]
  %v107 = vld [vmem:[%s1 + $0xa4] sm:$0xf]
  %v108 = vld [vmem:[%s1 + $0xa8] sm:$0xf]
  %v109 = vld [vmem:[%s1 + $0xac] sm:$0xf]
  %v110 = vld [vmem:[%s1 + $0xb0] sm:$0xf]
  %v111 = vld [vmem:[%s1 + $0xb4] sm:$0xf]
  %v112 = vld [vmem:[%s1 + $0xb8] sm:$0xf]
  %v113 = vld [vmem:[%s1 + $0xbc] sm:$0xf]
  %v114 = vld [vmem:[%s1 + $0xc0] sm:$0xf]
  %v115 = vld [vmem:[%s1 + $0xc4] sm:$0xf]
  %v116 = vld [vmem:[%s1 + $0xc8] sm:$0xf]
  %v117 = vld [vmem:[%s1 + $0xcc] sm:$0xf]
  %v118 = vld [vmem:[%s1 + $0xd0] sm:$0xf]
  %v119 = vld [vmem:[%s1 + $0xd4] sm:$0xf]
  %v120 = vld [vmem:[%s1 + $0xd8] sm:$0xf]
  %v121 = vld [vmem:[%s1 + $0xdc] sm:$0xf]
  %v122 = vld [vmem:[%s1 + $0xe0] sm:$0xf]
  %v123 = vld [vmem:[%s1 + $0xe4] sm:$0xf]
  %v124 = vld [vmem:[%s1 + $0xe8] sm:$0xf]
  %v125 = vld [vmem:[%s1 + $0xec] sm:$0xf]
  %v126 = vld [vmem:[%s1 + $0xf0] sm:$0xf]
  %v127 = vld [vmem:[%s1 + $0xf4] sm:$0xf]
  %v128 = vld [vmem:[%s1 + $0xf8] sm:$0xf]
  %v129 = vld [vmem:[%s1 + $0xfc] sm:$0xf]
  %v130 = vld [vmem:[%s1 + $0x100] sm:$0xf]
  %v131 = vld [vmem:[%s1 + $0x104] sm:$0xf]
  %v132 = vld [vmem:[%s1 + $0x108] sm:$0xf]
  %v133 = vld [vmem:[%s1 + $0x10c] sm:$0xf]
  %v134 = vld [vmem:[%s1 + $0x110] sm:$0xf]
  %v135 = vld [vmem:[%s1 + $0x114] sm:$0xf]
  %v136 = vld [vmem:[%s1 + $0x118] sm:$0xf]
  %v137 = vld [vmem:[%s1 + $0x11c] sm:$0xf]
  %v186 = vunpack.c.l.b16 %v18
  %v187 = vunpack.c.h.b16 %v18
  %v188 = vunpack.c.l.b16 %v19
  %v189 = vunpack.c.h.b16 %v19
  %v190 = vunpack.c.l.b16 %v20
  %v191 = vunpack.c.l.b16 %v21
  %v192 = vunpack.c.h.b16 %v21
  %v193 = vunpack.c.l.b16 %v22
  %v194 = vunpack.c.h.b16 %v22
  %v195 = vunpack.c.l.b16 %v23
  %v196 = vunpack.c.l.b16 %v24
  %v197 = vunpack.c.h.b16 %v24
  %v198 = vunpack.c.l.b16 %v25
  %v199 = vunpack.c.h.b16 %v25
  %v200 = vunpack.c.l.b16 %v26
  %v201 = vunpack.c.l.b16 %v27
  %v202 = vunpack.c.h.b16 %v27
  %v203 = vunpack.c.l.b16 %v28
  %v204 = vunpack.c.h.b16 %v28
  %v205 = vunpack.c.l.b16 %v29
  %v206 = vunpack.c.l.b16 %v30
  %v207 = vunpack.c.h.b16 %v30
  %v208 = vunpack.c.l.b16 %v31
  %v209 = vunpack.c.h.b16 %v31
  %v210 = vunpack.c.l.b16 %v32
  %v211 = vunpack.c.l.b16 %v33
  %v212 = vunpack.c.h.b16 %v33
  %v213 = vunpack.c.l.b16 %v34
  %v214 = vunpack.c.h.b16 %v34
  %v215 = vunpack.c.l.b16 %v35
  %v216 = vunpack.c.l.b16 %v36
  %v217 = vunpack.c.h.b16 %v36
  %v218 = vunpack.c.l.b16 %v37
  %v219 = vunpack.c.h.b16 %v37
  %v220 = vunpack.c.l.b16 %v38
  %v221 = vunpack.c.l.b16 %v39
  %v222 = vunpack.c.h.b16 %v39
  %v223 = vunpack.c.l.b16 %v40
  %v224 = vunpack.c.h.b16 %v40
  %v225 = vunpack.c.l.b16 %v41
  %v226 = vunpack.c.l.b16 %v42
  %v227 = vunpack.c.h.b16 %v42
  %v228 = vunpack.c.l.b16 %v43
  %v229 = vunpack.c.h.b16 %v43
  %v230 = vunpack.c.l.b16 %v44
  %v231 = vunpack.c.l.b16 %v45
  %v232 = vunpack.c.h.b16 %v45
  %v233 = vunpack.c.l.b16 %v46
  %v234 = vunpack.c.h.b16 %v46
  %v235 = vunpack.c.l.b16 %v47
  %v236 = vunpack.c.l.b16 %v48
  %v237 = vunpack.c.h.b16 %v48
  %v238 = vunpack.c.l.b16 %v49
  %v239 = vunpack.c.h.b16 %v49
  %v240 = vunpack.c.l.b16 %v50
  %v241 = vunpack.c.l.b16 %v51
  %v242 = vunpack.c.h.b16 %v51
  %v243 = vunpack.c.l.b16 %v52
  %v244 = vunpack.c.h.b16 %v52
  %v245 = vunpack.c.l.b16 %v53
  %v246 = vunpack.c.l.b16 %v54
  %v247 = vunpack.c.h.b16 %v54
  %v248 = vunpack.c.l.b16 %v55
  %v249 = vunpack.c.h.b16 %v55
  %v250 = vunpack.c.l.b16 %v56
  %v251 = vunpack.c.l.b16 %v57
  %v252 = vunpack.c.h.b16 %v57
  %v253 = vunpack.c.l.b16 %v58
  %v254 = vunpack.c.h.b16 %v58
  %v255 = vunpack.c.l.b16 %v59
  %v256 = vunpack.c.l.b16 %v60
  %v257 = vunpack.c.h.b16 %v60
  %v258 = vunpack.c.l.b16 %v61
  %v259 = vunpack.c.h.b16 %v61
  %v260 = vunpack.c.l.b16 %v62
  %v261 = vunpack.c.l.b16 %v63
  %v262 = vunpack.c.h.b16 %v63
  %v263 = vunpack.c.l.b16 %v64
  %v264 = vunpack.c.h.b16 %v64
  %v265 = vunpack.c.l.b16 %v65
  %v266 = vpack.c.b16 %v191, %v186
  %v267 = vpack.c.b16 %v192, %v187
  %v268 = vpack.c.b16 %v193, %v188
  %v269 = vpack.c.b16 %v194, %v189
  %v270 = vpack.c.b16 %v195, %v190
  %v271 = vpack.c.b16 %v201, %v196
  %v272 = vpack.c.b16 %v202, %v197
  %v273 = vpack.c.b16 %v203, %v198
  %v274 = vpack.c.b16 %v204, %v199
  %v275 = vpack.c.b16 %v205, %v200
  %v276 = vpack.c.b16 %v211, %v206
  %v277 = vpack.c.b16 %v212, %v207
  %v278 = vpack.c.b16 %v213, %v208
  %v279 = vpack.c.b16 %v214, %v209
  %v280 = vpack.c.b16 %v215, %v210
  %v281 = vpack.c.b16 %v221, %v216
  %v282 = vpack.c.b16 %v222, %v217
  %v283 = vpack.c.b16 %v223, %v218
  %v284 = vpack.c.b16 %v224, %v219
  %v285 = vpack.c.b16 %v225, %v220
  %v286 = vpack.c.b16 %v231, %v226
  %v287 = vpack.c.b16 %v232, %v227
  %v288 = vpack.c.b16 %v233, %v228
  %v289 = vpack.c.b16 %v234, %v229
  %v290 = vpack.c.b16 %v235, %v230
  %v291 = vpack.c.b16 %v241, %v236
  %v292 = vpack.c.b16 %v242, %v237
  %v293 = vpack.c.b16 %v243, %v238
  %v294 = vpack.c.b16 %v244, %v239
  %v295 = vpack.c.b16 %v245, %v240
  %v296 = vpack.c.b16 %v251, %v246
  %v297 = vpack.c.b16 %v252, %v247
  %v298 = vpack.c.b16 %v253, %v248
  %v299 = vpack.c.b16 %v254, %v249
  %v300 = vpack.c.b16 %v255, %v250
  %v301 = vpack.c.b16 %v261, %v256
  %v302 = vpack.c.b16 %v262, %v257
  %v303 = vpack.c.b16 %v263, %v258
  %v304 = vpack.c.b16 %v264, %v259
  %v305 = vpack.c.b16 %v265, %v260
  %v410 = vunpack.c.l.b16 %v66
  %v411 = vunpack.c.l.b16 %v67
  %v412 = vunpack.c.l.b16 %v68
  %v413 = vunpack.c.l.b16 %v69
  %v414 = vunpack.c.l.b16 %v70
  %v415 = vunpack.c.l.b16 %v71
  %v416 = vunpack.c.l.b16 %v72
  %v417 = vunpack.c.l.b16 %v73
  %v418 = vunpack.c.l.b16 %v74
  %v419 = vunpack.c.l.b16 %v75
  %v420 = vunpack.c.l.b16 %v76
  %v421 = vunpack.c.l.b16 %v77
  %v422 = vunpack.c.l.b16 %v78
  %v423 = vunpack.c.l.b16 %v79
  %v424 = vunpack.c.l.b16 %v80
  %v425 = vunpack.c.l.b16 %v81
  %v426 = vunpack.c.l.b16 %v82
  %v427 = vunpack.c.l.b16 %v83
  %v428 = vunpack.c.l.b16 %v84
  %v429 = vunpack.c.l.b16 %v85
  %v430 = vunpack.c.l.b16 %v86
  %v431 = vunpack.c.l.b16 %v87
  %v432 = vunpack.c.l.b16 %v88
  %v433 = vunpack.c.l.b16 %v89
  %v434 = vunpack.c.l.b16 %v90
  %v435 = vunpack.c.l.b16 %v91
  %v436 = vunpack.c.l.b16 %v92
  %v437 = vunpack.c.l.b16 %v93
  %v438 = vunpack.c.l.b16 %v94
  %v439 = vunpack.c.l.b16 %v95
  %v440 = vunpack.c.l.b16 %v96
  %v441 = vunpack.c.l.b16 %v97
  %v442 = vunpack.c.l.b16 %v98
  %v443 = vunpack.c.l.b16 %v99
  %v444 = vunpack.c.l.b16 %v100
  %v445 = vunpack.c.l.b16 %v101
  %v446 = vunpack.c.l.b16 %v102
  %v447 = vunpack.c.l.b16 %v103
  %v448 = vunpack.c.l.b16 %v104
  %v449 = vunpack.c.l.b16 %v105
  %v450 = vunpack.c.l.b16 %v106
  %v451 = vunpack.c.l.b16 %v107
  %v452 = vunpack.c.l.b16 %v108
  %v453 = vunpack.c.l.b16 %v109
  %v454 = vunpack.c.l.b16 %v110
  %v455 = vunpack.c.l.b16 %v111
  %v456 = vunpack.c.l.b16 %v112
  %v457 = vunpack.c.l.b16 %v113
  %v458 = vunpack.c.l.b16 %v114
  %v459 = vunpack.c.l.b16 %v115
  %v460 = vunpack.c.l.b16 %v116
  %v461 = vunpack.c.l.b16 %v117
  %v462 = vunpack.c.l.b16 %v118
  %v463 = vunpack.c.l.b16 %v119
  %v464 = vunpack.c.l.b16 %v120
  %v465 = vunpack.c.l.b16 %v121
  %v466 = vunpack.c.l.b16 %v122
  %v467 = vunpack.c.l.b16 %v123
  %v468 = vunpack.c.l.b16 %v124
  %v469 = vunpack.c.l.b16 %v125
  %v470 = vunpack.c.l.b16 %v126
  %v471 = vunpack.c.l.b16 %v127
  %v472 = vunpack.c.l.b16 %v128
  %v473 = vunpack.c.l.b16 %v129
  %v474 = vunpack.c.l.b16 %v130
  %v475 = vunpack.c.l.b16 %v131
  %v476 = vunpack.c.l.b16 %v132
  %v477 = vunpack.c.l.b16 %v133
  %v478 = vunpack.c.l.b16 %v134
  %v479 = vunpack.c.l.b16 %v135
  %v480 = vunpack.c.l.b16 %v136
  %v481 = vunpack.c.l.b16 %v137
  %v482 = vpack.c.b16 %v411, %v410
  %v483 = vpack.c.b16 %v413, %v412
  %v484 = vpack.c.b16 %v415, %v414
  %v485 = vpack.c.b16 %v417, %v416
  %v486 = vpack.c.b16 %v419, %v418
  %v487 = vpack.c.b16 %v421, %v420
  %v488 = vpack.c.b16 %v423, %v422
  %v489 = vpack.c.b16 %v425, %v424
  %v490 = vpack.c.b16 %v427, %v426
  %v491 = vpack.c.b16 %v429, %v428
  %v492 = vpack.c.b16 %v431, %v430
  %v493 = vpack.c.b16 %v433, %v432
  %v494 = vpack.c.b16 %v435, %v434
  %v495 = vpack.c.b16 %v437, %v436
  %v496 = vpack.c.b16 %v439, %v438
  %v497 = vpack.c.b16 %v441, %v440
  %v498 = vpack.c.b16 %v443, %v442
  %v499 = vpack.c.b16 %v445, %v444
  %v500 = vpack.c.b16 %v447, %v446
  %v501 = vpack.c.b16 %v449, %v448
  %v502 = vpack.c.b16 %v451, %v450
  %v503 = vpack.c.b16 %v453, %v452
  %v504 = vpack.c.b16 %v455, %v454
  %v505 = vpack.c.b16 %v457, %v456
  %v506 = vpack.c.b16 %v459, %v458
  %v507 = vpack.c.b16 %v461, %v460
  %v508 = vpack.c.b16 %v463, %v462
  %v509 = vpack.c.b16 %v465, %v464
  %v510 = vpack.c.b16 %v467, %v466
  %v511 = vpack.c.b16 %v469, %v468
  %v512 = vpack.c.b16 %v471, %v470
  %v513 = vpack.c.b16 %v473, %v472
  %v514 = vpack.c.b16 %v475, %v474
  %v515 = vpack.c.b16 %v477, %v476
  %v516 = vpack.c.b16 %v479, %v478
  %v517 = vpack.c.b16 %v481, %v480
  %vm554 = vcmask 523264
  %v556 = vsel %vm554, %v270, 0
  %v559 = vsel %vm554, %v275, 0
  %v562 = vsel %vm554, %v280, 0
  %v565 = vsel %vm554, %v285, 0
  %v568 = vsel %vm554, %v290, 0
  %v571 = vsel %vm554, %v295, 0
  %v574 = vsel %vm554, %v300, 0
  %v577 = vsel %vm554, %v305, 0
  %579 = vmatprep.subr.bf16.mxu0 0
  %580 = vmatpush1.bf16.msra.mxu0 %v482
  %581 = vmatprep.subr.bf16.mxu0 0
  %582 = vmatpush1.bf16.msra.mxu0 %v483
  %583 = vmatprep.subr.bf16.mxu0 0
  %584 = vmatpush1.bf16.msra.mxu0 %v484
  %585 = vmatprep.subr.bf16.mxu0 0
  %586 = vmatpush1.bf16.msra.mxu0 %v485
  %587 = vmatprep.subr.bf16.mxu0 0
  %588 = vmatpush1.bf16.msra.mxu0 %v486
  %589 = vmatprep.subr.bf16.mxu0 0
  %590 = vmatpush1.bf16.msra.mxu0 %v487
  %591 = vmatprep.subr.bf16.mxu0 0
  %592 = vmatpush1.bf16.msra.mxu0 %v488
  %593 = vmatprep.subr.bf16.mxu0 0
  %594 = vmatpush1.bf16.msra.mxu0 %v489
  %595 = vmatprep.subr.bf16.mxu0 0
  %596 = vmatpush1.bf16.msra.mxu0 %v490
  %597 = vmatprep.subr.bf16.mxu0 0
  %598 = vmatpush1.bf16.msra.mxu0 %v491
  %599 = vmatprep.subr.bf16.mxu0 0
  %600 = vmatpush1.bf16.msra.mxu0 %v492
  %601 = vmatprep.subr.bf16.mxu0 0
  %602 = vmatpush1.bf16.msra.mxu0 %v493
  %603 = vmatprep.subr.bf16.mxu0 0
  %604 = vmatpush1.bf16.msra.mxu0 %v494
  %605 = vmatprep.subr.bf16.mxu0 0
  %606 = vmatpush1.bf16.msra.mxu0 %v495
  %607 = vmatprep.subr.bf16.mxu0 0
  %608 = vmatpush1.bf16.msra.mxu0 %v496
  %609 = vmatprep.subr.bf16.mxu0 0
  %610 = vmatpush1.bf16.msra.mxu0 %v497
  %611 = vmatprep.mubr.bf16.mxu0 %v267
  %612 = vmatmul.mubr.bf16.gmra.mrb[0].mxu0 %v266
  %v613 = vpop.f32.mrb[0].mxu0
  %v614 = vadd.f32 0.0, %v613
  %v615 = vpop.f32.mrb[0].mxu0
  %v616 = vpop.f32.mrb[0].mxu0
  %v617 = vadd.f32 0.0, %v616
  %v618 = vpop.f32.mrb[0].mxu0
  %619 = vmatprep.mubr.bf16.mxu0 %v272
  %620 = vmatmul.mubr.bf16.gmra.mrb[0].mxu0 %v271
  %v621 = vpop.f32.mrb[0].mxu0
  %v622 = vadd.f32 0.0, %v621
  %v623 = vpop.f32.mrb[0].mxu0
  %v624 = vpop.f32.mrb[0].mxu0
  %v625 = vadd.f32 0.0, %v624
  %v626 = vpop.f32.mrb[0].mxu0
  %627 = vmatprep.mubr.bf16.mxu0 %v277
  %628 = vmatmul.mubr.bf16.gmra.mrb[0].mxu0 %v276
  %v629 = vpop.f32.mrb[0].mxu0
  %v630 = vadd.f32 0.0, %v629
  %v631 = vpop.f32.mrb[0].mxu0
  %v632 = vpop.f32.mrb[0].mxu0
  %v633 = vadd.f32 0.0, %v632
  %v634 = vpop.f32.mrb[0].mxu0
  %635 = vmatprep.mubr.bf16.mxu0 %v282
  %636 = vmatmul.mubr.bf16.gmra.mrb[0].mxu0 %v281
  %v637 = vpop.f32.mrb[0].mxu0
  %v638 = vadd.f32 0.0, %v637
  %v639 = vpop.f32.mrb[0].mxu0
  %v640 = vpop.f32.mrb[0].mxu0
  %v641 = vadd.f32 0.0, %v640
  %v642 = vpop.f32.mrb[0].mxu0
  %643 = vmatprep.mubr.bf16.mxu0 %v287
  %644 = vmatmul.mubr.bf16.gmra.mrb[0].mxu0 %v286
  %v645 = vpop.f32.mrb[0].mxu0
  %v646 = vadd.f32 0.0, %v645
  %v647 = vpop.f32.mrb[0].mxu0
  %v648 = vpop.f32.mrb[0].mxu0
  %v649 = vadd.f32 0.0, %v648
  %v650 = vpop.f32.mrb[0].mxu0
  %651 = vmatprep.mubr.bf16.mxu0 %v292
  %652 = vmatmul.mubr.bf16.gmra.mrb[0].mxu0 %v291
  %v653 = vpop.f32.mrb[0].mxu0
  %v654 = vadd.f32 0.0, %v653
  %v655 = vpop.f32.mrb[0].mxu0
  %v656 = vpop.f32.mrb[0].mxu0
  %v657 = vadd.f32 0.0, %v656
  %v658 = vpop.f32.mrb[0].mxu0
  %659 = vmatprep.mubr.bf16.mxu0 %v297
  %660 = vmatmul.mubr.bf16.gmra.mrb[0].mxu0 %v296
  %v661 = vpop.f32.mrb[0].mxu0
  %v662 = vadd.f32 0.0, %v661
  %v663 = vpop.f32.mrb[0].mxu0
  %v664 = vpop.f32.mrb[0].mxu0
  %v665 = vadd.f32 0.0, %v664
  %v666 = vpop.f32.mrb[0].mxu0
  %667 = vmatprep.mubr.bf16.mxu0 %v302
  %668 = vmatmul.mubr.bf16.gmra.mrb[0].mxu0 %v301
  %v669 = vpop.f32.mrb[0].mxu0
  %v670 = vadd.f32 0.0, %v669
  %v671 = vpop.f32.mrb[0].mxu0
  %v672 = vpop.f32.mrb[0].mxu0
  %v673 = vadd.f32 0.0, %v672
  %v674 = vpop.f32.mrb[0].mxu0
  %675 = vdwg.mxu0
  %676 = vmatprep.subr.bf16.mxu0 0
  %677 = vmatpush1.bf16.msra.mxu0 %v498
  %678 = vmatprep.subr.bf16.mxu0 0
  %679 = vmatpush1.bf16.msra.mxu0 %v499
  %680 = vmatprep.subr.bf16.mxu0 0
  %681 = vmatpush1.bf16.msra.mxu0 %v500
  %682 = vmatprep.subr.bf16.mxu0 0
  %683 = vmatpush1.bf16.msra.mxu0 %v501
  %684 = vmatprep.subr.bf16.mxu0 0
  %685 = vmatpush1.bf16.msra.mxu0 %v502
  %686 = vmatprep.subr.bf16.mxu0 0
  %687 = vmatpush1.bf16.msra.mxu0 %v503
  %688 = vmatprep.subr.bf16.mxu0 0
  %689 = vmatpush1.bf16.msra.mxu0 %v504
  %690 = vmatprep.subr.bf16.mxu0 0
  %691 = vmatpush1.bf16.msra.mxu0 %v505
  %692 = vmatprep.subr.bf16.mxu0 0
  %693 = vmatpush1.bf16.msra.mxu0 %v506
  %694 = vmatprep.subr.bf16.mxu0 0
  %695 = vmatpush1.bf16.msra.mxu0 %v507
  %696 = vmatprep.subr.bf16.mxu0 0
  %697 = vmatpush1.bf16.msra.mxu0 %v508
  %698 = vmatprep.subr.bf16.mxu0 0
  %699 = vmatpush1.bf16.msra.mxu0 %v509
  %700 = vmatprep.subr.bf16.mxu0 0
  %701 = vmatpush1.bf16.msra.mxu0 %v510
  %702 = vmatprep.subr.bf16.mxu0 0
  %703 = vmatpush1.bf16.msra.mxu0 %v511
  %704 = vmatprep.subr.bf16.mxu0 0
  %705 = vmatpush1.bf16.msra.mxu0 %v512
  %706 = vmatprep.subr.bf16.mxu0 0
  %707 = vmatpush1.bf16.msra.mxu0 %v513
  %708 = vmatprep.mubr.bf16.mxu0 %v269
  %709 = vmatmul.mubr.bf16.gmra.mrb[0].mxu0 %v268
  %v710 = vpop.f32.mrb[0].mxu0
  %v711 = vadd.f32 %v614, %v710
  %v712 = vpop.f32.mrb[0].mxu0
  %v713 = vpop.f32.mrb[0].mxu0
  %v714 = vadd.f32 %v617, %v713
  %v715 = vpop.f32.mrb[0].mxu0
  %716 = vmatprep.mubr.bf16.mxu0 %v274
  %717 = vmatmul.mubr.bf16.gmra.mrb[0].mxu0 %v273
  %v718 = vpop.f32.mrb[0].mxu0
  %v719 = vadd.f32 %v622, %v718
  %v720 = vpop.f32.mrb[0].mxu0
  %v721 = vpop.f32.mrb[0].mxu0
  %v722 = vadd.f32 %v625, %v721
  %v723 = vpop.f32.mrb[0].mxu0
  %724 = vmatprep.mubr.bf16.mxu0 %v279
  %725 = vmatmul.mubr.bf16.gmra.mrb[0].mxu0 %v278
  %v726 = vpop.f32.mrb[0].mxu0
  %v727 = vadd.f32 %v630, %v726
  %v728 = vpop.f32.mrb[0].mxu0
  %v729 = vpop.f32.mrb[0].mxu0
  %v730 = vadd.f32 %v633, %v729
  %v731 = vpop.f32.mrb[0].mxu0
  %732 = vmatprep.mubr.bf16.mxu0 %v284
  %733 = vmatmul.mubr.bf16.gmra.mrb[0].mxu0 %v283
  %v734 = vpop.f32.mrb[0].mxu0
  %v735 = vadd.f32 %v638, %v734
  %v736 = vpop.f32.mrb[0].mxu0
  %v737 = vpop.f32.mrb[0].mxu0
  %v738 = vadd.f32 %v641, %v737
  %v739 = vpop.f32.mrb[0].mxu0
  %740 = vmatprep.mubr.bf16.mxu0 %v289
  %741 = vmatmul.mubr.bf16.gmra.mrb[0].mxu0 %v288
  %v742 = vpop.f32.mrb[0].mxu0
  %v743 = vadd.f32 %v646, %v742
  %v744 = vpop.f32.mrb[0].mxu0
  %v745 = vpop.f32.mrb[0].mxu0
  %v746 = vadd.f32 %v649, %v745
  %v747 = vpop.f32.mrb[0].mxu0
  %748 = vmatprep.mubr.bf16.mxu0 %v294
  %749 = vmatmul.mubr.bf16.gmra.mrb[0].mxu0 %v293
  %v750 = vpop.f32.mrb[0].mxu0
  %v751 = vadd.f32 %v654, %v750
  %v752 = vpop.f32.mrb[0].mxu0
  %v753 = vpop.f32.mrb[0].mxu0
  %v754 = vadd.f32 %v657, %v753
  %v755 = vpop.f32.mrb[0].mxu0
  %756 = vmatprep.mubr.bf16.mxu0 %v299
  %757 = vmatmul.mubr.bf16.gmra.mrb[0].mxu0 %v298
  %v758 = vpop.f32.mrb[0].mxu0
  %v759 = vadd.f32 %v662, %v758
  %v760 = vpop.f32.mrb[0].mxu0
  %v761 = vpop.f32.mrb[0].mxu0
  %v762 = vadd.f32 %v665, %v761
  %v763 = vpop.f32.mrb[0].mxu0
  %764 = vmatprep.mubr.bf16.mxu0 %v304
  %765 = vmatmul.mubr.bf16.gmra.mrb[0].mxu0 %v303
  %v766 = vpop.f32.mrb[0].mxu0
  %v767 = vadd.f32 %v670, %v766
  %v768 = vpop.f32.mrb[0].mxu0
  %v769 = vpop.f32.mrb[0].mxu0
  %v770 = vadd.f32 %v673, %v769
  %v771 = vpop.f32.mrb[0].mxu0
  %772 = vdwg.mxu0
  %773 = vmatprep.subr.bf16.mxu0 0
  %774 = vmatpush1.bf16.msra.mxu0 %v514
  %775 = vmatprep.subr.bf16.mxu0 0
  %776 = vmatpush1.bf16.msra.mxu0 %v515
  %777 = vmatprep.subr.bf16.mxu0 0
  %778 = vmatpush1.bf16.msra.mxu0 %v516
  %779 = vmatprep.subr.bf16.mxu0 0
  %780 = vmatpush1.bf16.msra.mxu0 %v517
  %781 = vmatprep.subr.bf16.mxu0 0
  %782 = vmatpush1.bf16.msra.mxu0 0
  %783 = vmatprep.subr.bf16.mxu0 0
  %784 = vmatpush1.bf16.msra.mxu0 0
  %785 = vmatprep.subr.bf16.mxu0 0
  %786 = vmatpush1.bf16.msra.mxu0 0
  %787 = vmatprep.subr.bf16.mxu0 0
  %788 = vmatpush1.bf16.msra.mxu0 0
  %789 = vmatprep.subr.bf16.mxu0 0
  %790 = vmatpush1.bf16.msra.mxu0 0
  %791 = vmatprep.subr.bf16.mxu0 0
  %792 = vmatpush1.bf16.msra.mxu0 0
  %793 = vmatprep.subr.bf16.mxu0 0
  %794 = vmatpush1.bf16.msra.mxu0 0
  %795 = vmatprep.subr.bf16.mxu0 0
  %796 = vmatpush1.bf16.msra.mxu0 0
  %797 = vmatprep.subr.bf16.mxu0 0
  %798 = vmatpush1.bf16.msra.mxu0 0
  %799 = vmatprep.subr.bf16.mxu0 0
  %800 = vmatpush1.bf16.msra.mxu0 0
  %801 = vmatprep.subr.bf16.mxu0 0
  %802 = vmatpush1.bf16.msra.mxu0 0
  %803 = vmatprep.subr.bf16.mxu0 0
  %804 = vmatpush1.bf16.msra.mxu0 0
  %805 = vmatprep.mubr.bf16.mxu0 0
  %806 = vmatmul.mubr.bf16.gmra.mrb[0].mxu0 %v556
  %v807 = vpop.f32.mrb[0].mxu0
  %v808 = vadd.f32 %v711, %v807
  %v809 = vpop.f32.mrb[0].mxu0
  %v810 = vpop.f32.mrb[0].mxu0
  %v811 = vadd.f32 %v714, %v810
  %v812 = vpop.f32.mrb[0].mxu0
  %813 = vmatprep.mubr.bf16.mxu0 0
  %814 = vmatmul.mubr.bf16.gmra.mrb[0].mxu0 %v559
  %v815 = vpop.f32.mrb[0].mxu0
  %v816 = vadd.f32 %v719, %v815
  %v817 = vpop.f32.mrb[0].mxu0
  %v818 = vpop.f32.mrb[0].mxu0
  %v819 = vadd.f32 %v722, %v818
  %v820 = vpop.f32.mrb[0].mxu0
  %821 = vmatprep.mubr.bf16.mxu0 0
  %822 = vmatmul.mubr.bf16.gmra.mrb[0].mxu0 %v562
  %v823 = vpop.f32.mrb[0].mxu0
  %v824 = vadd.f32 %v727, %v823
  %v825 = vpop.f32.mrb[0].mxu0
  %v826 = vpop.f32.mrb[0].mxu0
  %v827 = vadd.f32 %v730, %v826
  %v828 = vpop.f32.mrb[0].mxu0
  %829 = vmatprep.mubr.bf16.mxu0 0
  %830 = vmatmul.mubr.bf16.gmra.mrb[0].mxu0 %v565
  %v831 = vpop.f32.mrb[0].mxu0
  %v832 = vadd.f32 %v735, %v831
  %v833 = vpop.f32.mrb[0].mxu0
  %v834 = vpop.f32.mrb[0].mxu0
  %v835 = vadd.f32 %v738, %v834
  %v836 = vpop.f32.mrb[0].mxu0
  %837 = vmatprep.mubr.bf16.mxu0 0
  %838 = vmatmul.mubr.bf16.gmra.mrb[0].mxu0 %v568
  %v839 = vpop.f32.mrb[0].mxu0
  %v840 = vadd.f32 %v743, %v839
  %v841 = vpop.f32.mrb[0].mxu0
  %v842 = vpop.f32.mrb[0].mxu0
  %v843 = vadd.f32 %v746, %v842
  %v844 = vpop.f32.mrb[0].mxu0
  %845 = vmatprep.mubr.bf16.mxu0 0
  %846 = vmatmul.mubr.bf16.gmra.mrb[0].mxu0 %v571
  %v847 = vpop.f32.mrb[0].mxu0
  %v848 = vadd.f32 %v751, %v847
  %v849 = vpop.f32.mrb[0].mxu0
  %v850 = vpop.f32.mrb[0].mxu0
  %v851 = vadd.f32 %v754, %v850
  %v852 = vpop.f32.mrb[0].mxu0
  %853 = vmatprep.mubr.bf16.mxu0 0
  %854 = vmatmul.mubr.bf16.gmra.mrb[0].mxu0 %v574
  %v855 = vpop.f32.mrb[0].mxu0
  %v856 = vadd.f32 %v759, %v855
  %v857 = vpop.f32.mrb[0].mxu0
  %v858 = vpop.f32.mrb[0].mxu0
  %v859 = vadd.f32 %v762, %v858
  %v860 = vpop.f32.mrb[0].mxu0
  %861 = vmatprep.mubr.bf16.mxu0 0
  %862 = vmatmul.mubr.bf16.gmra.mrb[0].mxu0 %v577
  %v863 = vpop.f32.mrb[0].mxu0
  %v864 = vadd.f32 %v767, %v863
  %v865 = vpop.f32.mrb[0].mxu0
  %v866 = vpop.f32.mrb[0].mxu0
  %v867 = vadd.f32 %v770, %v866
  %v868 = vpop.f32.mrb[0].mxu0
  %869 = vdwg.mxu0
  %v870 = vld [vmem:[%s2] sm:$0x1]
  %v872 = vlaneseq
  %v873 = vshrl.u32 %v872, 7
  %v874 = vsub.s32 0, %v873
  %v875 = vrot.slane %v870, %v874
  %v877 = vmul.f32 %v808, %v875
  %v878 = vmul.f32 %v811, %v875
  %v879 = vmul.f32 %v816, %v875
  %v880 = vmul.f32 %v819, %v875
  %v881 = vmul.f32 %v824, %v875
  %v882 = vmul.f32 %v827, %v875
  %v883 = vmul.f32 %v832, %v875
  %v884 = vmul.f32 %v835, %v875
  %v885 = vmul.f32 %v840, %v875
  %v886 = vmul.f32 %v843, %v875
  %v887 = vmul.f32 %v848, %v875
  %v888 = vmul.f32 %v851, %v875
  %v889 = vmul.f32 %v856, %v875
  %v890 = vmul.f32 %v859, %v875
  %v891 = vmul.f32 %v864, %v875
  %v892 = vmul.f32 %v867, %v875
  %v893 = vld [vmem:[%s3] sm:$0x1]
  %v895 = vlaneseq
  %v896 = vshrl.u32 %v895, 7
  %v897 = vsub.s32 0, %v896
  %v898 = vrot.slane %v893, %v897
  %v900 = vadd.f32 %v877, %v898
  %v901 = vadd.f32 %v878, %v898
  %v902 = vadd.f32 %v879, %v898
  %v903 = vadd.f32 %v880, %v898
  %v904 = vadd.f32 %v881, %v898
  %v905 = vadd.f32 %v882, %v898
  %v906 = vadd.f32 %v883, %v898
  %v907 = vadd.f32 %v884, %v898
  %v908 = vadd.f32 %v885, %v898
  %v909 = vadd.f32 %v886, %v898
  %v910 = vadd.f32 %v887, %v898
  %v911 = vadd.f32 %v888, %v898
  %v912 = vadd.f32 %v889, %v898
  %v913 = vadd.f32 %v890, %v898
  %v914 = vadd.f32 %v891, %v898
  %v915 = vadd.f32 %v892, %v898
  %v916 = vmax.f32 %v900, 0.0
  %v917 = vmax.f32 %v901, 0.0
  %v918 = vmax.f32 %v902, 0.0
  %v919 = vmax.f32 %v903, 0.0
  %v920 = vmax.f32 %v904, 0.0
  %v921 = vmax.f32 %v905, 0.0
  %v922 = vmax.f32 %v906, 0.0
  %v923 = vmax.f32 %v907, 0.0
  %v924 = vmax.f32 %v908, 0.0
  %v925 = vmax.f32 %v909, 0.0
  %v926 = vmax.f32 %v910, 0.0
  %v927 = vmax.f32 %v911, 0.0
  %v928 = vmax.f32 %v912, 0.0
  %v929 = vmax.f32 %v913, 0.0
  %v930 = vmax.f32 %v914, 0.0
  %v931 = vmax.f32 %v915, 0.0
  %v932 = vpack.c.bf16 %v917, %v916
  %v933 = vpack.c.bf16 %v919, %v918
  %v934 = vpack.c.bf16 %v921, %v920
  %v935 = vpack.c.bf16 %v923, %v922
  %v936 = vpack.c.bf16 %v925, %v924
  %v937 = vpack.c.bf16 %v927, %v926
  %v938 = vpack.c.bf16 %v929, %v928
  %v939 = vpack.c.bf16 %v931, %v930
  %v948 = vunpack.c.l.b16 %v932
  %v949 = vunpack.c.h.b16 %v932
  %v950 = vunpack.c.l.b16 %v933
  %v951 = vunpack.c.h.b16 %v933
  %v952 = vunpack.c.l.b16 %v934
  %v953 = vunpack.c.h.b16 %v934
  %v954 = vunpack.c.l.b16 %v935
  %v955 = vunpack.c.h.b16 %v935
  %v956 = vunpack.c.l.b16 %v936
  %v957 = vunpack.c.h.b16 %v936
  %v958 = vunpack.c.l.b16 %v937
  %v959 = vunpack.c.h.b16 %v937
  %v960 = vunpack.c.l.b16 %v938
  %v961 = vunpack.c.h.b16 %v938
  %v962 = vunpack.c.l.b16 %v939
  %v963 = vunpack.c.h.b16 %v939
  %v964 = vpack.c.b16 %v948, %v948
  %v965 = vpack.c.b16 %v949, %v949
  %v966 = vpack.c.b16 %v950, %v950
  %v967 = vpack.c.b16 %v951, %v951
  %v968 = vpack.c.b16 %v952, %v952
  %v969 = vpack.c.b16 %v953, %v953
  %v970 = vpack.c.b16 %v954, %v954
  %v971 = vpack.c.b16 %v955, %v955
  %v972 = vpack.c.b16 %v956, %v956
  %v973 = vpack.c.b16 %v957, %v957
  %v974 = vpack.c.b16 %v958, %v958
  %v975 = vpack.c.b16 %v959, %v959
  %v976 = vpack.c.b16 %v960, %v960
  %v977 = vpack.c.b16 %v961, %v961
  %v978 = vpack.c.b16 %v962, %v962
  %v979 = vpack.c.b16 %v963, %v963
  %996 = vst [vmem:[%s4] sm:$0xf] %v964
  %997 = vst [vmem:[%s4 + $0x4] sm:$0xf] %v965
  %998 = vst [vmem:[%s4 + $0x8] sm:$0xf] %v966
  %999 = vst [vmem:[%s4 + $0xc] sm:$0xf] %v967
  %1000 = vst [vmem:[%s4 + $0x10] sm:$0xf] %v968
  %1001 = vst [vmem:[%s4 + $0x14] sm:$0xf] %v969
  %1002 = vst [vmem:[%s4 + $0x18] sm:$0xf] %v970
  %1003 = vst [vmem:[%s4 + $0x1c] sm:$0xf] %v971
  %1004 = vst [vmem:[%s4 + $0x20] sm:$0xf] %v972
  %1005 = vst [vmem:[%s4 + $0x24] sm:$0xf] %v973
  %1006 = vst [vmem:[%s4 + $0x28] sm:$0xf] %v974
  %1007 = vst [vmem:[%s4 + $0x2c] sm:$0xf] %v975
  %1008 = vst [vmem:[%s4 + $0x30] sm:$0xf] %v976
  %1009 = vst [vmem:[%s4 + $0x34] sm:$0xf] %v977
  %1010 = vst [vmem:[%s4 + $0x38] sm:$0xf] %v978
  %1011 = vst [vmem:[%s4 + $0x3c] sm:$0xf] %v979
  // Predicated region
  $region18: #{_lambda_.13} parent=0 // pred_check
    _
  $region19: #{_lambda_.13} parent=0 // pred_check_branch
    %1013 = sbr.rel (0) target = $region21
  $region20: #{_lambda_.13} parent=0 // pred_region
    _
  $region21: #{_lambda_.13} parent=0 // pred_fallthru
    _
  // Predicated region
  $region22: #{_lambda_.13} parent=0 // pred_check
    _
  $region23: #{_lambda_.13} parent=0 // pred_check_branch
    %1015 = sbr.rel (0) target = $region25
  $region24: #{_lambda_.13} parent=0 // pred_region
    _
  $region25: #{_lambda_.13} parent=0 // pred_fallthru
    _

// kernel: _lambda_.14
$region0: #{_lambda_.14}
  #allocation0 [shape = 'u32[]', space=smem, size = 0x4, offset = 0x4, fixed_abs, tag = 'smem constant byte address 0x4 - core index']
  #allocation1 [shape = 'u32[144,128]{1,0:T(1,128)}', space=vmem, size = 0x12000, scoped, tag = 'internal scratch']
  %s0 = inlined_call_operand.vmem [shape: bf16[128,1152], index: 0, kind: input, shape index: {}]
  %s1 = inlined_call_operand.vmem [shape: bf16[1152,128], index: 1, kind: input, shape index: {}]
  %s2 = inlined_call_operand.vmem [shape: bf16[128,64], index: 2, kind: input, shape index: {}]
  %s3 = inlined_call_operand.vmem [shape: bf16[64,128], index: 3, kind: input, shape index: {}]
  %s4 = inlined_call_operand.vmem [shape: f32[128,128], index: 4, kind: output, shape index: {}]
  %s5 = sld [smem:[#allocation0]]
  $region26: #{_lambda_.14} parent=0
    _
  %s7 = ssub.s32 1, %s5
  %s8 = scalar_select 0, %s7, %s5
  // Predicated region
  $region2: #{_lambda_.14} parent=0 // pred_check
    _
  $region3: #{_lambda_.14} parent=0 // pred_check_branch
    %10 = sbr.rel (0) target = $region5
  $region4: #{_lambda_.14} parent=0 // pred_region
    _
  $region5: #{_lambda_.14} parent=0 // pred_fallthru
    _
  // Predicated region
  $region6: #{_lambda_.14} parent=0 // pred_check
    _
  $region7: #{_lambda_.14} parent=0 // pred_check_branch
    %12 = sbr.rel (0) target = $region9
  $region8: #{_lambda_.14} parent=0 // pred_region
    _
  $region9: #{_lambda_.14} parent=0 // pred_fallthru
    _
  // Predicated region
  $region10: #{_lambda_.14} parent=0 // pred_check
    _
  $region11: #{_lambda_.14} parent=0 // pred_check_branch
    %14 = sbr.rel (0) target = $region13
  $region12: #{_lambda_.14} parent=0 // pred_region
    _
  $region13: #{_lambda_.14} parent=0 // pred_fallthru
    _
  // Predicated region
  $region14: #{_lambda_.14} parent=0 // pred_check
    _
  $region15: #{_lambda_.14} parent=0 // pred_check_branch
    %16 = sbr.rel (0) target = $region17
  $region16: #{_lambda_.14} parent=0 // pred_region
    _
  $region17: #{_lambda_.14} parent=0 // pred_fallthru
    _
  %v18 = vld [vmem:[%s0] sm:$0xff]
  %v19 = vld [vmem:[%s0 + $0x8] sm:$0xff]
  %v20 = vld [vmem:[%s0 + $0x10] sm:$0xff]
  %v21 = vld [vmem:[%s0 + $0x18] sm:$0xff]
  %v22 = vld [vmem:[%s0 + $0x20] sm:$0xf]
  %v23 = vld [vmem:[%s0 + $0x24] sm:$0xff]
  %v24 = vld [vmem:[%s0 + $0x2c] sm:$0xff]
  %v25 = vld [vmem:[%s0 + $0x34] sm:$0xff]
  %v26 = vld [vmem:[%s0 + $0x3c] sm:$0xff]
  %v27 = vld [vmem:[%s0 + $0x44] sm:$0xf]
  %v28 = vld [vmem:[%s0 + $0x48] sm:$0xff]
  %v29 = vld [vmem:[%s0 + $0x50] sm:$0xff]
  %v30 = vld [vmem:[%s0 + $0x58] sm:$0xff]
  %v31 = vld [vmem:[%s0 + $0x60] sm:$0xff]
  %v32 = vld [vmem:[%s0 + $0x68] sm:$0xf]
  %v33 = vld [vmem:[%s0 + $0x6c] sm:$0xff]
  %v34 = vld [vmem:[%s0 + $0x74] sm:$0xff]
  %v35 = vld [vmem:[%s0 + $0x7c] sm:$0xff]
  %v36 = vld [vmem:[%s0 + $0x84] sm:$0xff]
  %v37 = vld [vmem:[%s0 + $0x8c] sm:$0xf]
  %v38 = vld [vmem:[%s0 + $0x90] sm:$0xff]
  %v39 = vld [vmem:[%s0 + $0x98] sm:$0xff]
  %v40 = vld [vmem:[%s0 + $0xa0] sm:$0xff]
  %v41 = vld [vmem:[%s0 + $0xa8] sm:$0xff]
  %v42 = vld [vmem:[%s0 + $0xb0] sm:$0xf]
  %v43 = vld [vmem:[%s0 + $0xb4] sm:$0xff]
  %v44 = vld [vmem:[%s0 + $0xbc] sm:$0xff]
  %v45 = vld [vmem:[%s0 + $0xc4] sm:$0xff]
  %v46 = vld [vmem:[%s0 + $0xcc] sm:$0xff]
  %v47 = vld [vmem:[%s0 + $0xd4] sm:$0xf]
  %v48 = vld [vmem:[%s0 + $0xd8] sm:$0xff]
  %v49 = vld [vmem:[%s0 + $0xe0] sm:$0xff]
  %v50 = vld [vmem:[%s0 + $0xe8] sm:$0xff]
  %v51 = vld [vmem:[%s0 + $0xf0] sm:$0xff]
  %v52 = vld [vmem:[%s0 + $0xf8] sm:$0xf]
  %v53 = vld [vmem:[%s0 + $0xfc] sm:$0xff]
  %v54 = vld [vmem:[%s0 + $0x104] sm:$0xff]
  %v55 = vld [vmem:[%s0 + $0x10c] sm:$0xff]
  %v56 = vld [vmem:[%s0 + $0x114] sm:$0xff]
  %v57 = vld [vmem:[%s0 + $0x11c] sm:$0xf]
  %v58 = vld [vmem:[%s0 + $0x120] sm:$0xff]
  %v59 = vld [vmem:[%s0 + $0x128] sm:$0xff]
  %v60 = vld [vmem:[%s0 + $0x130] sm:$0xff]
  %v61 = vld [vmem:[%s0 + $0x138] sm:$0xff]
  %v62 = vld [vmem:[%s0 + $0x140] sm:$0xf]
  %v63 = vld [vmem:[%s0 + $0x144] sm:$0xff]
  %v64 = vld [vmem:[%s0 + $0x14c] sm:$0xff]
  %v65 = vld [vmem:[%s0 + $0x154] sm:$0xff]
  %v66 = vld [vmem:[%s0 + $0x15c] sm:$0xff]
  %v67 = vld [vmem:[%s0 + $0x164] sm:$0xf]
  %v68 = vld [vmem:[%s0 + $0x168] sm:$0xff]
  %v69 = vld [vmem:[%s0 + $0x170] sm:$0xff]
  %v70 = vld [vmem:[%s0 + $0x178] sm:$0xff]
  %v71 = vld [vmem:[%s0 + $0x180] sm:$0xff]
  %v72 = vld [vmem:[%s0 + $0x188] sm:$0xf]
  %v73 = vld [vmem:[%s0 + $0x18c] sm:$0xff]
  %v74 = vld [vmem:[%s0 + $0x194] sm:$0xff]
  %v75 = vld [vmem:[%s0 + $0x19c] sm:$0xff]
  %v76 = vld [vmem:[%s0 + $0x1a4] sm:$0xff]
  %v77 = vld [vmem:[%s0 + $0x1ac] sm:$0xf]
  %v78 = vld [vmem:[%s0 + $0x1b0] sm:$0xff]
  %v79 = vld [vmem:[%s0 + $0x1b8] sm:$0xff]
  %v80 = vld [vmem:[%s0 + $0x1c0] sm:$0xff]
  %v81 = vld [vmem:[%s0 + $0x1c8] sm:$0xff]
  %v82 = vld [vmem:[%s0 + $0x1d0] sm:$0xf]
  %v83 = vld [vmem:[%s0 + $0x1d4] sm:$0xff]
  %v84 = vld [vmem:[%s0 + $0x1dc] sm:$0xff]
  %v85 = vld [vmem:[%s0 + $0x1e4] sm:$0xff]
  %v86 = vld [vmem:[%s0 + $0x1ec] sm:$0xff]
  %v87 = vld [vmem:[%s0 + $0x1f4] sm:$0xf]
  %v88 = vld [vmem:[%s0 + $0x1f8] sm:$0xff]
  %v89 = vld [vmem:[%s0 + $0x200] sm:$0xff]
  %v90 = vld [vmem:[%s0 + $0x208] sm:$0xff]
  %v91 = vld [vmem:[%s0 + $0x210] sm:$0xff]
  %v92 = vld [vmem:[%s0 + $0x218] sm:$0xf]
  %v93 = vld [vmem:[%s0 + $0x21c] sm:$0xff]
  %v94 = vld [vmem:[%s0 + $0x224] sm:$0xff]
  %v95 = vld [vmem:[%s0 + $0x22c] sm:$0xff]
  %v96 = vld [vmem:[%s0 + $0x234] sm:$0xff]
  %v97 = vld [vmem:[%s0 + $0x23c] sm:$0xf]
  %v98 = vld [vmem:[%s1] sm:$0xf]
  %v99 = vld [vmem:[%s1 + $0x4] sm:$0xf]
  %v100 = vld [vmem:[%s1 + $0x8] sm:$0xf]
  %v101 = vld [vmem:[%s1 + $0xc] sm:$0xf]
  %v102 = vld [vmem:[%s1 + $0x10] sm:$0xf]
  %v103 = vld [vmem:[%s1 + $0x14] sm:$0xf]
  %v104 = vld [vmem:[%s1 + $0x18] sm:$0xf]
  %v105 = vld [vmem:[%s1 + $0x1c] sm:$0xf]
  %v106 = vld [vmem:[%s1 + $0x20] sm:$0xf]
  %v107 = vld [vmem:[%s1 + $0x24] sm:$0xf]
  %v108 = vld [vmem:[%s1 + $0x28] sm:$0xf]
  %v109 = vld [vmem:[%s1 + $0x2c] sm:$0xf]
  %v110 = vld [vmem:[%s1 + $0x30] sm:$0xf]
  %v111 = vld [vmem:[%s1 + $0x34] sm:$0xf]
  %v112 = vld [vmem:[%s1 + $0x38] sm:$0xf]
  %v113 = vld [vmem:[%s1 + $0x3c] sm:$0xf]
  %v114 = vld [vmem:[%s1 + $0x40] sm:$0xf]
  %v115 = vld [vmem:[%s1 + $0x44] sm:$0xf]
  %v116 = vld [vmem:[%s1 + $0x48] sm:$0xf]
  %v117 = vld [vmem:[%s1 + $0x4c] sm:$0xf]
  %v118 = vld [vmem:[%s1 + $0x50] sm:$0xf]
  %v119 = vld [vmem:[%s1 + $0x54] sm:$0xf]
  %v120 = vld [vmem:[%s1 + $0x58] sm:$0xf]
  %v121 = vld [vmem:[%s1 + $0x5c] sm:$0xf]
  %v122 = vld [vmem:[%s1 + $0x60] sm:$0xf]
  %v123 = vld [vmem:[%s1 + $0x64] sm:$0xf]
  %v124 = vld [vmem:[%s1 + $0x68] sm:$0xf]
  %v125 = vld [vmem:[%s1 + $0x6c] sm:$0xf]
  %v126 = vld [vmem:[%s1 + $0x70] sm:$0xf]
  %v127 = vld [vmem:[%s1 + $0x74] sm:$0xf]
  %v128 = vld [vmem:[%s1 + $0x78] sm:$0xf]
  %v129 = vld [vmem:[%s1 + $0x7c] sm:$0xf]
  %v130 = vld [vmem:[%s1 + $0x80] sm:$0xf]
  %v131 = vld [vmem:[%s1 + $0x84] sm:$0xf]
  %v132 = vld [vmem:[%s1 + $0x88] sm:$0xf]
  %v133 = vld [vmem:[%s1 + $0x8c] sm:$0xf]
  %v134 = vld [vmem:[%s1 + $0x90] sm:$0xf]
  %v135 = vld [vmem:[%s1 + $0x94] sm:$0xf]
  %v136 = vld [vmem:[%s1 + $0x98] sm:$0xf]
  %v137 = vld [vmem:[%s1 + $0x9c] sm:$0xf]
  %v138 = vld [vmem:[%s1 + $0xa0] sm:$0xf]
  %v139 = vld [vmem:[%s1 + $0xa4] sm:$0xf]
  %v140 = vld [vmem:[%s1 + $0xa8] sm:$0xf]
  %v141 = vld [vmem:[%s1 + $0xac] sm:$0xf]
  %v142 = vld [vmem:[%s1 + $0xb0] sm:$0xf]
  %v143 = vld [vmem:[%s1 + $0xb4] sm:$0xf]
  %v144 = vld [vmem:[%s1 + $0xb8] sm:$0xf]
  %v145 = vld [vmem:[%s1 + $0xbc] sm:$0xf]
  %v146 = vld [vmem:[%s1 + $0xc0] sm:$0xf]
  %v147 = vld [vmem:[%s1 + $0xc4] sm:$0xf]
  %v148 = vld [vmem:[%s1 + $0xc8] sm:$0xf]
  %v149 = vld [vmem:[%s1 + $0xcc] sm:$0xf]
  %v150 = vld [vmem:[%s1 + $0xd0] sm:$0xf]
  %v151 = vld [vmem:[%s1 + $0xd4] sm:$0xf]
  %v152 = vld [vmem:[%s1 + $0xd8] sm:$0xf]
  %v153 = vld [vmem:[%s1 + $0xdc] sm:$0xf]
  %v154 = vld [vmem:[%s1 + $0xe0] sm:$0xf]
  %v155 = vld [vmem:[%s1 + $0xe4] sm:$0xf]
  %v156 = vld [vmem:[%s1 + $0xe8] sm:$0xf]
  %v157 = vld [vmem:[%s1 + $0xec] sm:$0xf]
  %v158 = vld [vmem:[%s1 + $0xf0] sm:$0xf]
  %v159 = vld [vmem:[%s1 + $0xf4] sm:$0xf]
  %v160 = vld [vmem:[%s1 + $0xf8] sm:$0xf]
  %v161 = vld [vmem:[%s1 + $0xfc] sm:$0xf]
  %v162 = vld [vmem:[%s1 + $0x100] sm:$0xf]
  %v163 = vld [vmem:[%s1 + $0x104] sm:$0xf]
  %v164 = vld [vmem:[%s1 + $0x108] sm:$0xf]
  %v165 = vld [vmem:[%s1 + $0x10c] sm:$0xf]
  %v166 = vld [vmem:[%s1 + $0x110] sm:$0xf]
  %v167 = vld [vmem:[%s1 + $0x114] sm:$0xf]
  %v168 = vld [vmem:[%s1 + $0x118] sm:$0xf]
  %v169 = vld [vmem:[%s1 + $0x11c] sm:$0xf]
  %v170 = vld [vmem:[%s1 + $0x120] sm:$0xf]
  %v171 = vld [vmem:[%s1 + $0x124] sm:$0xf]
  %v172 = vld [vmem:[%s1 + $0x128] sm:$0xf]
  %v173 = vld [vmem:[%s1 + $0x12c] sm:$0xf]
  %v174 = vld [vmem:[%s1 + $0x130] sm:$0xf]
  %v175 = vld [vmem:[%s1 + $0x134] sm:$0xf]
  %v176 = vld [vmem:[%s1 + $0x138] sm:$0xf]
  %v177 = vld [vmem:[%s1 + $0x13c] sm:$0xf]
  %v178 = vld [vmem:[%s1 + $0x140] sm:$0xf]
  %v179 = vld [vmem:[%s1 + $0x144] sm:$0xf]
  %v180 = vld [vmem:[%s1 + $0x148] sm:$0xf]
  %v181 = vld [vmem:[%s1 + $0x14c] sm:$0xf]
  %v182 = vld [vmem:[%s1 + $0x150] sm:$0xf]
  %v183 = vld [vmem:[%s1 + $0x154] sm:$0xf]
  %v184 = vld [vmem:[%s1 + $0x158] sm:$0xf]
  %v185 = vld [vmem:[%s1 + $0x15c] sm:$0xf]
  %v186 = vld [vmem:[%s1 + $0x160] sm:$0xf]
  %v187 = vld [vmem:[%s1 + $0x164] sm:$0xf]
  %v188 = vld [vmem:[%s1 + $0x168] sm:$0xf]
  %v189 = vld [vmem:[%s1 + $0x16c] sm:$0xf]
  %v190 = vld [vmem:[%s1 + $0x170] sm:$0xf]
  %v191 = vld [vmem:[%s1 + $0x174] sm:$0xf]
  %v192 = vld [vmem:[%s1 + $0x178] sm:$0xf]
  %v193 = vld [vmem:[%s1 + $0x17c] sm:$0xf]
  %v194 = vld [vmem:[%s1 + $0x180] sm:$0xf]
  %v195 = vld [vmem:[%s1 + $0x184] sm:$0xf]
  %v196 = vld [vmem:[%s1 + $0x188] sm:$0xf]
  %v197 = vld [vmem:[%s1 + $0x18c] sm:$0xf]
  %v198 = vld [vmem:[%s1 + $0x190] sm:$0xf]
  %v199 = vld [vmem:[%s1 + $0x194] sm:$0xf]
  %v200 = vld [vmem:[%s1 + $0x198] sm:$0xf]
  %v201 = vld [vmem:[%s1 + $0x19c] sm:$0xf]
  %v202 = vld [vmem:[%s1 + $0x1a0] sm:$0xf]
  %v203 = vld [vmem:[%s1 + $0x1a4] sm:$0xf]
  %v204 = vld [vmem:[%s1 + $0x1a8] sm:$0xf]
  %v205 = vld [vmem:[%s1 + $0x1ac] sm:$0xf]
  %v206 = vld [vmem:[%s1 + $0x1b0] sm:$0xf]
  %v207 = vld [vmem:[%s1 + $0x1b4] sm:$0xf]
  %v208 = vld [vmem:[%s1 + $0x1b8] sm:$0xf]
  %v209 = vld [vmem:[%s1 + $0x1bc] sm:$0xf]
  %v210 = vld [vmem:[%s1 + $0x1c0] sm:$0xf]
  %v211 = vld [vmem:[%s1 + $0x1c4] sm:$0xf]
  %v212 = vld [vmem:[%s1 + $0x1c8] sm:$0xf]
  %v213 = vld [vmem:[%s1 + $0x1cc] sm:$0xf]
  %v214 = vld [vmem:[%s1 + $0x1d0] sm:$0xf]
  %v215 = vld [vmem:[%s1 + $0x1d4] sm:$0xf]
  %v216 = vld [vmem:[%s1 + $0x1d8] sm:$0xf]
  %v217 = vld [vmem:[%s1 + $0x1dc] sm:$0xf]
  %v218 = vld [vmem:[%s1 + $0x1e0] sm:$0xf]
  %v219 = vld [vmem:[%s1 + $0x1e4] sm:$0xf]
  %v220 = vld [vmem:[%s1 + $0x1e8] sm:$0xf]
  %v221 = vld [vmem:[%s1 + $0x1ec] sm:$0xf]
  %v222 = vld [vmem:[%s1 + $0x1f0] sm:$0xf]
  %v223 = vld [vmem:[%s1 + $0x1f4] sm:$0xf]
  %v224 = vld [vmem:[%s1 + $0x1f8] sm:$0xf]
  %v225 = vld [vmem:[%s1 + $0x1fc] sm:$0xf]
  %v226 = vld [vmem:[%s1 + $0x200] sm:$0xf]
  %v227 = vld [vmem:[%s1 + $0x204] sm:$0xf]
  %v228 = vld [vmem:[%s1 + $0x208] sm:$0xf]
  %v229 = vld [vmem:[%s1 + $0x20c] sm:$0xf]
  %v230 = vld [vmem:[%s1 + $0x210] sm:$0xf]
  %v231 = vld [vmem:[%s1 + $0x214] sm:$0xf]
  %v232 = vld [vmem:[%s1 + $0x218] sm:$0xf]
  %v233 = vld [vmem:[%s1 + $0x21c] sm:$0xf]
  %v234 = vld [vmem:[%s1 + $0x220] sm:$0xf]
  %v235 = vld [vmem:[%s1 + $0x224] sm:$0xf]
  %v236 = vld [vmem:[%s1 + $0x228] sm:$0xf]
  %v237 = vld [vmem:[%s1 + $0x22c] sm:$0xf]
  %v238 = vld [vmem:[%s1 + $0x230] sm:$0xf]
  %v239 = vld [vmem:[%s1 + $0x234] sm:$0xf]
  %v240 = vld [vmem:[%s1 + $0x238] sm:$0xf]
  %v241 = vld [vmem:[%s1 + $0x23c] sm:$0xf]
  %v242 = vld [vmem:[%s2] sm:$0xf]
  %v243 = vld [vmem:[%s2 + $0x4] sm:$0xf]
  %v244 = vld [vmem:[%s2 + $0x8] sm:$0xf]
  %v245 = vld [vmem:[%s2 + $0xc] sm:$0xf]
  %v246 = vld [vmem:[%s2 + $0x10] sm:$0xf]
  %v247 = vld [vmem:[%s2 + $0x14] sm:$0xf]
  %v248 = vld [vmem:[%s2 + $0x18] sm:$0xf]
  %v249 = vld [vmem:[%s2 + $0x1c] sm:$0xf]
  %v250 = vld [vmem:[%s2 + $0x20] sm:$0xf]
  %v251 = vld [vmem:[%s2 + $0x24] sm:$0xf]
  %v252 = vld [vmem:[%s2 + $0x28] sm:$0xf]
  %v253 = vld [vmem:[%s2 + $0x2c] sm:$0xf]
  %v254 = vld [vmem:[%s2 + $0x30] sm:$0xf]
  %v255 = vld [vmem:[%s2 + $0x34] sm:$0xf]
  %v256 = vld [vmem:[%s2 + $0x38] sm:$0xf]
  %v257 = vld [vmem:[%s2 + $0x3c] sm:$0xf]
  %v258 = vld [vmem:[%s3] sm:$0xf]
  %v259 = vld [vmem:[%s3 + $0x4] sm:$0xf]
  %v260 = vld [vmem:[%s3 + $0x8] sm:$0xf]
  %v261 = vld [vmem:[%s3 + $0xc] sm:$0xf]
  %v262 = vld [vmem:[%s3 + $0x10] sm:$0xf]
  %v263 = vld [vmem:[%s3 + $0x14] sm:$0xf]
  %v264 = vld [vmem:[%s3 + $0x18] sm:$0xf]
  %v265 = vld [vmem:[%s3 + $0x1c] sm:$0xf]
  %v282 = vunpack.c.l.b16 %v242
  %v283 = vunpack.c.l.b16 %v243
  %v284 = vunpack.c.l.b16 %v244
  %v285 = vunpack.c.l.b16 %v245
  %v286 = vunpack.c.l.b16 %v246
  %v287 = vunpack.c.l.b16 %v247
  %v288 = vunpack.c.l.b16 %v248
  %v289 = vunpack.c.l.b16 %v249
  %v290 = vunpack.c.l.b16 %v250
  %v291 = vunpack.c.l.b16 %v251
  %v292 = vunpack.c.l.b16 %v252
  %v293 = vunpack.c.l.b16 %v253
  %v294 = vunpack.c.l.b16 %v254
  %v295 = vunpack.c.l.b16 %v255
  %v296 = vunpack.c.l.b16 %v256
  %v297 = vunpack.c.l.b16 %v257
  %v298 = vpack.c.b16 %v283, %v282
  %v299 = vpack.c.b16 %v285, %v284
  %v300 = vpack.c.b16 %v287, %v286
  %v301 = vpack.c.b16 %v289, %v288
  %v302 = vpack.c.b16 %v291, %v290
  %v303 = vpack.c.b16 %v293, %v292
  %v304 = vpack.c.b16 %v295, %v294
  %v305 = vpack.c.b16 %v297, %v296
  %v314 = vunpack.c.l.b16 %v258
  %v315 = vunpack.c.l.b16 %v259
  %v316 = vunpack.c.l.b16 %v260
  %v317 = vunpack.c.l.b16 %v261
  %v318 = vunpack.c.l.b16 %v262
  %v319 = vunpack.c.l.b16 %v263
  %v320 = vunpack.c.l.b16 %v264
  %v321 = vunpack.c.l.b16 %v265
  %v322 = vpack.c.b16 %v315, %v314
  %v323 = vpack.c.b16 %v317, %v316
  %v324 = vpack.c.b16 %v319, %v318
  %v325 = vpack.c.b16 %v321, %v320
  %vm330 = vcmask 523264
  %v332 = vsel %vm330, %v298, 0
  %v335 = vsel %vm330, %v299, 0
  %v338 = vsel %vm330, %v300, 0
  %v341 = vsel %vm330, %v301, 0
  %v344 = vsel %vm330, %v302, 0
  %v347 = vsel %vm330, %v303, 0
  %v350 = vsel %vm330, %v304, 0
  %v353 = vsel %vm330, %v305, 0
  %355 = vmatprep.subr.bf16.mxu0 0
  %356 = vmatpush1.bf16.msra.mxu0 %v322
  %357 = vmatprep.subr.bf16.mxu0 0
  %358 = vmatpush1.bf16.msra.mxu0 %v323
  %359 = vmatprep.subr.bf16.mxu0 0
  %360 = vmatpush1.bf16.msra.mxu0 %v324
  %361 = vmatprep.subr.bf16.mxu0 0
  %362 = vmatpush1.bf16.msra.mxu0 %v325
  %363 = vmatprep.subr.bf16.mxu0 0
  %364 = vmatpush1.bf16.msra.mxu0 0
  %365 = vmatprep.subr.bf16.mxu0 0
  %366 = vmatpush1.bf16.msra.mxu0 0
  %367 = vmatprep.subr.bf16.mxu0 0
  %368 = vmatpush1.bf16.msra.mxu0 0
  %369 = vmatprep.subr.bf16.mxu0 0
  %370 = vmatpush1.bf16.msra.mxu0 0
  %371 = vmatprep.subr.bf16.mxu0 0
  %372 = vmatpush1.bf16.msra.mxu0 0
  %373 = vmatprep.subr.bf16.mxu0 0
  %374 = vmatpush1.bf16.msra.mxu0 0
  %375 = vmatprep.subr.bf16.mxu0 0
  %376 = vmatpush1.bf16.msra.mxu0 0
  %377 = vmatprep.subr.bf16.mxu0 0
  %378 = vmatpush1.bf16.msra.mxu0 0
  %379 = vmatprep.subr.bf16.mxu0 0
  %380 = vmatpush1.bf16.msra.mxu0 0
  %381 = vmatprep.subr.bf16.mxu0 0
  %382 = vmatpush1.bf16.msra.mxu0 0
  %383 = vmatprep.subr.bf16.mxu0 0
  %384 = vmatpush1.bf16.msra.mxu0 0
  %385 = vmatprep.subr.bf16.mxu0 0
  %386 = vmatpush1.bf16.msra.mxu0 0
  %387 = vmatprep.mubr.bf16.mxu0 0
  %388 = vmatmul.mubr.bf16.gmra.mrb[0].mxu0 %v332
  %v389 = vpop.f32.mrb[0].mxu0
  %v390 = vadd.f32 0.0, %v389
  %v391 = vpop.f32.mrb[0].mxu0
  %v392 = vpop.f32.mrb[0].mxu0
  %v393 = vadd.f32 0.0, %v392
  %v394 = vpop.f32.mrb[0].mxu0
  %395 = vmatprep.mubr.bf16.mxu0 0
  %396 = vmatmul.mubr.bf16.gmra.mrb[0].mxu0 %v335
  %v397 = vpop.f32.mrb[0].mxu0
  %v398 = vadd.f32 0.0, %v397
  %v399 = vpop.f32.mrb[0].mxu0
  %v400 = vpop.f32.mrb[0].mxu0
  %v401 = vadd.f32 0.0, %v400
  %v402 = vpop.f32.mrb[0].mxu0
  %403 = vmatprep.mubr.bf16.mxu0 0
  %404 = vmatmul.mubr.bf16.gmra.mrb[0].mxu0 %v338
  %v405 = vpop.f32.mrb[0].mxu0
  %v406 = vadd.f32 0.0, %v405
  %v407 = vpop.f32.mrb[0].mxu0
  %v408 = vpop.f32.mrb[0].mxu0
  %v409 = vadd.f32 0.0, %v408
  %v410 = vpop.f32.mrb[0].mxu0
  %411 = vmatprep.mubr.bf16.mxu0 0
  %412 = vmatmul.mubr.bf16.gmra.mrb[0].mxu0 %v341
  %v413 = vpop.f32.mrb[0].mxu0
  %v414 = vadd.f32 0.0, %v413
  %v415 = vpop.f32.mrb[0].mxu0
  %v416 = vpop.f32.mrb[0].mxu0
  %v417 = vadd.f32 0.0, %v416
  %v418 = vpop.f32.mrb[0].mxu0
  %419 = vmatprep.mubr.bf16.mxu0 0
  %420 = vmatmul.mubr.bf16.gmra.mrb[0].mxu0 %v344
  %v421 = vpop.f32.mrb[0].mxu0
  %v422 = vadd.f32 0.0, %v421
  %v423 = vpop.f32.mrb[0].mxu0
  %v424 = vpop.f32.mrb[0].mxu0
  %v425 = vadd.f32 0.0, %v424
  %v426 = vpop.f32.mrb[0].mxu0
  %427 = vmatprep.mubr.bf16.mxu0 0
  %428 = vmatmul.mubr.bf16.gmra.mrb[0].mxu0 %v347
  %v429 = vpop.f32.mrb[0].mxu0
  %v430 = vadd.f32 0.0, %v429
  %v431 = vpop.f32.mrb[0].mxu0
  %v432 = vpop.f32.mrb[0].mxu0
  %v433 = vadd.f32 0.0, %v432
  %v434 = vpop.f32.mrb[0].mxu0
  %435 = vmatprep.mubr.bf16.mxu0 0
  %436 = vmatmul.mubr.bf16.gmra.mrb[0].mxu0 %v350
  %v437 = vpop.f32.mrb[0].mxu0
  %v438 = vadd.f32 0.0, %v437
  %v439 = vpop.f32.mrb[0].mxu0
  %v440 = vpop.f32.mrb[0].mxu0
  %v441 = vadd.f32 0.0, %v440
  %v442 = vpop.f32.mrb[0].mxu0
  %443 = vmatprep.mubr.bf16.mxu0 0
  %444 = vmatmul.mubr.bf16.gmra.mrb[0].mxu0 %v353
  %v445 = vpop.f32.mrb[0].mxu0
  %v446 = vadd.f32 0.0, %v445
  %v447 = vpop.f32.mrb[0].mxu0
  %v448 = vpop.f32.mrb[0].mxu0
  %v449 = vadd.f32 0.0, %v448
  %v450 = vpop.f32.mrb[0].mxu0
  %451 = vdwg.mxu0
  %v532 = vunpack.c.l.b16 %v18
  %v533 = vunpack.c.h.b16 %v18
  %v534 = vunpack.c.l.b16 %v19
  %v535 = vunpack.c.h.b16 %v19
  %v536 = vunpack.c.l.b16 %v20
  %v537 = vunpack.c.h.b16 %v20
  %v538 = vunpack.c.l.b16 %v21
  %v539 = vunpack.c.h.b16 %v21
  %v540 = vunpack.c.l.b16 %v22
  %v541 = vunpack.c.l.b16 %v23
  %v542 = vunpack.c.h.b16 %v23
  %v543 = vunpack.c.l.b16 %v24
  %v544 = vunpack.c.h.b16 %v24
  %v545 = vunpack.c.l.b16 %v25
  %v546 = vunpack.c.h.b16 %v25
  %v547 = vunpack.c.l.b16 %v26
  %v548 = vunpack.c.h.b16 %v26
  %v549 = vunpack.c.l.b16 %v27
  %v550 = vunpack.c.l.b16 %v28
  %v551 = vunpack.c.h.b16 %v28
  %v552 = vunpack.c.l.b16 %v29
  %v553 = vunpack.c.h.b16 %v29
  %v554 = vunpack.c.l.b16 %v30
  %v555 = vunpack.c.h.b16 %v30
  %v556 = vunpack.c.l.b16 %v31
  %v557 = vunpack.c.h.b16 %v31
  %v558 = vunpack.c.l.b16 %v32
  %v559 = vunpack.c.l.b16 %v33
  %v560 = vunpack.c.h.b16 %v33
  %v561 = vunpack.c.l.b16 %v34
  %v562 = vunpack.c.h.b16 %v34
  %v563 = vunpack.c.l.b16 %v35
  %v564 = vunpack.c.h.b16 %v35
  %v565 = vunpack.c.l.b16 %v36
  %v566 = vunpack.c.h.b16 %v36
  %v567 = vunpack.c.l.b16 %v37
  %v568 = vunpack.c.l.b16 %v38
  %v569 = vunpack.c.h.b16 %v38
  %v570 = vunpack.c.l.b16 %v39
  %v571 = vunpack.c.h.b16 %v39
  %v572 = vunpack.c.l.b16 %v40
  %v573 = vunpack.c.h.b16 %v40
  %v574 = vunpack.c.l.b16 %v41
  %v575 = vunpack.c.h.b16 %v41
  %v576 = vunpack.c.l.b16 %v42
  %v577 = vunpack.c.l.b16 %v43
  %v578 = vunpack.c.h.b16 %v43
  %v579 = vunpack.c.l.b16 %v44
  %v580 = vunpack.c.h.b16 %v44
  %v581 = vunpack.c.l.b16 %v45
  %v582 = vunpack.c.h.b16 %v45
  %v583 = vunpack.c.l.b16 %v46
  %v584 = vunpack.c.h.b16 %v46
  %v585 = vunpack.c.l.b16 %v47
  %v586 = vunpack.c.l.b16 %v48
  %v587 = vunpack.c.h.b16 %v48
  %v588 = vunpack.c.l.b16 %v49
  %v589 = vunpack.c.h.b16 %v49
  %v590 = vunpack.c.l.b16 %v50
  %v591 = vunpack.c.h.b16 %v50
  %v592 = vunpack.c.l.b16 %v51
  %v593 = vunpack.c.h.b16 %v51
  %v594 = vunpack.c.l.b16 %v52
  %v595 = vunpack.c.l.b16 %v53
  %v596 = vunpack.c.h.b16 %v53
  %v597 = vunpack.c.l.b16 %v54
  %v598 = vunpack.c.h.b16 %v54
  %v599 = vunpack.c.l.b16 %v55
  %v600 = vunpack.c.h.b16 %v55
  %v601 = vunpack.c.l.b16 %v56
  %v602 = vunpack.c.h.b16 %v56
  %v603 = vunpack.c.l.b16 %v57
  %v604 = vunpack.c.l.b16 %v58
  %v605 = vunpack.c.h.b16 %v58
  %v606 = vunpack.c.l.b16 %v59
  %v607 = vunpack.c.h.b16 %v59
  %v608 = vunpack.c.l.b16 %v60
  %v609 = vunpack.c.h.b16 %v60
  %v610 = vunpack.c.l.b16 %v61
  %v611 = vunpack.c.h.b16 %v61
  %v612 = vunpack.c.l.b16 %v62
  %v613 = vunpack.c.l.b16 %v63
  %v614 = vunpack.c.h.b16 %v63
  %v615 = vunpack.c.l.b16 %v64
  %v616 = vunpack.c.h.b16 %v64
  %v617 = vunpack.c.l.b16 %v65
  %v618 = vunpack.c.h.b16 %v65
  %v619 = vunpack.c.l.b16 %v66
  %v620 = vunpack.c.h.b16 %v66
  %v621 = vunpack.c.l.b16 %v67
  %v622 = vunpack.c.l.b16 %v68
  %v623 = vunpack.c.h.b16 %v68
  %v624 = vunpack.c.l.b16 %v69
  %v625 = vunpack.c.h.b16 %v69
  %v626 = vunpack.c.l.b16 %v70
  %v627 = vunpack.c.h.b16 %v70
  %v628 = vunpack.c.l.b16 %v71
  %v629 = vunpack.c.h.b16 %v71
  %v630 = vunpack.c.l.b16 %v72
  %v631 = vunpack.c.l.b16 %v73
  %v632 = vunpack.c.h.b16 %v73
  %v633 = vunpack.c.l.b16 %v74
  %v634 = vunpack.c.h.b16 %v74
  %v635 = vunpack.c.l.b16 %v75
  %v636 = vunpack.c.h.b16 %v75
  %v637 = vunpack.c.l.b16 %v76
  %v638 = vunpack.c.h.b16 %v76
  %v639 = vunpack.c.l.b16 %v77
  %v640 = vunpack.c.l.b16 %v78
  %v641 = vunpack.c.h.b16 %v78
  %v642 = vunpack.c.l.b16 %v79
  %v643 = vunpack.c.h.b16 %v79
  %v644 = vunpack.c.l.b16 %v80
  %v645 = vunpack.c.h.b16 %v80
  %v646 = vunpack.c.l.b16 %v81
  %v647 = vunpack.c.h.b16 %v81
  %v648 = vunpack.c.l.b16 %v82
  %v649 = vunpack.c.l.b16 %v83
  %v650 = vunpack.c.h.b16 %v83
  %v651 = vunpack.c.l.b16 %v84
  %v652 = vunpack.c.h.b16 %v84
  %v653 = vunpack.c.l.b16 %v85
  %v654 = vunpack.c.h.b16 %v85
  %v655 = vunpack.c.l.b16 %v86
  %v656 = vunpack.c.h.b16 %v86
  %v657 = vunpack.c.l.b16 %v87
  %v658 = vunpack.c.l.b16 %v88
  %v659 = vunpack.c.h.b16 %v88
  %v660 = vunpack.c.l.b16 %v89
  %v661 = vunpack.c.h.b16 %v89
  %v662 = vunpack.c.l.b16 %v90
  %v663 = vunpack.c.h.b16 %v90
  %v664 = vunpack.c.l.b16 %v91
  %v665 = vunpack.c.h.b16 %v91
  %v666 = vunpack.c.l.b16 %v92
  %v667 = vunpack.c.l.b16 %v93
  %v668 = vunpack.c.h.b16 %v93
  %v669 = vunpack.c.l.b16 %v94
  %v670 = vunpack.c.h.b16 %v94
  %v671 = vunpack.c.l.b16 %v95
  %v672 = vunpack.c.h.b16 %v95
  %v673 = vunpack.c.l.b16 %v96
  %v674 = vunpack.c.h.b16 %v96
  %v675 = vunpack.c.l.b16 %v97
  %v676 = vpack.c.b16 %v541, %v532
  %v677 = vpack.c.b16 %v542, %v533
  %v678 = vpack.c.b16 %v543, %v534
  %v679 = vpack.c.b16 %v544, %v535
  %v680 = vpack.c.b16 %v545, %v536
  %v681 = vpack.c.b16 %v546, %v537
  %v682 = vpack.c.b16 %v547, %v538
  %v683 = vpack.c.b16 %v548, %v539
  %v684 = vpack.c.b16 %v549, %v540
  %v685 = vpack.c.b16 %v559, %v550
  %v686 = vpack.c.b16 %v560, %v551
  %v687 = vpack.c.b16 %v561, %v552
  %v688 = vpack.c.b16 %v562, %v553
  %v689 = vpack.c.b16 %v563, %v554
  %v690 = vpack.c.b16 %v564, %v555
  %v691 = vpack.c.b16 %v565, %v556
  %v692 = vpack.c.b16 %v566, %v557
  %v693 = vpack.c.b16 %v567, %v558
  %v694 = vpack.c.b16 %v577, %v568
  %v695 = vpack.c.b16 %v578, %v569
  %v696 = vpack.c.b16 %v579, %v570
  %v697 = vpack.c.b16 %v580, %v571
  %v698 = vpack.c.b16 %v581, %v572
  %v699 = vpack.c.b16 %v582, %v573
  %v700 = vpack.c.b16 %v583, %v574
  %v701 = vpack.c.b16 %v584, %v575
  %v702 = vpack.c.b16 %v585, %v576
  %v703 = vpack.c.b16 %v595, %v586
  %v704 = vpack.c.b16 %v596, %v587
  %v705 = vpack.c.b16 %v597, %v588
  %v706 = vpack.c.b16 %v598, %v589
  %v707 = vpack.c.b16 %v599, %v590
  %v708 = vpack.c.b16 %v600, %v591
  %v709 = vpack.c.b16 %v601, %v592
  %v710 = vpack.c.b16 %v602, %v593
  %v711 = vpack.c.b16 %v603, %v594
  %v712 = vpack.c.b16 %v613, %v604
  %v713 = vpack.c.b16 %v614, %v605
  %v714 = vpack.c.b16 %v615, %v606
  %v715 = vpack.c.b16 %v616, %v607
  %v716 = vpack.c.b16 %v617, %v608
  %v717 = vpack.c.b16 %v618, %v609
  %v718 = vpack.c.b16 %v619, %v610
  %v719 = vpack.c.b16 %v620, %v611
  %v720 = vpack.c.b16 %v621, %v612
  %v721 = vpack.c.b16 %v631, %v622
  %v722 = vpack.c.b16 %v632, %v623
  %v723 = vpack.c.b16 %v633, %v624
  %v724 = vpack.c.b16 %v634, %v625
  %v725 = vpack.c.b16 %v635, %v626
  %v726 = vpack.c.b16 %v636, %v627
  %v727 = vpack.c.b16 %v637, %v628
  %v728 = vpack.c.b16 %v638, %v629
  %v729 = vpack.c.b16 %v639, %v630
  %v730 = vpack.c.b16 %v649, %v640
  %v731 = vpack.c.b16 %v650, %v641
  %v732 = vpack.c.b16 %v651, %v642
  %v733 = vpack.c.b16 %v652, %v643
  %v734 = vpack.c.b16 %v653, %v644
  %v735 = vpack.c.b16 %v654, %v645
  %v736 = vpack.c.b16 %v655, %v646
  %v737 = vpack.c.b16 %v656, %v647
  %v738 = vpack.c.b16 %v657, %v648
  %v739 = vpack.c.b16 %v667, %v658
  %v740 = vpack.c.b16 %v668, %v659
  %v741 = vpack.c.b16 %v669, %v660
  %v742 = vpack.c.b16 %v670, %v661
  %v743 = vpack.c.b16 %v671, %v662
  %v744 = vpack.c.b16 %v672, %v663
  %v745 = vpack.c.b16 %v673, %v664
  %v746 = vpack.c.b16 %v674, %v665
  %v747 = vpack.c.b16 %v675, %v666
  %v964 = vunpack.c.l.b16 %v98
  %v965 = vunpack.c.l.b16 %v99
  %v966 = vunpack.c.l.b16 %v100
  %v967 = vunpack.c.l.b16 %v101
  %v968 = vunpack.c.l.b16 %v102
  %v969 = vunpack.c.l.b16 %v103
  %v970 = vunpack.c.l.b16 %v104
  %v971 = vunpack.c.l.b16 %v105
  %v972 = vunpack.c.l.b16 %v106
  %v973 = vunpack.c.l.b16 %v107
  %v974 = vunpack.c.l.b16 %v108
  %v975 = vunpack.c.l.b16 %v109
  %v976 = vunpack.c.l.b16 %v110
  %v977 = vunpack.c.l.b16 %v111
  %v978 = vunpack.c.l.b16 %v112
  %v979 = vunpack.c.l.b16 %v113
  %v980 = vunpack.c.l.b16 %v114
  %v981 = vunpack.c.l.b16 %v115
  %v982 = vunpack.c.l.b16 %v116
  %v983 = vunpack.c.l.b16 %v117
  %v984 = vunpack.c.l.b16 %v118
  %v985 = vunpack.c.l.b16 %v119
  %v986 = vunpack.c.l.b16 %v120
  %v987 = vunpack.c.l.b16 %v121
  %v988 = vunpack.c.l.b16 %v122
  %v989 = vunpack.c.l.b16 %v123
  %v990 = vunpack.c.l.b16 %v124
  %v991 = vunpack.c.l.b16 %v125
  %v992 = vunpack.c.l.b16 %v126
  %v993 = vunpack.c.l.b16 %v127
  %v994 = vunpack.c.l.b16 %v128
  %v995 = vunpack.c.l.b16 %v129
  %v996 = vunpack.c.l.b16 %v130
  %v997 = vunpack.c.l.b16 %v131
  %v998 = vunpack.c.l.b16 %v132
  %v999 = vunpack.c.l.b16 %v133
  %v1000 = vunpack.c.l.b16 %v134
  %v1001 = vunpack.c.l.b16 %v135
  %v1002 = vunpack.c.l.b16 %v136
  %v1003 = vunpack.c.l.b16 %v137
  %v1004 = vunpack.c.l.b16 %v138
  %v1005 = vunpack.c.l.b16 %v139
  %v1006 = vunpack.c.l.b16 %v140
  %v1007 = vunpack.c.l.b16 %v141
  %v1008 = vunpack.c.l.b16 %v142
  %v1009 = vunpack.c.l.b16 %v143
  %v1010 = vunpack.c.l.b16 %v144
  %v1011 = vunpack.c.l.b16 %v145
  %v1012 = vunpack.c.l.b16 %v146
  %v1013 = vunpack.c.l.b16 %v147
  %v1014 = vunpack.c.l.b16 %v148
  %v1015 = vunpack.c.l.b16 %v149
  %v1016 = vunpack.c.l.b16 %v150
  %v1017 = vunpack.c.l.b16 %v151
  %v1018 = vunpack.c.l.b16 %v152
  %v1019 = vunpack.c.l.b16 %v153
  %v1020 = vunpack.c.l.b16 %v154
  %v1021 = vunpack.c.l.b16 %v155
  %v1022 = vunpack.c.l.b16 %v156
  %v1023 = vunpack.c.l.b16 %v157
  %v1024 = vunpack.c.l.b16 %v158
  %v1025 = vunpack.c.l.b16 %v159
  %v1026 = vunpack.c.l.b16 %v160
  %v1027 = vunpack.c.l.b16 %v161
  %v1028 = vunpack.c.l.b16 %v162
  %v1029 = vunpack.c.l.b16 %v163
  %v1030 = vunpack.c.l.b16 %v164
  %v1031 = vunpack.c.l.b16 %v165
  %v1032 = vunpack.c.l.b16 %v166
  %v1033 = vunpack.c.l.b16 %v167
  %v1034 = vunpack.c.l.b16 %v168
  %v1035 = vunpack.c.l.b16 %v169
  %v1036 = vunpack.c.l.b16 %v170
  %v1037 = vunpack.c.l.b16 %v171
  %v1038 = vunpack.c.l.b16 %v172
  %v1039 = vunpack.c.l.b16 %v173
  %v1040 = vunpack.c.l.b16 %v174
  %v1041 = vunpack.c.l.b16 %v175
  %v1042 = vunpack.c.l.b16 %v176
  %v1043 = vunpack.c.l.b16 %v177
  %v1044 = vunpack.c.l.b16 %v178
  %v1045 = vunpack.c.l.b16 %v179
  %v1046 = vunpack.c.l.b16 %v180
  %v1047 = vunpack.c.l.b16 %v181
  %v1048 = vunpack.c.l.b16 %v182
  %v1049 = vunpack.c.l.b16 %v183
  %v1050 = vunpack.c.l.b16 %v184
  %v1051 = vunpack.c.l.b16 %v185
  %v1052 = vunpack.c.l.b16 %v186
  %v1053 = vunpack.c.l.b16 %v187
  %v1054 = vunpack.c.l.b16 %v188
  %v1055 = vunpack.c.l.b16 %v189
  %v1056 = vunpack.c.l.b16 %v190
  %v1057 = vunpack.c.l.b16 %v191
  %v1058 = vunpack.c.l.b16 %v192
  %v1059 = vunpack.c.l.b16 %v193
  %v1060 = vunpack.c.l.b16 %v194
  %v1061 = vunpack.c.l.b16 %v195
  %v1062 = vunpack.c.l.b16 %v196
  %v1063 = vunpack.c.l.b16 %v197
  %v1064 = vunpack.c.l.b16 %v198
  %v1065 = vunpack.c.l.b16 %v199
  %v1066 = vunpack.c.l.b16 %v200
  %v1067 = vunpack.c.l.b16 %v201
  %v1068 = vunpack.c.l.b16 %v202
  %v1069 = vunpack.c.l.b16 %v203
  %v1070 = vunpack.c.l.b16 %v204
  %v1071 = vunpack.c.l.b16 %v205
  %v1072 = vunpack.c.l.b16 %v206
  %v1073 = vunpack.c.l.b16 %v207
  %v1074 = vunpack.c.l.b16 %v208
  %v1075 = vunpack.c.l.b16 %v209
  %v1076 = vunpack.c.l.b16 %v210
  %v1077 = vunpack.c.l.b16 %v211
  %v1078 = vunpack.c.l.b16 %v212
  %v1079 = vunpack.c.l.b16 %v213
  %v1080 = vunpack.c.l.b16 %v214
  %v1081 = vunpack.c.l.b16 %v215
  %v1082 = vunpack.c.l.b16 %v216
  %v1083 = vunpack.c.l.b16 %v217
  %v1084 = vunpack.c.l.b16 %v218
  %v1085 = vunpack.c.l.b16 %v219
  %v1086 = vunpack.c.l.b16 %v220
  %v1087 = vunpack.c.l.b16 %v221
  %v1088 = vunpack.c.l.b16 %v222
  %v1089 = vunpack.c.l.b16 %v223
  %v1090 = vunpack.c.l.b16 %v224
  %v1091 = vunpack.c.l.b16 %v225
  %v1092 = vunpack.c.l.b16 %v226
  %v1093 = vunpack.c.l.b16 %v227
  %v1094 = vunpack.c.l.b16 %v228
  %v1095 = vunpack.c.l.b16 %v229
  %v1096 = vunpack.c.l.b16 %v230
  %v1097 = vunpack.c.l.b16 %v231
  %v1098 = vunpack.c.l.b16 %v232
  %v1099 = vunpack.c.l.b16 %v233
  %v1100 = vunpack.c.l.b16 %v234
  %v1101 = vunpack.c.l.b16 %v235
  %v1102 = vunpack.c.l.b16 %v236
  %v1103 = vunpack.c.l.b16 %v237
  %v1104 = vunpack.c.l.b16 %v238
  %v1105 = vunpack.c.l.b16 %v239
  %v1106 = vunpack.c.l.b16 %v240
  %v1107 = vunpack.c.l.b16 %v241
  %v1108 = vpack.c.b16 %v965, %v964
  %v1109 = vpack.c.b16 %v967, %v966
  %v1110 = vpack.c.b16 %v969, %v968
  %v1111 = vpack.c.b16 %v971, %v970
  %v1112 = vpack.c.b16 %v973, %v972
  %v1113 = vpack.c.b16 %v975, %v974
  %v1114 = vpack.c.b16 %v977, %v976
  %v1115 = vpack.c.b16 %v979, %v978
  %v1116 = vpack.c.b16 %v981, %v980
  %v1117 = vpack.c.b16 %v983, %v982
  %v1118 = vpack.c.b16 %v985, %v984
  %v1119 = vpack.c.b16 %v987, %v986
  %v1120 = vpack.c.b16 %v989, %v988
  %v1121 = vpack.c.b16 %v991, %v990
  %v1122 = vpack.c.b16 %v993, %v992
  %v1123 = vpack.c.b16 %v995, %v994
  %v1124 = vpack.c.b16 %v997, %v996
  %v1125 = vpack.c.b16 %v999, %v998
  %v1126 = vpack.c.b16 %v1001, %v1000
  %v1127 = vpack.c.b16 %v1003, %v1002
  %v1128 = vpack.c.b16 %v1005, %v1004
  %v1129 = vpack.c.b16 %v1007, %v1006
  %v1130 = vpack.c.b16 %v1009, %v1008
  %v1131 = vpack.c.b16 %v1011, %v1010
  %v1132 = vpack.c.b16 %v1013, %v1012
  %v1133 = vpack.c.b16 %v1015, %v1014
  %v1134 = vpack.c.b16 %v1017, %v1016
  %v1135 = vpack.c.b16 %v1019, %v1018
  %v1136 = vpack.c.b16 %v1021, %v1020
  %v1137 = vpack.c.b16 %v1023, %v1022
  %v1138 = vpack.c.b16 %v1025, %v1024
  %v1139 = vpack.c.b16 %v1027, %v1026
  %v1140 = vpack.c.b16 %v1029, %v1028
  %v1141 = vpack.c.b16 %v1031, %v1030
  %v1142 = vpack.c.b16 %v1033, %v1032
  %v1143 = vpack.c.b16 %v1035, %v1034
  %v1144 = vpack.c.b16 %v1037, %v1036
  %v1145 = vpack.c.b16 %v1039, %v1038
  %v1146 = vpack.c.b16 %v1041, %v1040
  %v1147 = vpack.c.b16 %v1043, %v1042
  %v1148 = vpack.c.b16 %v1045, %v1044
  %v1149 = vpack.c.b16 %v1047, %v1046
  %v1150 = vpack.c.b16 %v1049, %v1048
  %v1151 = vpack.c.b16 %v1051, %v1050
  %v1152 = vpack.c.b16 %v1053, %v1052
  %v1153 = vpack.c.b16 %v1055, %v1054
  %v1154 = vpack.c.b16 %v1057, %v1056
  %v1155 = vpack.c.b16 %v1059, %v1058
  %v1156 = vpack.c.b16 %v1061, %v1060
  %v1157 = vpack.c.b16 %v1063, %v1062
  %v1158 = vpack.c.b16 %v1065, %v1064
  %v1159 = vpack.c.b16 %v1067, %v1066
  %v1160 = vpack.c.b16 %v1069, %v1068
  %v1161 = vpack.c.b16 %v1071, %v1070
  %v1162 = vpack.c.b16 %v1073, %v1072
  %v1163 = vpack.c.b16 %v1075, %v1074
  %v1164 = vpack.c.b16 %v1077, %v1076
  %v1165 = vpack.c.b16 %v1079, %v1078
  %v1166 = vpack.c.b16 %v1081, %v1080
  %v1167 = vpack.c.b16 %v1083, %v1082
  %v1168 = vpack.c.b16 %v1085, %v1084
  %v1169 = vpack.c.b16 %v1087, %v1086
  %v1170 = vpack.c.b16 %v1089, %v1088
  %v1171 = vpack.c.b16 %v1091, %v1090
  %v1172 = vpack.c.b16 %v1093, %v1092
  %v1173 = vpack.c.b16 %v1095, %v1094
  %v1174 = vpack.c.b16 %v1097, %v1096
  %v1175 = vpack.c.b16 %v1099, %v1098
  %v1176 = vpack.c.b16 %v1101, %v1100
  %v1177 = vpack.c.b16 %v1103, %v1102
  %v1178 = vpack.c.b16 %v1105, %v1104
  %v1179 = vpack.c.b16 %v1107, %v1106
  %1252 = vmatprep.subr.bf16.mxu0 0
  %1253 = vmatpush1.bf16.msra.mxu0 %v1108
  %1254 = vmatprep.subr.bf16.mxu0 0
  %1255 = vmatpush1.bf16.msra.mxu0 %v1109
  %1256 = vmatprep.subr.bf16.mxu0 0
  %1257 = vmatpush1.bf16.msra.mxu0 %v1110
  %1258 = vmatprep.subr.bf16.mxu0 0
  %1259 = vmatpush1.bf16.msra.mxu0 %v1111
  %1260 = vmatprep.subr.bf16.mxu0 0
  %1261 = vmatpush1.bf16.msra.mxu0 %v1112
  %1262 = vmatprep.subr.bf16.mxu0 0
  %1263 = vmatpush1.bf16.msra.mxu0 %v1113
  %1264 = vmatprep.subr.bf16.mxu0 0
  %1265 = vmatpush1.bf16.msra.mxu0 %v1114
  %1266 = vmatprep.subr.bf16.mxu0 0
  %1267 = vmatpush1.bf16.msra.mxu0 %v1115
  %1268 = vmatprep.subr.bf16.mxu0 0
  %1269 = vmatpush1.bf16.msra.mxu0 %v1116
  %1270 = vmatprep.subr.bf16.mxu0 0
  %1271 = vmatpush1.bf16.msra.mxu0 %v1117
  %1272 = vmatprep.subr.bf16.mxu0 0
  %1273 = vmatpush1.bf16.msra.mxu0 %v1118
  %1274 = vmatprep.subr.bf16.mxu0 0
  %1275 = vmatpush1.bf16.msra.mxu0 %v1119
  %1276 = vmatprep.subr.bf16.mxu0 0
  %1277 = vmatpush1.bf16.msra.mxu0 %v1120
  %1278 = vmatprep.subr.bf16.mxu0 0
  %1279 = vmatpush1.bf16.msra.mxu0 %v1121
  %1280 = vmatprep.subr.bf16.mxu0 0
  %1281 = vmatpush1.bf16.msra.mxu0 %v1122
  %1282 = vmatprep.subr.bf16.mxu0 0
  %1283 = vmatpush1.bf16.msra.mxu0 %v1123
  %1284 = vmatprep.mubr.bf16.mxu0 %v677
  %1285 = vmatmul.mubr.bf16.gmra.mrb[0].mxu0 %v676
  %v1286 = vpop.f32.mrb[0].mxu0
  %v1287 = vadd.f32 %v390, %v1286
  %v1288 = vpop.f32.mrb[0].mxu0
  %v1289 = vpop.f32.mrb[0].mxu0
  %v1290 = vadd.f32 %v393, %v1289
  %v1291 = vpop.f32.mrb[0].mxu0
  %1292 = vmatprep.mubr.bf16.mxu0 %v686
  %1293 = vmatmul.mubr.bf16.gmra.mrb[0].mxu0 %v685
  %v1294 = vpop.f32.mrb[0].mxu0
  %v1295 = vadd.f32 %v398, %v1294
  %v1296 = vpop.f32.mrb[0].mxu0
  %v1297 = vpop.f32.mrb[0].mxu0
  %v1298 = vadd.f32 %v401, %v1297
  %v1299 = vpop.f32.mrb[0].mxu0
  %1300 = vmatprep.mubr.bf16.mxu0 %v695
  %1301 = vmatmul.mubr.bf16.gmra.mrb[0].mxu0 %v694
  %v1302 = vpop.f32.mrb[0].mxu0
  %v1303 = vadd.f32 %v406, %v1302
  %v1304 = vpop.f32.mrb[0].mxu0
  %v1305 = vpop.f32.mrb[0].mxu0
  %v1306 = vadd.f32 %v409, %v1305
  %v1307 = vpop.f32.mrb[0].mxu0
  %1308 = vmatprep.mubr.bf16.mxu0 %v704
  %1309 = vmatmul.mubr.bf16.gmra.mrb[0].mxu0 %v703
  %v1310 = vpop.f32.mrb[0].mxu0
  %v1311 = vadd.f32 %v414, %v1310
  %v1312 = vpop.f32.mrb[0].mxu0
  %v1313 = vpop.f32.mrb[0].mxu0
  %v1314 = vadd.f32 %v417, %v1313
  %v1315 = vpop.f32.mrb[0].mxu0
  %1316 = vmatprep.mubr.bf16.mxu0 %v713
  %1317 = vmatmul.mubr.bf16.gmra.mrb[0].mxu0 %v712
  %v1318 = vpop.f32.mrb[0].mxu0
  %v1319 = vadd.f32 %v422, %v1318
  %v1320 = vpop.f32.mrb[0].mxu0
  %v1321 = vpop.f32.mrb[0].mxu0
  %v1322 = vadd.f32 %v425, %v1321
  %v1323 = vpop.f32.mrb[0].mxu0
  %1324 = vmatprep.mubr.bf16.mxu0 %v722
  %1325 = vmatmul.mubr.bf16.gmra.mrb[0].mxu0 %v721
  %v1326 = vpop.f32.mrb[0].mxu0
  %v1327 = vadd.f32 %v430, %v1326
  %v1328 = vpop.f32.mrb[0].mxu0
  %v1329 = vpop.f32.mrb[0].mxu0
  %v1330 = vadd.f32 %v433, %v1329
  %v1331 = vpop.f32.mrb[0].mxu0
  %1332 = vmatprep.mubr.bf16.mxu0 %v731
  %1333 = vmatmul.mubr.bf16.gmra.mrb[0].mxu0 %v730
  %v1334 = vpop.f32.mrb[0].mxu0
  %v1335 = vadd.f32 %v438, %v1334
  %v1336 = vpop.f32.mrb[0].mxu0
  %v1337 = vpop.f32.mrb[0].mxu0
  %v1338 = vadd.f32 %v441, %v1337
  %v1339 = vpop.f32.mrb[0].mxu0
  %1340 = vmatprep.mubr.bf16.mxu0 %v740
  %1341 = vmatmul.mubr.bf16.gmra.mrb[0].mxu0 %v739
  %v1342 = vpop.f32.mrb[0].mxu0
  %v1343 = vadd.f32 %v446, %v1342
  %v1344 = vpop.f32.mrb[0].mxu0
  %v1345 = vpop.f32.mrb[0].mxu0
  %v1346 = vadd.f32 %v449, %v1345
  %v1347 = vpop.f32.mrb[0].mxu0
  %1348 = vdwg.mxu0
  %1349 = vmatprep.subr.bf16.mxu0 0
  %1350 = vmatpush1.bf16.msra.mxu0 %v1124
  %1351 = vmatprep.subr.bf16.mxu0 0
  %1352 = vmatpush1.bf16.msra.mxu0 %v1125
  %1353 = vmatprep.subr.bf16.mxu0 0
  %1354 = vmatpush1.bf16.msra.mxu0 %v1126
  %1355 = vmatprep.subr.bf16.mxu0 0
  %1356 = vmatpush1.bf16.msra.mxu0 %v1127
  %1357 = vmatprep.subr.bf16.mxu0 0
  %1358 = vmatpush1.bf16.msra.mxu0 %v1128
  %1359 = vmatprep.subr.bf16.mxu0 0
  %1360 = vmatpush1.bf16.msra.mxu0 %v1129
  %1361 = vmatprep.subr.bf16.mxu0 0
  %1362 = vmatpush1.bf16.msra.mxu0 %v1130
  %1363 = vmatprep.subr.bf16.mxu0 0
  %1364 = vmatpush1.bf16.msra.mxu0 %v1131
  %1365 = vmatprep.subr.bf16.mxu0 0
  %1366 = vmatpush1.bf16.msra.mxu0 %v1132
  %1367 = vmatprep.subr.bf16.mxu0 0
  %1368 = vmatpush1.bf16.msra.mxu0 %v1133
  %1369 = vmatprep.subr.bf16.mxu0 0
  %1370 = vmatpush1.bf16.msra.mxu0 %v1134
  %1371 = vmatprep.subr.bf16.mxu0 0
  %1372 = vmatpush1.bf16.msra.mxu0 %v1135
  %1373 = vmatprep.subr.bf16.mxu0 0
  %1374 = vmatpush1.bf16.msra.mxu0 %v1136
  %1375 = vmatprep.subr.bf16.mxu0 0
  %1376 = vmatpush1.bf16.msra.mxu0 %v1137
  %1377 = vmatprep.subr.bf16.mxu0 0
  %1378 = vmatpush1.bf16.msra.mxu0 %v1138
  %1379 = vmatprep.subr.bf16.mxu0 0
  %1380 = vmatpush1.bf16.msra.mxu0 %v1139
  %1381 = vmatprep.mubr.bf16.mxu0 %v679
  %1382 = vmatmul.mubr.bf16.gmra.mrb[0].mxu0 %v678
  %v1383 = vpop.f32.mrb[0].mxu0
  %v1384 = vadd.f32 %v1287, %v1383
  %v1385 = vpop.f32.mrb[0].mxu0
  %v1386 = vpop.f32.mrb[0].mxu0
  %v1387 = vadd.f32 %v1290, %v1386
  %v1388 = vpop.f32.mrb[0].mxu0
  %1389 = vmatprep.mubr.bf16.mxu0 %v688
  %1390 = vmatmul.mubr.bf16.gmra.mrb[0].mxu0 %v687
  %v1391 = vpop.f32.mrb[0].mxu0
  %v1392 = vadd.f32 %v1295, %v1391
  %v1393 = vpop.f32.mrb[0].mxu0
  %v1394 = vpop.f32.mrb[0].mxu0
  %v1395 = vadd.f32 %v1298, %v1394
  %v1396 = vpop.f32.mrb[0].mxu0
  %1397 = vmatprep.mubr.bf16.mxu0 %v697
  %1398 = vmatmul.mubr.bf16.gmra.mrb[0].mxu0 %v696
  %v1399 = vpop.f32.mrb[0].mxu0
  %v1400 = vadd.f32 %v1303, %v1399
  %v1401 = vpop.f32.mrb[0].mxu0
  %v1402 = vpop.f32.mrb[0].mxu0
  %v1403 = vadd.f32 %v1306, %v1402
  %v1404 = vpop.f32.mrb[0].mxu0
  %1405 = vmatprep.mubr.bf16.mxu0 %v706
  %1406 = vmatmul.mubr.bf16.gmra.mrb[0].mxu0 %v705
  %v1407 = vpop.f32.mrb[0].mxu0
  %v1408 = vadd.f32 %v1311, %v1407
  %v1409 = vpop.f32.mrb[0].mxu0
  %v1410 = vpop.f32.mrb[0].mxu0
  %v1411 = vadd.f32 %v1314, %v1410
  %v1412 = vpop.f32.mrb[0].mxu0
  %1413 = vmatprep.mubr.bf16.mxu0 %v715
  %1414 = vmatmul.mubr.bf16.gmra.mrb[0].mxu0 %v714
  %v1415 = vpop.f32.mrb[0].mxu0
  %v1416 = vadd.f32 %v1319, %v1415
  %v1417 = vpop.f32.mrb[0].mxu0
  %v1418 = vpop.f32.mrb[0].mxu0
  %v1419 = vadd.f32 %v1322, %v1418
  %v1420 = vpop.f32.mrb[0].mxu0
  %1421 = vmatprep.mubr.bf16.mxu0 %v724
  %1422 = vmatmul.mubr.bf16.gmra.mrb[0].mxu0 %v723
  %v1423 = vpop.f32.mrb[0].mxu0
  %v1424 = vadd.f32 %v1327, %v1423
  %v1425 = vpop.f32.mrb[0].mxu0
  %v1426 = vpop.f32.mrb[0].mxu0
  %v1427 = vadd.f32 %v1330, %v1426
  %v1428 = vpop.f32.mrb[0].mxu0
  %1429 = vmatprep.mubr.bf16.mxu0 %v733
  %1430 = vmatmul.mubr.bf16.gmra.mrb[0].mxu0 %v732
  %v1431 = vpop.f32.mrb[0].mxu0
  %v1432 = vadd.f32 %v1335, %v1431
  %v1433 = vpop.f32.mrb[0].mxu0
  %v1434 = vpop.f32.mrb[0].mxu0
  %v1435 = vadd.f32 %v1338, %v1434
  %v1436 = vpop.f32.mrb[0].mxu0
  %1437 = vmatprep.mubr.bf16.mxu0 %v742
  %1438 = vmatmul.mubr.bf16.gmra.mrb[0].mxu0 %v741
  %v1439 = vpop.f32.mrb[0].mxu0
  %v1440 = vadd.f32 %v1343, %v1439
  %v1441 = vpop.f32.mrb[0].mxu0
  %v1442 = vpop.f32.mrb[0].mxu0
  %v1443 = vadd.f32 %v1346, %v1442
  %v1444 = vpop.f32.mrb[0].mxu0
  %1445 = vdwg.mxu0
  %1446 = vmatprep.subr.bf16.mxu0 0
  %1447 = vmatpush1.bf16.msra.mxu0 %v1140
  %1448 = vmatprep.subr.bf16.mxu0 0
  %1449 = vmatpush1.bf16.msra.mxu0 %v1141
  %1450 = vmatprep.subr.bf16.mxu0 0
  %1451 = vmatpush1.bf16.msra.mxu0 %v1142
  %1452 = vmatprep.subr.bf16.mxu0 0
  %1453 = vmatpush1.bf16.msra.mxu0 %v1143
  %1454 = vmatprep.subr.bf16.mxu0 0
  %1455 = vmatpush1.bf16.msra.mxu0 %v1144
  %1456 = vmatprep.subr.bf16.mxu0 0
  %1457 = vmatpush1.bf16.msra.mxu0 %v1145
  %1458 = vmatprep.subr.bf16.mxu0 0
  %1459 = vmatpush1.bf16.msra.mxu0 %v1146
  %1460 = vmatprep.subr.bf16.mxu0 0
  %1461 = vmatpush1.bf16.msra.mxu0 %v1147
  %1462 = vmatprep.subr.bf16.mxu0 0
  %1463 = vmatpush1.bf16.msra.mxu0 %v1148
  %1464 = vmatprep.subr.bf16.mxu0 0
  %1465 = vmatpush1.bf16.msra.mxu0 %v1149
  %1466 = vmatprep.subr.bf16.mxu0 0
  %1467 = vmatpush1.bf16.msra.mxu0 %v1150
  %1468 = vmatprep.subr.bf16.mxu0 0
  %1469 = vmatpush1.bf16.msra.mxu0 %v1151
  %1470 = vmatprep.subr.bf16.mxu0 0
  %1471 = vmatpush1.bf16.msra.mxu0 %v1152
  %1472 = vmatprep.subr.bf16.mxu0 0
  %1473 = vmatpush1.bf16.msra.mxu0 %v1153
  %1474 = vmatprep.subr.bf16.mxu0 0
  %1475 = vmatpush1.bf16.msra.mxu0 %v1154
  %1476 = vmatprep.subr.bf16.mxu0 0
  %1477 = vmatpush1.bf16.msra.mxu0 %v1155
  %1478 = vmatprep.mubr.bf16.mxu0 %v681
  %1479 = vmatmul.mubr.bf16.gmra.mrb[0].mxu0 %v680
  %v1480 = vpop.f32.mrb[0].mxu0
  %v1481 = vadd.f32 %v1384, %v1480
  %v1482 = vpop.f32.mrb[0].mxu0
  %v1483 = vpop.f32.mrb[0].mxu0
  %v1484 = vadd.f32 %v1387, %v1483
  %v1485 = vpop.f32.mrb[0].mxu0
  %1486 = vmatprep.mubr.bf16.mxu0 %v690
  %1487 = vmatmul.mubr.bf16.gmra.mrb[0].mxu0 %v689
  %v1488 = vpop.f32.mrb[0].mxu0
  %v1489 = vadd.f32 %v1392, %v1488
  %v1490 = vpop.f32.mrb[0].mxu0
  %v1491 = vpop.f32.mrb[0].mxu0
  %v1492 = vadd.f32 %v1395, %v1491
  %v1493 = vpop.f32.mrb[0].mxu0
  %1494 = vmatprep.mubr.bf16.mxu0 %v699
  %1495 = vmatmul.mubr.bf16.gmra.mrb[0].mxu0 %v698
  %v1496 = vpop.f32.mrb[0].mxu0
  %v1497 = vadd.f32 %v1400, %v1496
  %v1498 = vpop.f32.mrb[0].mxu0
  %v1499 = vpop.f32.mrb[0].mxu0
  %v1500 = vadd.f32 %v1403, %v1499
  %v1501 = vpop.f32.mrb[0].mxu0
  %1502 = vmatprep.mubr.bf16.mxu0 %v708
  %1503 = vmatmul.mubr.bf16.gmra.mrb[0].mxu0 %v707
  %v1504 = vpop.f32.mrb[0].mxu0
  %v1505 = vadd.f32 %v1408, %v1504
  %v1506 = vpop.f32.mrb[0].mxu0
  %v1507 = vpop.f32.mrb[0].mxu0
  %v1508 = vadd.f32 %v1411, %v1507
  %v1509 = vpop.f32.mrb[0].mxu0
  %1510 = vmatprep.mubr.bf16.mxu0 %v717
  %1511 = vmatmul.mubr.bf16.gmra.mrb[0].mxu0 %v716
  %v1512 = vpop.f32.mrb[0].mxu0
  %v1513 = vadd.f32 %v1416, %v1512
  %v1514 = vpop.f32.mrb[0].mxu0
  %v1515 = vpop.f32.mrb[0].mxu0
  %v1516 = vadd.f32 %v1419, %v1515
  %v1517 = vpop.f32.mrb[0].mxu0
  %1518 = vmatprep.mubr.bf16.mxu0 %v726
  %1519 = vmatmul.mubr.bf16.gmra.mrb[0].mxu0 %v725
  %v1520 = vpop.f32.mrb[0].mxu0
  %v1521 = vadd.f32 %v1424, %v1520
  %v1522 = vpop.f32.mrb[0].mxu0
  %v1523 = vpop.f32.mrb[0].mxu0
  %v1524 = vadd.f32 %v1427, %v1523
  %v1525 = vpop.f32.mrb[0].mxu0
  %1526 = vmatprep.mubr.bf16.mxu0 %v735
  %1527 = vmatmul.mubr.bf16.gmra.mrb[0].mxu0 %v734
  %v1528 = vpop.f32.mrb[0].mxu0
  %v1529 = vadd.f32 %v1432, %v1528
  %v1530 = vpop.f32.mrb[0].mxu0
  %v1531 = vpop.f32.mrb[0].mxu0
  %v1532 = vadd.f32 %v1435, %v1531
  %v1533 = vpop.f32.mrb[0].mxu0
  %1534 = vmatprep.mubr.bf16.mxu0 %v744
  %1535 = vmatmul.mubr.bf16.gmra.mrb[0].mxu0 %v743
  %v1536 = vpop.f32.mrb[0].mxu0
  %v1537 = vadd.f32 %v1440, %v1536
  %v1538 = vpop.f32.mrb[0].mxu0
  %v1539 = vpop.f32.mrb[0].mxu0
  %v1540 = vadd.f32 %v1443, %v1539
  %v1541 = vpop.f32.mrb[0].mxu0
  %1542 = vdwg.mxu0
  %1543 = vmatprep.subr.bf16.mxu0 0
  %1544 = vmatpush1.bf16.msra.mxu0 %v1156
  %1545 = vmatprep.subr.bf16.mxu0 0
  %1546 = vmatpush1.bf16.msra.mxu0 %v1157
  %1547 = vmatprep.subr.bf16.mxu0 0
  %1548 = vmatpush1.bf16.msra.mxu0 %v1158
  %1549 = vmatprep.subr.bf16.mxu0 0
  %1550 = vmatpush1.bf16.msra.mxu0 %v1159
  %1551 = vmatprep.subr.bf16.mxu0 0
  %1552 = vmatpush1.bf16.msra.mxu0 %v1160
  %1553 = vmatprep.subr.bf16.mxu0 0
  %1554 = vmatpush1.bf16.msra.mxu0 %v1161
  %1555 = vmatprep.subr.bf16.mxu0 0
  %1556 = vmatpush1.bf16.msra.mxu0 %v1162
  %1557 = vmatprep.subr.bf16.mxu0 0
  %1558 = vmatpush1.bf16.msra.mxu0 %v1163
  %1559 = vmatprep.subr.bf16.mxu0 0
  %1560 = vmatpush1.bf16.msra.mxu0 %v1164
  %1561 = vmatprep.subr.bf16.mxu0 0
  %1562 = vmatpush1.bf16.msra.mxu0 %v1165
  %1563 = vmatprep.subr.bf16.mxu0 0
  %1564 = vmatpush1.bf16.msra.mxu0 %v1166
  %1565 = vmatprep.subr.bf16.mxu0 0
  %1566 = vmatpush1.bf16.msra.mxu0 %v1167
  %1567 = vmatprep.subr.bf16.mxu0 0
  %1568 = vmatpush1.bf16.msra.mxu0 %v1168
  %1569 = vmatprep.subr.bf16.mxu0 0
  %1570 = vmatpush1.bf16.msra.mxu0 %v1169
  %1571 = vmatprep.subr.bf16.mxu0 0
  %1572 = vmatpush1.bf16.msra.mxu0 %v1170
  %1573 = vmatprep.subr.bf16.mxu0 0
  %1574 = vmatpush1.bf16.msra.mxu0 %v1171
  %1575 = vmatprep.mubr.bf16.mxu0 %v683
  %1576 = vmatmul.mubr.bf16.gmra.mrb[0].mxu0 %v682
  %v1577 = vpop.f32.mrb[0].mxu0
  %v1578 = vadd.f32 %v1481, %v1577
  %v1579 = vpop.f32.mrb[0].mxu0
  %v1580 = vpop.f32.mrb[0].mxu0
  %v1581 = vadd.f32 %v1484, %v1580
  %v1582 = vpop.f32.mrb[0].mxu0
  %1583 = vmatprep.mubr.bf16.mxu0 %v692
  %1584 = vmatmul.mubr.bf16.gmra.mrb[0].mxu0 %v691
  %v1585 = vpop.f32.mrb[0].mxu0
  %v1586 = vadd.f32 %v1489, %v1585
  %v1587 = vpop.f32.mrb[0].mxu0
  %v1588 = vpop.f32.mrb[0].mxu0
  %v1589 = vadd.f32 %v1492, %v1588
  %v1590 = vpop.f32.mrb[0].mxu0
  %1591 = vmatprep.mubr.bf16.mxu0 %v701
  %1592 = vmatmul.mubr.bf16.gmra.mrb[0].mxu0 %v700
  %v1593 = vpop.f32.mrb[0].mxu0
  %v1594 = vadd.f32 %v1497, %v1593
  %v1595 = vpop.f32.mrb[0].mxu0
  %v1596 = vpop.f32.mrb[0].mxu0
  %v1597 = vadd.f32 %v1500, %v1596
  %v1598 = vpop.f32.mrb[0].mxu0
  %1599 = vmatprep.mubr.bf16.mxu0 %v710
  %1600 = vmatmul.mubr.bf16.gmra.mrb[0].mxu0 %v709
  %v1601 = vpop.f32.mrb[0].mxu0
  %v1602 = vadd.f32 %v1505, %v1601
  %v1603 = vpop.f32.mrb[0].mxu0
  %v1604 = vpop.f32.mrb[0].mxu0
  %v1605 = vadd.f32 %v1508, %v1604
  %v1606 = vpop.f32.mrb[0].mxu0
  %1607 = vmatprep.mubr.bf16.mxu0 %v719
  %1608 = vmatmul.mubr.bf16.gmra.mrb[0].mxu0 %v718
  %v1609 = vpop.f32.mrb[0].mxu0
  %v1610 = vadd.f32 %v1513, %v1609
  %v1611 = vpop.f32.mrb[0].mxu0
  %v1612 = vpop.f32.mrb[0].mxu0
  %v1613 = vadd.f32 %v1516, %v1612
  %v1614 = vpop.f32.mrb[0].mxu0
  %1615 = vmatprep.mubr.bf16.mxu0 %v728
  %1616 = vmatmul.mubr.bf16.gmra.mrb[0].mxu0 %v727
  %v1617 = vpop.f32.mrb[0].mxu0
  %v1618 = vadd.f32 %v1521, %v1617
  %v1619 = vpop.f32.mrb[0].mxu0
  %v1620 = vpop.f32.mrb[0].mxu0
  %v1621 = vadd.f32 %v1524, %v1620
  %v1622 = vpop.f32.mrb[0].mxu0
  %1623 = vmatprep.mubr.bf16.mxu0 %v737
  %1624 = vmatmul.mubr.bf16.gmra.mrb[0].mxu0 %v736
  %v1625 = vpop.f32.mrb[0].mxu0
  %v1626 = vadd.f32 %v1529, %v1625
  %v1627 = vpop.f32.mrb[0].mxu0
  %v1628 = vpop.f32.mrb[0].mxu0
  %v1629 = vadd.f32 %v1532, %v1628
  %v1630 = vpop.f32.mrb[0].mxu0
  %1631 = vmatprep.mubr.bf16.mxu0 %v746
  %1632 = vmatmul.mubr.bf16.gmra.mrb[0].mxu0 %v745
  %v1633 = vpop.f32.mrb[0].mxu0
  %v1634 = vadd.f32 %v1537, %v1633
  %v1635 = vpop.f32.mrb[0].mxu0
  %v1636 = vpop.f32.mrb[0].mxu0
  %v1637 = vadd.f32 %v1540, %v1636
  %v1638 = vpop.f32.mrb[0].mxu0
  %1639 = vdwg.mxu0
  %1640 = vmatprep.subr.bf16.mxu0 0
  %1641 = vmatpush1.bf16.msra.mxu0 %v1172
  %1642 = vmatprep.subr.bf16.mxu0 0
  %1643 = vmatpush1.bf16.msra.mxu0 %v1173
  %1644 = vmatprep.subr.bf16.mxu0 0
  %1645 = vmatpush1.bf16.msra.mxu0 %v1174
  %1646 = vmatprep.subr.bf16.mxu0 0
  %1647 = vmatpush1.bf16.msra.mxu0 %v1175
  %1648 = vmatprep.subr.bf16.mxu0 0
  %1649 = vmatpush1.bf16.msra.mxu0 %v1176
  %1650 = vmatprep.subr.bf16.mxu0 0
  %1651 = vmatpush1.bf16.msra.mxu0 %v1177
  %1652 = vmatprep.subr.bf16.mxu0 0
  %1653 = vmatpush1.bf16.msra.mxu0 %v1178
  %1654 = vmatprep.subr.bf16.mxu0 0
  %1655 = vmatpush1.bf16.msra.mxu0 %v1179
  %1656 = vmatprep.subr.bf16.mxu0 0
  %1657 = vmatpush1.bf16.msra.mxu0 0
  %1658 = vmatprep.subr.bf16.mxu0 0
  %1659 = vmatpush1.bf16.msra.mxu0 0
  %1660 = vmatprep.subr.bf16.mxu0 0
  %1661 = vmatpush1.bf16.msra.mxu0 0
  %1662 = vmatprep.subr.bf16.mxu0 0
  %1663 = vmatpush1.bf16.msra.mxu0 0
  %1664 = vmatprep.subr.bf16.mxu0 0
  %1665 = vmatpush1.bf16.msra.mxu0 0
  %1666 = vmatprep.subr.bf16.mxu0 0
  %1667 = vmatpush1.bf16.msra.mxu0 0
  %1668 = vmatprep.subr.bf16.mxu0 0
  %1669 = vmatpush1.bf16.msra.mxu0 0
  %1670 = vmatprep.subr.bf16.mxu0 0
  %1671 = vmatpush1.bf16.msra.mxu0 0
  %1672 = vmatprep.mubr.bf16.mxu0 0
  %1673 = vmatmul.mubr.bf16.gmra.mrb[0].mxu0 %v684
  %v1674 = vpop.f32.mrb[0].mxu0
  %v1675 = vadd.f32 %v1578, %v1674
  %v1676 = vpop.f32.mrb[0].mxu0
  %v1677 = vpop.f32.mrb[0].mxu0
  %v1678 = vadd.f32 %v1581, %v1677
  %v1679 = vpop.f32.mrb[0].mxu0
  %1680 = vmatprep.mubr.bf16.mxu0 0
  %1681 = vmatmul.mubr.bf16.gmra.mrb[0].mxu0 %v693
  %v1682 = vpop.f32.mrb[0].mxu0
  %v1683 = vadd.f32 %v1586, %v1682
  %v1684 = vpop.f32.mrb[0].mxu0
  %v1685 = vpop.f32.mrb[0].mxu0
  %v1686 = vadd.f32 %v1589, %v1685
  %v1687 = vpop.f32.mrb[0].mxu0
  %1688 = vmatprep.mubr.bf16.mxu0 0
  %1689 = vmatmul.mubr.bf16.gmra.mrb[0].mxu0 %v702
  %v1690 = vpop.f32.mrb[0].mxu0
  %v1691 = vadd.f32 %v1594, %v1690
  %v1692 = vpop.f32.mrb[0].mxu0
  %v1693 = vpop.f32.mrb[0].mxu0
  %v1694 = vadd.f32 %v1597, %v1693
  %v1695 = vpop.f32.mrb[0].mxu0
  %1696 = vmatprep.mubr.bf16.mxu0 0
  %1697 = vmatmul.mubr.bf16.gmra.mrb[0].mxu0 %v711
  %v1698 = vpop.f32.mrb[0].mxu0
  %v1699 = vadd.f32 %v1602, %v1698
  %v1700 = vpop.f32.mrb[0].mxu0
  %v1701 = vpop.f32.mrb[0].mxu0
  %v1702 = vadd.f32 %v1605, %v1701
  %v1703 = vpop.f32.mrb[0].mxu0
  %1704 = vmatprep.mubr.bf16.mxu0 0
  %1705 = vmatmul.mubr.bf16.gmra.mrb[0].mxu0 %v720
  %v1706 = vpop.f32.mrb[0].mxu0
  %v1707 = vadd.f32 %v1610, %v1706
  %v1708 = vpop.f32.mrb[0].mxu0
  %v1709 = vpop.f32.mrb[0].mxu0
  %v1710 = vadd.f32 %v1613, %v1709
  %v1711 = vpop.f32.mrb[0].mxu0
  %1712 = vmatprep.mubr.bf16.mxu0 0
  %1713 = vmatmul.mubr.bf16.gmra.mrb[0].mxu0 %v729
  %v1714 = vpop.f32.mrb[0].mxu0
  %v1715 = vadd.f32 %v1618, %v1714
  %v1716 = vpop.f32.mrb[0].mxu0
  %v1717 = vpop.f32.mrb[0].mxu0
  %v1718 = vadd.f32 %v1621, %v1717
  %v1719 = vpop.f32.mrb[0].mxu0
  %1720 = vmatprep.mubr.bf16.mxu0 0
  %1721 = vmatmul.mubr.bf16.gmra.mrb[0].mxu0 %v738
  %v1722 = vpop.f32.mrb[0].mxu0
  %v1723 = vadd.f32 %v1626, %v1722
  %v1724 = vpop.f32.mrb[0].mxu0
  %v1725 = vpop.f32.mrb[0].mxu0
  %v1726 = vadd.f32 %v1629, %v1725
  %v1727 = vpop.f32.mrb[0].mxu0
  %1728 = vmatprep.mubr.bf16.mxu0 0
  %1729 = vmatmul.mubr.bf16.gmra.mrb[0].mxu0 %v747
  %v1730 = vpop.f32.mrb[0].mxu0
  %v1731 = vadd.f32 %v1634, %v1730
  %v1732 = vpop.f32.mrb[0].mxu0
  %v1733 = vpop.f32.mrb[0].mxu0
  %v1734 = vadd.f32 %v1637, %v1733
  %v1735 = vpop.f32.mrb[0].mxu0
  %1736 = vdwg.mxu0
  %1737 = vst [vmem:[%s4] sm:$0xff] %v1675
  %1738 = vst [vmem:[%s4 + $0x8] sm:$0xff] %v1678
  %1739 = vst [vmem:[%s4 + $0x10] sm:$0xff] %v1683
  %1740 = vst [vmem:[%s4 + $0x18] sm:$0xff] %v1686
  %1741 = vst [vmem:[%s4 + $0x20] sm:$0xff] %v1691
  %1742 = vst [vmem:[%s4 + $0x28] sm:$0xff] %v1694
  %1743 = vst [vmem:[%s4 + $0x30] sm:$0xff] %v1699
  %1744 = vst [vmem:[%s4 + $0x38] sm:$0xff] %v1702
  %1745 = vst [vmem:[%s4 + $0x40] sm:$0xff] %v1707
  %1746 = vst [vmem:[%s4 + $0x48] sm:$0xff] %v1710
  %1747 = vst [vmem:[%s4 + $0x50] sm:$0xff] %v1715
  %1748 = vst [vmem:[%s4 + $0x58] sm:$0xff] %v1718
  %1749 = vst [vmem:[%s4 + $0x60] sm:$0xff] %v1723
  %1750 = vst [vmem:[%s4 + $0x68] sm:$0xff] %v1726
  %1751 = vst [vmem:[%s4 + $0x70] sm:$0xff] %v1731
  %1752 = vst [vmem:[%s4 + $0x78] sm:$0xff] %v1734
  // Predicated region
  $region18: #{_lambda_.14} parent=0 // pred_check
    _
  $region19: #{_lambda_.14} parent=0 // pred_check_branch
    %1754 = sbr.rel (0) target = $region21
  $region20: #{_lambda_.14} parent=0 // pred_region
    _
  $region21: #{_lambda_.14} parent=0 // pred_fallthru
    _
  // Predicated region
  $region22: #{_lambda_.14} parent=0 // pred_check
    _
  $region23: #{_lambda_.14} parent=0 // pred_check_branch
    %1756 = sbr.rel (0) target = $region25
  $region24: #{_lambda_.14} parent=0 // pred_region
    _
  $region25: #{_lambda_.14} parent=0 // pred_fallthru
    _

</llo_original>
